<compile_context>
chip_gen: v5e
topology: v5e:2x2
jax: 0.10.0
libtpu: 0.0.40
codegen_flags: <defaults>
</compile_context>

<pallas_src>
import functools

import jax
import jax.numpy as jnp
from jax.experimental import pallas as pl
from jax.experimental.pallas import tpu as pltpu


# ----------------------------------------------------------------------------
# helpers
# ----------------------------------------------------------------------------
def _round_up(v: int, m: int) -> int:
    return (v + m - 1) // m * m


def _pick_m_tiling(M: int, tm_max: int):
    """Pick TM (multiple of 16, <= tm_max) minimizing row padding.

    Returns (Mpad, TM) with TM | Mpad.  Multiples of 16 keep bf16 sublane
    packing happy; ties prefer the larger TM (fewer grid steps)."""
    Mpad16 = _round_up(M, 16)
    if Mpad16 <= tm_max:
        return Mpad16, Mpad16
    best_tm = 16
    best_pad = _round_up(M, 16) - M
    for tm in range(16, tm_max + 1, 16):
        pad = _round_up(M, tm) - M
        if pad < best_pad or (pad == best_pad and tm > best_tm):
            best_tm, best_pad = tm, pad
    return M + best_pad, best_tm


_VMEM_LIMIT = 32 * 1024 * 1024  # fits v5e/v6e/v7x scoped budgets with headroom


# ----------------------------------------------------------------------------
# Pallas kernel: fused  O = relu(X @ W + b)   (ReLU optional)
#   X tile (TM, Kpad) bf16, W (Kpad, Npad) bf16 resident, b (1, Npad) f32.
#   f32 MXU accumulation, f32 epilogue, single cast at the store.
# ----------------------------------------------------------------------------
def _linear_kernel(x_ref, w_ref, b_ref, o_ref, *, apply_relu):
    acc = jnp.dot(x_ref[...], w_ref[...], preferred_element_type=jnp.float32)
    acc = acc + b_ref[...]
    if apply_relu:
        acc = jnp.maximum(acc, 0.0)
    o_ref[...] = acc.astype(o_ref.dtype)


def pallas_linear(x, w, b, *, relu, out_dtype=jnp.float32, tm=512):
    """x: (M, K), w: (K, N), b: (N,)  ->  (M, N) in out_dtype."""
    M, K = x.shape
    K2, N = w.shape
    assert K == K2, (K, K2)

    Kpad = _round_up(K, 128)
    Npad = _round_up(N, 128)
    Mpad, TM = _pick_m_tiling(M, tm)

    xb = jnp.pad(x.astype(jnp.bfloat16), ((0, Mpad - M), (0, Kpad - K)))
    wb = jnp.pad(w.astype(jnp.bfloat16), ((0, Kpad - K), (0, Npad - N)))
    bb = jnp.pad(b.astype(jnp.float32).reshape(1, N), ((0, 0), (0, Npad - N)))

    out_bytes = Mpad * Npad * jnp.dtype(out_dtype).itemsize
    cost = pl.CostEstimate(
        flops=2 * Mpad * Kpad * Npad,
        transcendentals=0,
        bytes_accessed=xb.size * 2 + wb.size * 2 + bb.size * 4 + out_bytes,
    )

    out = pl.pallas_call(
        functools.partial(_linear_kernel, apply_relu=relu),
        grid=(Mpad // TM,),
        in_specs=[
            pl.BlockSpec((TM, Kpad), lambda i: (i, 0)),      # pipelined X tiles
            pl.BlockSpec((Kpad, Npad), lambda i: (0, 0)),    # resident weight
            pl.BlockSpec((1, Npad), lambda i: (0, 0)),       # resident bias
        ],
        out_specs=pl.BlockSpec((TM, Npad), lambda i: (i, 0)),
        out_shape=jax.ShapeDtypeStruct((Mpad, Npad), out_dtype),
        compiler_params=pltpu.CompilerParams(
            dimension_semantics=("parallel",),
            vmem_limit_bytes=_VMEM_LIMIT,
        ),
        cost_estimate=cost,
    )(xb, wb, bb)
    return out[:M, :N]


# ----------------------------------------------------------------------------
# Pallas kernel: fused MLP head  Q = (relu(X @ W1 + b1)) @ W2 + b2
#   Both weights VMEM resident; the (TM, 512) hidden never touches HBM.
# ----------------------------------------------------------------------------
def _head_kernel(x_ref, w1_ref, b1_ref, w2_ref, b2_ref, o_ref):
    h = jnp.dot(x_ref[...], w1_ref[...], preferred_element_type=jnp.float32)
    h = jnp.maximum(h + b1_ref[...], 0.0)
    q = jnp.dot(h.astype(w2_ref.dtype), w2_ref[...],
                preferred_element_type=jnp.float32)
    o_ref[...] = (q + b2_ref[...]).astype(o_ref.dtype)


def pallas_mlp_head(x, w1, b1, w2, b2, *, tm=256):
    """x: (M, K) -> relu(x@w1+b1)@w2+b2 : (M, N) f32."""
    M, K = x.shape
    K1, H = w1.shape
    H2, N = w2.shape
    assert K == K1 and H == H2

    Kpad = _round_up(K, 128)
    Hpad = _round_up(H, 128)
    Npad = _round_up(N, 128)
    Mpad, TM = _pick_m_tiling(M, tm)

    xb = jnp.pad(x.astype(jnp.bfloat16), ((0, Mpad - M), (0, Kpad - K)))
    w1b = jnp.pad(w1.astype(jnp.bfloat16), ((0, Kpad - K), (0, Hpad - H)))
    b1b = jnp.pad(b1.astype(jnp.float32).reshape(1, H), ((0, 0), (0, Hpad - H)))
    w2b = jnp.pad(w2.astype(jnp.bfloat16), ((0, Hpad - H), (0, Npad - N)))
    b2b = jnp.pad(b2.astype(jnp.float32).reshape(1, N), ((0, 0), (0, Npad - N)))

    cost = pl.CostEstimate(
        flops=2 * Mpad * Kpad * Hpad + 2 * Mpad * Hpad * Npad,
        transcendentals=0,
        bytes_accessed=(xb.size * 2 + w1b.size * 2 + w2b.size * 2
                        + b1b.size * 4 + b2b.size * 4 + Mpad * Npad * 4),
    )

    out = pl.pallas_call(
        _head_kernel,
        grid=(Mpad // TM,),
        in_specs=[
            pl.BlockSpec((TM, Kpad), lambda i: (i, 0)),
            pl.BlockSpec((Kpad, Hpad), lambda i: (0, 0)),
            pl.BlockSpec((1, Hpad), lambda i: (0, 0)),
            pl.BlockSpec((Hpad, Npad), lambda i: (0, 0)),
            pl.BlockSpec((1, Npad), lambda i: (0, 0)),
        ],
        out_specs=pl.BlockSpec((TM, Npad), lambda i: (i, 0)),
        out_shape=jax.ShapeDtypeStruct((Mpad, Npad), jnp.float32),
        compiler_params=pltpu.CompilerParams(
            dimension_semantics=("parallel",),
            vmem_limit_bytes=_VMEM_LIMIT,
        ),
        cost_estimate=cost,
    )(xb, w1b, b1b, w2b, b2b)
    return out[:M, :N]


# ----------------------------------------------------------------------------
# Convolution = NHWC im2col (glue) + fused Pallas matmul (hot path)
# ----------------------------------------------------------------------------
# TODO(synk): the im2col patch slab is still materialized in HBM by XLA; a
# fully in-kernel gather (pl.ds strided windows over the NHWC activation)
# would remove that extra traffic.
def _im2col_nhwc(x, kh, kw, stride):
    """x: (B, H, W, C) -> (B*OH*OW, kh*kw*C) with (kh, kw, C) inner ordering."""
    B, H, W, C = x.shape
    OH = (H - kh) // stride + 1
    OW = (W - kw) // stride + 1
    cols = []
    for i in range(kh):
        for j in range(kw):
            patch = x[:, i:i + stride * OH:stride, j:j + stride * OW:stride, :]
            cols.append(patch)                               # (B, OH, OW, C)
    cols = jnp.stack(cols, axis=3)                           # (B, OH, OW, kh*kw, C)
    return cols.reshape(B * OH * OW, kh * kw * C), OH, OW


def conv2d_nhwc(x, w_hwio, b, *, stride, relu=True):
    """x: (B,H,W,C); w: (kh,kw,C,OC) HWIO; b: (OC,) -> (B,OH,OW,OC) bf16."""
    B = x.shape[0]
    kh, kw, C, OC = w_hwio.shape
    assert x.shape[-1] == C
    cols, OH, OW = _im2col_nhwc(x, kh, kw, stride)           # (B*OH*OW, kh*kw*C)
    w_mat = w_hwio.reshape(kh * kw * C, OC)
    out = pallas_linear(cols, w_mat, b, relu=relu,
                        out_dtype=jnp.bfloat16, tm=512)      # (B*OH*OW, OC)
    return out.reshape(B, OH, OW, OC)


# ----------------------------------------------------------------------------
# CNN (Nature-DQN) parameters + forward
# ----------------------------------------------------------------------------
def init_cnn_params(key, n_actions, obs_shape):
    c, h, w = obs_shape
    assert (h, w) == (84, 84), "Nature-DQN CNN expects 84x84 observations"
    ks = jax.random.split(key, 5)
    s = 0.02

    def W(k, shape):
        return jax.random.normal(k, shape, dtype=jnp.float32) * s

    params = {
        # HWIO layout == PyTorch (OC, C, kh, kw).transpose(2, 3, 1, 0)
        "conv1_w": W(ks[0], (8, 8, c, 32)),
        "conv1_b": jnp.zeros((32,), jnp.float32),
        "conv2_w": W(ks[1], (4, 4, 32, 64)),
        "conv2_b": jnp.zeros((64,), jnp.float32),
        "conv3_w": W(ks[2], (3, 3, 64, 64)),
        "conv3_b": jnp.zeros((64,), jnp.float32),
        # fc1_w rows ordered for the NHWC flatten (OH, OW, OC); equivalent to a
        # one-time permutation of the PyTorch (512, 64*7*7) weight (done at init
        # so no per-step transposes are needed).
        "fc1_w": W(ks[3], (7 * 7 * 64, 512)),
        "fc1_b": jnp.zeros((512,), jnp.float32),
        "fc2_w": W(ks[4], (512, n_actions)),
        "fc2_b": jnp.zeros((n_actions,), jnp.float32),
    }
    return params


@jax.jit
def cnn_forward(params, x):
    # x: (B, 4, 84, 84) NCHW like PyTorch -> NHWC once, stay NHWC throughout.
    x = jnp.transpose(x, (0, 2, 3, 1)).astype(jnp.bfloat16)
    x = conv2d_nhwc(x, params["conv1_w"], params["conv1_b"], stride=4)  # (B,20,20,32)
    x = conv2d_nhwc(x, params["conv2_w"], params["conv2_b"], stride=2)  # (B, 9, 9,64)
    x = conv2d_nhwc(x, params["conv3_w"], params["conv3_b"], stride=1)  # (B, 7, 7,64)
    B = x.shape[0]
    x = x.reshape(B, -1)                                                # NHWC flatten
    # FC1 (ReLU) + FC2 fused into a single Pallas kernel.
    q = pallas_mlp_head(x, params["fc1_w"], params["fc1_b"],
                        params["fc2_w"], params["fc2_b"])               # (B, n_actions)
    return q


# ----------------------------------------------------------------------------
# DQN wrapper (online / target dispatch, target = copy of online)
# ----------------------------------------------------------------------------
class DQN:
    def __init__(self, type: str, n_actions: int, obs_shape: tuple, config: dict) -> None:
        if type != "cnn":
            raise NotImplementedError("Only the 'cnn' variant is implemented in Pallas.")
        key = jax.random.PRNGKey(0)
        self.online = init_cnn_params(key, n_actions, obs_shape)
        # target.load_state_dict(online.state_dict())
        self.target = jax.tree_util.tree_map(lambda p: jnp.array(p), self.online)

    def forward(self, input, model):
        if model == "online":
            return cnn_forward(self.online, input)
        elif model == "target":
            return cnn_forward(self.target, input)
        else:
            raise ValueError(f"unknown model {model!r}")

    __call__ = forward


# ----------------------------------------------------------------------------
if __name__ == "__main__":
    n_actions = 6
    obs_shape = (4, 84, 84)  # (C, H, W) as implied by the CNN head (64*7*7 = 3136)
    batch = 2

    dqn = DQN("cnn", n_actions, obs_shape, config={"cnn": {}})

    key = jax.random.PRNGKey(0)
    x = jax.random.normal(key, (batch,) + obs_shape, dtype=jnp.float32)

    q_online = dqn(x, "online")
    q_target = dqn(x, "target")
    jax.block_until_ready(q_online)
    jax.block_until_ready(q_target)

    assert q_online.shape == (batch, n_actions)
    assert q_target.shape == (batch, n_actions)
    assert bool(jnp.all(jnp.isfinite(q_online)))
    # target was initialized from online's state dict -> identical outputs
    assert bool(jnp.allclose(q_online, q_target))

    print("KERNEL_OK")
</pallas_src>

<mosaic_0001>
module attributes {stable_mosaic.version = 11 : i64} {
  func.func @_linear_kernel(%arg0: i32, %arg1: memref<400x256xbf16, #tpu.memory_space<vmem>>, %arg2: memref<256x128xbf16, #tpu.memory_space<vmem>>, %arg3: memref<1x128xf32, #tpu.memory_space<vmem>>, %arg4: memref<400x128xbf16, #tpu.memory_space<vmem>>) attributes {dimension_semantics = [#tpu.dimension_semantics<parallel>], iteration_bounds = array<i64: 2>, scalar_prefetch = 0 : i64, scratch_operands = 0 : i64, tpu.core_type = #tpu.core_type<tc>, window_params = [{transform_indices = @transform_0, window_bounds = array<i64: 400, 256>}, {pipeline_mode = #tpu.pipeline_mode<synchronous>, transform_indices = @transform_1, window_bounds = array<i64: 256, 128>}, {pipeline_mode = #tpu.pipeline_mode<synchronous>, transform_indices = @transform_2, window_bounds = array<i64: 1, 128>}, {transform_indices = @transform_3, window_bounds = array<i64: 400, 128>}]} {
    %c0 = arith.constant 0 : index
    %c0_0 = arith.constant 0 : index
    %0 = vector.load %arg1[%c0, %c0_0] : memref<400x256xbf16, #tpu.memory_space<vmem>>, vector<400x256xbf16>
    %c0_1 = arith.constant 0 : index
    %c0_2 = arith.constant 0 : index
    %1 = vector.load %arg2[%c0_1, %c0_2] : memref<256x128xbf16, #tpu.memory_space<vmem>>, vector<256x128xbf16>
    %cst = arith.constant dense<0.000000e+00> : vector<400x128xf32>
    %2 = tpu.matmul %0, %1, %cst {dimension_numbers = #tpu.dot_dimension_numbers<[1], [0], [0], [1], [0, 0, 1, 1], [], []>} : vector<400x256xbf16>, vector<256x128xbf16>, vector<400x128xf32> -> vector<400x128xf32>
    %c0_3 = arith.constant 0 : index
    %c0_4 = arith.constant 0 : index
    %3 = vector.load %arg3[%c0_3, %c0_4] : memref<1x128xf32, #tpu.memory_space<vmem>>, vector<1x128xf32>
    %4 = vector.broadcast %3 : vector<1x128xf32> to vector<400x128xf32>
    %5 = arith.addf %2, %4 : vector<400x128xf32>
    %cst_5 = arith.constant 0.000000e+00 : f32
    %6 = vector.broadcast %cst_5 : f32 to vector<400x128xf32>
    %7 = arith.maximumf %5, %6 : vector<400x128xf32>
    %8 = arith.truncf %7 : vector<400x128xf32> to vector<400x128xbf16>
    %c0_6 = arith.constant 0 : index
    %c0_7 = arith.constant 0 : index
    %9 = vector.load %arg4[%c0_6, %c0_7] : memref<400x128xbf16, #tpu.memory_space<vmem>>, vector<400x128xbf16>
    tpu.vector_store %arg4[%c0_6, %c0_7], %8 {strides = array<i32>} : memref<400x128xbf16, #tpu.memory_space<vmem>>, vector<400x128xbf16>,
    return
  }
  func.func @transform_0(%arg0: i32) -> (i32, i32) {
    %c0_i32 = arith.constant 0 : i32
    %c0_i32_0 = arith.constant 0 : i32
    return %arg0, %c0_i32 : i32, i32
  }
  func.func @transform_1(%arg0: i32) -> (i32, i32) {
    %c0_i32 = arith.constant 0 : i32
    %c0_i32_0 = arith.constant 0 : i32
    %c0_i32_1 = arith.constant 0 : i32
    return %c0_i32, %c0_i32_0 : i32, i32
  }
  func.func @transform_2(%arg0: i32) -> (i32, i32) {
    %c0_i32 = arith.constant 0 : i32
    %c0_i32_0 = arith.constant 0 : i32
    %c0_i32_1 = arith.constant 0 : i32
    return %c0_i32, %c0_i32_0 : i32, i32
  }
  func.func @transform_3(%arg0: i32) -> (i32, i32) {
    %c0_i32 = arith.constant 0 : i32
    %c0_i32_0 = arith.constant 0 : i32
    return %arg0, %c0_i32 : i32, i32
  }
}

module attributes {stable_mosaic.version = 11 : i64} {
  func.func @_linear_kernel(%arg0: i32, %arg1: memref<176x512xbf16, #tpu.memory_space<vmem>>, %arg2: memref<512x128xbf16, #tpu.memory_space<vmem>>, %arg3: memref<1x128xf32, #tpu.memory_space<vmem>>, %arg4: memref<176x128xbf16, #tpu.memory_space<vmem>>) attributes {dimension_semantics = [#tpu.dimension_semantics<parallel>], iteration_bounds = array<i64: 1>, scalar_prefetch = 0 : i64, scratch_operands = 0 : i64, tpu.core_type = #tpu.core_type<tc>, window_params = [{transform_indices = @transform_0, window_bounds = array<i64: 176, 512>}, {pipeline_mode = #tpu.pipeline_mode<synchronous>, transform_indices = @transform_1, window_bounds = array<i64: 512, 128>}, {pipeline_mode = #tpu.pipeline_mode<synchronous>, transform_indices = @transform_2, window_bounds = array<i64: 1, 128>}, {transform_indices = @transform_3, window_bounds = array<i64: 176, 128>}]} {
    %c0 = arith.constant 0 : index
    %c0_0 = arith.constant 0 : index
    %0 = vector.load %arg1[%c0, %c0_0] : memref<176x512xbf16, #tpu.memory_space<vmem>>, vector<176x512xbf16>
    %c0_1 = arith.constant 0 : index
    %c0_2 = arith.constant 0 : index
    %1 = vector.load %arg2[%c0_1, %c0_2] : memref<512x128xbf16, #tpu.memory_space<vmem>>, vector<512x128xbf16>
    %cst = arith.constant dense<0.000000e+00> : vector<176x128xf32>
    %2 = tpu.matmul %0, %1, %cst {dimension_numbers = #tpu.dot_dimension_numbers<[1], [0], [0], [1], [0, 0, 1, 1], [], []>} : vector<176x512xbf16>, vector<512x128xbf16>, vector<176x128xf32> -> vector<176x128xf32>
    %c0_3 = arith.constant 0 : index
    %c0_4 = arith.constant 0 : index
    %3 = vector.load %arg3[%c0_3, %c0_4] : memref<1x128xf32, #tpu.memory_space<vmem>>, vector<1x128xf32>
    %4 = vector.broadcast %3 : vector<1x128xf32> to vector<176x128xf32>
    %5 = arith.addf %2, %4 : vector<176x128xf32>
    %cst_5 = arith.constant 0.000000e+00 : f32
    %6 = vector.broadcast %cst_5 : f32 to vector<176x128xf32>
    %7 = arith.maximumf %5, %6 : vector<176x128xf32>
    %8 = arith.truncf %7 : vector<176x128xf32> to vector<176x128xbf16>
    %c0_6 = arith.constant 0 : index
    %c0_7 = arith.constant 0 : index
    %9 = vector.load %arg4[%c0_6, %c0_7] : memref<176x128xbf16, #tpu.memory_space<vmem>>, vector<176x128xbf16>
    tpu.vector_store %arg4[%c0_6, %c0_7], %8 {strides = array<i32>} : memref<176x128xbf16, #tpu.memory_space<vmem>>, vector<176x128xbf16>,
    return
  }
  func.func @transform_0(%arg0: i32) -> (i32, i32) {
    %c0_i32 = arith.constant 0 : i32
    %c0_i32_0 = arith.constant 0 : i32
    return %arg0, %c0_i32 : i32, i32
  }
  func.func @transform_1(%arg0: i32) -> (i32, i32) {
    %c0_i32 = arith.constant 0 : i32
    %c0_i32_0 = arith.constant 0 : i32
    %c0_i32_1 = arith.constant 0 : i32
    return %c0_i32, %c0_i32_0 : i32, i32
  }
  func.func @transform_2(%arg0: i32) -> (i32, i32) {
    %c0_i32 = arith.constant 0 : i32
    %c0_i32_0 = arith.constant 0 : i32
    %c0_i32_1 = arith.constant 0 : i32
    return %c0_i32, %c0_i32_0 : i32, i32
  }
  func.func @transform_3(%arg0: i32) -> (i32, i32) {
    %c0_i32 = arith.constant 0 : i32
    %c0_i32_0 = arith.constant 0 : i32
    return %arg0, %c0_i32 : i32, i32
  }
}

module attributes {stable_mosaic.version = 11 : i64} {
  func.func @_linear_kernel(%arg0: i32, %arg1: memref<112x640xbf16, #tpu.memory_space<vmem>>, %arg2: memref<640x128xbf16, #tpu.memory_space<vmem>>, %arg3: memref<1x128xf32, #tpu.memory_space<vmem>>, %arg4: memref<112x128xbf16, #tpu.memory_space<vmem>>) attributes {dimension_semantics = [#tpu.dimension_semantics<parallel>], iteration_bounds = array<i64: 1>, scalar_prefetch = 0 : i64, scratch_operands = 0 : i64, tpu.core_type = #tpu.core_type<tc>, window_params = [{transform_indices = @transform_0, window_bounds = array<i64: 112, 640>}, {pipeline_mode = #tpu.pipeline_mode<synchronous>, transform_indices = @transform_1, window_bounds = array<i64: 640, 128>}, {pipeline_mode = #tpu.pipeline_mode<synchronous>, transform_indices = @transform_2, window_bounds = array<i64: 1, 128>}, {transform_indices = @transform_3, window_bounds = array<i64: 112, 128>}]} {
    %c0 = arith.constant 0 : index
    %c0_0 = arith.constant 0 : index
    %0 = vector.load %arg1[%c0, %c0_0] : memref<112x640xbf16, #tpu.memory_space<vmem>>, vector<112x640xbf16>
    %c0_1 = arith.constant 0 : index
    %c0_2 = arith.constant 0 : index
    %1 = vector.load %arg2[%c0_1, %c0_2] : memref<640x128xbf16, #tpu.memory_space<vmem>>, vector<640x128xbf16>
    %cst = arith.constant dense<0.000000e+00> : vector<112x128xf32>
    %2 = tpu.matmul %0, %1, %cst {dimension_numbers = #tpu.dot_dimension_numbers<[1], [0], [0], [1], [0, 0, 1, 1], [], []>} : vector<112x640xbf16>, vector<640x128xbf16>, vector<112x128xf32> -> vector<112x128xf32>
    %c0_3 = arith.constant 0 : index
    %c0_4 = arith.constant 0 : index
    %3 = vector.load %arg3[%c0_3, %c0_4] : memref<1x128xf32, #tpu.memory_space<vmem>>, vector<1x128xf32>
    %4 = vector.broadcast %3 : vector<1x128xf32> to vector<112x128xf32>
    %5 = arith.addf %2, %4 : vector<112x128xf32>
    %cst_5 = arith.constant 0.000000e+00 : f32
    %6 = vector.broadcast %cst_5 : f32 to vector<112x128xf32>
    %7 = arith.maximumf %5, %6 : vector<112x128xf32>
    %8 = arith.truncf %7 : vector<112x128xf32> to vector<112x128xbf16>
    %c0_6 = arith.constant 0 : index
    %c0_7 = arith.constant 0 : index
    %9 = vector.load %arg4[%c0_6, %c0_7] : memref<112x128xbf16, #tpu.memory_space<vmem>>, vector<112x128xbf16>
    tpu.vector_store %arg4[%c0_6, %c0_7], %8 {strides = array<i32>} : memref<112x128xbf16, #tpu.memory_space<vmem>>, vector<112x128xbf16>,
    return
  }
  func.func @transform_0(%arg0: i32) -> (i32, i32) {
    %c0_i32 = arith.constant 0 : i32
    %c0_i32_0 = arith.constant 0 : i32
    return %arg0, %c0_i32 : i32, i32
  }
  func.func @transform_1(%arg0: i32) -> (i32, i32) {
    %c0_i32 = arith.constant 0 : i32
    %c0_i32_0 = arith.constant 0 : i32
    %c0_i32_1 = arith.constant 0 : i32
    return %c0_i32, %c0_i32_0 : i32, i32
  }
  func.func @transform_2(%arg0: i32) -> (i32, i32) {
    %c0_i32 = arith.constant 0 : i32
    %c0_i32_0 = arith.constant 0 : i32
    %c0_i32_1 = arith.constant 0 : i32
    return %c0_i32, %c0_i32_0 : i32, i32
  }
  func.func @transform_3(%arg0: i32) -> (i32, i32) {
    %c0_i32 = arith.constant 0 : i32
    %c0_i32_0 = arith.constant 0 : i32
    return %arg0, %c0_i32 : i32, i32
  }
}

module attributes {stable_mosaic.version = 11 : i64} {
  func.func @_head_kernel(%arg0: i32, %arg1: memref<16x3200xbf16, #tpu.memory_space<vmem>>, %arg2: memref<3200x512xbf16, #tpu.memory_space<vmem>>, %arg3: memref<1x512xf32, #tpu.memory_space<vmem>>, %arg4: memref<512x128xbf16, #tpu.memory_space<vmem>>, %arg5: memref<1x128xf32, #tpu.memory_space<vmem>>, %arg6: memref<16x128xf32, #tpu.memory_space<vmem>>) attributes {dimension_semantics = [#tpu.dimension_semantics<parallel>], iteration_bounds = array<i64: 1>, scalar_prefetch = 0 : i64, scratch_operands = 0 : i64, tpu.core_type = #tpu.core_type<tc>, window_params = [{transform_indices = @transform_0, window_bounds = array<i64: 16, 3200>}, {pipeline_mode = #tpu.pipeline_mode<synchronous>, transform_indices = @transform_1, window_bounds = array<i64: 3200, 512>}, {pipeline_mode = #tpu.pipeline_mode<synchronous>, transform_indices = @transform_2, window_bounds = array<i64: 1, 512>}, {pipeline_mode = #tpu.pipeline_mode<synchronous>, transform_indices = @transform_3, window_bounds = array<i64: 512, 128>}, {pipeline_mode = #tpu.pipeline_mode<synchronous>, transform_indices = @transform_4, window_bounds = array<i64: 1, 128>}, {transform_indices = @transform_5, window_bounds = array<i64: 16, 128>}]} {
    %c0 = arith.constant 0 : index
    %c0_0 = arith.constant 0 : index
    %0 = vector.load %arg1[%c0, %c0_0] : memref<16x3200xbf16, #tpu.memory_space<vmem>>, vector<16x3200xbf16>
    %c0_1 = arith.constant 0 : index
    %c0_2 = arith.constant 0 : index
    %1 = vector.load %arg2[%c0_1, %c0_2] : memref<3200x512xbf16, #tpu.memory_space<vmem>>, vector<3200x512xbf16>
    %cst = arith.constant dense<0.000000e+00> : vector<16x512xf32>
    %2 = tpu.matmul %0, %1, %cst {dimension_numbers = #tpu.dot_dimension_numbers<[1], [0], [0], [1], [0, 0, 1, 1], [], []>} : vector<16x3200xbf16>, vector<3200x512xbf16>, vector<16x512xf32> -> vector<16x512xf32>
    %c0_3 = arith.constant 0 : index
    %c0_4 = arith.constant 0 : index
    %3 = vector.load %arg3[%c0_3, %c0_4] : memref<1x512xf32, #tpu.memory_space<vmem>>, vector<1x512xf32>
    %4 = vector.broadcast %3 : vector<1x512xf32> to vector<16x512xf32>
    %5 = arith.addf %2, %4 : vector<16x512xf32>
    %cst_5 = arith.constant 0.000000e+00 : f32
    %6 = vector.broadcast %cst_5 : f32 to vector<16x512xf32>
    %7 = arith.maximumf %5, %6 : vector<16x512xf32>
    %8 = arith.truncf %7 : vector<16x512xf32> to vector<16x512xbf16>
    %c0_6 = arith.constant 0 : index
    %c0_7 = arith.constant 0 : index
    %9 = vector.load %arg4[%c0_6, %c0_7] : memref<512x128xbf16, #tpu.memory_space<vmem>>, vector<512x128xbf16>
    %cst_8 = arith.constant dense<0.000000e+00> : vector<16x128xf32>
    %10 = tpu.matmul %8, %9, %cst_8 {dimension_numbers = #tpu.dot_dimension_numbers<[1], [0], [0], [1], [0, 0, 1, 1], [], []>} : vector<16x512xbf16>, vector<512x128xbf16>, vector<16x128xf32> -> vector<16x128xf32>
    %c0_9 = arith.constant 0 : index
    %c0_10 = arith.constant 0 : index
    %11 = vector.load %arg5[%c0_9, %c0_10] : memref<1x128xf32, #tpu.memory_space<vmem>>, vector<1x128xf32>
    %12 = vector.broadcast %11 : vector<1x128xf32> to vector<16x128xf32>
    %13 = arith.addf %10, %12 : vector<16x128xf32>
    %c0_11 = arith.constant 0 : index
    %c0_12 = arith.constant 0 : index
    %14 = vector.load %arg6[%c0_11, %c0_12] : memref<16x128xf32, #tpu.memory_space<vmem>>, vector<16x128xf32>
    tpu.vector_store %arg6[%c0_11, %c0_12], %13 {strides = array<i32>} : memref<16x128xf32, #tpu.memory_space<vmem>>, vector<16x128xf32>,
    return
  }
  func.func @transform_0(%arg0: i32) -> (i32, i32) {
    %c0_i32 = arith.constant 0 : i32
    %c0_i32_0 = arith.constant 0 : i32
    return %arg0, %c0_i32 : i32, i32
  }
  func.func @transform_1(%arg0: i32) -> (i32, i32) {
    %c0_i32 = arith.constant 0 : i32
    %c0_i32_0 = arith.constant 0 : i32
    %c0_i32_1 = arith.constant 0 : i32
    return %c0_i32, %c0_i32_0 : i32, i32
  }
  func.func @transform_2(%arg0: i32) -> (i32, i32) {
    %c0_i32 = arith.constant 0 : i32
    %c0_i32_0 = arith.constant 0 : i32
    %c0_i32_1 = arith.constant 0 : i32
    return %c0_i32, %c0_i32_0 : i32, i32
  }
  func.func @transform_3(%arg0: i32) -> (i32, i32) {
    %c0_i32 = arith.constant 0 : i32
    %c0_i32_0 = arith.constant 0 : i32
    %c0_i32_1 = arith.constant 0 : i32
    return %c0_i32, %c0_i32_0 : i32, i32
  }
  func.func @transform_4(%arg0: i32) -> (i32, i32) {
    %c0_i32 = arith.constant 0 : i32
    %c0_i32_0 = arith.constant 0 : i32
    %c0_i32_1 = arith.constant 0 : i32
    return %c0_i32, %c0_i32_0 : i32, i32
  }
  func.func @transform_5(%arg0: i32) -> (i32, i32) {
    %c0_i32 = arith.constant 0 : i32
    %c0_i32_0 = arith.constant 0 : i32
    return %arg0, %c0_i32 : i32, i32
  }
}

</mosaic_0001>

<llo_original>
// kernel: cnn_forward.4
$region0: #{cnn_forward.4}
  #allocation0 [shape = 'u32[]', space=smem, size = 0x4, offset = 0x4, fixed_abs, tag = 'smem constant byte address 0x4 - core index']
  #allocation1 [shape = 'u32[72,128]{1,0:T(1,128)}', space=vmem, size = 0x9000, scoped, tag = 'internal scratch']
  %s0 = inlined_call_operand.vmem [shape: bf16[800,256], index: 0, kind: input, shape index: {}]
  %s1 = inlined_call_operand.vmem [shape: bf16[256,128], index: 1, kind: input, shape index: {}]
  %s2 = inlined_call_operand.vmem [shape: f32[1,128], index: 2, kind: input, shape index: {}]
  %s3 = inlined_call_operand.vmem [shape: bf16[800,128], index: 3, kind: output, shape index: {}]
  %s4 = sld [smem:[#allocation0]]
  $region45: #{cnn_forward.4} parent=0
    _
  %s6 = ssub.s32 1, %s4
  %s7 = scalar_select 0, %s6, %s4
  loop: start=0, step=1, limit=4
  $region2: #{cnn_forward.4} parent=0 // loop_pre_header
    _
  $region3: #{cnn_forward.4} parent=0 // loop_header
    %s9 = sphi 0, %s13
    %p10 = scmp.ge.s32.totalorder %s9, 4
    %s19 = sphi 0, %s21
    %s22 = sphi 0, %s19
    %s23 = sphi 0, %s22
    %s39 = sphi 0, %s23
    %s43 = sphi 0, %s43
    %s45 = sphi 0, %s43
    %s46 = sphi 0, %s45
    %s60 = sphi 0, %s46
    %s64 = sphi 0, %s64
    %s66 = sphi 0, %s64
    %s67 = sphi 0, %s66
    %s81 = sphi 0, %s67
    %s87 = sphi 0, %s89
    %s90 = sphi 0, %s87
    %s91 = sphi 0, %s90
    %s107 = sphi 0, %s91
  $region4: #{cnn_forward.4} parent=0 // loop_header_branch
    %12 = sbr.rel (%p10) target = $region8
  $region5: #{cnn_forward.4} parent=0 // loop_body
    %s14 = ssub.s32 %s9, 1
    %s15 = ssub.s32 %s9, 2
    %s16 = sadd.s32 %s9, 1
    %s17 = ssub.s32 %s9, %s16
    %p18 = scmp.eq.s32.totalorder %s17, 0
    %s20 = sadd.s32 %s19, 1
    %s21 = scalar_select %p18, %s19, %s20
    %p24 = pneg %p18
    %p25 = scmp.eq.s32.totalorder %s9, 1
    %p26 = por %p24, %p25
    %p27 = scmp.ne.s32.totalorder %s19, %s22
    %p28 = scmp.eq.s32.totalorder %s9, 0
    %p29 = por %p27, %p28
    %p30 = scmp.ne.s32.totalorder %s19, %s22
    %p31 = scmp.eq.s32.totalorder %s14, 1
    %p32 = por %p30, %p31
    %p33 = scmp.ne.s32.totalorder %s22, %s23
    %p34 = scmp.eq.s32.totalorder %s14, 0
    %p35 = por %p33, %p34
    %p36 = scmp.ne.s32.totalorder %s22, %s23
    %p37 = scmp.eq.s32.totalorder %s15, 1
    %p38 = por %p36, %p37
    %p40 = scmp.ne.s32.totalorder %s23, %s39
    %p41 = scmp.eq.s32.totalorder %s15, 0
    %p42 = por %p40, %p41
    %s44 = sadd.s32 %s43, 1
    %p47 = scmp.eq.s32.totalorder %s9, 1
    %p48 = scmp.ne.s32.totalorder %s43, %s45
    %p49 = scmp.eq.s32.totalorder %s9, 0
    %p50 = por %p48, %p49
    %p51 = scmp.ne.s32.totalorder %s43, %s45
    %p52 = scmp.eq.s32.totalorder %s14, 1
    %p53 = por %p51, %p52
    %p54 = scmp.ne.s32.totalorder %s45, %s46
    %p55 = scmp.eq.s32.totalorder %s14, 0
    %p56 = por %p54, %p55
    %p57 = scmp.ne.s32.totalorder %s45, %s46
    %p58 = scmp.eq.s32.totalorder %s15, 1
    %p59 = por %p57, %p58
    %p61 = scmp.ne.s32.totalorder %s46, %s60
    %p62 = scmp.eq.s32.totalorder %s15, 0
    %p63 = por %p61, %p62
    %s65 = sadd.s32 %s64, 1
    %p68 = scmp.eq.s32.totalorder %s9, 1
    %p69 = scmp.ne.s32.totalorder %s64, %s66
    %p70 = scmp.eq.s32.totalorder %s9, 0
    %p71 = por %p69, %p70
    %p72 = scmp.ne.s32.totalorder %s64, %s66
    %p73 = scmp.eq.s32.totalorder %s14, 1
    %p74 = por %p72, %p73
    %p75 = scmp.ne.s32.totalorder %s66, %s67
    %p76 = scmp.eq.s32.totalorder %s14, 0
    %p77 = por %p75, %p76
    %p78 = scmp.ne.s32.totalorder %s66, %s67
    %p79 = scmp.eq.s32.totalorder %s15, 1
    %p80 = por %p78, %p79
    %p82 = scmp.ne.s32.totalorder %s67, %s81
    %p83 = scmp.eq.s32.totalorder %s15, 0
    %p84 = por %p82, %p83
    %s85 = ssub.s32 %s9, %s16
    %p86 = scmp.eq.s32.totalorder %s85, 0
    %s88 = sadd.s32 %s87, 1
    %s89 = scalar_select %p86, %s87, %s88
    %p92 = pneg %p86
    %p93 = scmp.eq.s32.totalorder %s9, 1
    %p94 = por %p92, %p93
    %p95 = scmp.ne.s32.totalorder %s87, %s90
    %p96 = scmp.eq.s32.totalorder %s9, 0
    %p97 = por %p95, %p96
    %p98 = scmp.ne.s32.totalorder %s87, %s90
    %p99 = scmp.eq.s32.totalorder %s14, 1
    %p100 = por %p98, %p99
    %p101 = scmp.ne.s32.totalorder %s90, %s91
    %p102 = scmp.eq.s32.totalorder %s14, 0
    %p103 = por %p101, %p102
    %p104 = scmp.ne.s32.totalorder %s90, %s91
    %p105 = scmp.eq.s32.totalorder %s15, 1
    %p106 = por %p104, %p105
    %p108 = scmp.ne.s32.totalorder %s91, %s107
    %p109 = scmp.eq.s32.totalorder %s15, 0
    %p110 = por %p108, %p109
    %p111 = scmp.le.s32.totalorder 1, %s9
    %p112 = scmp.lt.s32.totalorder %s9, 3
    %p113 = pnand %p111, %p112
    %p114 = pneg %p113
    // Predicated region
    $region9: #{cnn_forward.4} parent=5 // pred_check
      _
    $region10: #{cnn_forward.4} parent=5 // pred_check_branch
      %116 = sbr.rel (%p113) target = $region12
    $region11: #{cnn_forward.4} parent=5 // pred_region
      %s117 = ssub.s32 %s9, 1
      // Predicated region
      $region13: #{cnn_forward.4} parent=11 // pred_check
        %p118 = pneg %p56
      $region14: #{cnn_forward.4} parent=11 // pred_check_branch
        %120 = sbr.rel (%p118) target = $region16
      $region15: #{cnn_forward.4} parent=11 // pred_region
        _
      $region16: #{cnn_forward.4} parent=11 // pred_fallthru
        _
      // Predicated region
      $region17: #{cnn_forward.4} parent=11 // pred_check
        %p121 = pneg %p77
      $region18: #{cnn_forward.4} parent=11 // pred_check_branch
        %123 = sbr.rel (%p121) target = $region20
      $region19: #{cnn_forward.4} parent=11 // pred_region
        _
      $region20: #{cnn_forward.4} parent=11 // pred_fallthru
        _
    $region12: #{cnn_forward.4} parent=5 // pred_fallthru
      _
    %p124 = scmp.lt.s32.totalorder %s9, 2
    // Predicated region
    $region21: #{cnn_forward.4} parent=5 // pred_check
      %p125 = pneg %p124
    $region22: #{cnn_forward.4} parent=5 // pred_check_branch
      %127 = sbr.rel (%p125) target = $region24
    $region23: #{cnn_forward.4} parent=5 // pred_region
      // Predicated region
      $region25: #{cnn_forward.4} parent=23 // pred_check
        %p128 = pneg %p29
      $region26: #{cnn_forward.4} parent=23 // pred_check_branch
        %130 = sbr.rel (%p128) target = $region28
      $region27: #{cnn_forward.4} parent=23 // pred_region
        %s131 = smul.u32 50, %s9
        %p132 = scmp.lt.s32.totalorder %s131, 99
        %s133 = scalar_select %p132, %s131, 99
        %s134 = smul.addr %s133, 2
        %s135 = smul.addr %s134, 4
        %s136 = scalar_lea.vmem %s0, %s135
        %s137 = smul.u32 50, %s9
      $region28: #{cnn_forward.4} parent=23 // pred_fallthru
        _
    $region24: #{cnn_forward.4} parent=5 // pred_fallthru
      _
    %p138 = scmp.le.s32.totalorder 1, %s9
    %p139 = scmp.lt.s32.totalorder %s9, 3
    %p140 = pnand %p138, %p139
    %p141 = pneg %p140
    // Predicated region
    $region29: #{cnn_forward.4} parent=5 // pred_check
      _
    $region30: #{cnn_forward.4} parent=5 // pred_check_branch
      %143 = sbr.rel (%p140) target = $region32
    $region31: #{cnn_forward.4} parent=5 // pred_region
      %s144 = ssub.s32 %s9, 1
      %s145 = smul.u32 50, %s14
      %p146 = scmp.lt.s32.totalorder %s145, 99
      %s147 = scalar_select %p146, %s145, 99
      %s148 = smul.addr %s147, 2
      %s149 = smul.addr %s148, 4
      %s150 = scalar_lea.vmem %s0, %s149
      %p151 = pneg %p35
      %p152 = pneg %p32
      %p153 = pneg %p56
      %p154 = pneg %p53
      %p155 = pneg %p77
      %p156 = pneg %p74
      %p157 = pneg %p103
      %p158 = pneg %p100
      %s159 = smul.u32 50, %s14
      %p160 = scmp.lt.s32.totalorder %s159, 99
      %s161 = scalar_select %p160, %s159, 99
      %s162 = smul.addr %s161, 4
      %s163 = scalar_lea.vmem %s3, %s162
      %s164 = smul.u32 50, %s14
      %p165 = scmp.lt.s32.totalorder %s164, 99
      %s166 = scalar_select %p165, %s164, 99
      %s167 = smul.addr %s166, 2
      %s168 = smul.addr %s167, 4
      %s169 = scalar_lea.vmem %s0, %s168
      %s170 = smul.u32 50, %s14
      %s171 = smul.u32 50, %s14
      %p172 = scmp.lt.s32.totalorder %s171, 99
      %s173 = scalar_select %p172, %s171, 99
      %s174 = smul.addr %s173, 4
      %s175 = scalar_lea.vmem %s3, %s174
      %s176 = smul.u32 50, %s14
      %v177 = vld [vmem:[%s169] sm:$0xff]
      %v178 = vld [vmem:[%s169 + $0x8] sm:$0xff]
      %v179 = vld [vmem:[%s169 + $0x10] sm:$0xff]
      %v180 = vld [vmem:[%s169 + $0x18] sm:$0xff]
      %v181 = vld [vmem:[%s169 + $0x20] sm:$0xff]
      %v182 = vld [vmem:[%s169 + $0x28] sm:$0xff]
      %v183 = vld [vmem:[%s169 + $0x30] sm:$0xff]
      %v184 = vld [vmem:[%s169 + $0x38] sm:$0xff]
      %v185 = vld [vmem:[%s169 + $0x40] sm:$0xff]
      %v186 = vld [vmem:[%s169 + $0x48] sm:$0xff]
      %v187 = vld [vmem:[%s169 + $0x50] sm:$0xff]
      %v188 = vld [vmem:[%s169 + $0x58] sm:$0xff]
      %v189 = vld [vmem:[%s169 + $0x60] sm:$0xff]
      %v190 = vld [vmem:[%s169 + $0x68] sm:$0xff]
      %v191 = vld [vmem:[%s169 + $0x70] sm:$0xff]
      %v192 = vld [vmem:[%s169 + $0x78] sm:$0xff]
      %v193 = vld [vmem:[%s169 + $0x80] sm:$0xff]
      %v194 = vld [vmem:[%s169 + $0x88] sm:$0xff]
      %v195 = vld [vmem:[%s169 + $0x90] sm:$0xff]
      %v196 = vld [vmem:[%s169 + $0x98] sm:$0xff]
      %v197 = vld [vmem:[%s169 + $0xa0] sm:$0xff]
      %v198 = vld [vmem:[%s169 + $0xa8] sm:$0xff]
      %v199 = vld [vmem:[%s169 + $0xb0] sm:$0xff]
      %v200 = vld [vmem:[%s169 + $0xb8] sm:$0xff]
      %v201 = vld [vmem:[%s169 + $0xc0] sm:$0xff]
      %v202 = vld [vmem:[%s169 + $0xc8] sm:$0xff]
      %v203 = vld [vmem:[%s169 + $0xd0] sm:$0xff]
      %v204 = vld [vmem:[%s169 + $0xd8] sm:$0xff]
      %v205 = vld [vmem:[%s169 + $0xe0] sm:$0xff]
      %v206 = vld [vmem:[%s169 + $0xe8] sm:$0xff]
      %v207 = vld [vmem:[%s169 + $0xf0] sm:$0xff]
      %v208 = vld [vmem:[%s169 + $0xf8] sm:$0xff]
      %v209 = vld [vmem:[%s169 + $0x100] sm:$0xff]
      %v210 = vld [vmem:[%s169 + $0x108] sm:$0xff]
      %v211 = vld [vmem:[%s169 + $0x110] sm:$0xff]
      %v212 = vld [vmem:[%s169 + $0x118] sm:$0xff]
      %v213 = vld [vmem:[%s169 + $0x120] sm:$0xff]
      %v214 = vld [vmem:[%s169 + $0x128] sm:$0xff]
      %v215 = vld [vmem:[%s169 + $0x130] sm:$0xff]
      %v216 = vld [vmem:[%s169 + $0x138] sm:$0xff]
      %v217 = vld [vmem:[%s169 + $0x140] sm:$0xff]
      %v218 = vld [vmem:[%s169 + $0x148] sm:$0xff]
      %v219 = vld [vmem:[%s169 + $0x150] sm:$0xff]
      %v220 = vld [vmem:[%s169 + $0x158] sm:$0xff]
      %v221 = vld [vmem:[%s169 + $0x160] sm:$0xff]
      %v222 = vld [vmem:[%s169 + $0x168] sm:$0xff]
      %v223 = vld [vmem:[%s169 + $0x170] sm:$0xff]
      %v224 = vld [vmem:[%s169 + $0x178] sm:$0xff]
      %v225 = vld [vmem:[%s169 + $0x180] sm:$0xff]
      %v226 = vld [vmem:[%s169 + $0x188] sm:$0xff]
      %v227 = vld [vmem:[%s1] sm:$0xf]
      %v228 = vld [vmem:[%s1 + $0x4] sm:$0xf]
      %v229 = vld [vmem:[%s1 + $0x8] sm:$0xf]
      %v230 = vld [vmem:[%s1 + $0xc] sm:$0xf]
      %v231 = vld [vmem:[%s1 + $0x10] sm:$0xf]
      %v232 = vld [vmem:[%s1 + $0x14] sm:$0xf]
      %v233 = vld [vmem:[%s1 + $0x18] sm:$0xf]
      %v234 = vld [vmem:[%s1 + $0x1c] sm:$0xf]
      %v235 = vld [vmem:[%s1 + $0x20] sm:$0xf]
      %v236 = vld [vmem:[%s1 + $0x24] sm:$0xf]
      %v237 = vld [vmem:[%s1 + $0x28] sm:$0xf]
      %v238 = vld [vmem:[%s1 + $0x2c] sm:$0xf]
      %v239 = vld [vmem:[%s1 + $0x30] sm:$0xf]
      %v240 = vld [vmem:[%s1 + $0x34] sm:$0xf]
      %v241 = vld [vmem:[%s1 + $0x38] sm:$0xf]
      %v242 = vld [vmem:[%s1 + $0x3c] sm:$0xf]
      %v243 = vld [vmem:[%s1 + $0x40] sm:$0xf]
      %v244 = vld [vmem:[%s1 + $0x44] sm:$0xf]
      %v245 = vld [vmem:[%s1 + $0x48] sm:$0xf]
      %v246 = vld [vmem:[%s1 + $0x4c] sm:$0xf]
      %v247 = vld [vmem:[%s1 + $0x50] sm:$0xf]
      %v248 = vld [vmem:[%s1 + $0x54] sm:$0xf]
      %v249 = vld [vmem:[%s1 + $0x58] sm:$0xf]
      %v250 = vld [vmem:[%s1 + $0x5c] sm:$0xf]
      %v251 = vld [vmem:[%s1 + $0x60] sm:$0xf]
      %v252 = vld [vmem:[%s1 + $0x64] sm:$0xf]
      %v253 = vld [vmem:[%s1 + $0x68] sm:$0xf]
      %v254 = vld [vmem:[%s1 + $0x6c] sm:$0xf]
      %v255 = vld [vmem:[%s1 + $0x70] sm:$0xf]
      %v256 = vld [vmem:[%s1 + $0x74] sm:$0xf]
      %v257 = vld [vmem:[%s1 + $0x78] sm:$0xf]
      %v258 = vld [vmem:[%s1 + $0x7c] sm:$0xf]
      %v259 = vld [vmem:[%s2] sm:$0x1]
      %v261 = vperm.slane %v259, 0
      %v313 = vunpack.c.l.b16 %v177
      %v314 = vunpack.c.h.b16 %v177
      %v315 = vunpack.c.l.b16 %v178
      %v316 = vunpack.c.h.b16 %v178
      %v317 = vunpack.c.l.b16 %v179
      %v318 = vunpack.c.h.b16 %v179
      %v319 = vunpack.c.l.b16 %v180
      %v320 = vunpack.c.h.b16 %v180
      %v321 = vunpack.c.l.b16 %v181
      %v322 = vunpack.c.h.b16 %v181
      %v323 = vunpack.c.l.b16 %v182
      %v324 = vunpack.c.h.b16 %v182
      %v325 = vunpack.c.l.b16 %v183
      %v326 = vunpack.c.h.b16 %v183
      %v327 = vunpack.c.l.b16 %v184
      %v328 = vunpack.c.h.b16 %v184
      %v329 = vunpack.c.l.b16 %v185
      %v330 = vunpack.c.h.b16 %v185
      %v331 = vunpack.c.l.b16 %v186
      %v332 = vunpack.c.h.b16 %v186
      %v333 = vunpack.c.l.b16 %v187
      %v334 = vunpack.c.h.b16 %v187
      %v335 = vunpack.c.l.b16 %v188
      %v336 = vunpack.c.h.b16 %v188
      %v337 = vunpack.c.l.b16 %v189
      %v338 = vunpack.c.h.b16 %v189
      %v339 = vunpack.c.l.b16 %v190
      %v340 = vunpack.c.h.b16 %v190
      %v341 = vunpack.c.l.b16 %v191
      %v342 = vunpack.c.h.b16 %v191
      %v343 = vunpack.c.l.b16 %v192
      %v344 = vunpack.c.h.b16 %v192
      %v345 = vunpack.c.l.b16 %v193
      %v346 = vunpack.c.h.b16 %v193
      %v347 = vunpack.c.l.b16 %v194
      %v348 = vunpack.c.h.b16 %v194
      %v349 = vunpack.c.l.b16 %v195
      %v350 = vunpack.c.h.b16 %v195
      %v351 = vunpack.c.l.b16 %v196
      %v352 = vunpack.c.h.b16 %v196
      %v353 = vunpack.c.l.b16 %v197
      %v354 = vunpack.c.h.b16 %v197
      %v355 = vunpack.c.l.b16 %v198
      %v356 = vunpack.c.h.b16 %v198
      %v357 = vunpack.c.l.b16 %v199
      %v358 = vunpack.c.h.b16 %v199
      %v359 = vunpack.c.l.b16 %v200
      %v360 = vunpack.c.h.b16 %v200
      %v361 = vunpack.c.l.b16 %v201
      %v362 = vunpack.c.h.b16 %v201
      %v363 = vunpack.c.l.b16 %v202
      %v364 = vunpack.c.h.b16 %v202
      %v365 = vunpack.c.l.b16 %v203
      %v366 = vunpack.c.h.b16 %v203
      %v367 = vunpack.c.l.b16 %v204
      %v368 = vunpack.c.h.b16 %v204
      %v369 = vunpack.c.l.b16 %v205
      %v370 = vunpack.c.h.b16 %v205
      %v371 = vunpack.c.l.b16 %v206
      %v372 = vunpack.c.h.b16 %v206
      %v373 = vunpack.c.l.b16 %v207
      %v374 = vunpack.c.h.b16 %v207
      %v375 = vunpack.c.l.b16 %v208
      %v376 = vunpack.c.h.b16 %v208
      %v377 = vunpack.c.l.b16 %v209
      %v378 = vunpack.c.h.b16 %v209
      %v379 = vunpack.c.l.b16 %v210
      %v380 = vunpack.c.h.b16 %v210
      %v381 = vunpack.c.l.b16 %v211
      %v382 = vunpack.c.h.b16 %v211
      %v383 = vunpack.c.l.b16 %v212
      %v384 = vunpack.c.h.b16 %v212
      %v385 = vunpack.c.l.b16 %v213
      %v386 = vunpack.c.h.b16 %v213
      %v387 = vunpack.c.l.b16 %v214
      %v388 = vunpack.c.h.b16 %v214
      %v389 = vunpack.c.l.b16 %v215
      %v390 = vunpack.c.h.b16 %v215
      %v391 = vunpack.c.l.b16 %v216
      %v392 = vunpack.c.h.b16 %v216
      %v393 = vunpack.c.l.b16 %v217
      %v394 = vunpack.c.h.b16 %v217
      %v395 = vunpack.c.l.b16 %v218
      %v396 = vunpack.c.h.b16 %v218
      %v397 = vunpack.c.l.b16 %v219
      %v398 = vunpack.c.h.b16 %v219
      %v399 = vunpack.c.l.b16 %v220
      %v400 = vunpack.c.h.b16 %v220
      %v401 = vunpack.c.l.b16 %v221
      %v402 = vunpack.c.h.b16 %v221
      %v403 = vunpack.c.l.b16 %v222
      %v404 = vunpack.c.h.b16 %v222
      %v405 = vunpack.c.l.b16 %v223
      %v406 = vunpack.c.h.b16 %v223
      %v407 = vunpack.c.l.b16 %v224
      %v408 = vunpack.c.h.b16 %v224
      %v409 = vunpack.c.l.b16 %v225
      %v410 = vunpack.c.h.b16 %v225
      %v411 = vunpack.c.l.b16 %v226
      %v412 = vunpack.c.h.b16 %v226
      %v413 = vpack.c.b16 %v315, %v313
      %v414 = vpack.c.b16 %v316, %v314
      %v415 = vpack.c.b16 %v319, %v317
      %v416 = vpack.c.b16 %v320, %v318
      %v417 = vpack.c.b16 %v323, %v321
      %v418 = vpack.c.b16 %v324, %v322
      %v419 = vpack.c.b16 %v327, %v325
      %v420 = vpack.c.b16 %v328, %v326
      %v421 = vpack.c.b16 %v331, %v329
      %v422 = vpack.c.b16 %v332, %v330
      %v423 = vpack.c.b16 %v335, %v333
      %v424 = vpack.c.b16 %v336, %v334
      %v425 = vpack.c.b16 %v339, %v337
      %v426 = vpack.c.b16 %v340, %v338
      %v427 = vpack.c.b16 %v343, %v341
      %v428 = vpack.c.b16 %v344, %v342
      %v429 = vpack.c.b16 %v347, %v345
      %v430 = vpack.c.b16 %v348, %v346
      %v431 = vpack.c.b16 %v351, %v349
      %v432 = vpack.c.b16 %v352, %v350
      %v433 = vpack.c.b16 %v355, %v353
      %v434 = vpack.c.b16 %v356, %v354
      %v435 = vpack.c.b16 %v359, %v357
      %v436 = vpack.c.b16 %v360, %v358
      %v437 = vpack.c.b16 %v363, %v361
      %v438 = vpack.c.b16 %v364, %v362
      %v439 = vpack.c.b16 %v367, %v365
      %v440 = vpack.c.b16 %v368, %v366
      %v441 = vpack.c.b16 %v371, %v369
      %v442 = vpack.c.b16 %v372, %v370
      %v443 = vpack.c.b16 %v375, %v373
      %v444 = vpack.c.b16 %v376, %v374
      %v445 = vpack.c.b16 %v379, %v377
      %v446 = vpack.c.b16 %v380, %v378
      %v447 = vpack.c.b16 %v383, %v381
      %v448 = vpack.c.b16 %v384, %v382
      %v449 = vpack.c.b16 %v387, %v385
      %v450 = vpack.c.b16 %v388, %v386
      %v451 = vpack.c.b16 %v391, %v389
      %v452 = vpack.c.b16 %v392, %v390
      %v453 = vpack.c.b16 %v395, %v393
      %v454 = vpack.c.b16 %v396, %v394
      %v455 = vpack.c.b16 %v399, %v397
      %v456 = vpack.c.b16 %v400, %v398
      %v457 = vpack.c.b16 %v403, %v401
      %v458 = vpack.c.b16 %v404, %v402
      %v459 = vpack.c.b16 %v407, %v405
      %v460 = vpack.c.b16 %v408, %v406
      %v461 = vpack.c.b16 %v411, %v409
      %v462 = vpack.c.b16 %v412, %v410
      %v545 = vunpack.c.l.b16 %v227
      %v546 = vunpack.c.l.b16 %v228
      %v547 = vunpack.c.l.b16 %v229
      %v548 = vunpack.c.l.b16 %v230
      %v549 = vunpack.c.l.b16 %v231
      %v550 = vunpack.c.l.b16 %v232
      %v551 = vunpack.c.l.b16 %v233
      %v552 = vunpack.c.l.b16 %v234
      %v553 = vunpack.c.l.b16 %v235
      %v554 = vunpack.c.l.b16 %v236
      %v555 = vunpack.c.l.b16 %v237
      %v556 = vunpack.c.l.b16 %v238
      %v557 = vunpack.c.l.b16 %v239
      %v558 = vunpack.c.l.b16 %v240
      %v559 = vunpack.c.l.b16 %v241
      %v560 = vunpack.c.l.b16 %v242
      %v561 = vunpack.c.l.b16 %v243
      %v562 = vunpack.c.l.b16 %v244
      %v563 = vunpack.c.l.b16 %v245
      %v564 = vunpack.c.l.b16 %v246
      %v565 = vunpack.c.l.b16 %v247
      %v566 = vunpack.c.l.b16 %v248
      %v567 = vunpack.c.l.b16 %v249
      %v568 = vunpack.c.l.b16 %v250
      %v569 = vunpack.c.l.b16 %v251
      %v570 = vunpack.c.l.b16 %v252
      %v571 = vunpack.c.l.b16 %v253
      %v572 = vunpack.c.l.b16 %v254
      %v573 = vunpack.c.l.b16 %v255
      %v574 = vunpack.c.l.b16 %v256
      %v575 = vunpack.c.l.b16 %v257
      %v576 = vunpack.c.l.b16 %v258
      %v577 = vpack.c.b16 %v546, %v545
      %v578 = vpack.c.b16 %v548, %v547
      %v579 = vpack.c.b16 %v550, %v549
      %v580 = vpack.c.b16 %v552, %v551
      %v581 = vpack.c.b16 %v554, %v553
      %v582 = vpack.c.b16 %v556, %v555
      %v583 = vpack.c.b16 %v558, %v557
      %v584 = vpack.c.b16 %v560, %v559
      %v585 = vpack.c.b16 %v562, %v561
      %v586 = vpack.c.b16 %v564, %v563
      %v587 = vpack.c.b16 %v566, %v565
      %v588 = vpack.c.b16 %v568, %v567
      %v589 = vpack.c.b16 %v570, %v569
      %v590 = vpack.c.b16 %v572, %v571
      %v591 = vpack.c.b16 %v574, %v573
      %v592 = vpack.c.b16 %v576, %v575
      %609 = vmatpush.bf16.msra.mxu0 %v584
      %610 = vmatpush.bf16.msra.mxu0 %v583
      %611 = vmatpush.bf16.msra.mxu0 %v582
      %612 = vmatpush.bf16.msra.mxu0 %v581
      %613 = vmatpush.bf16.msra.mxu0 %v580
      %614 = vmatpush.bf16.msra.mxu0 %v579
      %615 = vmatpush.bf16.msra.mxu0 %v578
      %616 = vmatpush.bf16.msra.mxu0 %v577
      %617 = vmatmul.bf16.gmra.mxu0 %v413
      %v618 = vpop.f32.mrf.mxu0
      %v619 = vadd.f32 %v261, %v618
      %v620 = vpop.f32.mrf.mxu0
      %v621 = vadd.f32 %v261, %v620
      %622 = vmatmul.bf16.gmra.mxu0 %v415
      %v623 = vpop.f32.mrf.mxu0
      %v624 = vadd.f32 %v261, %v623
      %v625 = vpop.f32.mrf.mxu0
      %v626 = vadd.f32 %v261, %v625
      %627 = vmatmul.bf16.gmra.mxu0 %v417
      %v628 = vpop.f32.mrf.mxu0
      %v629 = vadd.f32 %v261, %v628
      %v630 = vpop.f32.mrf.mxu0
      %v631 = vadd.f32 %v261, %v630
      %632 = vmatmul.bf16.gmra.mxu0 %v419
      %v633 = vpop.f32.mrf.mxu0
      %v634 = vadd.f32 %v261, %v633
      %v635 = vpop.f32.mrf.mxu0
      %v636 = vadd.f32 %v261, %v635
      %637 = vmatmul.bf16.gmra.mxu0 %v421
      %v638 = vpop.f32.mrf.mxu0
      %v639 = vadd.f32 %v261, %v638
      %v640 = vpop.f32.mrf.mxu0
      %v641 = vadd.f32 %v261, %v640
      %642 = vmatmul.bf16.gmra.mxu0 %v423
      %v643 = vpop.f32.mrf.mxu0
      %v644 = vadd.f32 %v261, %v643
      %v645 = vpop.f32.mrf.mxu0
      %v646 = vadd.f32 %v261, %v645
      %647 = vmatmul.bf16.gmra.mxu0 %v425
      %v648 = vpop.f32.mrf.mxu0
      %v649 = vadd.f32 %v261, %v648
      %v650 = vpop.f32.mrf.mxu0
      %v651 = vadd.f32 %v261, %v650
      %652 = vmatmul.bf16.gmra.mxu0 %v427
      %v653 = vpop.f32.mrf.mxu0
      %v654 = vadd.f32 %v261, %v653
      %v655 = vpop.f32.mrf.mxu0
      %v656 = vadd.f32 %v261, %v655
      %657 = vmatmul.bf16.gmra.mxu0 %v429
      %v658 = vpop.f32.mrf.mxu0
      %v659 = vadd.f32 %v261, %v658
      %v660 = vpop.f32.mrf.mxu0
      %v661 = vadd.f32 %v261, %v660
      %662 = vmatmul.bf16.gmra.mxu0 %v431
      %v663 = vpop.f32.mrf.mxu0
      %v664 = vadd.f32 %v261, %v663
      %v665 = vpop.f32.mrf.mxu0
      %v666 = vadd.f32 %v261, %v665
      %667 = vmatmul.bf16.gmra.mxu0 %v433
      %v668 = vpop.f32.mrf.mxu0
      %v669 = vadd.f32 %v261, %v668
      %v670 = vpop.f32.mrf.mxu0
      %v671 = vadd.f32 %v261, %v670
      %672 = vmatmul.bf16.gmra.mxu0 %v435
      %v673 = vpop.f32.mrf.mxu0
      %v674 = vadd.f32 %v261, %v673
      %v675 = vpop.f32.mrf.mxu0
      %v676 = vadd.f32 %v261, %v675
      %677 = vmatmul.bf16.gmra.mxu0 %v437
      %v678 = vpop.f32.mrf.mxu0
      %v679 = vadd.f32 %v261, %v678
      %v680 = vpop.f32.mrf.mxu0
      %v681 = vadd.f32 %v261, %v680
      %682 = vmatmul.bf16.gmra.mxu0 %v439
      %v683 = vpop.f32.mrf.mxu0
      %v684 = vadd.f32 %v261, %v683
      %v685 = vpop.f32.mrf.mxu0
      %v686 = vadd.f32 %v261, %v685
      %687 = vmatmul.bf16.gmra.mxu0 %v441
      %v688 = vpop.f32.mrf.mxu0
      %v689 = vadd.f32 %v261, %v688
      %v690 = vpop.f32.mrf.mxu0
      %v691 = vadd.f32 %v261, %v690
      %692 = vmatmul.bf16.gmra.mxu0 %v443
      %v693 = vpop.f32.mrf.mxu0
      %v694 = vadd.f32 %v261, %v693
      %v695 = vpop.f32.mrf.mxu0
      %v696 = vadd.f32 %v261, %v695
      %697 = vmatmul.bf16.gmra.mxu0 %v445
      %v698 = vpop.f32.mrf.mxu0
      %v699 = vadd.f32 %v261, %v698
      %v700 = vpop.f32.mrf.mxu0
      %v701 = vadd.f32 %v261, %v700
      %702 = vmatmul.bf16.gmra.mxu0 %v447
      %v703 = vpop.f32.mrf.mxu0
      %v704 = vadd.f32 %v261, %v703
      %v705 = vpop.f32.mrf.mxu0
      %v706 = vadd.f32 %v261, %v705
      %707 = vmatmul.bf16.gmra.mxu0 %v449
      %v708 = vpop.f32.mrf.mxu0
      %v709 = vadd.f32 %v261, %v708
      %v710 = vpop.f32.mrf.mxu0
      %v711 = vadd.f32 %v261, %v710
      %712 = vmatmul.bf16.gmra.mxu0 %v451
      %v713 = vpop.f32.mrf.mxu0
      %v714 = vadd.f32 %v261, %v713
      %v715 = vpop.f32.mrf.mxu0
      %v716 = vadd.f32 %v261, %v715
      %717 = vmatmul.bf16.gmra.mxu0 %v453
      %v718 = vpop.f32.mrf.mxu0
      %v719 = vadd.f32 %v261, %v718
      %v720 = vpop.f32.mrf.mxu0
      %v721 = vadd.f32 %v261, %v720
      %722 = vmatmul.bf16.gmra.mxu0 %v455
      %v723 = vpop.f32.mrf.mxu0
      %v724 = vadd.f32 %v261, %v723
      %v725 = vpop.f32.mrf.mxu0
      %v726 = vadd.f32 %v261, %v725
      %727 = vmatmul.bf16.gmra.mxu0 %v457
      %v728 = vpop.f32.mrf.mxu0
      %v729 = vadd.f32 %v261, %v728
      %v730 = vpop.f32.mrf.mxu0
      %v731 = vadd.f32 %v261, %v730
      %732 = vmatmul.bf16.gmra.mxu0 %v459
      %v733 = vpop.f32.mrf.mxu0
      %v734 = vadd.f32 %v261, %v733
      %v735 = vpop.f32.mrf.mxu0
      %v736 = vadd.f32 %v261, %v735
      %737 = vmatmul.bf16.gmra.mxu0 %v461
      %v738 = vpop.f32.mrf.mxu0
      %v739 = vadd.f32 %v261, %v738
      %v740 = vpop.f32.mrf.mxu0
      %v741 = vadd.f32 %v261, %v740
      %742 = vdwg.mxu0
      %743 = vmatpush.bf16.msra.mxu0 %v592
      %744 = vmatpush.bf16.msra.mxu0 %v591
      %745 = vmatpush.bf16.msra.mxu0 %v590
      %746 = vmatpush.bf16.msra.mxu0 %v589
      %747 = vmatpush.bf16.msra.mxu0 %v588
      %748 = vmatpush.bf16.msra.mxu0 %v587
      %749 = vmatpush.bf16.msra.mxu0 %v586
      %750 = vmatpush.bf16.msra.mxu0 %v585
      %751 = vmatmul.bf16.gmra.mxu0 %v414
      %v752 = vpop.f32.mrf.mxu0
      %v753 = vadd.f32 %v619, %v752
      %v754 = vpop.f32.mrf.mxu0
      %v755 = vadd.f32 %v621, %v754
      %756 = vmatmul.bf16.gmra.mxu0 %v416
      %v757 = vpop.f32.mrf.mxu0
      %v758 = vadd.f32 %v624, %v757
      %v759 = vpop.f32.mrf.mxu0
      %v760 = vadd.f32 %v626, %v759
      %761 = vmatmul.bf16.gmra.mxu0 %v418
      %v762 = vpop.f32.mrf.mxu0
      %v763 = vadd.f32 %v629, %v762
      %v764 = vpop.f32.mrf.mxu0
      %v765 = vadd.f32 %v631, %v764
      %766 = vmatmul.bf16.gmra.mxu0 %v420
      %v767 = vpop.f32.mrf.mxu0
      %v768 = vadd.f32 %v634, %v767
      %v769 = vpop.f32.mrf.mxu0
      %v770 = vadd.f32 %v636, %v769
      %771 = vmatmul.bf16.gmra.mxu0 %v422
      %v772 = vpop.f32.mrf.mxu0
      %v773 = vadd.f32 %v639, %v772
      %v774 = vpop.f32.mrf.mxu0
      %v775 = vadd.f32 %v641, %v774
      %776 = vmatmul.bf16.gmra.mxu0 %v424
      %v777 = vpop.f32.mrf.mxu0
      %v778 = vadd.f32 %v644, %v777
      %v779 = vpop.f32.mrf.mxu0
      %v780 = vadd.f32 %v646, %v779
      %781 = vmatmul.bf16.gmra.mxu0 %v426
      %v782 = vpop.f32.mrf.mxu0
      %v783 = vadd.f32 %v649, %v782
      %v784 = vpop.f32.mrf.mxu0
      %v785 = vadd.f32 %v651, %v784
      %786 = vmatmul.bf16.gmra.mxu0 %v428
      %v787 = vpop.f32.mrf.mxu0
      %v788 = vadd.f32 %v654, %v787
      %v789 = vpop.f32.mrf.mxu0
      %v790 = vadd.f32 %v656, %v789
      %791 = vmatmul.bf16.gmra.mxu0 %v430
      %v792 = vpop.f32.mrf.mxu0
      %v793 = vadd.f32 %v659, %v792
      %v794 = vpop.f32.mrf.mxu0
      %v795 = vadd.f32 %v661, %v794
      %796 = vmatmul.bf16.gmra.mxu0 %v432
      %v797 = vpop.f32.mrf.mxu0
      %v798 = vadd.f32 %v664, %v797
      %v799 = vpop.f32.mrf.mxu0
      %v800 = vadd.f32 %v666, %v799
      %801 = vmatmul.bf16.gmra.mxu0 %v434
      %v802 = vpop.f32.mrf.mxu0
      %v803 = vadd.f32 %v669, %v802
      %v804 = vpop.f32.mrf.mxu0
      %v805 = vadd.f32 %v671, %v804
      %806 = vmatmul.bf16.gmra.mxu0 %v436
      %v807 = vpop.f32.mrf.mxu0
      %v808 = vadd.f32 %v674, %v807
      %v809 = vpop.f32.mrf.mxu0
      %v810 = vadd.f32 %v676, %v809
      %811 = vmatmul.bf16.gmra.mxu0 %v438
      %v812 = vpop.f32.mrf.mxu0
      %v813 = vadd.f32 %v679, %v812
      %v814 = vpop.f32.mrf.mxu0
      %v815 = vadd.f32 %v681, %v814
      %816 = vmatmul.bf16.gmra.mxu0 %v440
      %v817 = vpop.f32.mrf.mxu0
      %v818 = vadd.f32 %v684, %v817
      %v819 = vpop.f32.mrf.mxu0
      %v820 = vadd.f32 %v686, %v819
      %821 = vmatmul.bf16.gmra.mxu0 %v442
      %v822 = vpop.f32.mrf.mxu0
      %v823 = vadd.f32 %v689, %v822
      %v824 = vpop.f32.mrf.mxu0
      %v825 = vadd.f32 %v691, %v824
      %826 = vmatmul.bf16.gmra.mxu0 %v444
      %v827 = vpop.f32.mrf.mxu0
      %v828 = vadd.f32 %v694, %v827
      %v829 = vpop.f32.mrf.mxu0
      %v830 = vadd.f32 %v696, %v829
      %831 = vmatmul.bf16.gmra.mxu0 %v446
      %v832 = vpop.f32.mrf.mxu0
      %v833 = vadd.f32 %v699, %v832
      %v834 = vpop.f32.mrf.mxu0
      %v835 = vadd.f32 %v701, %v834
      %836 = vmatmul.bf16.gmra.mxu0 %v448
      %v837 = vpop.f32.mrf.mxu0
      %v838 = vadd.f32 %v704, %v837
      %v839 = vpop.f32.mrf.mxu0
      %v840 = vadd.f32 %v706, %v839
      %841 = vmatmul.bf16.gmra.mxu0 %v450
      %v842 = vpop.f32.mrf.mxu0
      %v843 = vadd.f32 %v709, %v842
      %v844 = vpop.f32.mrf.mxu0
      %v845 = vadd.f32 %v711, %v844
      %846 = vmatmul.bf16.gmra.mxu0 %v452
      %v847 = vpop.f32.mrf.mxu0
      %v848 = vadd.f32 %v714, %v847
      %v849 = vpop.f32.mrf.mxu0
      %v850 = vadd.f32 %v716, %v849
      %851 = vmatmul.bf16.gmra.mxu0 %v454
      %v852 = vpop.f32.mrf.mxu0
      %v853 = vadd.f32 %v719, %v852
      %v854 = vpop.f32.mrf.mxu0
      %v855 = vadd.f32 %v721, %v854
      %856 = vmatmul.bf16.gmra.mxu0 %v456
      %v857 = vpop.f32.mrf.mxu0
      %v858 = vadd.f32 %v724, %v857
      %v859 = vpop.f32.mrf.mxu0
      %v860 = vadd.f32 %v726, %v859
      %861 = vmatmul.bf16.gmra.mxu0 %v458
      %v862 = vpop.f32.mrf.mxu0
      %v863 = vadd.f32 %v729, %v862
      %v864 = vpop.f32.mrf.mxu0
      %v865 = vadd.f32 %v731, %v864
      %866 = vmatmul.bf16.gmra.mxu0 %v460
      %v867 = vpop.f32.mrf.mxu0
      %v868 = vadd.f32 %v734, %v867
      %v869 = vpop.f32.mrf.mxu0
      %v870 = vadd.f32 %v736, %v869
      %871 = vmatmul.bf16.gmra.mxu0 %v462
      %v872 = vpop.f32.mrf.mxu0
      %v873 = vadd.f32 %v739, %v872
      %v874 = vpop.f32.mrf.mxu0
      %v875 = vadd.f32 %v741, %v874
      %876 = vdwg.mxu0
      %v877 = vmax.f32 %v753, 0.0
      %v878 = vmax.f32 %v755, 0.0
      %v879 = vmax.f32 %v758, 0.0
      %v880 = vmax.f32 %v760, 0.0
      %v881 = vmax.f32 %v763, 0.0
      %v882 = vmax.f32 %v765, 0.0
      %v883 = vmax.f32 %v768, 0.0
      %v884 = vmax.f32 %v770, 0.0
      %v885 = vmax.f32 %v773, 0.0
      %v886 = vmax.f32 %v775, 0.0
      %v887 = vmax.f32 %v778, 0.0
      %v888 = vmax.f32 %v780, 0.0
      %v889 = vmax.f32 %v783, 0.0
      %v890 = vmax.f32 %v785, 0.0
      %v891 = vmax.f32 %v788, 0.0
      %v892 = vmax.f32 %v790, 0.0
      %v893 = vmax.f32 %v793, 0.0
      %v894 = vmax.f32 %v795, 0.0
      %v895 = vmax.f32 %v798, 0.0
      %v896 = vmax.f32 %v800, 0.0
      %v897 = vmax.f32 %v803, 0.0
      %v898 = vmax.f32 %v805, 0.0
      %v899 = vmax.f32 %v808, 0.0
      %v900 = vmax.f32 %v810, 0.0
      %v901 = vmax.f32 %v813, 0.0
      %v902 = vmax.f32 %v815, 0.0
      %v903 = vmax.f32 %v818, 0.0
      %v904 = vmax.f32 %v820, 0.0
      %v905 = vmax.f32 %v823, 0.0
      %v906 = vmax.f32 %v825, 0.0
      %v907 = vmax.f32 %v828, 0.0
      %v908 = vmax.f32 %v830, 0.0
      %v909 = vmax.f32 %v833, 0.0
      %v910 = vmax.f32 %v835, 0.0
      %v911 = vmax.f32 %v838, 0.0
      %v912 = vmax.f32 %v840, 0.0
      %v913 = vmax.f32 %v843, 0.0
      %v914 = vmax.f32 %v845, 0.0
      %v915 = vmax.f32 %v848, 0.0
      %v916 = vmax.f32 %v850, 0.0
      %v917 = vmax.f32 %v853, 0.0
      %v918 = vmax.f32 %v855, 0.0
      %v919 = vmax.f32 %v858, 0.0
      %v920 = vmax.f32 %v860, 0.0
      %v921 = vmax.f32 %v863, 0.0
      %v922 = vmax.f32 %v865, 0.0
      %v923 = vmax.f32 %v868, 0.0
      %v924 = vmax.f32 %v870, 0.0
      %v925 = vmax.f32 %v873, 0.0
      %v926 = vmax.f32 %v875, 0.0
      %v927 = vpack.c.bf16 %v877, %v877
      %v928 = vpack.c.bf16 %v878, %v878
      %v929 = vpack.c.bf16 %v879, %v879
      %v930 = vpack.c.bf16 %v880, %v880
      %v931 = vpack.c.bf16 %v881, %v881
      %v932 = vpack.c.bf16 %v882, %v882
      %v933 = vpack.c.bf16 %v883, %v883
      %v934 = vpack.c.bf16 %v884, %v884
      %v935 = vpack.c.bf16 %v885, %v885
      %v936 = vpack.c.bf16 %v886, %v886
      %v937 = vpack.c.bf16 %v887, %v887
      %v938 = vpack.c.bf16 %v888, %v888
      %v939 = vpack.c.bf16 %v889, %v889
      %v940 = vpack.c.bf16 %v890, %v890
      %v941 = vpack.c.bf16 %v891, %v891
      %v942 = vpack.c.bf16 %v892, %v892
      %v943 = vpack.c.bf16 %v893, %v893
      %v944 = vpack.c.bf16 %v894, %v894
      %v945 = vpack.c.bf16 %v895, %v895
      %v946 = vpack.c.bf16 %v896, %v896
      %v947 = vpack.c.bf16 %v897, %v897
      %v948 = vpack.c.bf16 %v898, %v898
      %v949 = vpack.c.bf16 %v899, %v899
      %v950 = vpack.c.bf16 %v900, %v900
      %v951 = vpack.c.bf16 %v901, %v901
      %v952 = vpack.c.bf16 %v902, %v902
      %v953 = vpack.c.bf16 %v903, %v903
      %v954 = vpack.c.bf16 %v904, %v904
      %v955 = vpack.c.bf16 %v905, %v905
      %v956 = vpack.c.bf16 %v906, %v906
      %v957 = vpack.c.bf16 %v907, %v907
      %v958 = vpack.c.bf16 %v908, %v908
      %v959 = vpack.c.bf16 %v909, %v909
      %v960 = vpack.c.bf16 %v910, %v910
      %v961 = vpack.c.bf16 %v911, %v911
      %v962 = vpack.c.bf16 %v912, %v912
      %v963 = vpack.c.bf16 %v913, %v913
      %v964 = vpack.c.bf16 %v914, %v914
      %v965 = vpack.c.bf16 %v915, %v915
      %v966 = vpack.c.bf16 %v916, %v916
      %v967 = vpack.c.bf16 %v917, %v917
      %v968 = vpack.c.bf16 %v918, %v918
      %v969 = vpack.c.bf16 %v919, %v919
      %v970 = vpack.c.bf16 %v920, %v920
      %v971 = vpack.c.bf16 %v921, %v921
      %v972 = vpack.c.bf16 %v922, %v922
      %v973 = vpack.c.bf16 %v923, %v923
      %v974 = vpack.c.bf16 %v924, %v924
      %v975 = vpack.c.bf16 %v925, %v925
      %v976 = vpack.c.bf16 %v926, %v926
      %977 = vst [vmem:[%s175] sm:$0xf] %v927
      %978 = vst [vmem:[%s175 + $0x4] sm:$0xf] %v928
      %979 = vst [vmem:[%s175 + $0x8] sm:$0xf] %v929
      %980 = vst [vmem:[%s175 + $0xc] sm:$0xf] %v930
      %981 = vst [vmem:[%s175 + $0x10] sm:$0xf] %v931
      %982 = vst [vmem:[%s175 + $0x14] sm:$0xf] %v932
      %983 = vst [vmem:[%s175 + $0x18] sm:$0xf] %v933
      %984 = vst [vmem:[%s175 + $0x1c] sm:$0xf] %v934
      %985 = vst [vmem:[%s175 + $0x20] sm:$0xf] %v935
      %986 = vst [vmem:[%s175 + $0x24] sm:$0xf] %v936
      %987 = vst [vmem:[%s175 + $0x28] sm:$0xf] %v937
      %988 = vst [vmem:[%s175 + $0x2c] sm:$0xf] %v938
      %989 = vst [vmem:[%s175 + $0x30] sm:$0xf] %v939
      %990 = vst [vmem:[%s175 + $0x34] sm:$0xf] %v940
      %991 = vst [vmem:[%s175 + $0x38] sm:$0xf] %v941
      %992 = vst [vmem:[%s175 + $0x3c] sm:$0xf] %v942
      %993 = vst [vmem:[%s175 + $0x40] sm:$0xf] %v943
      %994 = vst [vmem:[%s175 + $0x44] sm:$0xf] %v944
      %995 = vst [vmem:[%s175 + $0x48] sm:$0xf] %v945
      %996 = vst [vmem:[%s175 + $0x4c] sm:$0xf] %v946
      %997 = vst [vmem:[%s175 + $0x50] sm:$0xf] %v947
      %998 = vst [vmem:[%s175 + $0x54] sm:$0xf] %v948
      %999 = vst [vmem:[%s175 + $0x58] sm:$0xf] %v949
      %1000 = vst [vmem:[%s175 + $0x5c] sm:$0xf] %v950
      %1001 = vst [vmem:[%s175 + $0x60] sm:$0xf] %v951
      %1002 = vst [vmem:[%s175 + $0x64] sm:$0xf] %v952
      %1003 = vst [vmem:[%s175 + $0x68] sm:$0xf] %v953
      %1004 = vst [vmem:[%s175 + $0x6c] sm:$0xf] %v954
      %1005 = vst [vmem:[%s175 + $0x70] sm:$0xf] %v955
      %1006 = vst [vmem:[%s175 + $0x74] sm:$0xf] %v956
      %1007 = vst [vmem:[%s175 + $0x78] sm:$0xf] %v957
      %1008 = vst [vmem:[%s175 + $0x7c] sm:$0xf] %v958
      %1009 = vst [vmem:[%s175 + $0x80] sm:$0xf] %v959
      %1010 = vst [vmem:[%s175 + $0x84] sm:$0xf] %v960
      %1011 = vst [vmem:[%s175 + $0x88] sm:$0xf] %v961
      %1012 = vst [vmem:[%s175 + $0x8c] sm:$0xf] %v962
      %1013 = vst [vmem:[%s175 + $0x90] sm:$0xf] %v963
      %1014 = vst [vmem:[%s175 + $0x94] sm:$0xf] %v964
      %1015 = vst [vmem:[%s175 + $0x98] sm:$0xf] %v965
      %1016 = vst [vmem:[%s175 + $0x9c] sm:$0xf] %v966
      %1017 = vst [vmem:[%s175 + $0xa0] sm:$0xf] %v967
      %1018 = vst [vmem:[%s175 + $0xa4] sm:$0xf] %v968
      %1019 = vst [vmem:[%s175 + $0xa8] sm:$0xf] %v969
      %1020 = vst [vmem:[%s175 + $0xac] sm:$0xf] %v970
      %1021 = vst [vmem:[%s175 + $0xb0] sm:$0xf] %v971
      %1022 = vst [vmem:[%s175 + $0xb4] sm:$0xf] %v972
      %1023 = vst [vmem:[%s175 + $0xb8] sm:$0xf] %v973
      %1024 = vst [vmem:[%s175 + $0xbc] sm:$0xf] %v974
      %1025 = vst [vmem:[%s175 + $0xc0] sm:$0xf] %v975
      %1026 = vst [vmem:[%s175 + $0xc4] sm:$0xf] %v976
      %s1027 = smul.u32 50, %s14
      %p1028 = scmp.lt.s32.totalorder %s1027, 99
      %s1029 = scalar_select %p1028, %s1027, 99
      %s1030 = smul.addr %s1029, 4
      %s1031 = scalar_lea.vmem %s3, %s1030
      // Predicated region
      $region33: #{cnn_forward.4} parent=31 // pred_check
        %p1032 = pneg %p100
      $region34: #{cnn_forward.4} parent=31 // pred_check_branch
        %1034 = sbr.rel (%p1032) target = $region36
      $region35: #{cnn_forward.4} parent=31 // pred_region
        %s1035 = smul.u32 50, %s14
      $region36: #{cnn_forward.4} parent=31 // pred_fallthru
        _
    $region32: #{cnn_forward.4} parent=5 // pred_fallthru
      _
    %p1036 = scmp.le.s32.totalorder 2, %s9
    // Predicated region
    $region37: #{cnn_forward.4} parent=5 // pred_check
      %p1037 = pneg %p1036
    $region38: #{cnn_forward.4} parent=5 // pred_check_branch
      %1039 = sbr.rel (%p1037) target = $region40
    $region39: #{cnn_forward.4} parent=5 // pred_region
      %s1040 = ssub.s32 %s9, 2
      // Predicated region
      $region41: #{cnn_forward.4} parent=39 // pred_check
        %p1041 = pneg %p106
      $region42: #{cnn_forward.4} parent=39 // pred_check_branch
        %1043 = sbr.rel (%p1041) target = $region44
      $region43: #{cnn_forward.4} parent=39 // pred_region
        %s1044 = smul.u32 50, %s15
        %p1045 = scmp.lt.s32.totalorder %s1044, 99
        %s1046 = scalar_select %p1045, %s1044, 99
        %s1047 = smul.addr %s1046, 4
        %s1048 = scalar_lea.vmem %s3, %s1047
      $region44: #{cnn_forward.4} parent=39 // pred_fallthru
        _
    $region40: #{cnn_forward.4} parent=5 // pred_fallthru
      _
  $region6: #{cnn_forward.4} parent=0 // loop_footer
    %s13 = sadd.s32 1, %s9
  $region7: #{cnn_forward.4} parent=0 // loop_footer_branch
    %8 = sbr.rel target = $region3
  $region8: #{cnn_forward.4} parent=0 // loop_exit
    _

// kernel: cnn_forward.5
$region0: #{cnn_forward.5}
  #allocation0 [shape = 'u32[]', space=smem, size = 0x4, offset = 0x4, fixed_abs, tag = 'smem constant byte address 0x4 - core index']
  #allocation1 [shape = 'u32[72,128]{1,0:T(1,128)}', space=vmem, size = 0x9000, scoped, tag = 'internal scratch']
  %s0 = inlined_call_operand.vmem [shape: bf16[176,512], index: 0, kind: input, shape index: {}]
  %s1 = inlined_call_operand.vmem [shape: bf16[512,128], index: 1, kind: input, shape index: {}]
  %s2 = inlined_call_operand.vmem [shape: f32[1,128], index: 2, kind: input, shape index: {}]
  %s3 = inlined_call_operand.vmem [shape: bf16[176,128], index: 3, kind: output, shape index: {}]
  %s4 = sld [smem:[#allocation0]]
  $region22: #{cnn_forward.5} parent=0
    _
  %s6 = ssub.s32 1, %s4
  %s7 = scalar_select 0, %s6, %s4
  // Predicated region
  $region2: #{cnn_forward.5} parent=0 // pred_check
    _
  $region3: #{cnn_forward.5} parent=0 // pred_check_branch
    %9 = sbr.rel (0) target = $region5
  $region4: #{cnn_forward.5} parent=0 // pred_region
    _
  $region5: #{cnn_forward.5} parent=0 // pred_fallthru
    _
  // Predicated region
  $region6: #{cnn_forward.5} parent=0 // pred_check
    _
  $region7: #{cnn_forward.5} parent=0 // pred_check_branch
    %11 = sbr.rel (0) target = $region9
  $region8: #{cnn_forward.5} parent=0 // pred_region
    _
  $region9: #{cnn_forward.5} parent=0 // pred_fallthru
    _
  // Predicated region
  $region10: #{cnn_forward.5} parent=0 // pred_check
    _
  $region11: #{cnn_forward.5} parent=0 // pred_check_branch
    %13 = sbr.rel (0) target = $region13
  $region12: #{cnn_forward.5} parent=0 // pred_region
    _
  $region13: #{cnn_forward.5} parent=0 // pred_fallthru
    _
  %v14 = vld [vmem:[%s0] sm:$0xff]
  %v15 = vld [vmem:[%s0 + $0x8] sm:$0xff]
  %v16 = vld [vmem:[%s0 + $0x10] sm:$0xff]
  %v17 = vld [vmem:[%s0 + $0x18] sm:$0xff]
  %v18 = vld [vmem:[%s0 + $0x20] sm:$0xff]
  %v19 = vld [vmem:[%s0 + $0x28] sm:$0xff]
  %v20 = vld [vmem:[%s0 + $0x30] sm:$0xff]
  %v21 = vld [vmem:[%s0 + $0x38] sm:$0xff]
  %v22 = vld [vmem:[%s0 + $0x40] sm:$0xff]
  %v23 = vld [vmem:[%s0 + $0x48] sm:$0xff]
  %v24 = vld [vmem:[%s0 + $0x50] sm:$0xff]
  %v25 = vld [vmem:[%s0 + $0x58] sm:$0xff]
  %v26 = vld [vmem:[%s0 + $0x60] sm:$0xff]
  %v27 = vld [vmem:[%s0 + $0x68] sm:$0xff]
  %v28 = vld [vmem:[%s0 + $0x70] sm:$0xff]
  %v29 = vld [vmem:[%s0 + $0x78] sm:$0xff]
  %v30 = vld [vmem:[%s0 + $0x80] sm:$0xff]
  %v31 = vld [vmem:[%s0 + $0x88] sm:$0xff]
  %v32 = vld [vmem:[%s0 + $0x90] sm:$0xff]
  %v33 = vld [vmem:[%s0 + $0x98] sm:$0xff]
  %v34 = vld [vmem:[%s0 + $0xa0] sm:$0xff]
  %v35 = vld [vmem:[%s0 + $0xa8] sm:$0xff]
  %v36 = vld [vmem:[%s0 + $0xb0] sm:$0xff]
  %v37 = vld [vmem:[%s0 + $0xb8] sm:$0xff]
  %v38 = vld [vmem:[%s0 + $0xc0] sm:$0xff]
  %v39 = vld [vmem:[%s0 + $0xc8] sm:$0xff]
  %v40 = vld [vmem:[%s0 + $0xd0] sm:$0xff]
  %v41 = vld [vmem:[%s0 + $0xd8] sm:$0xff]
  %v42 = vld [vmem:[%s0 + $0xe0] sm:$0xff]
  %v43 = vld [vmem:[%s0 + $0xe8] sm:$0xff]
  %v44 = vld [vmem:[%s0 + $0xf0] sm:$0xff]
  %v45 = vld [vmem:[%s0 + $0xf8] sm:$0xff]
  %v46 = vld [vmem:[%s0 + $0x100] sm:$0xff]
  %v47 = vld [vmem:[%s0 + $0x108] sm:$0xff]
  %v48 = vld [vmem:[%s0 + $0x110] sm:$0xff]
  %v49 = vld [vmem:[%s0 + $0x118] sm:$0xff]
  %v50 = vld [vmem:[%s0 + $0x120] sm:$0xff]
  %v51 = vld [vmem:[%s0 + $0x128] sm:$0xff]
  %v52 = vld [vmem:[%s0 + $0x130] sm:$0xff]
  %v53 = vld [vmem:[%s0 + $0x138] sm:$0xff]
  %v54 = vld [vmem:[%s0 + $0x140] sm:$0xff]
  %v55 = vld [vmem:[%s0 + $0x148] sm:$0xff]
  %v56 = vld [vmem:[%s0 + $0x150] sm:$0xff]
  %v57 = vld [vmem:[%s0 + $0x158] sm:$0xff]
  %v58 = vld [vmem:[%s1] sm:$0xf]
  %v59 = vld [vmem:[%s1 + $0x4] sm:$0xf]
  %v60 = vld [vmem:[%s1 + $0x8] sm:$0xf]
  %v61 = vld [vmem:[%s1 + $0xc] sm:$0xf]
  %v62 = vld [vmem:[%s1 + $0x10] sm:$0xf]
  %v63 = vld [vmem:[%s1 + $0x14] sm:$0xf]
  %v64 = vld [vmem:[%s1 + $0x18] sm:$0xf]
  %v65 = vld [vmem:[%s1 + $0x1c] sm:$0xf]
  %v66 = vld [vmem:[%s1 + $0x20] sm:$0xf]
  %v67 = vld [vmem:[%s1 + $0x24] sm:$0xf]
  %v68 = vld [vmem:[%s1 + $0x28] sm:$0xf]
  %v69 = vld [vmem:[%s1 + $0x2c] sm:$0xf]
  %v70 = vld [vmem:[%s1 + $0x30] sm:$0xf]
  %v71 = vld [vmem:[%s1 + $0x34] sm:$0xf]
  %v72 = vld [vmem:[%s1 + $0x38] sm:$0xf]
  %v73 = vld [vmem:[%s1 + $0x3c] sm:$0xf]
  %v74 = vld [vmem:[%s1 + $0x40] sm:$0xf]
  %v75 = vld [vmem:[%s1 + $0x44] sm:$0xf]
  %v76 = vld [vmem:[%s1 + $0x48] sm:$0xf]
  %v77 = vld [vmem:[%s1 + $0x4c] sm:$0xf]
  %v78 = vld [vmem:[%s1 + $0x50] sm:$0xf]
  %v79 = vld [vmem:[%s1 + $0x54] sm:$0xf]
  %v80 = vld [vmem:[%s1 + $0x58] sm:$0xf]
  %v81 = vld [vmem:[%s1 + $0x5c] sm:$0xf]
  %v82 = vld [vmem:[%s1 + $0x60] sm:$0xf]
  %v83 = vld [vmem:[%s1 + $0x64] sm:$0xf]
  %v84 = vld [vmem:[%s1 + $0x68] sm:$0xf]
  %v85 = vld [vmem:[%s1 + $0x6c] sm:$0xf]
  %v86 = vld [vmem:[%s1 + $0x70] sm:$0xf]
  %v87 = vld [vmem:[%s1 + $0x74] sm:$0xf]
  %v88 = vld [vmem:[%s1 + $0x78] sm:$0xf]
  %v89 = vld [vmem:[%s1 + $0x7c] sm:$0xf]
  %v90 = vld [vmem:[%s1 + $0x80] sm:$0xf]
  %v91 = vld [vmem:[%s1 + $0x84] sm:$0xf]
  %v92 = vld [vmem:[%s1 + $0x88] sm:$0xf]
  %v93 = vld [vmem:[%s1 + $0x8c] sm:$0xf]
  %v94 = vld [vmem:[%s1 + $0x90] sm:$0xf]
  %v95 = vld [vmem:[%s1 + $0x94] sm:$0xf]
  %v96 = vld [vmem:[%s1 + $0x98] sm:$0xf]
  %v97 = vld [vmem:[%s1 + $0x9c] sm:$0xf]
  %v98 = vld [vmem:[%s1 + $0xa0] sm:$0xf]
  %v99 = vld [vmem:[%s1 + $0xa4] sm:$0xf]
  %v100 = vld [vmem:[%s1 + $0xa8] sm:$0xf]
  %v101 = vld [vmem:[%s1 + $0xac] sm:$0xf]
  %v102 = vld [vmem:[%s1 + $0xb0] sm:$0xf]
  %v103 = vld [vmem:[%s1 + $0xb4] sm:$0xf]
  %v104 = vld [vmem:[%s1 + $0xb8] sm:$0xf]
  %v105 = vld [vmem:[%s1 + $0xbc] sm:$0xf]
  %v106 = vld [vmem:[%s1 + $0xc0] sm:$0xf]
  %v107 = vld [vmem:[%s1 + $0xc4] sm:$0xf]
  %v108 = vld [vmem:[%s1 + $0xc8] sm:$0xf]
  %v109 = vld [vmem:[%s1 + $0xcc] sm:$0xf]
  %v110 = vld [vmem:[%s1 + $0xd0] sm:$0xf]
  %v111 = vld [vmem:[%s1 + $0xd4] sm:$0xf]
  %v112 = vld [vmem:[%s1 + $0xd8] sm:$0xf]
  %v113 = vld [vmem:[%s1 + $0xdc] sm:$0xf]
  %v114 = vld [vmem:[%s1 + $0xe0] sm:$0xf]
  %v115 = vld [vmem:[%s1 + $0xe4] sm:$0xf]
  %v116 = vld [vmem:[%s1 + $0xe8] sm:$0xf]
  %v117 = vld [vmem:[%s1 + $0xec] sm:$0xf]
  %v118 = vld [vmem:[%s1 + $0xf0] sm:$0xf]
  %v119 = vld [vmem:[%s1 + $0xf4] sm:$0xf]
  %v120 = vld [vmem:[%s1 + $0xf8] sm:$0xf]
  %v121 = vld [vmem:[%s1 + $0xfc] sm:$0xf]
  %v122 = vld [vmem:[%s2] sm:$0x1]
  %v124 = vperm.slane %v122, 0
  %v170 = vunpack.c.l.b16 %v14
  %v171 = vunpack.c.h.b16 %v14
  %v172 = vunpack.c.l.b16 %v15
  %v173 = vunpack.c.h.b16 %v15
  %v174 = vunpack.c.l.b16 %v16
  %v175 = vunpack.c.h.b16 %v16
  %v176 = vunpack.c.l.b16 %v17
  %v177 = vunpack.c.h.b16 %v17
  %v178 = vunpack.c.l.b16 %v18
  %v179 = vunpack.c.h.b16 %v18
  %v180 = vunpack.c.l.b16 %v19
  %v181 = vunpack.c.h.b16 %v19
  %v182 = vunpack.c.l.b16 %v20
  %v183 = vunpack.c.h.b16 %v20
  %v184 = vunpack.c.l.b16 %v21
  %v185 = vunpack.c.h.b16 %v21
  %v186 = vunpack.c.l.b16 %v22
  %v187 = vunpack.c.h.b16 %v22
  %v188 = vunpack.c.l.b16 %v23
  %v189 = vunpack.c.h.b16 %v23
  %v190 = vunpack.c.l.b16 %v24
  %v191 = vunpack.c.h.b16 %v24
  %v192 = vunpack.c.l.b16 %v25
  %v193 = vunpack.c.h.b16 %v25
  %v194 = vunpack.c.l.b16 %v26
  %v195 = vunpack.c.h.b16 %v26
  %v196 = vunpack.c.l.b16 %v27
  %v197 = vunpack.c.h.b16 %v27
  %v198 = vunpack.c.l.b16 %v28
  %v199 = vunpack.c.h.b16 %v28
  %v200 = vunpack.c.l.b16 %v29
  %v201 = vunpack.c.h.b16 %v29
  %v202 = vunpack.c.l.b16 %v30
  %v203 = vunpack.c.h.b16 %v30
  %v204 = vunpack.c.l.b16 %v31
  %v205 = vunpack.c.h.b16 %v31
  %v206 = vunpack.c.l.b16 %v32
  %v207 = vunpack.c.h.b16 %v32
  %v208 = vunpack.c.l.b16 %v33
  %v209 = vunpack.c.h.b16 %v33
  %v210 = vunpack.c.l.b16 %v34
  %v211 = vunpack.c.h.b16 %v34
  %v212 = vunpack.c.l.b16 %v35
  %v213 = vunpack.c.h.b16 %v35
  %v214 = vunpack.c.l.b16 %v36
  %v215 = vunpack.c.h.b16 %v36
  %v216 = vunpack.c.l.b16 %v37
  %v217 = vunpack.c.h.b16 %v37
  %v218 = vunpack.c.l.b16 %v38
  %v219 = vunpack.c.h.b16 %v38
  %v220 = vunpack.c.l.b16 %v39
  %v221 = vunpack.c.h.b16 %v39
  %v222 = vunpack.c.l.b16 %v40
  %v223 = vunpack.c.h.b16 %v40
  %v224 = vunpack.c.l.b16 %v41
  %v225 = vunpack.c.h.b16 %v41
  %v226 = vunpack.c.l.b16 %v42
  %v227 = vunpack.c.h.b16 %v42
  %v228 = vunpack.c.l.b16 %v43
  %v229 = vunpack.c.h.b16 %v43
  %v230 = vunpack.c.l.b16 %v44
  %v231 = vunpack.c.h.b16 %v44
  %v232 = vunpack.c.l.b16 %v45
  %v233 = vunpack.c.h.b16 %v45
  %v234 = vunpack.c.l.b16 %v46
  %v235 = vunpack.c.h.b16 %v46
  %v236 = vunpack.c.l.b16 %v47
  %v237 = vunpack.c.h.b16 %v47
  %v238 = vunpack.c.l.b16 %v48
  %v239 = vunpack.c.h.b16 %v48
  %v240 = vunpack.c.l.b16 %v49
  %v241 = vunpack.c.h.b16 %v49
  %v242 = vunpack.c.l.b16 %v50
  %v243 = vunpack.c.h.b16 %v50
  %v244 = vunpack.c.l.b16 %v51
  %v245 = vunpack.c.h.b16 %v51
  %v246 = vunpack.c.l.b16 %v52
  %v247 = vunpack.c.h.b16 %v52
  %v248 = vunpack.c.l.b16 %v53
  %v249 = vunpack.c.h.b16 %v53
  %v250 = vunpack.c.l.b16 %v54
  %v251 = vunpack.c.h.b16 %v54
  %v252 = vunpack.c.l.b16 %v55
  %v253 = vunpack.c.h.b16 %v55
  %v254 = vunpack.c.l.b16 %v56
  %v255 = vunpack.c.h.b16 %v56
  %v256 = vunpack.c.l.b16 %v57
  %v257 = vunpack.c.h.b16 %v57
  %v258 = vpack.c.b16 %v174, %v170
  %v259 = vpack.c.b16 %v175, %v171
  %v260 = vpack.c.b16 %v176, %v172
  %v261 = vpack.c.b16 %v177, %v173
  %v262 = vpack.c.b16 %v182, %v178
  %v263 = vpack.c.b16 %v183, %v179
  %v264 = vpack.c.b16 %v184, %v180
  %v265 = vpack.c.b16 %v185, %v181
  %v266 = vpack.c.b16 %v190, %v186
  %v267 = vpack.c.b16 %v191, %v187
  %v268 = vpack.c.b16 %v192, %v188
  %v269 = vpack.c.b16 %v193, %v189
  %v270 = vpack.c.b16 %v198, %v194
  %v271 = vpack.c.b16 %v199, %v195
  %v272 = vpack.c.b16 %v200, %v196
  %v273 = vpack.c.b16 %v201, %v197
  %v274 = vpack.c.b16 %v206, %v202
  %v275 = vpack.c.b16 %v207, %v203
  %v276 = vpack.c.b16 %v208, %v204
  %v277 = vpack.c.b16 %v209, %v205
  %v278 = vpack.c.b16 %v214, %v210
  %v279 = vpack.c.b16 %v215, %v211
  %v280 = vpack.c.b16 %v216, %v212
  %v281 = vpack.c.b16 %v217, %v213
  %v282 = vpack.c.b16 %v222, %v218
  %v283 = vpack.c.b16 %v223, %v219
  %v284 = vpack.c.b16 %v224, %v220
  %v285 = vpack.c.b16 %v225, %v221
  %v286 = vpack.c.b16 %v230, %v226
  %v287 = vpack.c.b16 %v231, %v227
  %v288 = vpack.c.b16 %v232, %v228
  %v289 = vpack.c.b16 %v233, %v229
  %v290 = vpack.c.b16 %v238, %v234
  %v291 = vpack.c.b16 %v239, %v235
  %v292 = vpack.c.b16 %v240, %v236
  %v293 = vpack.c.b16 %v241, %v237
  %v294 = vpack.c.b16 %v246, %v242
  %v295 = vpack.c.b16 %v247, %v243
  %v296 = vpack.c.b16 %v248, %v244
  %v297 = vpack.c.b16 %v249, %v245
  %v298 = vpack.c.b16 %v254, %v250
  %v299 = vpack.c.b16 %v255, %v251
  %v300 = vpack.c.b16 %v256, %v252
  %v301 = vpack.c.b16 %v257, %v253
  %v410 = vunpack.c.l.b16 %v58
  %v411 = vunpack.c.l.b16 %v59
  %v412 = vunpack.c.l.b16 %v60
  %v413 = vunpack.c.l.b16 %v61
  %v414 = vunpack.c.l.b16 %v62
  %v415 = vunpack.c.l.b16 %v63
  %v416 = vunpack.c.l.b16 %v64
  %v417 = vunpack.c.l.b16 %v65
  %v418 = vunpack.c.l.b16 %v66
  %v419 = vunpack.c.l.b16 %v67
  %v420 = vunpack.c.l.b16 %v68
  %v421 = vunpack.c.l.b16 %v69
  %v422 = vunpack.c.l.b16 %v70
  %v423 = vunpack.c.l.b16 %v71
  %v424 = vunpack.c.l.b16 %v72
  %v425 = vunpack.c.l.b16 %v73
  %v426 = vunpack.c.l.b16 %v74
  %v427 = vunpack.c.l.b16 %v75
  %v428 = vunpack.c.l.b16 %v76
  %v429 = vunpack.c.l.b16 %v77
  %v430 = vunpack.c.l.b16 %v78
  %v431 = vunpack.c.l.b16 %v79
  %v432 = vunpack.c.l.b16 %v80
  %v433 = vunpack.c.l.b16 %v81
  %v434 = vunpack.c.l.b16 %v82
  %v435 = vunpack.c.l.b16 %v83
  %v436 = vunpack.c.l.b16 %v84
  %v437 = vunpack.c.l.b16 %v85
  %v438 = vunpack.c.l.b16 %v86
  %v439 = vunpack.c.l.b16 %v87
  %v440 = vunpack.c.l.b16 %v88
  %v441 = vunpack.c.l.b16 %v89
  %v442 = vunpack.c.l.b16 %v90
  %v443 = vunpack.c.l.b16 %v91
  %v444 = vunpack.c.l.b16 %v92
  %v445 = vunpack.c.l.b16 %v93
  %v446 = vunpack.c.l.b16 %v94
  %v447 = vunpack.c.l.b16 %v95
  %v448 = vunpack.c.l.b16 %v96
  %v449 = vunpack.c.l.b16 %v97
  %v450 = vunpack.c.l.b16 %v98
  %v451 = vunpack.c.l.b16 %v99
  %v452 = vunpack.c.l.b16 %v100
  %v453 = vunpack.c.l.b16 %v101
  %v454 = vunpack.c.l.b16 %v102
  %v455 = vunpack.c.l.b16 %v103
  %v456 = vunpack.c.l.b16 %v104
  %v457 = vunpack.c.l.b16 %v105
  %v458 = vunpack.c.l.b16 %v106
  %v459 = vunpack.c.l.b16 %v107
  %v460 = vunpack.c.l.b16 %v108
  %v461 = vunpack.c.l.b16 %v109
  %v462 = vunpack.c.l.b16 %v110
  %v463 = vunpack.c.l.b16 %v111
  %v464 = vunpack.c.l.b16 %v112
  %v465 = vunpack.c.l.b16 %v113
  %v466 = vunpack.c.l.b16 %v114
  %v467 = vunpack.c.l.b16 %v115
  %v468 = vunpack.c.l.b16 %v116
  %v469 = vunpack.c.l.b16 %v117
  %v470 = vunpack.c.l.b16 %v118
  %v471 = vunpack.c.l.b16 %v119
  %v472 = vunpack.c.l.b16 %v120
  %v473 = vunpack.c.l.b16 %v121
  %v474 = vpack.c.b16 %v411, %v410
  %v475 = vpack.c.b16 %v413, %v412
  %v476 = vpack.c.b16 %v415, %v414
  %v477 = vpack.c.b16 %v417, %v416
  %v478 = vpack.c.b16 %v419, %v418
  %v479 = vpack.c.b16 %v421, %v420
  %v480 = vpack.c.b16 %v423, %v422
  %v481 = vpack.c.b16 %v425, %v424
  %v482 = vpack.c.b16 %v427, %v426
  %v483 = vpack.c.b16 %v429, %v428
  %v484 = vpack.c.b16 %v431, %v430
  %v485 = vpack.c.b16 %v433, %v432
  %v486 = vpack.c.b16 %v435, %v434
  %v487 = vpack.c.b16 %v437, %v436
  %v488 = vpack.c.b16 %v439, %v438
  %v489 = vpack.c.b16 %v441, %v440
  %v490 = vpack.c.b16 %v443, %v442
  %v491 = vpack.c.b16 %v445, %v444
  %v492 = vpack.c.b16 %v447, %v446
  %v493 = vpack.c.b16 %v449, %v448
  %v494 = vpack.c.b16 %v451, %v450
  %v495 = vpack.c.b16 %v453, %v452
  %v496 = vpack.c.b16 %v455, %v454
  %v497 = vpack.c.b16 %v457, %v456
  %v498 = vpack.c.b16 %v459, %v458
  %v499 = vpack.c.b16 %v461, %v460
  %v500 = vpack.c.b16 %v463, %v462
  %v501 = vpack.c.b16 %v465, %v464
  %v502 = vpack.c.b16 %v467, %v466
  %v503 = vpack.c.b16 %v469, %v468
  %v504 = vpack.c.b16 %v471, %v470
  %v505 = vpack.c.b16 %v473, %v472
  %538 = vmatpush.bf16.msra.mxu0 %v481
  %539 = vmatpush.bf16.msra.mxu0 %v480
  %540 = vmatpush.bf16.msra.mxu0 %v479
  %541 = vmatpush.bf16.msra.mxu0 %v478
  %542 = vmatpush.bf16.msra.mxu0 %v477
  %543 = vmatpush.bf16.msra.mxu0 %v476
  %544 = vmatpush.bf16.msra.mxu0 %v475
  %545 = vmatpush.bf16.msra.mxu0 %v474
  %546 = vmatmul.bf16.gmra.mxu0 %v258
  %v547 = vpop.f32.mrf.mxu0
  %v548 = vadd.f32 %v124, %v547
  %v549 = vpop.f32.mrf.mxu0
  %v550 = vadd.f32 %v124, %v549
  %551 = vmatmul.bf16.gmra.mxu0 %v262
  %v552 = vpop.f32.mrf.mxu0
  %v553 = vadd.f32 %v124, %v552
  %v554 = vpop.f32.mrf.mxu0
  %v555 = vadd.f32 %v124, %v554
  %556 = vmatmul.bf16.gmra.mxu0 %v266
  %v557 = vpop.f32.mrf.mxu0
  %v558 = vadd.f32 %v124, %v557
  %v559 = vpop.f32.mrf.mxu0
  %v560 = vadd.f32 %v124, %v559
  %561 = vmatmul.bf16.gmra.mxu0 %v270
  %v562 = vpop.f32.mrf.mxu0
  %v563 = vadd.f32 %v124, %v562
  %v564 = vpop.f32.mrf.mxu0
  %v565 = vadd.f32 %v124, %v564
  %566 = vmatmul.bf16.gmra.mxu0 %v274
  %v567 = vpop.f32.mrf.mxu0
  %v568 = vadd.f32 %v124, %v567
  %v569 = vpop.f32.mrf.mxu0
  %v570 = vadd.f32 %v124, %v569
  %571 = vmatmul.bf16.gmra.mxu0 %v278
  %v572 = vpop.f32.mrf.mxu0
  %v573 = vadd.f32 %v124, %v572
  %v574 = vpop.f32.mrf.mxu0
  %v575 = vadd.f32 %v124, %v574
  %576 = vmatmul.bf16.gmra.mxu0 %v282
  %v577 = vpop.f32.mrf.mxu0
  %v578 = vadd.f32 %v124, %v577
  %v579 = vpop.f32.mrf.mxu0
  %v580 = vadd.f32 %v124, %v579
  %581 = vmatmul.bf16.gmra.mxu0 %v286
  %v582 = vpop.f32.mrf.mxu0
  %v583 = vadd.f32 %v124, %v582
  %v584 = vpop.f32.mrf.mxu0
  %v585 = vadd.f32 %v124, %v584
  %586 = vmatmul.bf16.gmra.mxu0 %v290
  %v587 = vpop.f32.mrf.mxu0
  %v588 = vadd.f32 %v124, %v587
  %v589 = vpop.f32.mrf.mxu0
  %v590 = vadd.f32 %v124, %v589
  %591 = vmatmul.bf16.gmra.mxu0 %v294
  %v592 = vpop.f32.mrf.mxu0
  %v593 = vadd.f32 %v124, %v592
  %v594 = vpop.f32.mrf.mxu0
  %v595 = vadd.f32 %v124, %v594
  %596 = vmatmul.bf16.gmra.mxu0 %v298
  %v597 = vpop.f32.mrf.mxu0
  %v598 = vadd.f32 %v124, %v597
  %v599 = vpop.f32.mrf.mxu0
  %v600 = vadd.f32 %v124, %v599
  %601 = vdwg.mxu0
  %602 = vmatpush.bf16.msra.mxu0 %v489
  %603 = vmatpush.bf16.msra.mxu0 %v488
  %604 = vmatpush.bf16.msra.mxu0 %v487
  %605 = vmatpush.bf16.msra.mxu0 %v486
  %606 = vmatpush.bf16.msra.mxu0 %v485
  %607 = vmatpush.bf16.msra.mxu0 %v484
  %608 = vmatpush.bf16.msra.mxu0 %v483
  %609 = vmatpush.bf16.msra.mxu0 %v482
  %610 = vmatmul.bf16.gmra.mxu0 %v259
  %v611 = vpop.f32.mrf.mxu0
  %v612 = vadd.f32 %v548, %v611
  %v613 = vpop.f32.mrf.mxu0
  %v614 = vadd.f32 %v550, %v613
  %615 = vmatmul.bf16.gmra.mxu0 %v263
  %v616 = vpop.f32.mrf.mxu0
  %v617 = vadd.f32 %v553, %v616
  %v618 = vpop.f32.mrf.mxu0
  %v619 = vadd.f32 %v555, %v618
  %620 = vmatmul.bf16.gmra.mxu0 %v267
  %v621 = vpop.f32.mrf.mxu0
  %v622 = vadd.f32 %v558, %v621
  %v623 = vpop.f32.mrf.mxu0
  %v624 = vadd.f32 %v560, %v623
  %625 = vmatmul.bf16.gmra.mxu0 %v271
  %v626 = vpop.f32.mrf.mxu0
  %v627 = vadd.f32 %v563, %v626
  %v628 = vpop.f32.mrf.mxu0
  %v629 = vadd.f32 %v565, %v628
  %630 = vmatmul.bf16.gmra.mxu0 %v275
  %v631 = vpop.f32.mrf.mxu0
  %v632 = vadd.f32 %v568, %v631
  %v633 = vpop.f32.mrf.mxu0
  %v634 = vadd.f32 %v570, %v633
  %635 = vmatmul.bf16.gmra.mxu0 %v279
  %v636 = vpop.f32.mrf.mxu0
  %v637 = vadd.f32 %v573, %v636
  %v638 = vpop.f32.mrf.mxu0
  %v639 = vadd.f32 %v575, %v638
  %640 = vmatmul.bf16.gmra.mxu0 %v283
  %v641 = vpop.f32.mrf.mxu0
  %v642 = vadd.f32 %v578, %v641
  %v643 = vpop.f32.mrf.mxu0
  %v644 = vadd.f32 %v580, %v643
  %645 = vmatmul.bf16.gmra.mxu0 %v287
  %v646 = vpop.f32.mrf.mxu0
  %v647 = vadd.f32 %v583, %v646
  %v648 = vpop.f32.mrf.mxu0
  %v649 = vadd.f32 %v585, %v648
  %650 = vmatmul.bf16.gmra.mxu0 %v291
  %v651 = vpop.f32.mrf.mxu0
  %v652 = vadd.f32 %v588, %v651
  %v653 = vpop.f32.mrf.mxu0
  %v654 = vadd.f32 %v590, %v653
  %655 = vmatmul.bf16.gmra.mxu0 %v295
  %v656 = vpop.f32.mrf.mxu0
  %v657 = vadd.f32 %v593, %v656
  %v658 = vpop.f32.mrf.mxu0
  %v659 = vadd.f32 %v595, %v658
  %660 = vmatmul.bf16.gmra.mxu0 %v299
  %v661 = vpop.f32.mrf.mxu0
  %v662 = vadd.f32 %v598, %v661
  %v663 = vpop.f32.mrf.mxu0
  %v664 = vadd.f32 %v600, %v663
  %665 = vdwg.mxu0
  %666 = vmatpush.bf16.msra.mxu0 %v497
  %667 = vmatpush.bf16.msra.mxu0 %v496
  %668 = vmatpush.bf16.msra.mxu0 %v495
  %669 = vmatpush.bf16.msra.mxu0 %v494
  %670 = vmatpush.bf16.msra.mxu0 %v493
  %671 = vmatpush.bf16.msra.mxu0 %v492
  %672 = vmatpush.bf16.msra.mxu0 %v491
  %673 = vmatpush.bf16.msra.mxu0 %v490
  %674 = vmatmul.bf16.gmra.mxu0 %v260
  %v675 = vpop.f32.mrf.mxu0
  %v676 = vadd.f32 %v612, %v675
  %v677 = vpop.f32.mrf.mxu0
  %v678 = vadd.f32 %v614, %v677
  %679 = vmatmul.bf16.gmra.mxu0 %v264
  %v680 = vpop.f32.mrf.mxu0
  %v681 = vadd.f32 %v617, %v680
  %v682 = vpop.f32.mrf.mxu0
  %v683 = vadd.f32 %v619, %v682
  %684 = vmatmul.bf16.gmra.mxu0 %v268
  %v685 = vpop.f32.mrf.mxu0
  %v686 = vadd.f32 %v622, %v685
  %v687 = vpop.f32.mrf.mxu0
  %v688 = vadd.f32 %v624, %v687
  %689 = vmatmul.bf16.gmra.mxu0 %v272
  %v690 = vpop.f32.mrf.mxu0
  %v691 = vadd.f32 %v627, %v690
  %v692 = vpop.f32.mrf.mxu0
  %v693 = vadd.f32 %v629, %v692
  %694 = vmatmul.bf16.gmra.mxu0 %v276
  %v695 = vpop.f32.mrf.mxu0
  %v696 = vadd.f32 %v632, %v695
  %v697 = vpop.f32.mrf.mxu0
  %v698 = vadd.f32 %v634, %v697
  %699 = vmatmul.bf16.gmra.mxu0 %v280
  %v700 = vpop.f32.mrf.mxu0
  %v701 = vadd.f32 %v637, %v700
  %v702 = vpop.f32.mrf.mxu0
  %v703 = vadd.f32 %v639, %v702
  %704 = vmatmul.bf16.gmra.mxu0 %v284
  %v705 = vpop.f32.mrf.mxu0
  %v706 = vadd.f32 %v642, %v705
  %v707 = vpop.f32.mrf.mxu0
  %v708 = vadd.f32 %v644, %v707
  %709 = vmatmul.bf16.gmra.mxu0 %v288
  %v710 = vpop.f32.mrf.mxu0
  %v711 = vadd.f32 %v647, %v710
  %v712 = vpop.f32.mrf.mxu0
  %v713 = vadd.f32 %v649, %v712
  %714 = vmatmul.bf16.gmra.mxu0 %v292
  %v715 = vpop.f32.mrf.mxu0
  %v716 = vadd.f32 %v652, %v715
  %v717 = vpop.f32.mrf.mxu0
  %v718 = vadd.f32 %v654, %v717
  %719 = vmatmul.bf16.gmra.mxu0 %v296
  %v720 = vpop.f32.mrf.mxu0
  %v721 = vadd.f32 %v657, %v720
  %v722 = vpop.f32.mrf.mxu0
  %v723 = vadd.f32 %v659, %v722
  %724 = vmatmul.bf16.gmra.mxu0 %v300
  %v725 = vpop.f32.mrf.mxu0
  %v726 = vadd.f32 %v662, %v725
  %v727 = vpop.f32.mrf.mxu0
  %v728 = vadd.f32 %v664, %v727
  %729 = vdwg.mxu0
  %730 = vmatpush.bf16.msra.mxu0 %v505
  %731 = vmatpush.bf16.msra.mxu0 %v504
  %732 = vmatpush.bf16.msra.mxu0 %v503
  %733 = vmatpush.bf16.msra.mxu0 %v502
  %734 = vmatpush.bf16.msra.mxu0 %v501
  %735 = vmatpush.bf16.msra.mxu0 %v500
  %736 = vmatpush.bf16.msra.mxu0 %v499
  %737 = vmatpush.bf16.msra.mxu0 %v498
  %738 = vmatmul.bf16.gmra.mxu0 %v261
  %v739 = vpop.f32.mrf.mxu0
  %v740 = vadd.f32 %v676, %v739
  %v741 = vpop.f32.mrf.mxu0
  %v742 = vadd.f32 %v678, %v741
  %743 = vmatmul.bf16.gmra.mxu0 %v265
  %v744 = vpop.f32.mrf.mxu0
  %v745 = vadd.f32 %v681, %v744
  %v746 = vpop.f32.mrf.mxu0
  %v747 = vadd.f32 %v683, %v746
  %748 = vmatmul.bf16.gmra.mxu0 %v269
  %v749 = vpop.f32.mrf.mxu0
  %v750 = vadd.f32 %v686, %v749
  %v751 = vpop.f32.mrf.mxu0
  %v752 = vadd.f32 %v688, %v751
  %753 = vmatmul.bf16.gmra.mxu0 %v273
  %v754 = vpop.f32.mrf.mxu0
  %v755 = vadd.f32 %v691, %v754
  %v756 = vpop.f32.mrf.mxu0
  %v757 = vadd.f32 %v693, %v756
  %758 = vmatmul.bf16.gmra.mxu0 %v277
  %v759 = vpop.f32.mrf.mxu0
  %v760 = vadd.f32 %v696, %v759
  %v761 = vpop.f32.mrf.mxu0
  %v762 = vadd.f32 %v698, %v761
  %763 = vmatmul.bf16.gmra.mxu0 %v281
  %v764 = vpop.f32.mrf.mxu0
  %v765 = vadd.f32 %v701, %v764
  %v766 = vpop.f32.mrf.mxu0
  %v767 = vadd.f32 %v703, %v766
  %768 = vmatmul.bf16.gmra.mxu0 %v285
  %v769 = vpop.f32.mrf.mxu0
  %v770 = vadd.f32 %v706, %v769
  %v771 = vpop.f32.mrf.mxu0
  %v772 = vadd.f32 %v708, %v771
  %773 = vmatmul.bf16.gmra.mxu0 %v289
  %v774 = vpop.f32.mrf.mxu0
  %v775 = vadd.f32 %v711, %v774
  %v776 = vpop.f32.mrf.mxu0
  %v777 = vadd.f32 %v713, %v776
  %778 = vmatmul.bf16.gmra.mxu0 %v293
  %v779 = vpop.f32.mrf.mxu0
  %v780 = vadd.f32 %v716, %v779
  %v781 = vpop.f32.mrf.mxu0
  %v782 = vadd.f32 %v718, %v781
  %783 = vmatmul.bf16.gmra.mxu0 %v297
  %v784 = vpop.f32.mrf.mxu0
  %v785 = vadd.f32 %v721, %v784
  %v786 = vpop.f32.mrf.mxu0
  %v787 = vadd.f32 %v723, %v786
  %788 = vmatmul.bf16.gmra.mxu0 %v301
  %v789 = vpop.f32.mrf.mxu0
  %v790 = vadd.f32 %v726, %v789
  %v791 = vpop.f32.mrf.mxu0
  %v792 = vadd.f32 %v728, %v791
  %793 = vdwg.mxu0
  %v794 = vmax.f32 %v740, 0.0
  %v795 = vmax.f32 %v742, 0.0
  %v796 = vmax.f32 %v745, 0.0
  %v797 = vmax.f32 %v747, 0.0
  %v798 = vmax.f32 %v750, 0.0
  %v799 = vmax.f32 %v752, 0.0
  %v800 = vmax.f32 %v755, 0.0
  %v801 = vmax.f32 %v757, 0.0
  %v802 = vmax.f32 %v760, 0.0
  %v803 = vmax.f32 %v762, 0.0
  %v804 = vmax.f32 %v765, 0.0
  %v805 = vmax.f32 %v767, 0.0
  %v806 = vmax.f32 %v770, 0.0
  %v807 = vmax.f32 %v772, 0.0
  %v808 = vmax.f32 %v775, 0.0
  %v809 = vmax.f32 %v777, 0.0
  %v810 = vmax.f32 %v780, 0.0
  %v811 = vmax.f32 %v782, 0.0
  %v812 = vmax.f32 %v785, 0.0
  %v813 = vmax.f32 %v787, 0.0
  %v814 = vmax.f32 %v790, 0.0
  %v815 = vmax.f32 %v792, 0.0
  %v816 = vpack.c.bf16 %v794, %v794
  %v817 = vpack.c.bf16 %v795, %v795
  %v818 = vpack.c.bf16 %v796, %v796
  %v819 = vpack.c.bf16 %v797, %v797
  %v820 = vpack.c.bf16 %v798, %v798
  %v821 = vpack.c.bf16 %v799, %v799
  %v822 = vpack.c.bf16 %v800, %v800
  %v823 = vpack.c.bf16 %v801, %v801
  %v824 = vpack.c.bf16 %v802, %v802
  %v825 = vpack.c.bf16 %v803, %v803
  %v826 = vpack.c.bf16 %v804, %v804
  %v827 = vpack.c.bf16 %v805, %v805
  %v828 = vpack.c.bf16 %v806, %v806
  %v829 = vpack.c.bf16 %v807, %v807
  %v830 = vpack.c.bf16 %v808, %v808
  %v831 = vpack.c.bf16 %v809, %v809
  %v832 = vpack.c.bf16 %v810, %v810
  %v833 = vpack.c.bf16 %v811, %v811
  %v834 = vpack.c.bf16 %v812, %v812
  %v835 = vpack.c.bf16 %v813, %v813
  %v836 = vpack.c.bf16 %v814, %v814
  %v837 = vpack.c.bf16 %v815, %v815
  %838 = vst [vmem:[%s3] sm:$0xf] %v816
  %839 = vst [vmem:[%s3 + $0x4] sm:$0xf] %v817
  %840 = vst [vmem:[%s3 + $0x8] sm:$0xf] %v818
  %841 = vst [vmem:[%s3 + $0xc] sm:$0xf] %v819
  %842 = vst [vmem:[%s3 + $0x10] sm:$0xf] %v820
  %843 = vst [vmem:[%s3 + $0x14] sm:$0xf] %v821
  %844 = vst [vmem:[%s3 + $0x18] sm:$0xf] %v822
  %845 = vst [vmem:[%s3 + $0x1c] sm:$0xf] %v823
  %846 = vst [vmem:[%s3 + $0x20] sm:$0xf] %v824
  %847 = vst [vmem:[%s3 + $0x24] sm:$0xf] %v825
  %848 = vst [vmem:[%s3 + $0x28] sm:$0xf] %v826
  %849 = vst [vmem:[%s3 + $0x2c] sm:$0xf] %v827
  %850 = vst [vmem:[%s3 + $0x30] sm:$0xf] %v828
  %851 = vst [vmem:[%s3 + $0x34] sm:$0xf] %v829
  %852 = vst [vmem:[%s3 + $0x38] sm:$0xf] %v830
  %853 = vst [vmem:[%s3 + $0x3c] sm:$0xf] %v831
  %854 = vst [vmem:[%s3 + $0x40] sm:$0xf] %v832
  %855 = vst [vmem:[%s3 + $0x44] sm:$0xf] %v833
  %856 = vst [vmem:[%s3 + $0x48] sm:$0xf] %v834
  %857 = vst [vmem:[%s3 + $0x4c] sm:$0xf] %v835
  %858 = vst [vmem:[%s3 + $0x50] sm:$0xf] %v836
  %859 = vst [vmem:[%s3 + $0x54] sm:$0xf] %v837
  // Predicated region
  $region14: #{cnn_forward.5} parent=0 // pred_check
    _
  $region15: #{cnn_forward.5} parent=0 // pred_check_branch
    %861 = sbr.rel (0) target = $region17
  $region16: #{cnn_forward.5} parent=0 // pred_region
    _
  $region17: #{cnn_forward.5} parent=0 // pred_fallthru
    _
  // Predicated region
  $region18: #{cnn_forward.5} parent=0 // pred_check
    _
  $region19: #{cnn_forward.5} parent=0 // pred_check_branch
    %863 = sbr.rel (0) target = $region21
  $region20: #{cnn_forward.5} parent=0 // pred_region
    _
  $region21: #{cnn_forward.5} parent=0 // pred_fallthru
    _

// kernel: cnn_forward.6
$region0: #{cnn_forward.6}
  #allocation0 [shape = 'u32[]', space=smem, size = 0x4, offset = 0x4, fixed_abs, tag = 'smem constant byte address 0x4 - core index']
  #allocation1 [shape = 'u32[72,128]{1,0:T(1,128)}', space=vmem, size = 0x9000, scoped, tag = 'internal scratch']
  %s0 = inlined_call_operand.vmem [shape: bf16[112,640], index: 0, kind: input, shape index: {}]
  %s1 = inlined_call_operand.vmem [shape: bf16[640,128], index: 1, kind: input, shape index: {}]
  %s2 = inlined_call_operand.vmem [shape: f32[1,128], index: 2, kind: input, shape index: {}]
  %s3 = inlined_call_operand.vmem [shape: bf16[112,128], index: 3, kind: output, shape index: {}]
  %s4 = sld [smem:[#allocation0]]
  $region22: #{cnn_forward.6} parent=0
    _
  %s6 = ssub.s32 1, %s4
  %s7 = scalar_select 0, %s6, %s4
  // Predicated region
  $region2: #{cnn_forward.6} parent=0 // pred_check
    _
  $region3: #{cnn_forward.6} parent=0 // pred_check_branch
    %9 = sbr.rel (0) target = $region5
  $region4: #{cnn_forward.6} parent=0 // pred_region
    _
  $region5: #{cnn_forward.6} parent=0 // pred_fallthru
    _
  // Predicated region
  $region6: #{cnn_forward.6} parent=0 // pred_check
    _
  $region7: #{cnn_forward.6} parent=0 // pred_check_branch
    %11 = sbr.rel (0) target = $region9
  $region8: #{cnn_forward.6} parent=0 // pred_region
    _
  $region9: #{cnn_forward.6} parent=0 // pred_fallthru
    _
  // Predicated region
  $region10: #{cnn_forward.6} parent=0 // pred_check
    _
  $region11: #{cnn_forward.6} parent=0 // pred_check_branch
    %13 = sbr.rel (0) target = $region13
  $region12: #{cnn_forward.6} parent=0 // pred_region
    _
  $region13: #{cnn_forward.6} parent=0 // pred_fallthru
    _
  %v14 = vld [vmem:[%s0] sm:$0xff]
  %v15 = vld [vmem:[%s0 + $0x8] sm:$0xff]
  %v16 = vld [vmem:[%s0 + $0x10] sm:$0xf]
  %v17 = vld [vmem:[%s0 + $0x14] sm:$0xff]
  %v18 = vld [vmem:[%s0 + $0x1c] sm:$0xff]
  %v19 = vld [vmem:[%s0 + $0x24] sm:$0xf]
  %v20 = vld [vmem:[%s0 + $0x28] sm:$0xff]
  %v21 = vld [vmem:[%s0 + $0x30] sm:$0xff]
  %v22 = vld [vmem:[%s0 + $0x38] sm:$0xf]
  %v23 = vld [vmem:[%s0 + $0x3c] sm:$0xff]
  %v24 = vld [vmem:[%s0 + $0x44] sm:$0xff]
  %v25 = vld [vmem:[%s0 + $0x4c] sm:$0xf]
  %v26 = vld [vmem:[%s0 + $0x50] sm:$0xff]
  %v27 = vld [vmem:[%s0 + $0x58] sm:$0xff]
  %v28 = vld [vmem:[%s0 + $0x60] sm:$0xf]
  %v29 = vld [vmem:[%s0 + $0x64] sm:$0xff]
  %v30 = vld [vmem:[%s0 + $0x6c] sm:$0xff]
  %v31 = vld [vmem:[%s0 + $0x74] sm:$0xf]
  %v32 = vld [vmem:[%s0 + $0x78] sm:$0xff]
  %v33 = vld [vmem:[%s0 + $0x80] sm:$0xff]
  %v34 = vld [vmem:[%s0 + $0x88] sm:$0xf]
  %v35 = vld [vmem:[%s0 + $0x8c] sm:$0xff]
  %v36 = vld [vmem:[%s0 + $0x94] sm:$0xff]
  %v37 = vld [vmem:[%s0 + $0x9c] sm:$0xf]
  %v38 = vld [vmem:[%s0 + $0xa0] sm:$0xff]
  %v39 = vld [vmem:[%s0 + $0xa8] sm:$0xff]
  %v40 = vld [vmem:[%s0 + $0xb0] sm:$0xf]
  %v41 = vld [vmem:[%s0 + $0xb4] sm:$0xff]
  %v42 = vld [vmem:[%s0 + $0xbc] sm:$0xff]
  %v43 = vld [vmem:[%s0 + $0xc4] sm:$0xf]
  %v44 = vld [vmem:[%s0 + $0xc8] sm:$0xff]
  %v45 = vld [vmem:[%s0 + $0xd0] sm:$0xff]
  %v46 = vld [vmem:[%s0 + $0xd8] sm:$0xf]
  %v47 = vld [vmem:[%s0 + $0xdc] sm:$0xff]
  %v48 = vld [vmem:[%s0 + $0xe4] sm:$0xff]
  %v49 = vld [vmem:[%s0 + $0xec] sm:$0xf]
  %v50 = vld [vmem:[%s0 + $0xf0] sm:$0xff]
  %v51 = vld [vmem:[%s0 + $0xf8] sm:$0xff]
  %v52 = vld [vmem:[%s0 + $0x100] sm:$0xf]
  %v53 = vld [vmem:[%s0 + $0x104] sm:$0xff]
  %v54 = vld [vmem:[%s0 + $0x10c] sm:$0xff]
  %v55 = vld [vmem:[%s0 + $0x114] sm:$0xf]
  %v56 = vld [vmem:[%s1] sm:$0xf]
  %v57 = vld [vmem:[%s1 + $0x4] sm:$0xf]
  %v58 = vld [vmem:[%s1 + $0x8] sm:$0xf]
  %v59 = vld [vmem:[%s1 + $0xc] sm:$0xf]
  %v60 = vld [vmem:[%s1 + $0x10] sm:$0xf]
  %v61 = vld [vmem:[%s1 + $0x14] sm:$0xf]
  %v62 = vld [vmem:[%s1 + $0x18] sm:$0xf]
  %v63 = vld [vmem:[%s1 + $0x1c] sm:$0xf]
  %v64 = vld [vmem:[%s1 + $0x20] sm:$0xf]
  %v65 = vld [vmem:[%s1 + $0x24] sm:$0xf]
  %v66 = vld [vmem:[%s1 + $0x28] sm:$0xf]
  %v67 = vld [vmem:[%s1 + $0x2c] sm:$0xf]
  %v68 = vld [vmem:[%s1 + $0x30] sm:$0xf]
  %v69 = vld [vmem:[%s1 + $0x34] sm:$0xf]
  %v70 = vld [vmem:[%s1 + $0x38] sm:$0xf]
  %v71 = vld [vmem:[%s1 + $0x3c] sm:$0xf]
  %v72 = vld [vmem:[%s1 + $0x40] sm:$0xf]
  %v73 = vld [vmem:[%s1 + $0x44] sm:$0xf]
  %v74 = vld [vmem:[%s1 + $0x48] sm:$0xf]
  %v75 = vld [vmem:[%s1 + $0x4c] sm:$0xf]
  %v76 = vld [vmem:[%s1 + $0x50] sm:$0xf]
  %v77 = vld [vmem:[%s1 + $0x54] sm:$0xf]
  %v78 = vld [vmem:[%s1 + $0x58] sm:$0xf]
  %v79 = vld [vmem:[%s1 + $0x5c] sm:$0xf]
  %v80 = vld [vmem:[%s1 + $0x60] sm:$0xf]
  %v81 = vld [vmem:[%s1 + $0x64] sm:$0xf]
  %v82 = vld [vmem:[%s1 + $0x68] sm:$0xf]
  %v83 = vld [vmem:[%s1 + $0x6c] sm:$0xf]
  %v84 = vld [vmem:[%s1 + $0x70] sm:$0xf]
  %v85 = vld [vmem:[%s1 + $0x74] sm:$0xf]
  %v86 = vld [vmem:[%s1 + $0x78] sm:$0xf]
  %v87 = vld [vmem:[%s1 + $0x7c] sm:$0xf]
  %v88 = vld [vmem:[%s1 + $0x80] sm:$0xf]
  %v89 = vld [vmem:[%s1 + $0x84] sm:$0xf]
  %v90 = vld [vmem:[%s1 + $0x88] sm:$0xf]
  %v91 = vld [vmem:[%s1 + $0x8c] sm:$0xf]
  %v92 = vld [vmem:[%s1 + $0x90] sm:$0xf]
  %v93 = vld [vmem:[%s1 + $0x94] sm:$0xf]
  %v94 = vld [vmem:[%s1 + $0x98] sm:$0xf]
  %v95 = vld [vmem:[%s1 + $0x9c] sm:$0xf]
  %v96 = vld [vmem:[%s1 + $0xa0] sm:$0xf]
  %v97 = vld [vmem:[%s1 + $0xa4] sm:$0xf]
  %v98 = vld [vmem:[%s1 + $0xa8] sm:$0xf]
  %v99 = vld [vmem:[%s1 + $0xac] sm:$0xf]
  %v100 = vld [vmem:[%s1 + $0xb0] sm:$0xf]
  %v101 = vld [vmem:[%s1 + $0xb4] sm:$0xf]
  %v102 = vld [vmem:[%s1 + $0xb8] sm:$0xf]
  %v103 = vld [vmem:[%s1 + $0xbc] sm:$0xf]
  %v104 = vld [vmem:[%s1 + $0xc0] sm:$0xf]
  %v105 = vld [vmem:[%s1 + $0xc4] sm:$0xf]
  %v106 = vld [vmem:[%s1 + $0xc8] sm:$0xf]
  %v107 = vld [vmem:[%s1 + $0xcc] sm:$0xf]
  %v108 = vld [vmem:[%s1 + $0xd0] sm:$0xf]
  %v109 = vld [vmem:[%s1 + $0xd4] sm:$0xf]
  %v110 = vld [vmem:[%s1 + $0xd8] sm:$0xf]
  %v111 = vld [vmem:[%s1 + $0xdc] sm:$0xf]
  %v112 = vld [vmem:[%s1 + $0xe0] sm:$0xf]
  %v113 = vld [vmem:[%s1 + $0xe4] sm:$0xf]
  %v114 = vld [vmem:[%s1 + $0xe8] sm:$0xf]
  %v115 = vld [vmem:[%s1 + $0xec] sm:$0xf]
  %v116 = vld [vmem:[%s1 + $0xf0] sm:$0xf]
  %v117 = vld [vmem:[%s1 + $0xf4] sm:$0xf]
  %v118 = vld [vmem:[%s1 + $0xf8] sm:$0xf]
  %v119 = vld [vmem:[%s1 + $0xfc] sm:$0xf]
  %v120 = vld [vmem:[%s1 + $0x100] sm:$0xf]
  %v121 = vld [vmem:[%s1 + $0x104] sm:$0xf]
  %v122 = vld [vmem:[%s1 + $0x108] sm:$0xf]
  %v123 = vld [vmem:[%s1 + $0x10c] sm:$0xf]
  %v124 = vld [vmem:[%s1 + $0x110] sm:$0xf]
  %v125 = vld [vmem:[%s1 + $0x114] sm:$0xf]
  %v126 = vld [vmem:[%s1 + $0x118] sm:$0xf]
  %v127 = vld [vmem:[%s1 + $0x11c] sm:$0xf]
  %v128 = vld [vmem:[%s1 + $0x120] sm:$0xf]
  %v129 = vld [vmem:[%s1 + $0x124] sm:$0xf]
  %v130 = vld [vmem:[%s1 + $0x128] sm:$0xf]
  %v131 = vld [vmem:[%s1 + $0x12c] sm:$0xf]
  %v132 = vld [vmem:[%s1 + $0x130] sm:$0xf]
  %v133 = vld [vmem:[%s1 + $0x134] sm:$0xf]
  %v134 = vld [vmem:[%s1 + $0x138] sm:$0xf]
  %v135 = vld [vmem:[%s1 + $0x13c] sm:$0xf]
  %v136 = vld [vmem:[%s2] sm:$0x1]
  %v138 = vperm.slane %v136, 0
  %v182 = vunpack.c.l.b16 %v14
  %v183 = vunpack.c.h.b16 %v14
  %v184 = vunpack.c.l.b16 %v15
  %v185 = vunpack.c.h.b16 %v15
  %v186 = vunpack.c.l.b16 %v16
  %v187 = vunpack.c.l.b16 %v17
  %v188 = vunpack.c.h.b16 %v17
  %v189 = vunpack.c.l.b16 %v18
  %v190 = vunpack.c.h.b16 %v18
  %v191 = vunpack.c.l.b16 %v19
  %v192 = vunpack.c.l.b16 %v20
  %v193 = vunpack.c.h.b16 %v20
  %v194 = vunpack.c.l.b16 %v21
  %v195 = vunpack.c.h.b16 %v21
  %v196 = vunpack.c.l.b16 %v22
  %v197 = vunpack.c.l.b16 %v23
  %v198 = vunpack.c.h.b16 %v23
  %v199 = vunpack.c.l.b16 %v24
  %v200 = vunpack.c.h.b16 %v24
  %v201 = vunpack.c.l.b16 %v25
  %v202 = vunpack.c.l.b16 %v26
  %v203 = vunpack.c.h.b16 %v26
  %v204 = vunpack.c.l.b16 %v27
  %v205 = vunpack.c.h.b16 %v27
  %v206 = vunpack.c.l.b16 %v28
  %v207 = vunpack.c.l.b16 %v29
  %v208 = vunpack.c.h.b16 %v29
  %v209 = vunpack.c.l.b16 %v30
  %v210 = vunpack.c.h.b16 %v30
  %v211 = vunpack.c.l.b16 %v31
  %v212 = vunpack.c.l.b16 %v32
  %v213 = vunpack.c.h.b16 %v32
  %v214 = vunpack.c.l.b16 %v33
  %v215 = vunpack.c.h.b16 %v33
  %v216 = vunpack.c.l.b16 %v34
  %v217 = vunpack.c.l.b16 %v35
  %v218 = vunpack.c.h.b16 %v35
  %v219 = vunpack.c.l.b16 %v36
  %v220 = vunpack.c.h.b16 %v36
  %v221 = vunpack.c.l.b16 %v37
  %v222 = vunpack.c.l.b16 %v38
  %v223 = vunpack.c.h.b16 %v38
  %v224 = vunpack.c.l.b16 %v39
  %v225 = vunpack.c.h.b16 %v39
  %v226 = vunpack.c.l.b16 %v40
  %v227 = vunpack.c.l.b16 %v41
  %v228 = vunpack.c.h.b16 %v41
  %v229 = vunpack.c.l.b16 %v42
  %v230 = vunpack.c.h.b16 %v42
  %v231 = vunpack.c.l.b16 %v43
  %v232 = vunpack.c.l.b16 %v44
  %v233 = vunpack.c.h.b16 %v44
  %v234 = vunpack.c.l.b16 %v45
  %v235 = vunpack.c.h.b16 %v45
  %v236 = vunpack.c.l.b16 %v46
  %v237 = vunpack.c.l.b16 %v47
  %v238 = vunpack.c.h.b16 %v47
  %v239 = vunpack.c.l.b16 %v48
  %v240 = vunpack.c.h.b16 %v48
  %v241 = vunpack.c.l.b16 %v49
  %v242 = vunpack.c.l.b16 %v50
  %v243 = vunpack.c.h.b16 %v50
  %v244 = vunpack.c.l.b16 %v51
  %v245 = vunpack.c.h.b16 %v51
  %v246 = vunpack.c.l.b16 %v52
  %v247 = vunpack.c.l.b16 %v53
  %v248 = vunpack.c.h.b16 %v53
  %v249 = vunpack.c.l.b16 %v54
  %v250 = vunpack.c.h.b16 %v54
  %v251 = vunpack.c.l.b16 %v55
  %v252 = vpack.c.b16 %v187, %v182
  %v253 = vpack.c.b16 %v188, %v183
  %v254 = vpack.c.b16 %v189, %v184
  %v255 = vpack.c.b16 %v190, %v185
  %v256 = vpack.c.b16 %v191, %v186
  %v257 = vpack.c.b16 %v197, %v192
  %v258 = vpack.c.b16 %v198, %v193
  %v259 = vpack.c.b16 %v199, %v194
  %v260 = vpack.c.b16 %v200, %v195
  %v261 = vpack.c.b16 %v201, %v196
  %v262 = vpack.c.b16 %v207, %v202
  %v263 = vpack.c.b16 %v208, %v203
  %v264 = vpack.c.b16 %v209, %v204
  %v265 = vpack.c.b16 %v210, %v205
  %v266 = vpack.c.b16 %v211, %v206
  %v267 = vpack.c.b16 %v217, %v212
  %v268 = vpack.c.b16 %v218, %v213
  %v269 = vpack.c.b16 %v219, %v214
  %v270 = vpack.c.b16 %v220, %v215
  %v271 = vpack.c.b16 %v221, %v216
  %v272 = vpack.c.b16 %v227, %v222
  %v273 = vpack.c.b16 %v228, %v223
  %v274 = vpack.c.b16 %v229, %v224
  %v275 = vpack.c.b16 %v230, %v225
  %v276 = vpack.c.b16 %v231, %v226
  %v277 = vpack.c.b16 %v237, %v232
  %v278 = vpack.c.b16 %v238, %v233
  %v279 = vpack.c.b16 %v239, %v234
  %v280 = vpack.c.b16 %v240, %v235
  %v281 = vpack.c.b16 %v241, %v236
  %v282 = vpack.c.b16 %v247, %v242
  %v283 = vpack.c.b16 %v248, %v243
  %v284 = vpack.c.b16 %v249, %v244
  %v285 = vpack.c.b16 %v250, %v245
  %v286 = vpack.c.b16 %v251, %v246
  %v402 = vunpack.c.l.b16 %v56
  %v403 = vunpack.c.l.b16 %v57
  %v404 = vunpack.c.l.b16 %v58
  %v405 = vunpack.c.l.b16 %v59
  %v406 = vunpack.c.l.b16 %v60
  %v407 = vunpack.c.l.b16 %v61
  %v408 = vunpack.c.l.b16 %v62
  %v409 = vunpack.c.l.b16 %v63
  %v410 = vunpack.c.l.b16 %v64
  %v411 = vunpack.c.l.b16 %v65
  %v412 = vunpack.c.l.b16 %v66
  %v413 = vunpack.c.l.b16 %v67
  %v414 = vunpack.c.l.b16 %v68
  %v415 = vunpack.c.l.b16 %v69
  %v416 = vunpack.c.l.b16 %v70
  %v417 = vunpack.c.l.b16 %v71
  %v418 = vunpack.c.l.b16 %v72
  %v419 = vunpack.c.l.b16 %v73
  %v420 = vunpack.c.l.b16 %v74
  %v421 = vunpack.c.l.b16 %v75
  %v422 = vunpack.c.l.b16 %v76
  %v423 = vunpack.c.l.b16 %v77
  %v424 = vunpack.c.l.b16 %v78
  %v425 = vunpack.c.l.b16 %v79
  %v426 = vunpack.c.l.b16 %v80
  %v427 = vunpack.c.l.b16 %v81
  %v428 = vunpack.c.l.b16 %v82
  %v429 = vunpack.c.l.b16 %v83
  %v430 = vunpack.c.l.b16 %v84
  %v431 = vunpack.c.l.b16 %v85
  %v432 = vunpack.c.l.b16 %v86
  %v433 = vunpack.c.l.b16 %v87
  %v434 = vunpack.c.l.b16 %v88
  %v435 = vunpack.c.l.b16 %v89
  %v436 = vunpack.c.l.b16 %v90
  %v437 = vunpack.c.l.b16 %v91
  %v438 = vunpack.c.l.b16 %v92
  %v439 = vunpack.c.l.b16 %v93
  %v440 = vunpack.c.l.b16 %v94
  %v441 = vunpack.c.l.b16 %v95
  %v442 = vunpack.c.l.b16 %v96
  %v443 = vunpack.c.l.b16 %v97
  %v444 = vunpack.c.l.b16 %v98
  %v445 = vunpack.c.l.b16 %v99
  %v446 = vunpack.c.l.b16 %v100
  %v447 = vunpack.c.l.b16 %v101
  %v448 = vunpack.c.l.b16 %v102
  %v449 = vunpack.c.l.b16 %v103
  %v450 = vunpack.c.l.b16 %v104
  %v451 = vunpack.c.l.b16 %v105
  %v452 = vunpack.c.l.b16 %v106
  %v453 = vunpack.c.l.b16 %v107
  %v454 = vunpack.c.l.b16 %v108
  %v455 = vunpack.c.l.b16 %v109
  %v456 = vunpack.c.l.b16 %v110
  %v457 = vunpack.c.l.b16 %v111
  %v458 = vunpack.c.l.b16 %v112
  %v459 = vunpack.c.l.b16 %v113
  %v460 = vunpack.c.l.b16 %v114
  %v461 = vunpack.c.l.b16 %v115
  %v462 = vunpack.c.l.b16 %v116
  %v463 = vunpack.c.l.b16 %v117
  %v464 = vunpack.c.l.b16 %v118
  %v465 = vunpack.c.l.b16 %v119
  %v466 = vunpack.c.l.b16 %v120
  %v467 = vunpack.c.l.b16 %v121
  %v468 = vunpack.c.l.b16 %v122
  %v469 = vunpack.c.l.b16 %v123
  %v470 = vunpack.c.l.b16 %v124
  %v471 = vunpack.c.l.b16 %v125
  %v472 = vunpack.c.l.b16 %v126
  %v473 = vunpack.c.l.b16 %v127
  %v474 = vunpack.c.l.b16 %v128
  %v475 = vunpack.c.l.b16 %v129
  %v476 = vunpack.c.l.b16 %v130
  %v477 = vunpack.c.l.b16 %v131
  %v478 = vunpack.c.l.b16 %v132
  %v479 = vunpack.c.l.b16 %v133
  %v480 = vunpack.c.l.b16 %v134
  %v481 = vunpack.c.l.b16 %v135
  %v482 = vpack.c.b16 %v403, %v402
  %v483 = vpack.c.b16 %v405, %v404
  %v484 = vpack.c.b16 %v407, %v406
  %v485 = vpack.c.b16 %v409, %v408
  %v486 = vpack.c.b16 %v411, %v410
  %v487 = vpack.c.b16 %v413, %v412
  %v488 = vpack.c.b16 %v415, %v414
  %v489 = vpack.c.b16 %v417, %v416
  %v490 = vpack.c.b16 %v419, %v418
  %v491 = vpack.c.b16 %v421, %v420
  %v492 = vpack.c.b16 %v423, %v422
  %v493 = vpack.c.b16 %v425, %v424
  %v494 = vpack.c.b16 %v427, %v426
  %v495 = vpack.c.b16 %v429, %v428
  %v496 = vpack.c.b16 %v431, %v430
  %v497 = vpack.c.b16 %v433, %v432
  %v498 = vpack.c.b16 %v435, %v434
  %v499 = vpack.c.b16 %v437, %v436
  %v500 = vpack.c.b16 %v439, %v438
  %v501 = vpack.c.b16 %v441, %v440
  %v502 = vpack.c.b16 %v443, %v442
  %v503 = vpack.c.b16 %v445, %v444
  %v504 = vpack.c.b16 %v447, %v446
  %v505 = vpack.c.b16 %v449, %v448
  %v506 = vpack.c.b16 %v451, %v450
  %v507 = vpack.c.b16 %v453, %v452
  %v508 = vpack.c.b16 %v455, %v454
  %v509 = vpack.c.b16 %v457, %v456
  %v510 = vpack.c.b16 %v459, %v458
  %v511 = vpack.c.b16 %v461, %v460
  %v512 = vpack.c.b16 %v463, %v462
  %v513 = vpack.c.b16 %v465, %v464
  %v514 = vpack.c.b16 %v467, %v466
  %v515 = vpack.c.b16 %v469, %v468
  %v516 = vpack.c.b16 %v471, %v470
  %v517 = vpack.c.b16 %v473, %v472
  %v518 = vpack.c.b16 %v475, %v474
  %v519 = vpack.c.b16 %v477, %v476
  %v520 = vpack.c.b16 %v479, %v478
  %v521 = vpack.c.b16 %v481, %v480
  %562 = vmatpush.bf16.msra.mxu0 %v489
  %563 = vmatpush.bf16.msra.mxu0 %v488
  %564 = vmatpush.bf16.msra.mxu0 %v487
  %565 = vmatpush.bf16.msra.mxu0 %v486
  %566 = vmatpush.bf16.msra.mxu0 %v485
  %567 = vmatpush.bf16.msra.mxu0 %v484
  %568 = vmatpush.bf16.msra.mxu0 %v483
  %569 = vmatpush.bf16.msra.mxu0 %v482
  %570 = vmatmul.bf16.gmra.mxu0 %v252
  %v571 = vpop.f32.mrf.mxu0
  %v572 = vadd.f32 %v138, %v571
  %v573 = vpop.f32.mrf.mxu0
  %v574 = vadd.f32 %v138, %v573
  %575 = vmatmul.bf16.gmra.mxu0 %v257
  %v576 = vpop.f32.mrf.mxu0
  %v577 = vadd.f32 %v138, %v576
  %v578 = vpop.f32.mrf.mxu0
  %v579 = vadd.f32 %v138, %v578
  %580 = vmatmul.bf16.gmra.mxu0 %v262
  %v581 = vpop.f32.mrf.mxu0
  %v582 = vadd.f32 %v138, %v581
  %v583 = vpop.f32.mrf.mxu0
  %v584 = vadd.f32 %v138, %v583
  %585 = vmatmul.bf16.gmra.mxu0 %v267
  %v586 = vpop.f32.mrf.mxu0
  %v587 = vadd.f32 %v138, %v586
  %v588 = vpop.f32.mrf.mxu0
  %v589 = vadd.f32 %v138, %v588
  %590 = vmatmul.bf16.gmra.mxu0 %v272
  %v591 = vpop.f32.mrf.mxu0
  %v592 = vadd.f32 %v138, %v591
  %v593 = vpop.f32.mrf.mxu0
  %v594 = vadd.f32 %v138, %v593
  %595 = vmatmul.bf16.gmra.mxu0 %v277
  %v596 = vpop.f32.mrf.mxu0
  %v597 = vadd.f32 %v138, %v596
  %v598 = vpop.f32.mrf.mxu0
  %v599 = vadd.f32 %v138, %v598
  %600 = vmatmul.bf16.gmra.mxu0 %v282
  %v601 = vpop.f32.mrf.mxu0
  %v602 = vadd.f32 %v138, %v601
  %v603 = vpop.f32.mrf.mxu0
  %v604 = vadd.f32 %v138, %v603
  %605 = vdwg.mxu0
  %606 = vmatpush.bf16.msra.mxu0 %v497
  %607 = vmatpush.bf16.msra.mxu0 %v496
  %608 = vmatpush.bf16.msra.mxu0 %v495
  %609 = vmatpush.bf16.msra.mxu0 %v494
  %610 = vmatpush.bf16.msra.mxu0 %v493
  %611 = vmatpush.bf16.msra.mxu0 %v492
  %612 = vmatpush.bf16.msra.mxu0 %v491
  %613 = vmatpush.bf16.msra.mxu0 %v490
  %614 = vmatmul.bf16.gmra.mxu0 %v253
  %v615 = vpop.f32.mrf.mxu0
  %v616 = vadd.f32 %v572, %v615
  %v617 = vpop.f32.mrf.mxu0
  %v618 = vadd.f32 %v574, %v617
  %619 = vmatmul.bf16.gmra.mxu0 %v258
  %v620 = vpop.f32.mrf.mxu0
  %v621 = vadd.f32 %v577, %v620
  %v622 = vpop.f32.mrf.mxu0
  %v623 = vadd.f32 %v579, %v622
  %624 = vmatmul.bf16.gmra.mxu0 %v263
  %v625 = vpop.f32.mrf.mxu0
  %v626 = vadd.f32 %v582, %v625
  %v627 = vpop.f32.mrf.mxu0
  %v628 = vadd.f32 %v584, %v627
  %629 = vmatmul.bf16.gmra.mxu0 %v268
  %v630 = vpop.f32.mrf.mxu0
  %v631 = vadd.f32 %v587, %v630
  %v632 = vpop.f32.mrf.mxu0
  %v633 = vadd.f32 %v589, %v632
  %634 = vmatmul.bf16.gmra.mxu0 %v273
  %v635 = vpop.f32.mrf.mxu0
  %v636 = vadd.f32 %v592, %v635
  %v637 = vpop.f32.mrf.mxu0
  %v638 = vadd.f32 %v594, %v637
  %639 = vmatmul.bf16.gmra.mxu0 %v278
  %v640 = vpop.f32.mrf.mxu0
  %v641 = vadd.f32 %v597, %v640
  %v642 = vpop.f32.mrf.mxu0
  %v643 = vadd.f32 %v599, %v642
  %644 = vmatmul.bf16.gmra.mxu0 %v283
  %v645 = vpop.f32.mrf.mxu0
  %v646 = vadd.f32 %v602, %v645
  %v647 = vpop.f32.mrf.mxu0
  %v648 = vadd.f32 %v604, %v647
  %649 = vdwg.mxu0
  %650 = vmatpush.bf16.msra.mxu0 %v505
  %651 = vmatpush.bf16.msra.mxu0 %v504
  %652 = vmatpush.bf16.msra.mxu0 %v503
  %653 = vmatpush.bf16.msra.mxu0 %v502
  %654 = vmatpush.bf16.msra.mxu0 %v501
  %655 = vmatpush.bf16.msra.mxu0 %v500
  %656 = vmatpush.bf16.msra.mxu0 %v499
  %657 = vmatpush.bf16.msra.mxu0 %v498
  %658 = vmatmul.bf16.gmra.mxu0 %v254
  %v659 = vpop.f32.mrf.mxu0
  %v660 = vadd.f32 %v616, %v659
  %v661 = vpop.f32.mrf.mxu0
  %v662 = vadd.f32 %v618, %v661
  %663 = vmatmul.bf16.gmra.mxu0 %v259
  %v664 = vpop.f32.mrf.mxu0
  %v665 = vadd.f32 %v621, %v664
  %v666 = vpop.f32.mrf.mxu0
  %v667 = vadd.f32 %v623, %v666
  %668 = vmatmul.bf16.gmra.mxu0 %v264
  %v669 = vpop.f32.mrf.mxu0
  %v670 = vadd.f32 %v626, %v669
  %v671 = vpop.f32.mrf.mxu0
  %v672 = vadd.f32 %v628, %v671
  %673 = vmatmul.bf16.gmra.mxu0 %v269
  %v674 = vpop.f32.mrf.mxu0
  %v675 = vadd.f32 %v631, %v674
  %v676 = vpop.f32.mrf.mxu0
  %v677 = vadd.f32 %v633, %v676
  %678 = vmatmul.bf16.gmra.mxu0 %v274
  %v679 = vpop.f32.mrf.mxu0
  %v680 = vadd.f32 %v636, %v679
  %v681 = vpop.f32.mrf.mxu0
  %v682 = vadd.f32 %v638, %v681
  %683 = vmatmul.bf16.gmra.mxu0 %v279
  %v684 = vpop.f32.mrf.mxu0
  %v685 = vadd.f32 %v641, %v684
  %v686 = vpop.f32.mrf.mxu0
  %v687 = vadd.f32 %v643, %v686
  %688 = vmatmul.bf16.gmra.mxu0 %v284
  %v689 = vpop.f32.mrf.mxu0
  %v690 = vadd.f32 %v646, %v689
  %v691 = vpop.f32.mrf.mxu0
  %v692 = vadd.f32 %v648, %v691
  %693 = vdwg.mxu0
  %694 = vmatpush.bf16.msra.mxu0 %v513
  %695 = vmatpush.bf16.msra.mxu0 %v512
  %696 = vmatpush.bf16.msra.mxu0 %v511
  %697 = vmatpush.bf16.msra.mxu0 %v510
  %698 = vmatpush.bf16.msra.mxu0 %v509
  %699 = vmatpush.bf16.msra.mxu0 %v508
  %700 = vmatpush.bf16.msra.mxu0 %v507
  %701 = vmatpush.bf16.msra.mxu0 %v506
  %702 = vmatmul.bf16.gmra.mxu0 %v255
  %v703 = vpop.f32.mrf.mxu0
  %v704 = vadd.f32 %v660, %v703
  %v705 = vpop.f32.mrf.mxu0
  %v706 = vadd.f32 %v662, %v705
  %707 = vmatmul.bf16.gmra.mxu0 %v260
  %v708 = vpop.f32.mrf.mxu0
  %v709 = vadd.f32 %v665, %v708
  %v710 = vpop.f32.mrf.mxu0
  %v711 = vadd.f32 %v667, %v710
  %712 = vmatmul.bf16.gmra.mxu0 %v265
  %v713 = vpop.f32.mrf.mxu0
  %v714 = vadd.f32 %v670, %v713
  %v715 = vpop.f32.mrf.mxu0
  %v716 = vadd.f32 %v672, %v715
  %717 = vmatmul.bf16.gmra.mxu0 %v270
  %v718 = vpop.f32.mrf.mxu0
  %v719 = vadd.f32 %v675, %v718
  %v720 = vpop.f32.mrf.mxu0
  %v721 = vadd.f32 %v677, %v720
  %722 = vmatmul.bf16.gmra.mxu0 %v275
  %v723 = vpop.f32.mrf.mxu0
  %v724 = vadd.f32 %v680, %v723
  %v725 = vpop.f32.mrf.mxu0
  %v726 = vadd.f32 %v682, %v725
  %727 = vmatmul.bf16.gmra.mxu0 %v280
  %v728 = vpop.f32.mrf.mxu0
  %v729 = vadd.f32 %v685, %v728
  %v730 = vpop.f32.mrf.mxu0
  %v731 = vadd.f32 %v687, %v730
  %732 = vmatmul.bf16.gmra.mxu0 %v285
  %v733 = vpop.f32.mrf.mxu0
  %v734 = vadd.f32 %v690, %v733
  %v735 = vpop.f32.mrf.mxu0
  %v736 = vadd.f32 %v692, %v735
  %737 = vdwg.mxu0
  %738 = vmatpush.bf16.msra.mxu0 %v521
  %739 = vmatpush.bf16.msra.mxu0 %v520
  %740 = vmatpush.bf16.msra.mxu0 %v519
  %741 = vmatpush.bf16.msra.mxu0 %v518
  %742 = vmatpush.bf16.msra.mxu0 %v517
  %743 = vmatpush.bf16.msra.mxu0 %v516
  %744 = vmatpush.bf16.msra.mxu0 %v515
  %745 = vmatpush.bf16.msra.mxu0 %v514
  %746 = vmatmul.bf16.gmra.mxu0 %v256
  %v747 = vpop.f32.mrf.mxu0
  %v748 = vadd.f32 %v704, %v747
  %v749 = vpop.f32.mrf.mxu0
  %v750 = vadd.f32 %v706, %v749
  %751 = vmatmul.bf16.gmra.mxu0 %v261
  %v752 = vpop.f32.mrf.mxu0
  %v753 = vadd.f32 %v709, %v752
  %v754 = vpop.f32.mrf.mxu0
  %v755 = vadd.f32 %v711, %v754
  %756 = vmatmul.bf16.gmra.mxu0 %v266
  %v757 = vpop.f32.mrf.mxu0
  %v758 = vadd.f32 %v714, %v757
  %v759 = vpop.f32.mrf.mxu0
  %v760 = vadd.f32 %v716, %v759
  %761 = vmatmul.bf16.gmra.mxu0 %v271
  %v762 = vpop.f32.mrf.mxu0
  %v763 = vadd.f32 %v719, %v762
  %v764 = vpop.f32.mrf.mxu0
  %v765 = vadd.f32 %v721, %v764
  %766 = vmatmul.bf16.gmra.mxu0 %v276
  %v767 = vpop.f32.mrf.mxu0
  %v768 = vadd.f32 %v724, %v767
  %v769 = vpop.f32.mrf.mxu0
  %v770 = vadd.f32 %v726, %v769
  %771 = vmatmul.bf16.gmra.mxu0 %v281
  %v772 = vpop.f32.mrf.mxu0
  %v773 = vadd.f32 %v729, %v772
  %v774 = vpop.f32.mrf.mxu0
  %v775 = vadd.f32 %v731, %v774
  %776 = vmatmul.bf16.gmra.mxu0 %v286
  %v777 = vpop.f32.mrf.mxu0
  %v778 = vadd.f32 %v734, %v777
  %v779 = vpop.f32.mrf.mxu0
  %v780 = vadd.f32 %v736, %v779
  %781 = vdwg.mxu0
  %v782 = vmax.f32 %v748, 0.0
  %v783 = vmax.f32 %v750, 0.0
  %v784 = vmax.f32 %v753, 0.0
  %v785 = vmax.f32 %v755, 0.0
  %v786 = vmax.f32 %v758, 0.0
  %v787 = vmax.f32 %v760, 0.0
  %v788 = vmax.f32 %v763, 0.0
  %v789 = vmax.f32 %v765, 0.0
  %v790 = vmax.f32 %v768, 0.0
  %v791 = vmax.f32 %v770, 0.0
  %v792 = vmax.f32 %v773, 0.0
  %v793 = vmax.f32 %v775, 0.0
  %v794 = vmax.f32 %v778, 0.0
  %v795 = vmax.f32 %v780, 0.0
  %v796 = vpack.c.bf16 %v782, %v782
  %v797 = vpack.c.bf16 %v783, %v783
  %v798 = vpack.c.bf16 %v784, %v784
  %v799 = vpack.c.bf16 %v785, %v785
  %v800 = vpack.c.bf16 %v786, %v786
  %v801 = vpack.c.bf16 %v787, %v787
  %v802 = vpack.c.bf16 %v788, %v788
  %v803 = vpack.c.bf16 %v789, %v789
  %v804 = vpack.c.bf16 %v790, %v790
  %v805 = vpack.c.bf16 %v791, %v791
  %v806 = vpack.c.bf16 %v792, %v792
  %v807 = vpack.c.bf16 %v793, %v793
  %v808 = vpack.c.bf16 %v794, %v794
  %v809 = vpack.c.bf16 %v795, %v795
  %810 = vst [vmem:[%s3] sm:$0xf] %v796
  %811 = vst [vmem:[%s3 + $0x4] sm:$0xf] %v797
  %812 = vst [vmem:[%s3 + $0x8] sm:$0xf] %v798
  %813 = vst [vmem:[%s3 + $0xc] sm:$0xf] %v799
  %814 = vst [vmem:[%s3 + $0x10] sm:$0xf] %v800
  %815 = vst [vmem:[%s3 + $0x14] sm:$0xf] %v801
  %816 = vst [vmem:[%s3 + $0x18] sm:$0xf] %v802
  %817 = vst [vmem:[%s3 + $0x1c] sm:$0xf] %v803
  %818 = vst [vmem:[%s3 + $0x20] sm:$0xf] %v804
  %819 = vst [vmem:[%s3 + $0x24] sm:$0xf] %v805
  %820 = vst [vmem:[%s3 + $0x28] sm:$0xf] %v806
  %821 = vst [vmem:[%s3 + $0x2c] sm:$0xf] %v807
  %822 = vst [vmem:[%s3 + $0x30] sm:$0xf] %v808
  %823 = vst [vmem:[%s3 + $0x34] sm:$0xf] %v809
  // Predicated region
  $region14: #{cnn_forward.6} parent=0 // pred_check
    _
  $region15: #{cnn_forward.6} parent=0 // pred_check_branch
    %825 = sbr.rel (0) target = $region17
  $region16: #{cnn_forward.6} parent=0 // pred_region
    _
  $region17: #{cnn_forward.6} parent=0 // pred_fallthru
    _
  // Predicated region
  $region18: #{cnn_forward.6} parent=0 // pred_check
    _
  $region19: #{cnn_forward.6} parent=0 // pred_check_branch
    %827 = sbr.rel (0) target = $region21
  $region20: #{cnn_forward.6} parent=0 // pred_region
    _
  $region21: #{cnn_forward.6} parent=0 // pred_fallthru
    _

// kernel: cnn_forward.7
$region0: #{cnn_forward.7}
  #allocation0 [shape = 'u32[]', space=smem, size = 0x4, offset = 0x4, fixed_abs, tag = 'smem constant byte address 0x4 - core index']
  #allocation1 [shape = 'u32[72,128]{1,0:T(1,128)}', space=vmem, size = 0x9000, scoped, tag = 'internal scratch']
  %s0 = inlined_call_operand.vmem [shape: bf16[16,3200], index: 0, kind: input, shape index: {}]
  %s1 = inlined_call_operand.vmem [shape: bf16[3200,512], index: 1, kind: input, shape index: {}]
  %s2 = inlined_call_operand.vmem [shape: f32[1,512], index: 2, kind: input, shape index: {}]
  %s3 = inlined_call_operand.vmem [shape: bf16[512,128], index: 3, kind: input, shape index: {}]
  %s4 = inlined_call_operand.vmem [shape: f32[1,128], index: 4, kind: input, shape index: {}]
  %s5 = inlined_call_operand.vmem [shape: f32[16,128], index: 5, kind: output, shape index: {}]
  %s6 = sld [smem:[#allocation0]]
  $region30: #{cnn_forward.7} parent=0
    _
  %s8 = ssub.s32 1, %s6
  %s9 = scalar_select 0, %s8, %s6
  // Predicated region
  $region2: #{cnn_forward.7} parent=0 // pred_check
    _
  $region3: #{cnn_forward.7} parent=0 // pred_check_branch
    %11 = sbr.rel (0) target = $region5
  $region4: #{cnn_forward.7} parent=0 // pred_region
    _
  $region5: #{cnn_forward.7} parent=0 // pred_fallthru
    _
  // Predicated region
  $region6: #{cnn_forward.7} parent=0 // pred_check
    _
  $region7: #{cnn_forward.7} parent=0 // pred_check_branch
    %13 = sbr.rel (0) target = $region9
  $region8: #{cnn_forward.7} parent=0 // pred_region
    _
  $region9: #{cnn_forward.7} parent=0 // pred_fallthru
    _
  // Predicated region
  $region10: #{cnn_forward.7} parent=0 // pred_check
    _
  $region11: #{cnn_forward.7} parent=0 // pred_check_branch
    %15 = sbr.rel (0) target = $region13
  $region12: #{cnn_forward.7} parent=0 // pred_region
    _
  $region13: #{cnn_forward.7} parent=0 // pred_fallthru
    _
  // Predicated region
  $region14: #{cnn_forward.7} parent=0 // pred_check
    _
  $region15: #{cnn_forward.7} parent=0 // pred_check_branch
    %17 = sbr.rel (0) target = $region17
  $region16: #{cnn_forward.7} parent=0 // pred_region
    _
  $region17: #{cnn_forward.7} parent=0 // pred_fallthru
    _
  // Predicated region
  $region18: #{cnn_forward.7} parent=0 // pred_check
    _
  $region19: #{cnn_forward.7} parent=0 // pred_check_branch
    %19 = sbr.rel (0) target = $region21
  $region20: #{cnn_forward.7} parent=0 // pred_region
    _
  $region21: #{cnn_forward.7} parent=0 // pred_fallthru
    _
  %v20 = vld [vmem:[%s0] sm:$0xff]
  %v21 = vld [vmem:[%s0 + $0x8] sm:$0xff]
  %v22 = vld [vmem:[%s0 + $0x10] sm:$0xff]
  %v23 = vld [vmem:[%s0 + $0x18] sm:$0xff]
  %v24 = vld [vmem:[%s0 + $0x20] sm:$0xff]
  %v25 = vld [vmem:[%s0 + $0x28] sm:$0xff]
  %v26 = vld [vmem:[%s0 + $0x30] sm:$0xff]
  %v27 = vld [vmem:[%s0 + $0x38] sm:$0xff]
  %v28 = vld [vmem:[%s0 + $0x40] sm:$0xff]
  %v29 = vld [vmem:[%s0 + $0x48] sm:$0xff]
  %v30 = vld [vmem:[%s0 + $0x50] sm:$0xff]
  %v31 = vld [vmem:[%s0 + $0x58] sm:$0xff]
  %v32 = vld [vmem:[%s0 + $0x60] sm:$0xf]
  %v33 = vld [vmem:[%s0 + $0x64] sm:$0xff]
  %v34 = vld [vmem:[%s0 + $0x6c] sm:$0xff]
  %v35 = vld [vmem:[%s0 + $0x74] sm:$0xff]
  %v36 = vld [vmem:[%s0 + $0x7c] sm:$0xff]
  %v37 = vld [vmem:[%s0 + $0x84] sm:$0xff]
  %v38 = vld [vmem:[%s0 + $0x8c] sm:$0xff]
  %v39 = vld [vmem:[%s0 + $0x94] sm:$0xff]
  %v40 = vld [vmem:[%s0 + $0x9c] sm:$0xff]
  %v41 = vld [vmem:[%s0 + $0xa4] sm:$0xff]
  %v42 = vld [vmem:[%s0 + $0xac] sm:$0xff]
  %v43 = vld [vmem:[%s0 + $0xb4] sm:$0xff]
  %v44 = vld [vmem:[%s0 + $0xbc] sm:$0xff]
  %v45 = vld [vmem:[%s0 + $0xc4] sm:$0xf]
  %v46 = vld [vmem:[%s1] sm:$0xff]
  %v47 = vld [vmem:[%s1 + $0x8] sm:$0xff]
  %v48 = vld [vmem:[%s1 + $0x10] sm:$0xff]
  %v49 = vld [vmem:[%s1 + $0x18] sm:$0xff]
  %v50 = vld [vmem:[%s1 + $0x20] sm:$0xff]
  %v51 = vld [vmem:[%s1 + $0x28] sm:$0xff]
  %v52 = vld [vmem:[%s1 + $0x30] sm:$0xff]
  %v53 = vld [vmem:[%s1 + $0x38] sm:$0xff]
  %v54 = vld [vmem:[%s1 + $0x40] sm:$0xff]
  %v55 = vld [vmem:[%s1 + $0x48] sm:$0xff]
  %v56 = vld [vmem:[%s1 + $0x50] sm:$0xff]
  %v57 = vld [vmem:[%s1 + $0x58] sm:$0xff]
  %v58 = vld [vmem:[%s1 + $0x60] sm:$0xff]
  %v59 = vld [vmem:[%s1 + $0x68] sm:$0xff]
  %v60 = vld [vmem:[%s1 + $0x70] sm:$0xff]
  %v61 = vld [vmem:[%s1 + $0x78] sm:$0xff]
  %v62 = vld [vmem:[%s1 + $0x80] sm:$0xff]
  %v63 = vld [vmem:[%s1 + $0x88] sm:$0xff]
  %v64 = vld [vmem:[%s1 + $0x90] sm:$0xff]
  %v65 = vld [vmem:[%s1 + $0x98] sm:$0xff]
  %v66 = vld [vmem:[%s1 + $0xa0] sm:$0xff]
  %v67 = vld [vmem:[%s1 + $0xa8] sm:$0xff]
  %v68 = vld [vmem:[%s1 + $0xb0] sm:$0xff]
  %v69 = vld [vmem:[%s1 + $0xb8] sm:$0xff]
  %v70 = vld [vmem:[%s1 + $0xc0] sm:$0xff]
  %v71 = vld [vmem:[%s1 + $0xc8] sm:$0xff]
  %v72 = vld [vmem:[%s1 + $0xd0] sm:$0xff]
  %v73 = vld [vmem:[%s1 + $0xd8] sm:$0xff]
  %v74 = vld [vmem:[%s1 + $0xe0] sm:$0xff]
  %v75 = vld [vmem:[%s1 + $0xe8] sm:$0xff]
  %v76 = vld [vmem:[%s1 + $0xf0] sm:$0xff]
  %v77 = vld [vmem:[%s1 + $0xf8] sm:$0xff]
  %v78 = vld [vmem:[%s1 + $0x100] sm:$0xff]
  %v79 = vld [vmem:[%s1 + $0x108] sm:$0xff]
  %v80 = vld [vmem:[%s1 + $0x110] sm:$0xff]
  %v81 = vld [vmem:[%s1 + $0x118] sm:$0xff]
  %v82 = vld [vmem:[%s1 + $0x120] sm:$0xff]
  %v83 = vld [vmem:[%s1 + $0x128] sm:$0xff]
  %v84 = vld [vmem:[%s1 + $0x130] sm:$0xff]
  %v85 = vld [vmem:[%s1 + $0x138] sm:$0xff]
  %v86 = vld [vmem:[%s1 + $0x140] sm:$0xff]
  %v87 = vld [vmem:[%s1 + $0x148] sm:$0xff]
  %v88 = vld [vmem:[%s1 + $0x150] sm:$0xff]
  %v89 = vld [vmem:[%s1 + $0x158] sm:$0xff]
  %v90 = vld [vmem:[%s1 + $0x160] sm:$0xff]
  %v91 = vld [vmem:[%s1 + $0x168] sm:$0xff]
  %v92 = vld [vmem:[%s1 + $0x170] sm:$0xff]
  %v93 = vld [vmem:[%s1 + $0x178] sm:$0xff]
  %v94 = vld [vmem:[%s1 + $0x180] sm:$0xff]
  %v95 = vld [vmem:[%s1 + $0x188] sm:$0xff]
  %v96 = vld [vmem:[%s1 + $0x190] sm:$0xff]
  %v97 = vld [vmem:[%s1 + $0x198] sm:$0xff]
  %v98 = vld [vmem:[%s1 + $0x1a0] sm:$0xff]
  %v99 = vld [vmem:[%s1 + $0x1a8] sm:$0xff]
  %v100 = vld [vmem:[%s1 + $0x1b0] sm:$0xff]
  %v101 = vld [vmem:[%s1 + $0x1b8] sm:$0xff]
  %v102 = vld [vmem:[%s1 + $0x1c0] sm:$0xff]
  %v103 = vld [vmem:[%s1 + $0x1c8] sm:$0xff]
  %v104 = vld [vmem:[%s1 + $0x1d0] sm:$0xff]
  %v105 = vld [vmem:[%s1 + $0x1d8] sm:$0xff]
  %v106 = vld [vmem:[%s1 + $0x1e0] sm:$0xff]
  %v107 = vld [vmem:[%s1 + $0x1e8] sm:$0xff]
  %v108 = vld [vmem:[%s1 + $0x1f0] sm:$0xff]
  %v109 = vld [vmem:[%s1 + $0x1f8] sm:$0xff]
  %v110 = vld [vmem:[%s1 + $0x200] sm:$0xff]
  %v111 = vld [vmem:[%s1 + $0x208] sm:$0xff]
  %v112 = vld [vmem:[%s1 + $0x210] sm:$0xff]
  %v113 = vld [vmem:[%s1 + $0x218] sm:$0xff]
  %v114 = vld [vmem:[%s1 + $0x220] sm:$0xff]
  %v115 = vld [vmem:[%s1 + $0x228] sm:$0xff]
  %v116 = vld [vmem:[%s1 + $0x230] sm:$0xff]
  %v117 = vld [vmem:[%s1 + $0x238] sm:$0xff]
  %v118 = vld [vmem:[%s1 + $0x240] sm:$0xff]
  %v119 = vld [vmem:[%s1 + $0x248] sm:$0xff]
  %v120 = vld [vmem:[%s1 + $0x250] sm:$0xff]
  %v121 = vld [vmem:[%s1 + $0x258] sm:$0xff]
  %v122 = vld [vmem:[%s1 + $0x260] sm:$0xff]
  %v123 = vld [vmem:[%s1 + $0x268] sm:$0xff]
  %v124 = vld [vmem:[%s1 + $0x270] sm:$0xff]
  %v125 = vld [vmem:[%s1 + $0x278] sm:$0xff]
  %v126 = vld [vmem:[%s1 + $0x280] sm:$0xff]
  %v127 = vld [vmem:[%s1 + $0x288] sm:$0xff]
  %v128 = vld [vmem:[%s1 + $0x290] sm:$0xff]
  %v129 = vld [vmem:[%s1 + $0x298] sm:$0xff]
  %v130 = vld [vmem:[%s1 + $0x2a0] sm:$0xff]
  %v131 = vld [vmem:[%s1 + $0x2a8] sm:$0xff]
  %v132 = vld [vmem:[%s1 + $0x2b0] sm:$0xff]
  %v133 = vld [vmem:[%s1 + $0x2b8] sm:$0xff]
  %v134 = vld [vmem:[%s1 + $0x2c0] sm:$0xff]
  %v135 = vld [vmem:[%s1 + $0x2c8] sm:$0xff]
  %v136 = vld [vmem:[%s1 + $0x2d0] sm:$0xff]
  %v137 = vld [vmem:[%s1 + $0x2d8] sm:$0xff]
  %v138 = vld [vmem:[%s1 + $0x2e0] sm:$0xff]
  %v139 = vld [vmem:[%s1 + $0x2e8] sm:$0xff]
  %v140 = vld [vmem:[%s1 + $0x2f0] sm:$0xff]
  %v141 = vld [vmem:[%s1 + $0x2f8] sm:$0xff]
  %v142 = vld [vmem:[%s1 + $0x300] sm:$0xff]
  %v143 = vld [vmem:[%s1 + $0x308] sm:$0xff]
  %v144 = vld [vmem:[%s1 + $0x310] sm:$0xff]
  %v145 = vld [vmem:[%s1 + $0x318] sm:$0xff]
  %v146 = vld [vmem:[%s1 + $0x320] sm:$0xff]
  %v147 = vld [vmem:[%s1 + $0x328] sm:$0xff]
  %v148 = vld [vmem:[%s1 + $0x330] sm:$0xff]
  %v149 = vld [vmem:[%s1 + $0x338] sm:$0xff]
  %v150 = vld [vmem:[%s1 + $0x340] sm:$0xff]
  %v151 = vld [vmem:[%s1 + $0x348] sm:$0xff]
  %v152 = vld [vmem:[%s1 + $0x350] sm:$0xff]
  %v153 = vld [vmem:[%s1 + $0x358] sm:$0xff]
  %v154 = vld [vmem:[%s1 + $0x360] sm:$0xff]
  %v155 = vld [vmem:[%s1 + $0x368] sm:$0xff]
  %v156 = vld [vmem:[%s1 + $0x370] sm:$0xff]
  %v157 = vld [vmem:[%s1 + $0x378] sm:$0xff]
  %v158 = vld [vmem:[%s1 + $0x380] sm:$0xff]
  %v159 = vld [vmem:[%s1 + $0x388] sm:$0xff]
  %v160 = vld [vmem:[%s1 + $0x390] sm:$0xff]
  %v161 = vld [vmem:[%s1 + $0x398] sm:$0xff]
  %v162 = vld [vmem:[%s1 + $0x3a0] sm:$0xff]
  %v163 = vld [vmem:[%s1 + $0x3a8] sm:$0xff]
  %v164 = vld [vmem:[%s1 + $0x3b0] sm:$0xff]
  %v165 = vld [vmem:[%s1 + $0x3b8] sm:$0xff]
  %v166 = vld [vmem:[%s1 + $0x3c0] sm:$0xff]
  %v167 = vld [vmem:[%s1 + $0x3c8] sm:$0xff]
  %v168 = vld [vmem:[%s1 + $0x3d0] sm:$0xff]
  %v169 = vld [vmem:[%s1 + $0x3d8] sm:$0xff]
  %v170 = vld [vmem:[%s1 + $0x3e0] sm:$0xff]
  %v171 = vld [vmem:[%s1 + $0x3e8] sm:$0xff]
  %v172 = vld [vmem:[%s1 + $0x3f0] sm:$0xff]
  %v173 = vld [vmem:[%s1 + $0x3f8] sm:$0xff]
  %v174 = vld [vmem:[%s1 + $0x400] sm:$0xff]
  %v175 = vld [vmem:[%s1 + $0x408] sm:$0xff]
  %v176 = vld [vmem:[%s1 + $0x410] sm:$0xff]
  %v177 = vld [vmem:[%s1 + $0x418] sm:$0xff]
  %v178 = vld [vmem:[%s1 + $0x420] sm:$0xff]
  %v179 = vld [vmem:[%s1 + $0x428] sm:$0xff]
  %v180 = vld [vmem:[%s1 + $0x430] sm:$0xff]
  %v181 = vld [vmem:[%s1 + $0x438] sm:$0xff]
  %v182 = vld [vmem:[%s1 + $0x440] sm:$0xff]
  %v183 = vld [vmem:[%s1 + $0x448] sm:$0xff]
  %v184 = vld [vmem:[%s1 + $0x450] sm:$0xff]
  %v185 = vld [vmem:[%s1 + $0x458] sm:$0xff]
  %v186 = vld [vmem:[%s1 + $0x460] sm:$0xff]
  %v187 = vld [vmem:[%s1 + $0x468] sm:$0xff]
  %v188 = vld [vmem:[%s1 + $0x470] sm:$0xff]
  %v189 = vld [vmem:[%s1 + $0x478] sm:$0xff]
  %v190 = vld [vmem:[%s1 + $0x480] sm:$0xff]
  %v191 = vld [vmem:[%s1 + $0x488] sm:$0xff]
  %v192 = vld [vmem:[%s1 + $0x490] sm:$0xff]
  %v193 = vld [vmem:[%s1 + $0x498] sm:$0xff]
  %v194 = vld [vmem:[%s1 + $0x4a0] sm:$0xff]
  %v195 = vld [vmem:[%s1 + $0x4a8] sm:$0xff]
  %v196 = vld [vmem:[%s1 + $0x4b0] sm:$0xff]
  %v197 = vld [vmem:[%s1 + $0x4b8] sm:$0xff]
  %v198 = vld [vmem:[%s1 + $0x4c0] sm:$0xff]
  %v199 = vld [vmem:[%s1 + $0x4c8] sm:$0xff]
  %v200 = vld [vmem:[%s1 + $0x4d0] sm:$0xff]
  %v201 = vld [vmem:[%s1 + $0x4d8] sm:$0xff]
  %v202 = vld [vmem:[%s1 + $0x4e0] sm:$0xff]
  %v203 = vld [vmem:[%s1 + $0x4e8] sm:$0xff]
  %v204 = vld [vmem:[%s1 + $0x4f0] sm:$0xff]
  %v205 = vld [vmem:[%s1 + $0x4f8] sm:$0xff]
  %v206 = vld [vmem:[%s1 + $0x500] sm:$0xff]
  %v207 = vld [vmem:[%s1 + $0x508] sm:$0xff]
  %v208 = vld [vmem:[%s1 + $0x510] sm:$0xff]
  %v209 = vld [vmem:[%s1 + $0x518] sm:$0xff]
  %v210 = vld [vmem:[%s1 + $0x520] sm:$0xff]
  %v211 = vld [vmem:[%s1 + $0x528] sm:$0xff]
  %v212 = vld [vmem:[%s1 + $0x530] sm:$0xff]
  %v213 = vld [vmem:[%s1 + $0x538] sm:$0xff]
  %v214 = vld [vmem:[%s1 + $0x540] sm:$0xff]
  %v215 = vld [vmem:[%s1 + $0x548] sm:$0xff]
  %v216 = vld [vmem:[%s1 + $0x550] sm:$0xff]
  %v217 = vld [vmem:[%s1 + $0x558] sm:$0xff]
  %v218 = vld [vmem:[%s1 + $0x560] sm:$0xff]
  %v219 = vld [vmem:[%s1 + $0x568] sm:$0xff]
  %v220 = vld [vmem:[%s1 + $0x570] sm:$0xff]
  %v221 = vld [vmem:[%s1 + $0x578] sm:$0xff]
  %v222 = vld [vmem:[%s1 + $0x580] sm:$0xff]
  %v223 = vld [vmem:[%s1 + $0x588] sm:$0xff]
  %v224 = vld [vmem:[%s1 + $0x590] sm:$0xff]
  %v225 = vld [vmem:[%s1 + $0x598] sm:$0xff]
  %v226 = vld [vmem:[%s1 + $0x5a0] sm:$0xff]
  %v227 = vld [vmem:[%s1 + $0x5a8] sm:$0xff]
  %v228 = vld [vmem:[%s1 + $0x5b0] sm:$0xff]
  %v229 = vld [vmem:[%s1 + $0x5b8] sm:$0xff]
  %v230 = vld [vmem:[%s1 + $0x5c0] sm:$0xff]
  %v231 = vld [vmem:[%s1 + $0x5c8] sm:$0xff]
  %v232 = vld [vmem:[%s1 + $0x5d0] sm:$0xff]
  %v233 = vld [vmem:[%s1 + $0x5d8] sm:$0xff]
  %v234 = vld [vmem:[%s1 + $0x5e0] sm:$0xff]
  %v235 = vld [vmem:[%s1 + $0x5e8] sm:$0xff]
  %v236 = vld [vmem:[%s1 + $0x5f0] sm:$0xff]
  %v237 = vld [vmem:[%s1 + $0x5f8] sm:$0xff]
  %v238 = vld [vmem:[%s1 + $0x600] sm:$0xff]
  %v239 = vld [vmem:[%s1 + $0x608] sm:$0xff]
  %v240 = vld [vmem:[%s1 + $0x610] sm:$0xff]
  %v241 = vld [vmem:[%s1 + $0x618] sm:$0xff]
  %v242 = vld [vmem:[%s1 + $0x620] sm:$0xff]
  %v243 = vld [vmem:[%s1 + $0x628] sm:$0xff]
  %v244 = vld [vmem:[%s1 + $0x630] sm:$0xff]
  %v245 = vld [vmem:[%s1 + $0x638] sm:$0xff]
  %v246 = vld [vmem:[%s1 + $0x640] sm:$0xff]
  %v247 = vld [vmem:[%s1 + $0x648] sm:$0xff]
  %v248 = vld [vmem:[%s1 + $0x650] sm:$0xff]
  %v249 = vld [vmem:[%s1 + $0x658] sm:$0xff]
  %v250 = vld [vmem:[%s1 + $0x660] sm:$0xff]
  %v251 = vld [vmem:[%s1 + $0x668] sm:$0xff]
  %v252 = vld [vmem:[%s1 + $0x670] sm:$0xff]
  %v253 = vld [vmem:[%s1 + $0x678] sm:$0xff]
  %v254 = vld [vmem:[%s1 + $0x680] sm:$0xff]
  %v255 = vld [vmem:[%s1 + $0x688] sm:$0xff]
  %v256 = vld [vmem:[%s1 + $0x690] sm:$0xff]
  %v257 = vld [vmem:[%s1 + $0x698] sm:$0xff]
  %v258 = vld [vmem:[%s1 + $0x6a0] sm:$0xff]
  %v259 = vld [vmem:[%s1 + $0x6a8] sm:$0xff]
  %v260 = vld [vmem:[%s1 + $0x6b0] sm:$0xff]
  %v261 = vld [vmem:[%s1 + $0x6b8] sm:$0xff]
  %v262 = vld [vmem:[%s1 + $0x6c0] sm:$0xff]
  %v263 = vld [vmem:[%s1 + $0x6c8] sm:$0xff]
  %v264 = vld [vmem:[%s1 + $0x6d0] sm:$0xff]
  %v265 = vld [vmem:[%s1 + $0x6d8] sm:$0xff]
  %v266 = vld [vmem:[%s1 + $0x6e0] sm:$0xff]
  %v267 = vld [vmem:[%s1 + $0x6e8] sm:$0xff]
  %v268 = vld [vmem:[%s1 + $0x6f0] sm:$0xff]
  %v269 = vld [vmem:[%s1 + $0x6f8] sm:$0xff]
  %v270 = vld [vmem:[%s1 + $0x700] sm:$0xff]
  %v271 = vld [vmem:[%s1 + $0x708] sm:$0xff]
  %v272 = vld [vmem:[%s1 + $0x710] sm:$0xff]
  %v273 = vld [vmem:[%s1 + $0x718] sm:$0xff]
  %v274 = vld [vmem:[%s1 + $0x720] sm:$0xff]
  %v275 = vld [vmem:[%s1 + $0x728] sm:$0xff]
  %v276 = vld [vmem:[%s1 + $0x730] sm:$0xff]
  %v277 = vld [vmem:[%s1 + $0x738] sm:$0xff]
  %v278 = vld [vmem:[%s1 + $0x740] sm:$0xff]
  %v279 = vld [vmem:[%s1 + $0x748] sm:$0xff]
  %v280 = vld [vmem:[%s1 + $0x750] sm:$0xff]
  %v281 = vld [vmem:[%s1 + $0x758] sm:$0xff]
  %v282 = vld [vmem:[%s1 + $0x760] sm:$0xff]
  %v283 = vld [vmem:[%s1 + $0x768] sm:$0xff]
  %v284 = vld [vmem:[%s1 + $0x770] sm:$0xff]
  %v285 = vld [vmem:[%s1 + $0x778] sm:$0xff]
  %v286 = vld [vmem:[%s1 + $0x780] sm:$0xff]
  %v287 = vld [vmem:[%s1 + $0x788] sm:$0xff]
  %v288 = vld [vmem:[%s1 + $0x790] sm:$0xff]
  %v289 = vld [vmem:[%s1 + $0x798] sm:$0xff]
  %v290 = vld [vmem:[%s1 + $0x7a0] sm:$0xff]
  %v291 = vld [vmem:[%s1 + $0x7a8] sm:$0xff]
  %v292 = vld [vmem:[%s1 + $0x7b0] sm:$0xff]
  %v293 = vld [vmem:[%s1 + $0x7b8] sm:$0xff]
  %v294 = vld [vmem:[%s1 + $0x7c0] sm:$0xff]
  %v295 = vld [vmem:[%s1 + $0x7c8] sm:$0xff]
  %v296 = vld [vmem:[%s1 + $0x7d0] sm:$0xff]
  %v297 = vld [vmem:[%s1 + $0x7d8] sm:$0xff]
  %v298 = vld [vmem:[%s1 + $0x7e0] sm:$0xff]
  %v299 = vld [vmem:[%s1 + $0x7e8] sm:$0xff]
  %v300 = vld [vmem:[%s1 + $0x7f0] sm:$0xff]
  %v301 = vld [vmem:[%s1 + $0x7f8] sm:$0xff]
  %v302 = vld [vmem:[%s1 + $0x800] sm:$0xff]
  %v303 = vld [vmem:[%s1 + $0x808] sm:$0xff]
  %v304 = vld [vmem:[%s1 + $0x810] sm:$0xff]
  %v305 = vld [vmem:[%s1 + $0x818] sm:$0xff]
  %v306 = vld [vmem:[%s1 + $0x820] sm:$0xff]
  %v307 = vld [vmem:[%s1 + $0x828] sm:$0xff]
  %v308 = vld [vmem:[%s1 + $0x830] sm:$0xff]
  %v309 = vld [vmem:[%s1 + $0x838] sm:$0xff]
  %v310 = vld [vmem:[%s1 + $0x840] sm:$0xff]
  %v311 = vld [vmem:[%s1 + $0x848] sm:$0xff]
  %v312 = vld [vmem:[%s1 + $0x850] sm:$0xff]
  %v313 = vld [vmem:[%s1 + $0x858] sm:$0xff]
  %v314 = vld [vmem:[%s1 + $0x860] sm:$0xff]
  %v315 = vld [vmem:[%s1 + $0x868] sm:$0xff]
  %v316 = vld [vmem:[%s1 + $0x870] sm:$0xff]
  %v317 = vld [vmem:[%s1 + $0x878] sm:$0xff]
  %v318 = vld [vmem:[%s1 + $0x880] sm:$0xff]
  %v319 = vld [vmem:[%s1 + $0x888] sm:$0xff]
  %v320 = vld [vmem:[%s1 + $0x890] sm:$0xff]
  %v321 = vld [vmem:[%s1 + $0x898] sm:$0xff]
  %v322 = vld [vmem:[%s1 + $0x8a0] sm:$0xff]
  %v323 = vld [vmem:[%s1 + $0x8a8] sm:$0xff]
  %v324 = vld [vmem:[%s1 + $0x8b0] sm:$0xff]
  %v325 = vld [vmem:[%s1 + $0x8b8] sm:$0xff]
  %v326 = vld [vmem:[%s1 + $0x8c0] sm:$0xff]
  %v327 = vld [vmem:[%s1 + $0x8c8] sm:$0xff]
  %v328 = vld [vmem:[%s1 + $0x8d0] sm:$0xff]
  %v329 = vld [vmem:[%s1 + $0x8d8] sm:$0xff]
  %v330 = vld [vmem:[%s1 + $0x8e0] sm:$0xff]
  %v331 = vld [vmem:[%s1 + $0x8e8] sm:$0xff]
  %v332 = vld [vmem:[%s1 + $0x8f0] sm:$0xff]
  %v333 = vld [vmem:[%s1 + $0x8f8] sm:$0xff]
  %v334 = vld [vmem:[%s1 + $0x900] sm:$0xff]
  %v335 = vld [vmem:[%s1 + $0x908] sm:$0xff]
  %v336 = vld [vmem:[%s1 + $0x910] sm:$0xff]
  %v337 = vld [vmem:[%s1 + $0x918] sm:$0xff]
  %v338 = vld [vmem:[%s1 + $0x920] sm:$0xff]
  %v339 = vld [vmem:[%s1 + $0x928] sm:$0xff]
  %v340 = vld [vmem:[%s1 + $0x930] sm:$0xff]
  %v341 = vld [vmem:[%s1 + $0x938] sm:$0xff]
  %v342 = vld [vmem:[%s1 + $0x940] sm:$0xff]
  %v343 = vld [vmem:[%s1 + $0x948] sm:$0xff]
  %v344 = vld [vmem:[%s1 + $0x950] sm:$0xff]
  %v345 = vld [vmem:[%s1 + $0x958] sm:$0xff]
  %v346 = vld [vmem:[%s1 + $0x960] sm:$0xff]
  %v347 = vld [vmem:[%s1 + $0x968] sm:$0xff]
  %v348 = vld [vmem:[%s1 + $0x970] sm:$0xff]
  %v349 = vld [vmem:[%s1 + $0x978] sm:$0xff]
  %v350 = vld [vmem:[%s1 + $0x980] sm:$0xff]
  %v351 = vld [vmem:[%s1 + $0x988] sm:$0xff]
  %v352 = vld [vmem:[%s1 + $0x990] sm:$0xff]
  %v353 = vld [vmem:[%s1 + $0x998] sm:$0xff]
  %v354 = vld [vmem:[%s1 + $0x9a0] sm:$0xff]
  %v355 = vld [vmem:[%s1 + $0x9a8] sm:$0xff]
  %v356 = vld [vmem:[%s1 + $0x9b0] sm:$0xff]
  %v357 = vld [vmem:[%s1 + $0x9b8] sm:$0xff]
  %v358 = vld [vmem:[%s1 + $0x9c0] sm:$0xff]
  %v359 = vld [vmem:[%s1 + $0x9c8] sm:$0xff]
  %v360 = vld [vmem:[%s1 + $0x9d0] sm:$0xff]
  %v361 = vld [vmem:[%s1 + $0x9d8] sm:$0xff]
  %v362 = vld [vmem:[%s1 + $0x9e0] sm:$0xff]
  %v363 = vld [vmem:[%s1 + $0x9e8] sm:$0xff]
  %v364 = vld [vmem:[%s1 + $0x9f0] sm:$0xff]
  %v365 = vld [vmem:[%s1 + $0x9f8] sm:$0xff]
  %v366 = vld [vmem:[%s1 + $0xa00] sm:$0xff]
  %v367 = vld [vmem:[%s1 + $0xa08] sm:$0xff]
  %v368 = vld [vmem:[%s1 + $0xa10] sm:$0xff]
  %v369 = vld [vmem:[%s1 + $0xa18] sm:$0xff]
  %v370 = vld [vmem:[%s1 + $0xa20] sm:$0xff]
  %v371 = vld [vmem:[%s1 + $0xa28] sm:$0xff]
  %v372 = vld [vmem:[%s1 + $0xa30] sm:$0xff]
  %v373 = vld [vmem:[%s1 + $0xa38] sm:$0xff]
  %v374 = vld [vmem:[%s1 + $0xa40] sm:$0xff]
  %v375 = vld [vmem:[%s1 + $0xa48] sm:$0xff]
  %v376 = vld [vmem:[%s1 + $0xa50] sm:$0xff]
  %v377 = vld [vmem:[%s1 + $0xa58] sm:$0xff]
  %v378 = vld [vmem:[%s1 + $0xa60] sm:$0xff]
  %v379 = vld [vmem:[%s1 + $0xa68] sm:$0xff]
  %v380 = vld [vmem:[%s1 + $0xa70] sm:$0xff]
  %v381 = vld [vmem:[%s1 + $0xa78] sm:$0xff]
  %v382 = vld [vmem:[%s1 + $0xa80] sm:$0xff]
  %v383 = vld [vmem:[%s1 + $0xa88] sm:$0xff]
  %v384 = vld [vmem:[%s1 + $0xa90] sm:$0xff]
  %v385 = vld [vmem:[%s1 + $0xa98] sm:$0xff]
  %v386 = vld [vmem:[%s1 + $0xaa0] sm:$0xff]
  %v387 = vld [vmem:[%s1 + $0xaa8] sm:$0xff]
  %v388 = vld [vmem:[%s1 + $0xab0] sm:$0xff]
  %v389 = vld [vmem:[%s1 + $0xab8] sm:$0xff]
  %v390 = vld [vmem:[%s1 + $0xac0] sm:$0xff]
  %v391 = vld [vmem:[%s1 + $0xac8] sm:$0xff]
  %v392 = vld [vmem:[%s1 + $0xad0] sm:$0xff]
  %v393 = vld [vmem:[%s1 + $0xad8] sm:$0xff]
  %v394 = vld [vmem:[%s1 + $0xae0] sm:$0xff]
  %v395 = vld [vmem:[%s1 + $0xae8] sm:$0xff]
  %v396 = vld [vmem:[%s1 + $0xaf0] sm:$0xff]
  %v397 = vld [vmem:[%s1 + $0xaf8] sm:$0xff]
  %v398 = vld [vmem:[%s1 + $0xb00] sm:$0xff]
  %v399 = vld [vmem:[%s1 + $0xb08] sm:$0xff]
  %v400 = vld [vmem:[%s1 + $0xb10] sm:$0xff]
  %v401 = vld [vmem:[%s1 + $0xb18] sm:$0xff]
  %v402 = vld [vmem:[%s1 + $0xb20] sm:$0xff]
  %v403 = vld [vmem:[%s1 + $0xb28] sm:$0xff]
  %v404 = vld [vmem:[%s1 + $0xb30] sm:$0xff]
  %v405 = vld [vmem:[%s1 + $0xb38] sm:$0xff]
  %v406 = vld [vmem:[%s1 + $0xb40] sm:$0xff]
  %v407 = vld [vmem:[%s1 + $0xb48] sm:$0xff]
  %v408 = vld [vmem:[%s1 + $0xb50] sm:$0xff]
  %v409 = vld [vmem:[%s1 + $0xb58] sm:$0xff]
  %v410 = vld [vmem:[%s1 + $0xb60] sm:$0xff]
  %v411 = vld [vmem:[%s1 + $0xb68] sm:$0xff]
  %v412 = vld [vmem:[%s1 + $0xb70] sm:$0xff]
  %v413 = vld [vmem:[%s1 + $0xb78] sm:$0xff]
  %v414 = vld [vmem:[%s1 + $0xb80] sm:$0xff]
  %v415 = vld [vmem:[%s1 + $0xb88] sm:$0xff]
  %v416 = vld [vmem:[%s1 + $0xb90] sm:$0xff]
  %v417 = vld [vmem:[%s1 + $0xb98] sm:$0xff]
  %v418 = vld [vmem:[%s1 + $0xba0] sm:$0xff]
  %v419 = vld [vmem:[%s1 + $0xba8] sm:$0xff]
  %v420 = vld [vmem:[%s1 + $0xbb0] sm:$0xff]
  %v421 = vld [vmem:[%s1 + $0xbb8] sm:$0xff]
  %v422 = vld [vmem:[%s1 + $0xbc0] sm:$0xff]
  %v423 = vld [vmem:[%s1 + $0xbc8] sm:$0xff]
  %v424 = vld [vmem:[%s1 + $0xbd0] sm:$0xff]
  %v425 = vld [vmem:[%s1 + $0xbd8] sm:$0xff]
  %v426 = vld [vmem:[%s1 + $0xbe0] sm:$0xff]
  %v427 = vld [vmem:[%s1 + $0xbe8] sm:$0xff]
  %v428 = vld [vmem:[%s1 + $0xbf0] sm:$0xff]
  %v429 = vld [vmem:[%s1 + $0xbf8] sm:$0xff]
  %v430 = vld [vmem:[%s1 + $0xc00] sm:$0xff]
  %v431 = vld [vmem:[%s1 + $0xc08] sm:$0xff]
  %v432 = vld [vmem:[%s1 + $0xc10] sm:$0xff]
  %v433 = vld [vmem:[%s1 + $0xc18] sm:$0xff]
  %v434 = vld [vmem:[%s1 + $0xc20] sm:$0xff]
  %v435 = vld [vmem:[%s1 + $0xc28] sm:$0xff]
  %v436 = vld [vmem:[%s1 + $0xc30] sm:$0xff]
  %v437 = vld [vmem:[%s1 + $0xc38] sm:$0xff]
  %v438 = vld [vmem:[%s1 + $0xc40] sm:$0xff]
  %v439 = vld [vmem:[%s1 + $0xc48] sm:$0xff]
  %v440 = vld [vmem:[%s1 + $0xc50] sm:$0xff]
  %v441 = vld [vmem:[%s1 + $0xc58] sm:$0xff]
  %v442 = vld [vmem:[%s1 + $0xc60] sm:$0xff]
  %v443 = vld [vmem:[%s1 + $0xc68] sm:$0xff]
  %v444 = vld [vmem:[%s1 + $0xc70] sm:$0xff]
  %v445 = vld [vmem:[%s1 + $0xc78] sm:$0xff]
  %v446 = vld [vmem:[%s1 + $0xc80] sm:$0xff]
  %v447 = vld [vmem:[%s1 + $0xc88] sm:$0xff]
  %v448 = vld [vmem:[%s1 + $0xc90] sm:$0xff]
  %v449 = vld [vmem:[%s1 + $0xc98] sm:$0xff]
  %v450 = vld [vmem:[%s1 + $0xca0] sm:$0xff]
  %v451 = vld [vmem:[%s1 + $0xca8] sm:$0xff]
  %v452 = vld [vmem:[%s1 + $0xcb0] sm:$0xff]
  %v453 = vld [vmem:[%s1 + $0xcb8] sm:$0xff]
  %v454 = vld [vmem:[%s1 + $0xcc0] sm:$0xff]
  %v455 = vld [vmem:[%s1 + $0xcc8] sm:$0xff]
  %v456 = vld [vmem:[%s1 + $0xcd0] sm:$0xff]
  %v457 = vld [vmem:[%s1 + $0xcd8] sm:$0xff]
  %v458 = vld [vmem:[%s1 + $0xce0] sm:$0xff]
  %v459 = vld [vmem:[%s1 + $0xce8] sm:$0xff]
  %v460 = vld [vmem:[%s1 + $0xcf0] sm:$0xff]
  %v461 = vld [vmem:[%s1 + $0xcf8] sm:$0xff]
  %v462 = vld [vmem:[%s1 + $0xd00] sm:$0xff]
  %v463 = vld [vmem:[%s1 + $0xd08] sm:$0xff]
  %v464 = vld [vmem:[%s1 + $0xd10] sm:$0xff]
  %v465 = vld [vmem:[%s1 + $0xd18] sm:$0xff]
  %v466 = vld [vmem:[%s1 + $0xd20] sm:$0xff]
  %v467 = vld [vmem:[%s1 + $0xd28] sm:$0xff]
  %v468 = vld [vmem:[%s1 + $0xd30] sm:$0xff]
  %v469 = vld [vmem:[%s1 + $0xd38] sm:$0xff]
  %v470 = vld [vmem:[%s1 + $0xd40] sm:$0xff]
  %v471 = vld [vmem:[%s1 + $0xd48] sm:$0xff]
  %v472 = vld [vmem:[%s1 + $0xd50] sm:$0xff]
  %v473 = vld [vmem:[%s1 + $0xd58] sm:$0xff]
  %v474 = vld [vmem:[%s1 + $0xd60] sm:$0xff]
  %v475 = vld [vmem:[%s1 + $0xd68] sm:$0xff]
  %v476 = vld [vmem:[%s1 + $0xd70] sm:$0xff]
  %v477 = vld [vmem:[%s1 + $0xd78] sm:$0xff]
  %v478 = vld [vmem:[%s1 + $0xd80] sm:$0xff]
  %v479 = vld [vmem:[%s1 + $0xd88] sm:$0xff]
  %v480 = vld [vmem:[%s1 + $0xd90] sm:$0xff]
  %v481 = vld [vmem:[%s1 + $0xd98] sm:$0xff]
  %v482 = vld [vmem:[%s1 + $0xda0] sm:$0xff]
  %v483 = vld [vmem:[%s1 + $0xda8] sm:$0xff]
  %v484 = vld [vmem:[%s1 + $0xdb0] sm:$0xff]
  %v485 = vld [vmem:[%s1 + $0xdb8] sm:$0xff]
  %v486 = vld [vmem:[%s1 + $0xdc0] sm:$0xff]
  %v487 = vld [vmem:[%s1 + $0xdc8] sm:$0xff]
  %v488 = vld [vmem:[%s1 + $0xdd0] sm:$0xff]
  %v489 = vld [vmem:[%s1 + $0xdd8] sm:$0xff]
  %v490 = vld [vmem:[%s1 + $0xde0] sm:$0xff]
  %v491 = vld [vmem:[%s1 + $0xde8] sm:$0xff]
  %v492 = vld [vmem:[%s1 + $0xdf0] sm:$0xff]
  %v493 = vld [vmem:[%s1 + $0xdf8] sm:$0xff]
  %v494 = vld [vmem:[%s1 + $0xe00] sm:$0xff]
  %v495 = vld [vmem:[%s1 + $0xe08] sm:$0xff]
  %v496 = vld [vmem:[%s1 + $0xe10] sm:$0xff]
  %v497 = vld [vmem:[%s1 + $0xe18] sm:$0xff]
  %v498 = vld [vmem:[%s1 + $0xe20] sm:$0xff]
  %v499 = vld [vmem:[%s1 + $0xe28] sm:$0xff]
  %v500 = vld [vmem:[%s1 + $0xe30] sm:$0xff]
  %v501 = vld [vmem:[%s1 + $0xe38] sm:$0xff]
  %v502 = vld [vmem:[%s1 + $0xe40] sm:$0xff]
  %v503 = vld [vmem:[%s1 + $0xe48] sm:$0xff]
  %v504 = vld [vmem:[%s1 + $0xe50] sm:$0xff]
  %v505 = vld [vmem:[%s1 + $0xe58] sm:$0xff]
  %v506 = vld [vmem:[%s1 + $0xe60] sm:$0xff]
  %v507 = vld [vmem:[%s1 + $0xe68] sm:$0xff]
  %v508 = vld [vmem:[%s1 + $0xe70] sm:$0xff]
  %v509 = vld [vmem:[%s1 + $0xe78] sm:$0xff]
  %v510 = vld [vmem:[%s1 + $0xe80] sm:$0xff]
  %v511 = vld [vmem:[%s1 + $0xe88] sm:$0xff]
  %v512 = vld [vmem:[%s1 + $0xe90] sm:$0xff]
  %v513 = vld [vmem:[%s1 + $0xe98] sm:$0xff]
  %v514 = vld [vmem:[%s1 + $0xea0] sm:$0xff]
  %v515 = vld [vmem:[%s1 + $0xea8] sm:$0xff]
  %v516 = vld [vmem:[%s1 + $0xeb0] sm:$0xff]
  %v517 = vld [vmem:[%s1 + $0xeb8] sm:$0xff]
  %v518 = vld [vmem:[%s1 + $0xec0] sm:$0xff]
  %v519 = vld [vmem:[%s1 + $0xec8] sm:$0xff]
  %v520 = vld [vmem:[%s1 + $0xed0] sm:$0xff]
  %v521 = vld [vmem:[%s1 + $0xed8] sm:$0xff]
  %v522 = vld [vmem:[%s1 + $0xee0] sm:$0xff]
  %v523 = vld [vmem:[%s1 + $0xee8] sm:$0xff]
  %v524 = vld [vmem:[%s1 + $0xef0] sm:$0xff]
  %v525 = vld [vmem:[%s1 + $0xef8] sm:$0xff]
  %v526 = vld [vmem:[%s1 + $0xf00] sm:$0xff]
  %v527 = vld [vmem:[%s1 + $0xf08] sm:$0xff]
  %v528 = vld [vmem:[%s1 + $0xf10] sm:$0xff]
  %v529 = vld [vmem:[%s1 + $0xf18] sm:$0xff]
  %v530 = vld [vmem:[%s1 + $0xf20] sm:$0xff]
  %v531 = vld [vmem:[%s1 + $0xf28] sm:$0xff]
  %v532 = vld [vmem:[%s1 + $0xf30] sm:$0xff]
  %v533 = vld [vmem:[%s1 + $0xf38] sm:$0xff]
  %v534 = vld [vmem:[%s1 + $0xf40] sm:$0xff]
  %v535 = vld [vmem:[%s1 + $0xf48] sm:$0xff]
  %v536 = vld [vmem:[%s1 + $0xf50] sm:$0xff]
  %v537 = vld [vmem:[%s1 + $0xf58] sm:$0xff]
  %v538 = vld [vmem:[%s1 + $0xf60] sm:$0xff]
  %v539 = vld [vmem:[%s1 + $0xf68] sm:$0xff]
  %v540 = vld [vmem:[%s1 + $0xf70] sm:$0xff]
  %v541 = vld [vmem:[%s1 + $0xf78] sm:$0xff]
  %v542 = vld [vmem:[%s1 + $0xf80] sm:$0xff]
  %v543 = vld [vmem:[%s1 + $0xf88] sm:$0xff]
  %v544 = vld [vmem:[%s1 + $0xf90] sm:$0xff]
  %v545 = vld [vmem:[%s1 + $0xf98] sm:$0xff]
  %v546 = vld [vmem:[%s1 + $0xfa0] sm:$0xff]
  %v547 = vld [vmem:[%s1 + $0xfa8] sm:$0xff]
  %v548 = vld [vmem:[%s1 + $0xfb0] sm:$0xff]
  %v549 = vld [vmem:[%s1 + $0xfb8] sm:$0xff]
  %v550 = vld [vmem:[%s1 + $0xfc0] sm:$0xff]
  %v551 = vld [vmem:[%s1 + $0xfc8] sm:$0xff]
  %v552 = vld [vmem:[%s1 + $0xfd0] sm:$0xff]
  %v553 = vld [vmem:[%s1 + $0xfd8] sm:$0xff]
  %v554 = vld [vmem:[%s1 + $0xfe0] sm:$0xff]
  %v555 = vld [vmem:[%s1 + $0xfe8] sm:$0xff]
  %v556 = vld [vmem:[%s1 + $0xff0] sm:$0xff]
  %v557 = vld [vmem:[%s1 + $0xff8] sm:$0xff]
  %v558 = vld [vmem:[%s1 + $0x1000] sm:$0xff]
  %v559 = vld [vmem:[%s1 + $0x1008] sm:$0xff]
  %v560 = vld [vmem:[%s1 + $0x1010] sm:$0xff]
  %v561 = vld [vmem:[%s1 + $0x1018] sm:$0xff]
  %v562 = vld [vmem:[%s1 + $0x1020] sm:$0xff]
  %v563 = vld [vmem:[%s1 + $0x1028] sm:$0xff]
  %v564 = vld [vmem:[%s1 + $0x1030] sm:$0xff]
  %v565 = vld [vmem:[%s1 + $0x1038] sm:$0xff]
  %v566 = vld [vmem:[%s1 + $0x1040] sm:$0xff]
  %v567 = vld [vmem:[%s1 + $0x1048] sm:$0xff]
  %v568 = vld [vmem:[%s1 + $0x1050] sm:$0xff]
  %v569 = vld [vmem:[%s1 + $0x1058] sm:$0xff]
  %v570 = vld [vmem:[%s1 + $0x1060] sm:$0xff]
  %v571 = vld [vmem:[%s1 + $0x1068] sm:$0xff]
  %v572 = vld [vmem:[%s1 + $0x1070] sm:$0xff]
  %v573 = vld [vmem:[%s1 + $0x1078] sm:$0xff]
  %v574 = vld [vmem:[%s1 + $0x1080] sm:$0xff]
  %v575 = vld [vmem:[%s1 + $0x1088] sm:$0xff]
  %v576 = vld [vmem:[%s1 + $0x1090] sm:$0xff]
  %v577 = vld [vmem:[%s1 + $0x1098] sm:$0xff]
  %v578 = vld [vmem:[%s1 + $0x10a0] sm:$0xff]
  %v579 = vld [vmem:[%s1 + $0x10a8] sm:$0xff]
  %v580 = vld [vmem:[%s1 + $0x10b0] sm:$0xff]
  %v581 = vld [vmem:[%s1 + $0x10b8] sm:$0xff]
  %v582 = vld [vmem:[%s1 + $0x10c0] sm:$0xff]
  %v583 = vld [vmem:[%s1 + $0x10c8] sm:$0xff]
  %v584 = vld [vmem:[%s1 + $0x10d0] sm:$0xff]
  %v585 = vld [vmem:[%s1 + $0x10d8] sm:$0xff]
  %v586 = vld [vmem:[%s1 + $0x10e0] sm:$0xff]
  %v587 = vld [vmem:[%s1 + $0x10e8] sm:$0xff]
  %v588 = vld [vmem:[%s1 + $0x10f0] sm:$0xff]
  %v589 = vld [vmem:[%s1 + $0x10f8] sm:$0xff]
  %v590 = vld [vmem:[%s1 + $0x1100] sm:$0xff]
  %v591 = vld [vmem:[%s1 + $0x1108] sm:$0xff]
  %v592 = vld [vmem:[%s1 + $0x1110] sm:$0xff]
  %v593 = vld [vmem:[%s1 + $0x1118] sm:$0xff]
  %v594 = vld [vmem:[%s1 + $0x1120] sm:$0xff]
  %v595 = vld [vmem:[%s1 + $0x1128] sm:$0xff]
  %v596 = vld [vmem:[%s1 + $0x1130] sm:$0xff]
  %v597 = vld [vmem:[%s1 + $0x1138] sm:$0xff]
  %v598 = vld [vmem:[%s1 + $0x1140] sm:$0xff]
  %v599 = vld [vmem:[%s1 + $0x1148] sm:$0xff]
  %v600 = vld [vmem:[%s1 + $0x1150] sm:$0xff]
  %v601 = vld [vmem:[%s1 + $0x1158] sm:$0xff]
  %v602 = vld [vmem:[%s1 + $0x1160] sm:$0xff]
  %v603 = vld [vmem:[%s1 + $0x1168] sm:$0xff]
  %v604 = vld [vmem:[%s1 + $0x1170] sm:$0xff]
  %v605 = vld [vmem:[%s1 + $0x1178] sm:$0xff]
  %v606 = vld [vmem:[%s1 + $0x1180] sm:$0xff]
  %v607 = vld [vmem:[%s1 + $0x1188] sm:$0xff]
  %v608 = vld [vmem:[%s1 + $0x1190] sm:$0xff]
  %v609 = vld [vmem:[%s1 + $0x1198] sm:$0xff]
  %v610 = vld [vmem:[%s1 + $0x11a0] sm:$0xff]
  %v611 = vld [vmem:[%s1 + $0x11a8] sm:$0xff]
  %v612 = vld [vmem:[%s1 + $0x11b0] sm:$0xff]
  %v613 = vld [vmem:[%s1 + $0x11b8] sm:$0xff]
  %v614 = vld [vmem:[%s1 + $0x11c0] sm:$0xff]
  %v615 = vld [vmem:[%s1 + $0x11c8] sm:$0xff]
  %v616 = vld [vmem:[%s1 + $0x11d0] sm:$0xff]
  %v617 = vld [vmem:[%s1 + $0x11d8] sm:$0xff]
  %v618 = vld [vmem:[%s1 + $0x11e0] sm:$0xff]
  %v619 = vld [vmem:[%s1 + $0x11e8] sm:$0xff]
  %v620 = vld [vmem:[%s1 + $0x11f0] sm:$0xff]
  %v621 = vld [vmem:[%s1 + $0x11f8] sm:$0xff]
  %v622 = vld [vmem:[%s1 + $0x1200] sm:$0xff]
  %v623 = vld [vmem:[%s1 + $0x1208] sm:$0xff]
  %v624 = vld [vmem:[%s1 + $0x1210] sm:$0xff]
  %v625 = vld [vmem:[%s1 + $0x1218] sm:$0xff]
  %v626 = vld [vmem:[%s1 + $0x1220] sm:$0xff]
  %v627 = vld [vmem:[%s1 + $0x1228] sm:$0xff]
  %v628 = vld [vmem:[%s1 + $0x1230] sm:$0xff]
  %v629 = vld [vmem:[%s1 + $0x1238] sm:$0xff]
  %v630 = vld [vmem:[%s1 + $0x1240] sm:$0xff]
  %v631 = vld [vmem:[%s1 + $0x1248] sm:$0xff]
  %v632 = vld [vmem:[%s1 + $0x1250] sm:$0xff]
  %v633 = vld [vmem:[%s1 + $0x1258] sm:$0xff]
  %v634 = vld [vmem:[%s1 + $0x1260] sm:$0xff]
  %v635 = vld [vmem:[%s1 + $0x1268] sm:$0xff]
  %v636 = vld [vmem:[%s1 + $0x1270] sm:$0xff]
  %v637 = vld [vmem:[%s1 + $0x1278] sm:$0xff]
  %v638 = vld [vmem:[%s1 + $0x1280] sm:$0xff]
  %v639 = vld [vmem:[%s1 + $0x1288] sm:$0xff]
  %v640 = vld [vmem:[%s1 + $0x1290] sm:$0xff]
  %v641 = vld [vmem:[%s1 + $0x1298] sm:$0xff]
  %v642 = vld [vmem:[%s1 + $0x12a0] sm:$0xff]
  %v643 = vld [vmem:[%s1 + $0x12a8] sm:$0xff]
  %v644 = vld [vmem:[%s1 + $0x12b0] sm:$0xff]
  %v645 = vld [vmem:[%s1 + $0x12b8] sm:$0xff]
  %v646 = vld [vmem:[%s1 + $0x12c0] sm:$0xff]
  %v647 = vld [vmem:[%s1 + $0x12c8] sm:$0xff]
  %v648 = vld [vmem:[%s1 + $0x12d0] sm:$0xff]
  %v649 = vld [vmem:[%s1 + $0x12d8] sm:$0xff]
  %v650 = vld [vmem:[%s1 + $0x12e0] sm:$0xff]
  %v651 = vld [vmem:[%s1 + $0x12e8] sm:$0xff]
  %v652 = vld [vmem:[%s1 + $0x12f0] sm:$0xff]
  %v653 = vld [vmem:[%s1 + $0x12f8] sm:$0xff]
  %v654 = vld [vmem:[%s1 + $0x1300] sm:$0xff]
  %v655 = vld [vmem:[%s1 + $0x1308] sm:$0xff]
  %v656 = vld [vmem:[%s1 + $0x1310] sm:$0xff]
  %v657 = vld [vmem:[%s1 + $0x1318] sm:$0xff]
  %v658 = vld [vmem:[%s1 + $0x1320] sm:$0xff]
  %v659 = vld [vmem:[%s1 + $0x1328] sm:$0xff]
  %v660 = vld [vmem:[%s1 + $0x1330] sm:$0xff]
  %v661 = vld [vmem:[%s1 + $0x1338] sm:$0xff]
  %v662 = vld [vmem:[%s1 + $0x1340] sm:$0xff]
  %v663 = vld [vmem:[%s1 + $0x1348] sm:$0xff]
  %v664 = vld [vmem:[%s1 + $0x1350] sm:$0xff]
  %v665 = vld [vmem:[%s1 + $0x1358] sm:$0xff]
  %v666 = vld [vmem:[%s1 + $0x1360] sm:$0xff]
  %v667 = vld [vmem:[%s1 + $0x1368] sm:$0xff]
  %v668 = vld [vmem:[%s1 + $0x1370] sm:$0xff]
  %v669 = vld [vmem:[%s1 + $0x1378] sm:$0xff]
  %v670 = vld [vmem:[%s1 + $0x1380] sm:$0xff]
  %v671 = vld [vmem:[%s1 + $0x1388] sm:$0xff]
  %v672 = vld [vmem:[%s1 + $0x1390] sm:$0xff]
  %v673 = vld [vmem:[%s1 + $0x1398] sm:$0xff]
  %v674 = vld [vmem:[%s1 + $0x13a0] sm:$0xff]
  %v675 = vld [vmem:[%s1 + $0x13a8] sm:$0xff]
  %v676 = vld [vmem:[%s1 + $0x13b0] sm:$0xff]
  %v677 = vld [vmem:[%s1 + $0x13b8] sm:$0xff]
  %v678 = vld [vmem:[%s1 + $0x13c0] sm:$0xff]
  %v679 = vld [vmem:[%s1 + $0x13c8] sm:$0xff]
  %v680 = vld [vmem:[%s1 + $0x13d0] sm:$0xff]
  %v681 = vld [vmem:[%s1 + $0x13d8] sm:$0xff]
  %v682 = vld [vmem:[%s1 + $0x13e0] sm:$0xff]
  %v683 = vld [vmem:[%s1 + $0x13e8] sm:$0xff]
  %v684 = vld [vmem:[%s1 + $0x13f0] sm:$0xff]
  %v685 = vld [vmem:[%s1 + $0x13f8] sm:$0xff]
  %v686 = vld [vmem:[%s1 + $0x1400] sm:$0xff]
  %v687 = vld [vmem:[%s1 + $0x1408] sm:$0xff]
  %v688 = vld [vmem:[%s1 + $0x1410] sm:$0xff]
  %v689 = vld [vmem:[%s1 + $0x1418] sm:$0xff]
  %v690 = vld [vmem:[%s1 + $0x1420] sm:$0xff]
  %v691 = vld [vmem:[%s1 + $0x1428] sm:$0xff]
  %v692 = vld [vmem:[%s1 + $0x1430] sm:$0xff]
  %v693 = vld [vmem:[%s1 + $0x1438] sm:$0xff]
  %v694 = vld [vmem:[%s1 + $0x1440] sm:$0xff]
  %v695 = vld [vmem:[%s1 + $0x1448] sm:$0xff]
  %v696 = vld [vmem:[%s1 + $0x1450] sm:$0xff]
  %v697 = vld [vmem:[%s1 + $0x1458] sm:$0xff]
  %v698 = vld [vmem:[%s1 + $0x1460] sm:$0xff]
  %v699 = vld [vmem:[%s1 + $0x1468] sm:$0xff]
  %v700 = vld [vmem:[%s1 + $0x1470] sm:$0xff]
  %v701 = vld [vmem:[%s1 + $0x1478] sm:$0xff]
  %v702 = vld [vmem:[%s1 + $0x1480] sm:$0xff]
  %v703 = vld [vmem:[%s1 + $0x1488] sm:$0xff]
  %v704 = vld [vmem:[%s1 + $0x1490] sm:$0xff]
  %v705 = vld [vmem:[%s1 + $0x1498] sm:$0xff]
  %v706 = vld [vmem:[%s1 + $0x14a0] sm:$0xff]
  %v707 = vld [vmem:[%s1 + $0x14a8] sm:$0xff]
  %v708 = vld [vmem:[%s1 + $0x14b0] sm:$0xff]
  %v709 = vld [vmem:[%s1 + $0x14b8] sm:$0xff]
  %v710 = vld [vmem:[%s1 + $0x14c0] sm:$0xff]
  %v711 = vld [vmem:[%s1 + $0x14c8] sm:$0xff]
  %v712 = vld [vmem:[%s1 + $0x14d0] sm:$0xff]
  %v713 = vld [vmem:[%s1 + $0x14d8] sm:$0xff]
  %v714 = vld [vmem:[%s1 + $0x14e0] sm:$0xff]
  %v715 = vld [vmem:[%s1 + $0x14e8] sm:$0xff]
  %v716 = vld [vmem:[%s1 + $0x14f0] sm:$0xff]
  %v717 = vld [vmem:[%s1 + $0x14f8] sm:$0xff]
  %v718 = vld [vmem:[%s1 + $0x1500] sm:$0xff]
  %v719 = vld [vmem:[%s1 + $0x1508] sm:$0xff]
  %v720 = vld [vmem:[%s1 + $0x1510] sm:$0xff]
  %v721 = vld [vmem:[%s1 + $0x1518] sm:$0xff]
  %v722 = vld [vmem:[%s1 + $0x1520] sm:$0xff]
  %v723 = vld [vmem:[%s1 + $0x1528] sm:$0xff]
  %v724 = vld [vmem:[%s1 + $0x1530] sm:$0xff]
  %v725 = vld [vmem:[%s1 + $0x1538] sm:$0xff]
  %v726 = vld [vmem:[%s1 + $0x1540] sm:$0xff]
  %v727 = vld [vmem:[%s1 + $0x1548] sm:$0xff]
  %v728 = vld [vmem:[%s1 + $0x1550] sm:$0xff]
  %v729 = vld [vmem:[%s1 + $0x1558] sm:$0xff]
  %v730 = vld [vmem:[%s1 + $0x1560] sm:$0xff]
  %v731 = vld [vmem:[%s1 + $0x1568] sm:$0xff]
  %v732 = vld [vmem:[%s1 + $0x1570] sm:$0xff]
  %v733 = vld [vmem:[%s1 + $0x1578] sm:$0xff]
  %v734 = vld [vmem:[%s1 + $0x1580] sm:$0xff]
  %v735 = vld [vmem:[%s1 + $0x1588] sm:$0xff]
  %v736 = vld [vmem:[%s1 + $0x1590] sm:$0xff]
  %v737 = vld [vmem:[%s1 + $0x1598] sm:$0xff]
  %v738 = vld [vmem:[%s1 + $0x15a0] sm:$0xff]
  %v739 = vld [vmem:[%s1 + $0x15a8] sm:$0xff]
  %v740 = vld [vmem:[%s1 + $0x15b0] sm:$0xff]
  %v741 = vld [vmem:[%s1 + $0x15b8] sm:$0xff]
  %v742 = vld [vmem:[%s1 + $0x15c0] sm:$0xff]
  %v743 = vld [vmem:[%s1 + $0x15c8] sm:$0xff]
  %v744 = vld [vmem:[%s1 + $0x15d0] sm:$0xff]
  %v745 = vld [vmem:[%s1 + $0x15d8] sm:$0xff]
  %v746 = vld [vmem:[%s1 + $0x15e0] sm:$0xff]
  %v747 = vld [vmem:[%s1 + $0x15e8] sm:$0xff]
  %v748 = vld [vmem:[%s1 + $0x15f0] sm:$0xff]
  %v749 = vld [vmem:[%s1 + $0x15f8] sm:$0xff]
  %v750 = vld [vmem:[%s1 + $0x1600] sm:$0xff]
  %v751 = vld [vmem:[%s1 + $0x1608] sm:$0xff]
  %v752 = vld [vmem:[%s1 + $0x1610] sm:$0xff]
  %v753 = vld [vmem:[%s1 + $0x1618] sm:$0xff]
  %v754 = vld [vmem:[%s1 + $0x1620] sm:$0xff]
  %v755 = vld [vmem:[%s1 + $0x1628] sm:$0xff]
  %v756 = vld [vmem:[%s1 + $0x1630] sm:$0xff]
  %v757 = vld [vmem:[%s1 + $0x1638] sm:$0xff]
  %v758 = vld [vmem:[%s1 + $0x1640] sm:$0xff]
  %v759 = vld [vmem:[%s1 + $0x1648] sm:$0xff]
  %v760 = vld [vmem:[%s1 + $0x1650] sm:$0xff]
  %v761 = vld [vmem:[%s1 + $0x1658] sm:$0xff]
  %v762 = vld [vmem:[%s1 + $0x1660] sm:$0xff]
  %v763 = vld [vmem:[%s1 + $0x1668] sm:$0xff]
  %v764 = vld [vmem:[%s1 + $0x1670] sm:$0xff]
  %v765 = vld [vmem:[%s1 + $0x1678] sm:$0xff]
  %v766 = vld [vmem:[%s1 + $0x1680] sm:$0xff]
  %v767 = vld [vmem:[%s1 + $0x1688] sm:$0xff]
  %v768 = vld [vmem:[%s1 + $0x1690] sm:$0xff]
  %v769 = vld [vmem:[%s1 + $0x1698] sm:$0xff]
  %v770 = vld [vmem:[%s1 + $0x16a0] sm:$0xff]
  %v771 = vld [vmem:[%s1 + $0x16a8] sm:$0xff]
  %v772 = vld [vmem:[%s1 + $0x16b0] sm:$0xff]
  %v773 = vld [vmem:[%s1 + $0x16b8] sm:$0xff]
  %v774 = vld [vmem:[%s1 + $0x16c0] sm:$0xff]
  %v775 = vld [vmem:[%s1 + $0x16c8] sm:$0xff]
  %v776 = vld [vmem:[%s1 + $0x16d0] sm:$0xff]
  %v777 = vld [vmem:[%s1 + $0x16d8] sm:$0xff]
  %v778 = vld [vmem:[%s1 + $0x16e0] sm:$0xff]
  %v779 = vld [vmem:[%s1 + $0x16e8] sm:$0xff]
  %v780 = vld [vmem:[%s1 + $0x16f0] sm:$0xff]
  %v781 = vld [vmem:[%s1 + $0x16f8] sm:$0xff]
  %v782 = vld [vmem:[%s1 + $0x1700] sm:$0xff]
  %v783 = vld [vmem:[%s1 + $0x1708] sm:$0xff]
  %v784 = vld [vmem:[%s1 + $0x1710] sm:$0xff]
  %v785 = vld [vmem:[%s1 + $0x1718] sm:$0xff]
  %v786 = vld [vmem:[%s1 + $0x1720] sm:$0xff]
  %v787 = vld [vmem:[%s1 + $0x1728] sm:$0xff]
  %v788 = vld [vmem:[%s1 + $0x1730] sm:$0xff]
  %v789 = vld [vmem:[%s1 + $0x1738] sm:$0xff]
  %v790 = vld [vmem:[%s1 + $0x1740] sm:$0xff]
  %v791 = vld [vmem:[%s1 + $0x1748] sm:$0xff]
  %v792 = vld [vmem:[%s1 + $0x1750] sm:$0xff]
  %v793 = vld [vmem:[%s1 + $0x1758] sm:$0xff]
  %v794 = vld [vmem:[%s1 + $0x1760] sm:$0xff]
  %v795 = vld [vmem:[%s1 + $0x1768] sm:$0xff]
  %v796 = vld [vmem:[%s1 + $0x1770] sm:$0xff]
  %v797 = vld [vmem:[%s1 + $0x1778] sm:$0xff]
  %v798 = vld [vmem:[%s1 + $0x1780] sm:$0xff]
  %v799 = vld [vmem:[%s1 + $0x1788] sm:$0xff]
  %v800 = vld [vmem:[%s1 + $0x1790] sm:$0xff]
  %v801 = vld [vmem:[%s1 + $0x1798] sm:$0xff]
  %v802 = vld [vmem:[%s1 + $0x17a0] sm:$0xff]
  %v803 = vld [vmem:[%s1 + $0x17a8] sm:$0xff]
  %v804 = vld [vmem:[%s1 + $0x17b0] sm:$0xff]
  %v805 = vld [vmem:[%s1 + $0x17b8] sm:$0xff]
  %v806 = vld [vmem:[%s1 + $0x17c0] sm:$0xff]
  %v807 = vld [vmem:[%s1 + $0x17c8] sm:$0xff]
  %v808 = vld [vmem:[%s1 + $0x17d0] sm:$0xff]
  %v809 = vld [vmem:[%s1 + $0x17d8] sm:$0xff]
  %v810 = vld [vmem:[%s1 + $0x17e0] sm:$0xff]
  %v811 = vld [vmem:[%s1 + $0x17e8] sm:$0xff]
  %v812 = vld [vmem:[%s1 + $0x17f0] sm:$0xff]
  %v813 = vld [vmem:[%s1 + $0x17f8] sm:$0xff]
  %v814 = vld [vmem:[%s1 + $0x1800] sm:$0xff]
  %v815 = vld [vmem:[%s1 + $0x1808] sm:$0xff]
  %v816 = vld [vmem:[%s1 + $0x1810] sm:$0xff]
  %v817 = vld [vmem:[%s1 + $0x1818] sm:$0xff]
  %v818 = vld [vmem:[%s1 + $0x1820] sm:$0xff]
  %v819 = vld [vmem:[%s1 + $0x1828] sm:$0xff]
  %v820 = vld [vmem:[%s1 + $0x1830] sm:$0xff]
  %v821 = vld [vmem:[%s1 + $0x1838] sm:$0xff]
  %v822 = vld [vmem:[%s1 + $0x1840] sm:$0xff]
  %v823 = vld [vmem:[%s1 + $0x1848] sm:$0xff]
  %v824 = vld [vmem:[%s1 + $0x1850] sm:$0xff]
  %v825 = vld [vmem:[%s1 + $0x1858] sm:$0xff]
  %v826 = vld [vmem:[%s1 + $0x1860] sm:$0xff]
  %v827 = vld [vmem:[%s1 + $0x1868] sm:$0xff]
  %v828 = vld [vmem:[%s1 + $0x1870] sm:$0xff]
  %v829 = vld [vmem:[%s1 + $0x1878] sm:$0xff]
  %v830 = vld [vmem:[%s1 + $0x1880] sm:$0xff]
  %v831 = vld [vmem:[%s1 + $0x1888] sm:$0xff]
  %v832 = vld [vmem:[%s1 + $0x1890] sm:$0xff]
  %v833 = vld [vmem:[%s1 + $0x1898] sm:$0xff]
  %v834 = vld [vmem:[%s1 + $0x18a0] sm:$0xff]
  %v835 = vld [vmem:[%s1 + $0x18a8] sm:$0xff]
  %v836 = vld [vmem:[%s1 + $0x18b0] sm:$0xff]
  %v837 = vld [vmem:[%s1 + $0x18b8] sm:$0xff]
  %v838 = vld [vmem:[%s1 + $0x18c0] sm:$0xff]
  %v839 = vld [vmem:[%s1 + $0x18c8] sm:$0xff]
  %v840 = vld [vmem:[%s1 + $0x18d0] sm:$0xff]
  %v841 = vld [vmem:[%s1 + $0x18d8] sm:$0xff]
  %v842 = vld [vmem:[%s1 + $0x18e0] sm:$0xff]
  %v843 = vld [vmem:[%s1 + $0x18e8] sm:$0xff]
  %v844 = vld [vmem:[%s1 + $0x18f0] sm:$0xff]
  %v845 = vld [vmem:[%s1 + $0x18f8] sm:$0xff]
  %v846 = vld [vmem:[%s2] sm:$0xf]
  %v848 = vperm.slane %v846, 0
  %v849 = vperm.slane %v846, 1
  %v850 = vperm.slane %v846, 2
  %v851 = vperm.slane %v846, 3
  %v882 = vunpack.c.l.b16 %v20
  %v883 = vunpack.c.h.b16 %v20
  %v884 = vunpack.c.l.b16 %v21
  %v885 = vunpack.c.h.b16 %v21
  %v886 = vunpack.c.l.b16 %v22
  %v887 = vunpack.c.h.b16 %v22
  %v888 = vunpack.c.l.b16 %v23
  %v889 = vunpack.c.h.b16 %v23
  %v890 = vunpack.c.l.b16 %v24
  %v891 = vunpack.c.h.b16 %v24
  %v892 = vunpack.c.l.b16 %v25
  %v893 = vunpack.c.h.b16 %v25
  %v894 = vunpack.c.l.b16 %v26
  %v895 = vunpack.c.h.b16 %v26
  %v896 = vunpack.c.l.b16 %v27
  %v897 = vunpack.c.h.b16 %v27
  %v898 = vunpack.c.l.b16 %v28
  %v899 = vunpack.c.h.b16 %v28
  %v900 = vunpack.c.l.b16 %v29
  %v901 = vunpack.c.h.b16 %v29
  %v902 = vunpack.c.l.b16 %v30
  %v903 = vunpack.c.h.b16 %v30
  %v904 = vunpack.c.l.b16 %v31
  %v905 = vunpack.c.h.b16 %v31
  %v906 = vunpack.c.l.b16 %v32
  %v907 = vunpack.c.l.b16 %v33
  %v908 = vunpack.c.h.b16 %v33
  %v909 = vunpack.c.l.b16 %v34
  %v910 = vunpack.c.h.b16 %v34
  %v911 = vunpack.c.l.b16 %v35
  %v912 = vunpack.c.h.b16 %v35
  %v913 = vunpack.c.l.b16 %v36
  %v914 = vunpack.c.h.b16 %v36
  %v915 = vunpack.c.l.b16 %v37
  %v916 = vunpack.c.h.b16 %v37
  %v917 = vunpack.c.l.b16 %v38
  %v918 = vunpack.c.h.b16 %v38
  %v919 = vunpack.c.l.b16 %v39
  %v920 = vunpack.c.h.b16 %v39
  %v921 = vunpack.c.l.b16 %v40
  %v922 = vunpack.c.h.b16 %v40
  %v923 = vunpack.c.l.b16 %v41
  %v924 = vunpack.c.h.b16 %v41
  %v925 = vunpack.c.l.b16 %v42
  %v926 = vunpack.c.h.b16 %v42
  %v927 = vunpack.c.l.b16 %v43
  %v928 = vunpack.c.h.b16 %v43
  %v929 = vunpack.c.l.b16 %v44
  %v930 = vunpack.c.h.b16 %v44
  %v931 = vunpack.c.l.b16 %v45
  %v932 = vpack.c.b16 %v907, %v882
  %v933 = vpack.c.b16 %v908, %v883
  %v934 = vpack.c.b16 %v909, %v884
  %v935 = vpack.c.b16 %v910, %v885
  %v936 = vpack.c.b16 %v911, %v886
  %v937 = vpack.c.b16 %v912, %v887
  %v938 = vpack.c.b16 %v913, %v888
  %v939 = vpack.c.b16 %v914, %v889
  %v940 = vpack.c.b16 %v915, %v890
  %v941 = vpack.c.b16 %v916, %v891
  %v942 = vpack.c.b16 %v917, %v892
  %v943 = vpack.c.b16 %v918, %v893
  %v944 = vpack.c.b16 %v919, %v894
  %v945 = vpack.c.b16 %v920, %v895
  %v946 = vpack.c.b16 %v921, %v896
  %v947 = vpack.c.b16 %v922, %v897
  %v948 = vpack.c.b16 %v923, %v898
  %v949 = vpack.c.b16 %v924, %v899
  %v950 = vpack.c.b16 %v925, %v900
  %v951 = vpack.c.b16 %v926, %v901
  %v952 = vpack.c.b16 %v927, %v902
  %v953 = vpack.c.b16 %v928, %v903
  %v954 = vpack.c.b16 %v929, %v904
  %v955 = vpack.c.b16 %v930, %v905
  %v956 = vpack.c.b16 %v931, %v906
  %v1782 = vunpack.c.l.b16 %v46
  %v1783 = vunpack.c.h.b16 %v46
  %v1784 = vunpack.c.l.b16 %v47
  %v1785 = vunpack.c.h.b16 %v47
  %v1786 = vunpack.c.l.b16 %v48
  %v1787 = vunpack.c.h.b16 %v48
  %v1788 = vunpack.c.l.b16 %v49
  %v1789 = vunpack.c.h.b16 %v49
  %v1790 = vunpack.c.l.b16 %v50
  %v1791 = vunpack.c.h.b16 %v50
  %v1792 = vunpack.c.l.b16 %v51
  %v1793 = vunpack.c.h.b16 %v51
  %v1794 = vunpack.c.l.b16 %v52
  %v1795 = vunpack.c.h.b16 %v52
  %v1796 = vunpack.c.l.b16 %v53
  %v1797 = vunpack.c.h.b16 %v53
  %v1798 = vunpack.c.l.b16 %v54
  %v1799 = vunpack.c.h.b16 %v54
  %v1800 = vunpack.c.l.b16 %v55
  %v1801 = vunpack.c.h.b16 %v55
  %v1802 = vunpack.c.l.b16 %v56
  %v1803 = vunpack.c.h.b16 %v56
  %v1804 = vunpack.c.l.b16 %v57
  %v1805 = vunpack.c.h.b16 %v57
  %v1806 = vunpack.c.l.b16 %v58
  %v1807 = vunpack.c.h.b16 %v58
  %v1808 = vunpack.c.l.b16 %v59
  %v1809 = vunpack.c.h.b16 %v59
  %v1810 = vunpack.c.l.b16 %v60
  %v1811 = vunpack.c.h.b16 %v60
  %v1812 = vunpack.c.l.b16 %v61
  %v1813 = vunpack.c.h.b16 %v61
  %v1814 = vunpack.c.l.b16 %v62
  %v1815 = vunpack.c.h.b16 %v62
  %v1816 = vunpack.c.l.b16 %v63
  %v1817 = vunpack.c.h.b16 %v63
  %v1818 = vunpack.c.l.b16 %v64
  %v1819 = vunpack.c.h.b16 %v64
  %v1820 = vunpack.c.l.b16 %v65
  %v1821 = vunpack.c.h.b16 %v65
  %v1822 = vunpack.c.l.b16 %v66
  %v1823 = vunpack.c.h.b16 %v66
  %v1824 = vunpack.c.l.b16 %v67
  %v1825 = vunpack.c.h.b16 %v67
  %v1826 = vunpack.c.l.b16 %v68
  %v1827 = vunpack.c.h.b16 %v68
  %v1828 = vunpack.c.l.b16 %v69
  %v1829 = vunpack.c.h.b16 %v69
  %v1830 = vunpack.c.l.b16 %v70
  %v1831 = vunpack.c.h.b16 %v70
  %v1832 = vunpack.c.l.b16 %v71
  %v1833 = vunpack.c.h.b16 %v71
  %v1834 = vunpack.c.l.b16 %v72
  %v1835 = vunpack.c.h.b16 %v72
  %v1836 = vunpack.c.l.b16 %v73
  %v1837 = vunpack.c.h.b16 %v73
  %v1838 = vunpack.c.l.b16 %v74
  %v1839 = vunpack.c.h.b16 %v74
  %v1840 = vunpack.c.l.b16 %v75
  %v1841 = vunpack.c.h.b16 %v75
  %v1842 = vunpack.c.l.b16 %v76
  %v1843 = vunpack.c.h.b16 %v76
  %v1844 = vunpack.c.l.b16 %v77
  %v1845 = vunpack.c.h.b16 %v77
  %v1846 = vunpack.c.l.b16 %v78
  %v1847 = vunpack.c.h.b16 %v78
  %v1848 = vunpack.c.l.b16 %v79
  %v1849 = vunpack.c.h.b16 %v79
  %v1850 = vunpack.c.l.b16 %v80
  %v1851 = vunpack.c.h.b16 %v80
  %v1852 = vunpack.c.l.b16 %v81
  %v1853 = vunpack.c.h.b16 %v81
  %v1854 = vunpack.c.l.b16 %v82
  %v1855 = vunpack.c.h.b16 %v82
  %v1856 = vunpack.c.l.b16 %v83
  %v1857 = vunpack.c.h.b16 %v83
  %v1858 = vunpack.c.l.b16 %v84
  %v1859 = vunpack.c.h.b16 %v84
  %v1860 = vunpack.c.l.b16 %v85
  %v1861 = vunpack.c.h.b16 %v85
  %v1862 = vunpack.c.l.b16 %v86
  %v1863 = vunpack.c.h.b16 %v86
  %v1864 = vunpack.c.l.b16 %v87
  %v1865 = vunpack.c.h.b16 %v87
  %v1866 = vunpack.c.l.b16 %v88
  %v1867 = vunpack.c.h.b16 %v88
  %v1868 = vunpack.c.l.b16 %v89
  %v1869 = vunpack.c.h.b16 %v89
  %v1870 = vunpack.c.l.b16 %v90
  %v1871 = vunpack.c.h.b16 %v90
  %v1872 = vunpack.c.l.b16 %v91
  %v1873 = vunpack.c.h.b16 %v91
  %v1874 = vunpack.c.l.b16 %v92
  %v1875 = vunpack.c.h.b16 %v92
  %v1876 = vunpack.c.l.b16 %v93
  %v1877 = vunpack.c.h.b16 %v93
  %v1878 = vunpack.c.l.b16 %v94
  %v1879 = vunpack.c.h.b16 %v94
  %v1880 = vunpack.c.l.b16 %v95
  %v1881 = vunpack.c.h.b16 %v95
  %v1882 = vunpack.c.l.b16 %v96
  %v1883 = vunpack.c.h.b16 %v96
  %v1884 = vunpack.c.l.b16 %v97
  %v1885 = vunpack.c.h.b16 %v97
  %v1886 = vunpack.c.l.b16 %v98
  %v1887 = vunpack.c.h.b16 %v98
  %v1888 = vunpack.c.l.b16 %v99
  %v1889 = vunpack.c.h.b16 %v99
  %v1890 = vunpack.c.l.b16 %v100
  %v1891 = vunpack.c.h.b16 %v100
  %v1892 = vunpack.c.l.b16 %v101
  %v1893 = vunpack.c.h.b16 %v101
  %v1894 = vunpack.c.l.b16 %v102
  %v1895 = vunpack.c.h.b16 %v102
  %v1896 = vunpack.c.l.b16 %v103
  %v1897 = vunpack.c.h.b16 %v103
  %v1898 = vunpack.c.l.b16 %v104
  %v1899 = vunpack.c.h.b16 %v104
  %v1900 = vunpack.c.l.b16 %v105
  %v1901 = vunpack.c.h.b16 %v105
  %v1902 = vunpack.c.l.b16 %v106
  %v1903 = vunpack.c.h.b16 %v106
  %v1904 = vunpack.c.l.b16 %v107
  %v1905 = vunpack.c.h.b16 %v107
  %v1906 = vunpack.c.l.b16 %v108
  %v1907 = vunpack.c.h.b16 %v108
  %v1908 = vunpack.c.l.b16 %v109
  %v1909 = vunpack.c.h.b16 %v109
  %v1910 = vunpack.c.l.b16 %v110
  %v1911 = vunpack.c.h.b16 %v110
  %v1912 = vunpack.c.l.b16 %v111
  %v1913 = vunpack.c.h.b16 %v111
  %v1914 = vunpack.c.l.b16 %v112
  %v1915 = vunpack.c.h.b16 %v112
  %v1916 = vunpack.c.l.b16 %v113
  %v1917 = vunpack.c.h.b16 %v113
  %v1918 = vunpack.c.l.b16 %v114
  %v1919 = vunpack.c.h.b16 %v114
  %v1920 = vunpack.c.l.b16 %v115
  %v1921 = vunpack.c.h.b16 %v115
  %v1922 = vunpack.c.l.b16 %v116
  %v1923 = vunpack.c.h.b16 %v116
  %v1924 = vunpack.c.l.b16 %v117
  %v1925 = vunpack.c.h.b16 %v117
  %v1926 = vunpack.c.l.b16 %v118
  %v1927 = vunpack.c.h.b16 %v118
  %v1928 = vunpack.c.l.b16 %v119
  %v1929 = vunpack.c.h.b16 %v119
  %v1930 = vunpack.c.l.b16 %v120
  %v1931 = vunpack.c.h.b16 %v120
  %v1932 = vunpack.c.l.b16 %v121
  %v1933 = vunpack.c.h.b16 %v121
  %v1934 = vunpack.c.l.b16 %v122
  %v1935 = vunpack.c.h.b16 %v122
  %v1936 = vunpack.c.l.b16 %v123
  %v1937 = vunpack.c.h.b16 %v123
  %v1938 = vunpack.c.l.b16 %v124
  %v1939 = vunpack.c.h.b16 %v124
  %v1940 = vunpack.c.l.b16 %v125
  %v1941 = vunpack.c.h.b16 %v125
  %v1942 = vunpack.c.l.b16 %v126
  %v1943 = vunpack.c.h.b16 %v126
  %v1944 = vunpack.c.l.b16 %v127
  %v1945 = vunpack.c.h.b16 %v127
  %v1946 = vunpack.c.l.b16 %v128
  %v1947 = vunpack.c.h.b16 %v128
  %v1948 = vunpack.c.l.b16 %v129
  %v1949 = vunpack.c.h.b16 %v129
  %v1950 = vunpack.c.l.b16 %v130
  %v1951 = vunpack.c.h.b16 %v130
  %v1952 = vunpack.c.l.b16 %v131
  %v1953 = vunpack.c.h.b16 %v131
  %v1954 = vunpack.c.l.b16 %v132
  %v1955 = vunpack.c.h.b16 %v132
  %v1956 = vunpack.c.l.b16 %v133
  %v1957 = vunpack.c.h.b16 %v133
  %v1958 = vunpack.c.l.b16 %v134
  %v1959 = vunpack.c.h.b16 %v134
  %v1960 = vunpack.c.l.b16 %v135
  %v1961 = vunpack.c.h.b16 %v135
  %v1962 = vunpack.c.l.b16 %v136
  %v1963 = vunpack.c.h.b16 %v136
  %v1964 = vunpack.c.l.b16 %v137
  %v1965 = vunpack.c.h.b16 %v137
  %v1966 = vunpack.c.l.b16 %v138
  %v1967 = vunpack.c.h.b16 %v138
  %v1968 = vunpack.c.l.b16 %v139
  %v1969 = vunpack.c.h.b16 %v139
  %v1970 = vunpack.c.l.b16 %v140
  %v1971 = vunpack.c.h.b16 %v140
  %v1972 = vunpack.c.l.b16 %v141
  %v1973 = vunpack.c.h.b16 %v141
  %v1974 = vunpack.c.l.b16 %v142
  %v1975 = vunpack.c.h.b16 %v142
  %v1976 = vunpack.c.l.b16 %v143
  %v1977 = vunpack.c.h.b16 %v143
  %v1978 = vunpack.c.l.b16 %v144
  %v1979 = vunpack.c.h.b16 %v144
  %v1980 = vunpack.c.l.b16 %v145
  %v1981 = vunpack.c.h.b16 %v145
  %v1982 = vunpack.c.l.b16 %v146
  %v1983 = vunpack.c.h.b16 %v146
  %v1984 = vunpack.c.l.b16 %v147
  %v1985 = vunpack.c.h.b16 %v147
  %v1986 = vunpack.c.l.b16 %v148
  %v1987 = vunpack.c.h.b16 %v148
  %v1988 = vunpack.c.l.b16 %v149
  %v1989 = vunpack.c.h.b16 %v149
  %v1990 = vunpack.c.l.b16 %v150
  %v1991 = vunpack.c.h.b16 %v150
  %v1992 = vunpack.c.l.b16 %v151
  %v1993 = vunpack.c.h.b16 %v151
  %v1994 = vunpack.c.l.b16 %v152
  %v1995 = vunpack.c.h.b16 %v152
  %v1996 = vunpack.c.l.b16 %v153
  %v1997 = vunpack.c.h.b16 %v153
  %v1998 = vunpack.c.l.b16 %v154
  %v1999 = vunpack.c.h.b16 %v154
  %v2000 = vunpack.c.l.b16 %v155
  %v2001 = vunpack.c.h.b16 %v155
  %v2002 = vunpack.c.l.b16 %v156
  %v2003 = vunpack.c.h.b16 %v156
  %v2004 = vunpack.c.l.b16 %v157
  %v2005 = vunpack.c.h.b16 %v157
  %v2006 = vunpack.c.l.b16 %v158
  %v2007 = vunpack.c.h.b16 %v158
  %v2008 = vunpack.c.l.b16 %v159
  %v2009 = vunpack.c.h.b16 %v159
  %v2010 = vunpack.c.l.b16 %v160
  %v2011 = vunpack.c.h.b16 %v160
  %v2012 = vunpack.c.l.b16 %v161
  %v2013 = vunpack.c.h.b16 %v161
  %v2014 = vunpack.c.l.b16 %v162
  %v2015 = vunpack.c.h.b16 %v162
  %v2016 = vunpack.c.l.b16 %v163
  %v2017 = vunpack.c.h.b16 %v163
  %v2018 = vunpack.c.l.b16 %v164
  %v2019 = vunpack.c.h.b16 %v164
  %v2020 = vunpack.c.l.b16 %v165
  %v2021 = vunpack.c.h.b16 %v165
  %v2022 = vunpack.c.l.b16 %v166
  %v2023 = vunpack.c.h.b16 %v166
  %v2024 = vunpack.c.l.b16 %v167
  %v2025 = vunpack.c.h.b16 %v167
  %v2026 = vunpack.c.l.b16 %v168
  %v2027 = vunpack.c.h.b16 %v168
  %v2028 = vunpack.c.l.b16 %v169
  %v2029 = vunpack.c.h.b16 %v169
  %v2030 = vunpack.c.l.b16 %v170
  %v2031 = vunpack.c.h.b16 %v170
  %v2032 = vunpack.c.l.b16 %v171
  %v2033 = vunpack.c.h.b16 %v171
  %v2034 = vunpack.c.l.b16 %v172
  %v2035 = vunpack.c.h.b16 %v172
  %v2036 = vunpack.c.l.b16 %v173
  %v2037 = vunpack.c.h.b16 %v173
  %v2038 = vunpack.c.l.b16 %v174
  %v2039 = vunpack.c.h.b16 %v174
  %v2040 = vunpack.c.l.b16 %v175
  %v2041 = vunpack.c.h.b16 %v175
  %v2042 = vunpack.c.l.b16 %v176
  %v2043 = vunpack.c.h.b16 %v176
  %v2044 = vunpack.c.l.b16 %v177
  %v2045 = vunpack.c.h.b16 %v177
  %v2046 = vunpack.c.l.b16 %v178
  %v2047 = vunpack.c.h.b16 %v178
  %v2048 = vunpack.c.l.b16 %v179
  %v2049 = vunpack.c.h.b16 %v179
  %v2050 = vunpack.c.l.b16 %v180
  %v2051 = vunpack.c.h.b16 %v180
  %v2052 = vunpack.c.l.b16 %v181
  %v2053 = vunpack.c.h.b16 %v181
  %v2054 = vunpack.c.l.b16 %v182
  %v2055 = vunpack.c.h.b16 %v182
  %v2056 = vunpack.c.l.b16 %v183
  %v2057 = vunpack.c.h.b16 %v183
  %v2058 = vunpack.c.l.b16 %v184
  %v2059 = vunpack.c.h.b16 %v184
  %v2060 = vunpack.c.l.b16 %v185
  %v2061 = vunpack.c.h.b16 %v185
  %v2062 = vunpack.c.l.b16 %v186
  %v2063 = vunpack.c.h.b16 %v186
  %v2064 = vunpack.c.l.b16 %v187
  %v2065 = vunpack.c.h.b16 %v187
  %v2066 = vunpack.c.l.b16 %v188
  %v2067 = vunpack.c.h.b16 %v188
  %v2068 = vunpack.c.l.b16 %v189
  %v2069 = vunpack.c.h.b16 %v189
  %v2070 = vunpack.c.l.b16 %v190
  %v2071 = vunpack.c.h.b16 %v190
  %v2072 = vunpack.c.l.b16 %v191
  %v2073 = vunpack.c.h.b16 %v191
  %v2074 = vunpack.c.l.b16 %v192
  %v2075 = vunpack.c.h.b16 %v192
  %v2076 = vunpack.c.l.b16 %v193
  %v2077 = vunpack.c.h.b16 %v193
  %v2078 = vunpack.c.l.b16 %v194
  %v2079 = vunpack.c.h.b16 %v194
  %v2080 = vunpack.c.l.b16 %v195
  %v2081 = vunpack.c.h.b16 %v195
  %v2082 = vunpack.c.l.b16 %v196
  %v2083 = vunpack.c.h.b16 %v196
  %v2084 = vunpack.c.l.b16 %v197
  %v2085 = vunpack.c.h.b16 %v197
  %v2086 = vunpack.c.l.b16 %v198
  %v2087 = vunpack.c.h.b16 %v198
  %v2088 = vunpack.c.l.b16 %v199
  %v2089 = vunpack.c.h.b16 %v199
  %v2090 = vunpack.c.l.b16 %v200
  %v2091 = vunpack.c.h.b16 %v200
  %v2092 = vunpack.c.l.b16 %v201
  %v2093 = vunpack.c.h.b16 %v201
  %v2094 = vunpack.c.l.b16 %v202
  %v2095 = vunpack.c.h.b16 %v202
  %v2096 = vunpack.c.l.b16 %v203
  %v2097 = vunpack.c.h.b16 %v203
  %v2098 = vunpack.c.l.b16 %v204
  %v2099 = vunpack.c.h.b16 %v204
  %v2100 = vunpack.c.l.b16 %v205
  %v2101 = vunpack.c.h.b16 %v205
  %v2102 = vunpack.c.l.b16 %v206
  %v2103 = vunpack.c.h.b16 %v206
  %v2104 = vunpack.c.l.b16 %v207
  %v2105 = vunpack.c.h.b16 %v207
  %v2106 = vunpack.c.l.b16 %v208
  %v2107 = vunpack.c.h.b16 %v208
  %v2108 = vunpack.c.l.b16 %v209
  %v2109 = vunpack.c.h.b16 %v209
  %v2110 = vunpack.c.l.b16 %v210
  %v2111 = vunpack.c.h.b16 %v210
  %v2112 = vunpack.c.l.b16 %v211
  %v2113 = vunpack.c.h.b16 %v211
  %v2114 = vunpack.c.l.b16 %v212
  %v2115 = vunpack.c.h.b16 %v212
  %v2116 = vunpack.c.l.b16 %v213
  %v2117 = vunpack.c.h.b16 %v213
  %v2118 = vunpack.c.l.b16 %v214
  %v2119 = vunpack.c.h.b16 %v214
  %v2120 = vunpack.c.l.b16 %v215
  %v2121 = vunpack.c.h.b16 %v215
  %v2122 = vunpack.c.l.b16 %v216
  %v2123 = vunpack.c.h.b16 %v216
  %v2124 = vunpack.c.l.b16 %v217
  %v2125 = vunpack.c.h.b16 %v217
  %v2126 = vunpack.c.l.b16 %v218
  %v2127 = vunpack.c.h.b16 %v218
  %v2128 = vunpack.c.l.b16 %v219
  %v2129 = vunpack.c.h.b16 %v219
  %v2130 = vunpack.c.l.b16 %v220
  %v2131 = vunpack.c.h.b16 %v220
  %v2132 = vunpack.c.l.b16 %v221
  %v2133 = vunpack.c.h.b16 %v221
  %v2134 = vunpack.c.l.b16 %v222
  %v2135 = vunpack.c.h.b16 %v222
  %v2136 = vunpack.c.l.b16 %v223
  %v2137 = vunpack.c.h.b16 %v223
  %v2138 = vunpack.c.l.b16 %v224
  %v2139 = vunpack.c.h.b16 %v224
  %v2140 = vunpack.c.l.b16 %v225
  %v2141 = vunpack.c.h.b16 %v225
  %v2142 = vunpack.c.l.b16 %v226
  %v2143 = vunpack.c.h.b16 %v226
  %v2144 = vunpack.c.l.b16 %v227
  %v2145 = vunpack.c.h.b16 %v227
  %v2146 = vunpack.c.l.b16 %v228
  %v2147 = vunpack.c.h.b16 %v228
  %v2148 = vunpack.c.l.b16 %v229
  %v2149 = vunpack.c.h.b16 %v229
  %v2150 = vunpack.c.l.b16 %v230
  %v2151 = vunpack.c.h.b16 %v230
  %v2152 = vunpack.c.l.b16 %v231
  %v2153 = vunpack.c.h.b16 %v231
  %v2154 = vunpack.c.l.b16 %v232
  %v2155 = vunpack.c.h.b16 %v232
  %v2156 = vunpack.c.l.b16 %v233
  %v2157 = vunpack.c.h.b16 %v233
  %v2158 = vunpack.c.l.b16 %v234
  %v2159 = vunpack.c.h.b16 %v234
  %v2160 = vunpack.c.l.b16 %v235
  %v2161 = vunpack.c.h.b16 %v235
  %v2162 = vunpack.c.l.b16 %v236
  %v2163 = vunpack.c.h.b16 %v236
  %v2164 = vunpack.c.l.b16 %v237
  %v2165 = vunpack.c.h.b16 %v237
  %v2166 = vunpack.c.l.b16 %v238
  %v2167 = vunpack.c.h.b16 %v238
  %v2168 = vunpack.c.l.b16 %v239
  %v2169 = vunpack.c.h.b16 %v239
  %v2170 = vunpack.c.l.b16 %v240
  %v2171 = vunpack.c.h.b16 %v240
  %v2172 = vunpack.c.l.b16 %v241
  %v2173 = vunpack.c.h.b16 %v241
  %v2174 = vunpack.c.l.b16 %v242
  %v2175 = vunpack.c.h.b16 %v242
  %v2176 = vunpack.c.l.b16 %v243
  %v2177 = vunpack.c.h.b16 %v243
  %v2178 = vunpack.c.l.b16 %v244
  %v2179 = vunpack.c.h.b16 %v244
  %v2180 = vunpack.c.l.b16 %v245
  %v2181 = vunpack.c.h.b16 %v245
  %v2182 = vunpack.c.l.b16 %v246
  %v2183 = vunpack.c.h.b16 %v246
  %v2184 = vunpack.c.l.b16 %v247
  %v2185 = vunpack.c.h.b16 %v247
  %v2186 = vunpack.c.l.b16 %v248
  %v2187 = vunpack.c.h.b16 %v248
  %v2188 = vunpack.c.l.b16 %v249
  %v2189 = vunpack.c.h.b16 %v249
  %v2190 = vunpack.c.l.b16 %v250
  %v2191 = vunpack.c.h.b16 %v250
  %v2192 = vunpack.c.l.b16 %v251
  %v2193 = vunpack.c.h.b16 %v251
  %v2194 = vunpack.c.l.b16 %v252
  %v2195 = vunpack.c.h.b16 %v252
  %v2196 = vunpack.c.l.b16 %v253
  %v2197 = vunpack.c.h.b16 %v253
  %v2198 = vunpack.c.l.b16 %v254
  %v2199 = vunpack.c.h.b16 %v254
  %v2200 = vunpack.c.l.b16 %v255
  %v2201 = vunpack.c.h.b16 %v255
  %v2202 = vunpack.c.l.b16 %v256
  %v2203 = vunpack.c.h.b16 %v256
  %v2204 = vunpack.c.l.b16 %v257
  %v2205 = vunpack.c.h.b16 %v257
  %v2206 = vunpack.c.l.b16 %v258
  %v2207 = vunpack.c.h.b16 %v258
  %v2208 = vunpack.c.l.b16 %v259
  %v2209 = vunpack.c.h.b16 %v259
  %v2210 = vunpack.c.l.b16 %v260
  %v2211 = vunpack.c.h.b16 %v260
  %v2212 = vunpack.c.l.b16 %v261
  %v2213 = vunpack.c.h.b16 %v261
  %v2214 = vunpack.c.l.b16 %v262
  %v2215 = vunpack.c.h.b16 %v262
  %v2216 = vunpack.c.l.b16 %v263
  %v2217 = vunpack.c.h.b16 %v263
  %v2218 = vunpack.c.l.b16 %v264
  %v2219 = vunpack.c.h.b16 %v264
  %v2220 = vunpack.c.l.b16 %v265
  %v2221 = vunpack.c.h.b16 %v265
  %v2222 = vunpack.c.l.b16 %v266
  %v2223 = vunpack.c.h.b16 %v266
  %v2224 = vunpack.c.l.b16 %v267
  %v2225 = vunpack.c.h.b16 %v267
  %v2226 = vunpack.c.l.b16 %v268
  %v2227 = vunpack.c.h.b16 %v268
  %v2228 = vunpack.c.l.b16 %v269
  %v2229 = vunpack.c.h.b16 %v269
  %v2230 = vunpack.c.l.b16 %v270
  %v2231 = vunpack.c.h.b16 %v270
  %v2232 = vunpack.c.l.b16 %v271
  %v2233 = vunpack.c.h.b16 %v271
  %v2234 = vunpack.c.l.b16 %v272
  %v2235 = vunpack.c.h.b16 %v272
  %v2236 = vunpack.c.l.b16 %v273
  %v2237 = vunpack.c.h.b16 %v273
  %v2238 = vunpack.c.l.b16 %v274
  %v2239 = vunpack.c.h.b16 %v274
  %v2240 = vunpack.c.l.b16 %v275
  %v2241 = vunpack.c.h.b16 %v275
  %v2242 = vunpack.c.l.b16 %v276
  %v2243 = vunpack.c.h.b16 %v276
  %v2244 = vunpack.c.l.b16 %v277
  %v2245 = vunpack.c.h.b16 %v277
  %v2246 = vunpack.c.l.b16 %v278
  %v2247 = vunpack.c.h.b16 %v278
  %v2248 = vunpack.c.l.b16 %v279
  %v2249 = vunpack.c.h.b16 %v279
  %v2250 = vunpack.c.l.b16 %v280
  %v2251 = vunpack.c.h.b16 %v280
  %v2252 = vunpack.c.l.b16 %v281
  %v2253 = vunpack.c.h.b16 %v281
  %v2254 = vunpack.c.l.b16 %v282
  %v2255 = vunpack.c.h.b16 %v282
  %v2256 = vunpack.c.l.b16 %v283
  %v2257 = vunpack.c.h.b16 %v283
  %v2258 = vunpack.c.l.b16 %v284
  %v2259 = vunpack.c.h.b16 %v284
  %v2260 = vunpack.c.l.b16 %v285
  %v2261 = vunpack.c.h.b16 %v285
  %v2262 = vunpack.c.l.b16 %v286
  %v2263 = vunpack.c.h.b16 %v286
  %v2264 = vunpack.c.l.b16 %v287
  %v2265 = vunpack.c.h.b16 %v287
  %v2266 = vunpack.c.l.b16 %v288
  %v2267 = vunpack.c.h.b16 %v288
  %v2268 = vunpack.c.l.b16 %v289
  %v2269 = vunpack.c.h.b16 %v289
  %v2270 = vunpack.c.l.b16 %v290
  %v2271 = vunpack.c.h.b16 %v290
  %v2272 = vunpack.c.l.b16 %v291
  %v2273 = vunpack.c.h.b16 %v291
  %v2274 = vunpack.c.l.b16 %v292
  %v2275 = vunpack.c.h.b16 %v292
  %v2276 = vunpack.c.l.b16 %v293
  %v2277 = vunpack.c.h.b16 %v293
  %v2278 = vunpack.c.l.b16 %v294
  %v2279 = vunpack.c.h.b16 %v294
  %v2280 = vunpack.c.l.b16 %v295
  %v2281 = vunpack.c.h.b16 %v295
  %v2282 = vunpack.c.l.b16 %v296
  %v2283 = vunpack.c.h.b16 %v296
  %v2284 = vunpack.c.l.b16 %v297
  %v2285 = vunpack.c.h.b16 %v297
  %v2286 = vunpack.c.l.b16 %v298
  %v2287 = vunpack.c.h.b16 %v298
  %v2288 = vunpack.c.l.b16 %v299
  %v2289 = vunpack.c.h.b16 %v299
  %v2290 = vunpack.c.l.b16 %v300
  %v2291 = vunpack.c.h.b16 %v300
  %v2292 = vunpack.c.l.b16 %v301
  %v2293 = vunpack.c.h.b16 %v301
  %v2294 = vunpack.c.l.b16 %v302
  %v2295 = vunpack.c.h.b16 %v302
  %v2296 = vunpack.c.l.b16 %v303
  %v2297 = vunpack.c.h.b16 %v303
  %v2298 = vunpack.c.l.b16 %v304
  %v2299 = vunpack.c.h.b16 %v304
  %v2300 = vunpack.c.l.b16 %v305
  %v2301 = vunpack.c.h.b16 %v305
  %v2302 = vunpack.c.l.b16 %v306
  %v2303 = vunpack.c.h.b16 %v306
  %v2304 = vunpack.c.l.b16 %v307
  %v2305 = vunpack.c.h.b16 %v307
  %v2306 = vunpack.c.l.b16 %v308
  %v2307 = vunpack.c.h.b16 %v308
  %v2308 = vunpack.c.l.b16 %v309
  %v2309 = vunpack.c.h.b16 %v309
  %v2310 = vunpack.c.l.b16 %v310
  %v2311 = vunpack.c.h.b16 %v310
  %v2312 = vunpack.c.l.b16 %v311
  %v2313 = vunpack.c.h.b16 %v311
  %v2314 = vunpack.c.l.b16 %v312
  %v2315 = vunpack.c.h.b16 %v312
  %v2316 = vunpack.c.l.b16 %v313
  %v2317 = vunpack.c.h.b16 %v313
  %v2318 = vunpack.c.l.b16 %v314
  %v2319 = vunpack.c.h.b16 %v314
  %v2320 = vunpack.c.l.b16 %v315
  %v2321 = vunpack.c.h.b16 %v315
  %v2322 = vunpack.c.l.b16 %v316
  %v2323 = vunpack.c.h.b16 %v316
  %v2324 = vunpack.c.l.b16 %v317
  %v2325 = vunpack.c.h.b16 %v317
  %v2326 = vunpack.c.l.b16 %v318
  %v2327 = vunpack.c.h.b16 %v318
  %v2328 = vunpack.c.l.b16 %v319
  %v2329 = vunpack.c.h.b16 %v319
  %v2330 = vunpack.c.l.b16 %v320
  %v2331 = vunpack.c.h.b16 %v320
  %v2332 = vunpack.c.l.b16 %v321
  %v2333 = vunpack.c.h.b16 %v321
  %v2334 = vunpack.c.l.b16 %v322
  %v2335 = vunpack.c.h.b16 %v322
  %v2336 = vunpack.c.l.b16 %v323
  %v2337 = vunpack.c.h.b16 %v323
  %v2338 = vunpack.c.l.b16 %v324
  %v2339 = vunpack.c.h.b16 %v324
  %v2340 = vunpack.c.l.b16 %v325
  %v2341 = vunpack.c.h.b16 %v325
  %v2342 = vunpack.c.l.b16 %v326
  %v2343 = vunpack.c.h.b16 %v326
  %v2344 = vunpack.c.l.b16 %v327
  %v2345 = vunpack.c.h.b16 %v327
  %v2346 = vunpack.c.l.b16 %v328
  %v2347 = vunpack.c.h.b16 %v328
  %v2348 = vunpack.c.l.b16 %v329
  %v2349 = vunpack.c.h.b16 %v329
  %v2350 = vunpack.c.l.b16 %v330
  %v2351 = vunpack.c.h.b16 %v330
  %v2352 = vunpack.c.l.b16 %v331
  %v2353 = vunpack.c.h.b16 %v331
  %v2354 = vunpack.c.l.b16 %v332
  %v2355 = vunpack.c.h.b16 %v332
  %v2356 = vunpack.c.l.b16 %v333
  %v2357 = vunpack.c.h.b16 %v333
  %v2358 = vunpack.c.l.b16 %v334
  %v2359 = vunpack.c.h.b16 %v334
  %v2360 = vunpack.c.l.b16 %v335
  %v2361 = vunpack.c.h.b16 %v335
  %v2362 = vunpack.c.l.b16 %v336
  %v2363 = vunpack.c.h.b16 %v336
  %v2364 = vunpack.c.l.b16 %v337
  %v2365 = vunpack.c.h.b16 %v337
  %v2366 = vunpack.c.l.b16 %v338
  %v2367 = vunpack.c.h.b16 %v338
  %v2368 = vunpack.c.l.b16 %v339
  %v2369 = vunpack.c.h.b16 %v339
  %v2370 = vunpack.c.l.b16 %v340
  %v2371 = vunpack.c.h.b16 %v340
  %v2372 = vunpack.c.l.b16 %v341
  %v2373 = vunpack.c.h.b16 %v341
  %v2374 = vunpack.c.l.b16 %v342
  %v2375 = vunpack.c.h.b16 %v342
  %v2376 = vunpack.c.l.b16 %v343
  %v2377 = vunpack.c.h.b16 %v343
  %v2378 = vunpack.c.l.b16 %v344
  %v2379 = vunpack.c.h.b16 %v344
  %v2380 = vunpack.c.l.b16 %v345
  %v2381 = vunpack.c.h.b16 %v345
  %v2382 = vunpack.c.l.b16 %v346
  %v2383 = vunpack.c.h.b16 %v346
  %v2384 = vunpack.c.l.b16 %v347
  %v2385 = vunpack.c.h.b16 %v347
  %v2386 = vunpack.c.l.b16 %v348
  %v2387 = vunpack.c.h.b16 %v348
  %v2388 = vunpack.c.l.b16 %v349
  %v2389 = vunpack.c.h.b16 %v349
  %v2390 = vunpack.c.l.b16 %v350
  %v2391 = vunpack.c.h.b16 %v350
  %v2392 = vunpack.c.l.b16 %v351
  %v2393 = vunpack.c.h.b16 %v351
  %v2394 = vunpack.c.l.b16 %v352
  %v2395 = vunpack.c.h.b16 %v352
  %v2396 = vunpack.c.l.b16 %v353
  %v2397 = vunpack.c.h.b16 %v353
  %v2398 = vunpack.c.l.b16 %v354
  %v2399 = vunpack.c.h.b16 %v354
  %v2400 = vunpack.c.l.b16 %v355
  %v2401 = vunpack.c.h.b16 %v355
  %v2402 = vunpack.c.l.b16 %v356
  %v2403 = vunpack.c.h.b16 %v356
  %v2404 = vunpack.c.l.b16 %v357
  %v2405 = vunpack.c.h.b16 %v357
  %v2406 = vunpack.c.l.b16 %v358
  %v2407 = vunpack.c.h.b16 %v358
  %v2408 = vunpack.c.l.b16 %v359
  %v2409 = vunpack.c.h.b16 %v359
  %v2410 = vunpack.c.l.b16 %v360
  %v2411 = vunpack.c.h.b16 %v360
  %v2412 = vunpack.c.l.b16 %v361
  %v2413 = vunpack.c.h.b16 %v361
  %v2414 = vunpack.c.l.b16 %v362
  %v2415 = vunpack.c.h.b16 %v362
  %v2416 = vunpack.c.l.b16 %v363
  %v2417 = vunpack.c.h.b16 %v363
  %v2418 = vunpack.c.l.b16 %v364
  %v2419 = vunpack.c.h.b16 %v364
  %v2420 = vunpack.c.l.b16 %v365
  %v2421 = vunpack.c.h.b16 %v365
  %v2422 = vunpack.c.l.b16 %v366
  %v2423 = vunpack.c.h.b16 %v366
  %v2424 = vunpack.c.l.b16 %v367
  %v2425 = vunpack.c.h.b16 %v367
  %v2426 = vunpack.c.l.b16 %v368
  %v2427 = vunpack.c.h.b16 %v368
  %v2428 = vunpack.c.l.b16 %v369
  %v2429 = vunpack.c.h.b16 %v369
  %v2430 = vunpack.c.l.b16 %v370
  %v2431 = vunpack.c.h.b16 %v370
  %v2432 = vunpack.c.l.b16 %v371
  %v2433 = vunpack.c.h.b16 %v371
  %v2434 = vunpack.c.l.b16 %v372
  %v2435 = vunpack.c.h.b16 %v372
  %v2436 = vunpack.c.l.b16 %v373
  %v2437 = vunpack.c.h.b16 %v373
  %v2438 = vunpack.c.l.b16 %v374
  %v2439 = vunpack.c.h.b16 %v374
  %v2440 = vunpack.c.l.b16 %v375
  %v2441 = vunpack.c.h.b16 %v375
  %v2442 = vunpack.c.l.b16 %v376
  %v2443 = vunpack.c.h.b16 %v376
  %v2444 = vunpack.c.l.b16 %v377
  %v2445 = vunpack.c.h.b16 %v377
  %v2446 = vunpack.c.l.b16 %v378
  %v2447 = vunpack.c.h.b16 %v378
  %v2448 = vunpack.c.l.b16 %v379
  %v2449 = vunpack.c.h.b16 %v379
  %v2450 = vunpack.c.l.b16 %v380
  %v2451 = vunpack.c.h.b16 %v380
  %v2452 = vunpack.c.l.b16 %v381
  %v2453 = vunpack.c.h.b16 %v381
  %v2454 = vunpack.c.l.b16 %v382
  %v2455 = vunpack.c.h.b16 %v382
  %v2456 = vunpack.c.l.b16 %v383
  %v2457 = vunpack.c.h.b16 %v383
  %v2458 = vunpack.c.l.b16 %v384
  %v2459 = vunpack.c.h.b16 %v384
  %v2460 = vunpack.c.l.b16 %v385
  %v2461 = vunpack.c.h.b16 %v385
  %v2462 = vunpack.c.l.b16 %v386
  %v2463 = vunpack.c.h.b16 %v386
  %v2464 = vunpack.c.l.b16 %v387
  %v2465 = vunpack.c.h.b16 %v387
  %v2466 = vunpack.c.l.b16 %v388
  %v2467 = vunpack.c.h.b16 %v388
  %v2468 = vunpack.c.l.b16 %v389
  %v2469 = vunpack.c.h.b16 %v389
  %v2470 = vunpack.c.l.b16 %v390
  %v2471 = vunpack.c.h.b16 %v390
  %v2472 = vunpack.c.l.b16 %v391
  %v2473 = vunpack.c.h.b16 %v391
  %v2474 = vunpack.c.l.b16 %v392
  %v2475 = vunpack.c.h.b16 %v392
  %v2476 = vunpack.c.l.b16 %v393
  %v2477 = vunpack.c.h.b16 %v393
  %v2478 = vunpack.c.l.b16 %v394
  %v2479 = vunpack.c.h.b16 %v394
  %v2480 = vunpack.c.l.b16 %v395
  %v2481 = vunpack.c.h.b16 %v395
  %v2482 = vunpack.c.l.b16 %v396
  %v2483 = vunpack.c.h.b16 %v396
  %v2484 = vunpack.c.l.b16 %v397
  %v2485 = vunpack.c.h.b16 %v397
  %v2486 = vunpack.c.l.b16 %v398
  %v2487 = vunpack.c.h.b16 %v398
  %v2488 = vunpack.c.l.b16 %v399
  %v2489 = vunpack.c.h.b16 %v399
  %v2490 = vunpack.c.l.b16 %v400
  %v2491 = vunpack.c.h.b16 %v400
  %v2492 = vunpack.c.l.b16 %v401
  %v2493 = vunpack.c.h.b16 %v401
  %v2494 = vunpack.c.l.b16 %v402
  %v2495 = vunpack.c.h.b16 %v402
  %v2496 = vunpack.c.l.b16 %v403
  %v2497 = vunpack.c.h.b16 %v403
  %v2498 = vunpack.c.l.b16 %v404
  %v2499 = vunpack.c.h.b16 %v404
  %v2500 = vunpack.c.l.b16 %v405
  %v2501 = vunpack.c.h.b16 %v405
  %v2502 = vunpack.c.l.b16 %v406
  %v2503 = vunpack.c.h.b16 %v406
  %v2504 = vunpack.c.l.b16 %v407
  %v2505 = vunpack.c.h.b16 %v407
  %v2506 = vunpack.c.l.b16 %v408
  %v2507 = vunpack.c.h.b16 %v408
  %v2508 = vunpack.c.l.b16 %v409
  %v2509 = vunpack.c.h.b16 %v409
  %v2510 = vunpack.c.l.b16 %v410
  %v2511 = vunpack.c.h.b16 %v410
  %v2512 = vunpack.c.l.b16 %v411
  %v2513 = vunpack.c.h.b16 %v411
  %v2514 = vunpack.c.l.b16 %v412
  %v2515 = vunpack.c.h.b16 %v412
  %v2516 = vunpack.c.l.b16 %v413
  %v2517 = vunpack.c.h.b16 %v413
  %v2518 = vunpack.c.l.b16 %v414
  %v2519 = vunpack.c.h.b16 %v414
  %v2520 = vunpack.c.l.b16 %v415
  %v2521 = vunpack.c.h.b16 %v415
  %v2522 = vunpack.c.l.b16 %v416
  %v2523 = vunpack.c.h.b16 %v416
  %v2524 = vunpack.c.l.b16 %v417
  %v2525 = vunpack.c.h.b16 %v417
  %v2526 = vunpack.c.l.b16 %v418
  %v2527 = vunpack.c.h.b16 %v418
  %v2528 = vunpack.c.l.b16 %v419
  %v2529 = vunpack.c.h.b16 %v419
  %v2530 = vunpack.c.l.b16 %v420
  %v2531 = vunpack.c.h.b16 %v420
  %v2532 = vunpack.c.l.b16 %v421
  %v2533 = vunpack.c.h.b16 %v421
  %v2534 = vunpack.c.l.b16 %v422
  %v2535 = vunpack.c.h.b16 %v422
  %v2536 = vunpack.c.l.b16 %v423
  %v2537 = vunpack.c.h.b16 %v423
  %v2538 = vunpack.c.l.b16 %v424
  %v2539 = vunpack.c.h.b16 %v424
  %v2540 = vunpack.c.l.b16 %v425
  %v2541 = vunpack.c.h.b16 %v425
  %v2542 = vunpack.c.l.b16 %v426
  %v2543 = vunpack.c.h.b16 %v426
  %v2544 = vunpack.c.l.b16 %v427
  %v2545 = vunpack.c.h.b16 %v427
  %v2546 = vunpack.c.l.b16 %v428
  %v2547 = vunpack.c.h.b16 %v428
  %v2548 = vunpack.c.l.b16 %v429
  %v2549 = vunpack.c.h.b16 %v429
  %v2550 = vunpack.c.l.b16 %v430
  %v2551 = vunpack.c.h.b16 %v430
  %v2552 = vunpack.c.l.b16 %v431
  %v2553 = vunpack.c.h.b16 %v431
  %v2554 = vunpack.c.l.b16 %v432
  %v2555 = vunpack.c.h.b16 %v432
  %v2556 = vunpack.c.l.b16 %v433
  %v2557 = vunpack.c.h.b16 %v433
  %v2558 = vunpack.c.l.b16 %v434
  %v2559 = vunpack.c.h.b16 %v434
  %v2560 = vunpack.c.l.b16 %v435
  %v2561 = vunpack.c.h.b16 %v435
  %v2562 = vunpack.c.l.b16 %v436
  %v2563 = vunpack.c.h.b16 %v436
  %v2564 = vunpack.c.l.b16 %v437
  %v2565 = vunpack.c.h.b16 %v437
  %v2566 = vunpack.c.l.b16 %v438
  %v2567 = vunpack.c.h.b16 %v438
  %v2568 = vunpack.c.l.b16 %v439
  %v2569 = vunpack.c.h.b16 %v439
  %v2570 = vunpack.c.l.b16 %v440
  %v2571 = vunpack.c.h.b16 %v440
  %v2572 = vunpack.c.l.b16 %v441
  %v2573 = vunpack.c.h.b16 %v441
  %v2574 = vunpack.c.l.b16 %v442
  %v2575 = vunpack.c.h.b16 %v442
  %v2576 = vunpack.c.l.b16 %v443
  %v2577 = vunpack.c.h.b16 %v443
  %v2578 = vunpack.c.l.b16 %v444
  %v2579 = vunpack.c.h.b16 %v444
  %v2580 = vunpack.c.l.b16 %v445
  %v2581 = vunpack.c.h.b16 %v445
  %v2582 = vunpack.c.l.b16 %v446
  %v2583 = vunpack.c.h.b16 %v446
  %v2584 = vunpack.c.l.b16 %v447
  %v2585 = vunpack.c.h.b16 %v447
  %v2586 = vunpack.c.l.b16 %v448
  %v2587 = vunpack.c.h.b16 %v448
  %v2588 = vunpack.c.l.b16 %v449
  %v2589 = vunpack.c.h.b16 %v449
  %v2590 = vunpack.c.l.b16 %v450
  %v2591 = vunpack.c.h.b16 %v450
  %v2592 = vunpack.c.l.b16 %v451
  %v2593 = vunpack.c.h.b16 %v451
  %v2594 = vunpack.c.l.b16 %v452
  %v2595 = vunpack.c.h.b16 %v452
  %v2596 = vunpack.c.l.b16 %v453
  %v2597 = vunpack.c.h.b16 %v453
  %v2598 = vunpack.c.l.b16 %v454
  %v2599 = vunpack.c.h.b16 %v454
  %v2600 = vunpack.c.l.b16 %v455
  %v2601 = vunpack.c.h.b16 %v455
  %v2602 = vunpack.c.l.b16 %v456
  %v2603 = vunpack.c.h.b16 %v456
  %v2604 = vunpack.c.l.b16 %v457
  %v2605 = vunpack.c.h.b16 %v457
  %v2606 = vunpack.c.l.b16 %v458
  %v2607 = vunpack.c.h.b16 %v458
  %v2608 = vunpack.c.l.b16 %v459
  %v2609 = vunpack.c.h.b16 %v459
  %v2610 = vunpack.c.l.b16 %v460
  %v2611 = vunpack.c.h.b16 %v460
  %v2612 = vunpack.c.l.b16 %v461
  %v2613 = vunpack.c.h.b16 %v461
  %v2614 = vunpack.c.l.b16 %v462
  %v2615 = vunpack.c.h.b16 %v462
  %v2616 = vunpack.c.l.b16 %v463
  %v2617 = vunpack.c.h.b16 %v463
  %v2618 = vunpack.c.l.b16 %v464
  %v2619 = vunpack.c.h.b16 %v464
  %v2620 = vunpack.c.l.b16 %v465
  %v2621 = vunpack.c.h.b16 %v465
  %v2622 = vunpack.c.l.b16 %v466
  %v2623 = vunpack.c.h.b16 %v466
  %v2624 = vunpack.c.l.b16 %v467
  %v2625 = vunpack.c.h.b16 %v467
  %v2626 = vunpack.c.l.b16 %v468
  %v2627 = vunpack.c.h.b16 %v468
  %v2628 = vunpack.c.l.b16 %v469
  %v2629 = vunpack.c.h.b16 %v469
  %v2630 = vunpack.c.l.b16 %v470
  %v2631 = vunpack.c.h.b16 %v470
  %v2632 = vunpack.c.l.b16 %v471
  %v2633 = vunpack.c.h.b16 %v471
  %v2634 = vunpack.c.l.b16 %v472
  %v2635 = vunpack.c.h.b16 %v472
  %v2636 = vunpack.c.l.b16 %v473
  %v2637 = vunpack.c.h.b16 %v473
  %v2638 = vunpack.c.l.b16 %v474
  %v2639 = vunpack.c.h.b16 %v474
  %v2640 = vunpack.c.l.b16 %v475
  %v2641 = vunpack.c.h.b16 %v475
  %v2642 = vunpack.c.l.b16 %v476
  %v2643 = vunpack.c.h.b16 %v476
  %v2644 = vunpack.c.l.b16 %v477
  %v2645 = vunpack.c.h.b16 %v477
  %v2646 = vunpack.c.l.b16 %v478
  %v2647 = vunpack.c.h.b16 %v478
  %v2648 = vunpack.c.l.b16 %v479
  %v2649 = vunpack.c.h.b16 %v479
  %v2650 = vunpack.c.l.b16 %v480
  %v2651 = vunpack.c.h.b16 %v480
  %v2652 = vunpack.c.l.b16 %v481
  %v2653 = vunpack.c.h.b16 %v481
  %v2654 = vunpack.c.l.b16 %v482
  %v2655 = vunpack.c.h.b16 %v482
  %v2656 = vunpack.c.l.b16 %v483
  %v2657 = vunpack.c.h.b16 %v483
  %v2658 = vunpack.c.l.b16 %v484
  %v2659 = vunpack.c.h.b16 %v484
  %v2660 = vunpack.c.l.b16 %v485
  %v2661 = vunpack.c.h.b16 %v485
  %v2662 = vunpack.c.l.b16 %v486
  %v2663 = vunpack.c.h.b16 %v486
  %v2664 = vunpack.c.l.b16 %v487
  %v2665 = vunpack.c.h.b16 %v487
  %v2666 = vunpack.c.l.b16 %v488
  %v2667 = vunpack.c.h.b16 %v488
  %v2668 = vunpack.c.l.b16 %v489
  %v2669 = vunpack.c.h.b16 %v489
  %v2670 = vunpack.c.l.b16 %v490
  %v2671 = vunpack.c.h.b16 %v490
  %v2672 = vunpack.c.l.b16 %v491
  %v2673 = vunpack.c.h.b16 %v491
  %v2674 = vunpack.c.l.b16 %v492
  %v2675 = vunpack.c.h.b16 %v492
  %v2676 = vunpack.c.l.b16 %v493
  %v2677 = vunpack.c.h.b16 %v493
  %v2678 = vunpack.c.l.b16 %v494
  %v2679 = vunpack.c.h.b16 %v494
  %v2680 = vunpack.c.l.b16 %v495
  %v2681 = vunpack.c.h.b16 %v495
  %v2682 = vunpack.c.l.b16 %v496
  %v2683 = vunpack.c.h.b16 %v496
  %v2684 = vunpack.c.l.b16 %v497
  %v2685 = vunpack.c.h.b16 %v497
  %v2686 = vunpack.c.l.b16 %v498
  %v2687 = vunpack.c.h.b16 %v498
  %v2688 = vunpack.c.l.b16 %v499
  %v2689 = vunpack.c.h.b16 %v499
  %v2690 = vunpack.c.l.b16 %v500
  %v2691 = vunpack.c.h.b16 %v500
  %v2692 = vunpack.c.l.b16 %v501
  %v2693 = vunpack.c.h.b16 %v501
  %v2694 = vunpack.c.l.b16 %v502
  %v2695 = vunpack.c.h.b16 %v502
  %v2696 = vunpack.c.l.b16 %v503
  %v2697 = vunpack.c.h.b16 %v503
  %v2698 = vunpack.c.l.b16 %v504
  %v2699 = vunpack.c.h.b16 %v504
  %v2700 = vunpack.c.l.b16 %v505
  %v2701 = vunpack.c.h.b16 %v505
  %v2702 = vunpack.c.l.b16 %v506
  %v2703 = vunpack.c.h.b16 %v506
  %v2704 = vunpack.c.l.b16 %v507
  %v2705 = vunpack.c.h.b16 %v507
  %v2706 = vunpack.c.l.b16 %v508
  %v2707 = vunpack.c.h.b16 %v508
  %v2708 = vunpack.c.l.b16 %v509
  %v2709 = vunpack.c.h.b16 %v509
  %v2710 = vunpack.c.l.b16 %v510
  %v2711 = vunpack.c.h.b16 %v510
  %v2712 = vunpack.c.l.b16 %v511
  %v2713 = vunpack.c.h.b16 %v511
  %v2714 = vunpack.c.l.b16 %v512
  %v2715 = vunpack.c.h.b16 %v512
  %v2716 = vunpack.c.l.b16 %v513
  %v2717 = vunpack.c.h.b16 %v513
  %v2718 = vunpack.c.l.b16 %v514
  %v2719 = vunpack.c.h.b16 %v514
  %v2720 = vunpack.c.l.b16 %v515
  %v2721 = vunpack.c.h.b16 %v515
  %v2722 = vunpack.c.l.b16 %v516
  %v2723 = vunpack.c.h.b16 %v516
  %v2724 = vunpack.c.l.b16 %v517
  %v2725 = vunpack.c.h.b16 %v517
  %v2726 = vunpack.c.l.b16 %v518
  %v2727 = vunpack.c.h.b16 %v518
  %v2728 = vunpack.c.l.b16 %v519
  %v2729 = vunpack.c.h.b16 %v519
  %v2730 = vunpack.c.l.b16 %v520
  %v2731 = vunpack.c.h.b16 %v520
  %v2732 = vunpack.c.l.b16 %v521
  %v2733 = vunpack.c.h.b16 %v521
  %v2734 = vunpack.c.l.b16 %v522
  %v2735 = vunpack.c.h.b16 %v522
  %v2736 = vunpack.c.l.b16 %v523
  %v2737 = vunpack.c.h.b16 %v523
  %v2738 = vunpack.c.l.b16 %v524
  %v2739 = vunpack.c.h.b16 %v524
  %v2740 = vunpack.c.l.b16 %v525
  %v2741 = vunpack.c.h.b16 %v525
  %v2742 = vunpack.c.l.b16 %v526
  %v2743 = vunpack.c.h.b16 %v526
  %v2744 = vunpack.c.l.b16 %v527
  %v2745 = vunpack.c.h.b16 %v527
  %v2746 = vunpack.c.l.b16 %v528
  %v2747 = vunpack.c.h.b16 %v528
  %v2748 = vunpack.c.l.b16 %v529
  %v2749 = vunpack.c.h.b16 %v529
  %v2750 = vunpack.c.l.b16 %v530
  %v2751 = vunpack.c.h.b16 %v530
  %v2752 = vunpack.c.l.b16 %v531
  %v2753 = vunpack.c.h.b16 %v531
  %v2754 = vunpack.c.l.b16 %v532
  %v2755 = vunpack.c.h.b16 %v532
  %v2756 = vunpack.c.l.b16 %v533
  %v2757 = vunpack.c.h.b16 %v533
  %v2758 = vunpack.c.l.b16 %v534
  %v2759 = vunpack.c.h.b16 %v534
  %v2760 = vunpack.c.l.b16 %v535
  %v2761 = vunpack.c.h.b16 %v535
  %v2762 = vunpack.c.l.b16 %v536
  %v2763 = vunpack.c.h.b16 %v536
  %v2764 = vunpack.c.l.b16 %v537
  %v2765 = vunpack.c.h.b16 %v537
  %v2766 = vunpack.c.l.b16 %v538
  %v2767 = vunpack.c.h.b16 %v538
  %v2768 = vunpack.c.l.b16 %v539
  %v2769 = vunpack.c.h.b16 %v539
  %v2770 = vunpack.c.l.b16 %v540
  %v2771 = vunpack.c.h.b16 %v540
  %v2772 = vunpack.c.l.b16 %v541
  %v2773 = vunpack.c.h.b16 %v541
  %v2774 = vunpack.c.l.b16 %v542
  %v2775 = vunpack.c.h.b16 %v542
  %v2776 = vunpack.c.l.b16 %v543
  %v2777 = vunpack.c.h.b16 %v543
  %v2778 = vunpack.c.l.b16 %v544
  %v2779 = vunpack.c.h.b16 %v544
  %v2780 = vunpack.c.l.b16 %v545
  %v2781 = vunpack.c.h.b16 %v545
  %v2782 = vunpack.c.l.b16 %v546
  %v2783 = vunpack.c.h.b16 %v546
  %v2784 = vunpack.c.l.b16 %v547
  %v2785 = vunpack.c.h.b16 %v547
  %v2786 = vunpack.c.l.b16 %v548
  %v2787 = vunpack.c.h.b16 %v548
  %v2788 = vunpack.c.l.b16 %v549
  %v2789 = vunpack.c.h.b16 %v549
  %v2790 = vunpack.c.l.b16 %v550
  %v2791 = vunpack.c.h.b16 %v550
  %v2792 = vunpack.c.l.b16 %v551
  %v2793 = vunpack.c.h.b16 %v551
  %v2794 = vunpack.c.l.b16 %v552
  %v2795 = vunpack.c.h.b16 %v552
  %v2796 = vunpack.c.l.b16 %v553
  %v2797 = vunpack.c.h.b16 %v553
  %v2798 = vunpack.c.l.b16 %v554
  %v2799 = vunpack.c.h.b16 %v554
  %v2800 = vunpack.c.l.b16 %v555
  %v2801 = vunpack.c.h.b16 %v555
  %v2802 = vunpack.c.l.b16 %v556
  %v2803 = vunpack.c.h.b16 %v556
  %v2804 = vunpack.c.l.b16 %v557
  %v2805 = vunpack.c.h.b16 %v557
  %v2806 = vunpack.c.l.b16 %v558
  %v2807 = vunpack.c.h.b16 %v558
  %v2808 = vunpack.c.l.b16 %v559
  %v2809 = vunpack.c.h.b16 %v559
  %v2810 = vunpack.c.l.b16 %v560
  %v2811 = vunpack.c.h.b16 %v560
  %v2812 = vunpack.c.l.b16 %v561
  %v2813 = vunpack.c.h.b16 %v561
  %v2814 = vunpack.c.l.b16 %v562
  %v2815 = vunpack.c.h.b16 %v562
  %v2816 = vunpack.c.l.b16 %v563
  %v2817 = vunpack.c.h.b16 %v563
  %v2818 = vunpack.c.l.b16 %v564
  %v2819 = vunpack.c.h.b16 %v564
  %v2820 = vunpack.c.l.b16 %v565
  %v2821 = vunpack.c.h.b16 %v565
  %v2822 = vunpack.c.l.b16 %v566
  %v2823 = vunpack.c.h.b16 %v566
  %v2824 = vunpack.c.l.b16 %v567
  %v2825 = vunpack.c.h.b16 %v567
  %v2826 = vunpack.c.l.b16 %v568
  %v2827 = vunpack.c.h.b16 %v568
  %v2828 = vunpack.c.l.b16 %v569
  %v2829 = vunpack.c.h.b16 %v569
  %v2830 = vunpack.c.l.b16 %v570
  %v2831 = vunpack.c.h.b16 %v570
  %v2832 = vunpack.c.l.b16 %v571
  %v2833 = vunpack.c.h.b16 %v571
  %v2834 = vunpack.c.l.b16 %v572
  %v2835 = vunpack.c.h.b16 %v572
  %v2836 = vunpack.c.l.b16 %v573
  %v2837 = vunpack.c.h.b16 %v573
  %v2838 = vunpack.c.l.b16 %v574
  %v2839 = vunpack.c.h.b16 %v574
  %v2840 = vunpack.c.l.b16 %v575
  %v2841 = vunpack.c.h.b16 %v575
  %v2842 = vunpack.c.l.b16 %v576
  %v2843 = vunpack.c.h.b16 %v576
  %v2844 = vunpack.c.l.b16 %v577
  %v2845 = vunpack.c.h.b16 %v577
  %v2846 = vunpack.c.l.b16 %v578
  %v2847 = vunpack.c.h.b16 %v578
  %v2848 = vunpack.c.l.b16 %v579
  %v2849 = vunpack.c.h.b16 %v579
  %v2850 = vunpack.c.l.b16 %v580
  %v2851 = vunpack.c.h.b16 %v580
  %v2852 = vunpack.c.l.b16 %v581
  %v2853 = vunpack.c.h.b16 %v581
  %v2854 = vunpack.c.l.b16 %v582
  %v2855 = vunpack.c.h.b16 %v582
  %v2856 = vunpack.c.l.b16 %v583
  %v2857 = vunpack.c.h.b16 %v583
  %v2858 = vunpack.c.l.b16 %v584
  %v2859 = vunpack.c.h.b16 %v584
  %v2860 = vunpack.c.l.b16 %v585
  %v2861 = vunpack.c.h.b16 %v585
  %v2862 = vunpack.c.l.b16 %v586
  %v2863 = vunpack.c.h.b16 %v586
  %v2864 = vunpack.c.l.b16 %v587
  %v2865 = vunpack.c.h.b16 %v587
  %v2866 = vunpack.c.l.b16 %v588
  %v2867 = vunpack.c.h.b16 %v588
  %v2868 = vunpack.c.l.b16 %v589
  %v2869 = vunpack.c.h.b16 %v589
  %v2870 = vunpack.c.l.b16 %v590
  %v2871 = vunpack.c.h.b16 %v590
  %v2872 = vunpack.c.l.b16 %v591
  %v2873 = vunpack.c.h.b16 %v591
  %v2874 = vunpack.c.l.b16 %v592
  %v2875 = vunpack.c.h.b16 %v592
  %v2876 = vunpack.c.l.b16 %v593
  %v2877 = vunpack.c.h.b16 %v593
  %v2878 = vunpack.c.l.b16 %v594
  %v2879 = vunpack.c.h.b16 %v594
  %v2880 = vunpack.c.l.b16 %v595
  %v2881 = vunpack.c.h.b16 %v595
  %v2882 = vunpack.c.l.b16 %v596
  %v2883 = vunpack.c.h.b16 %v596
  %v2884 = vunpack.c.l.b16 %v597
  %v2885 = vunpack.c.h.b16 %v597
  %v2886 = vunpack.c.l.b16 %v598
  %v2887 = vunpack.c.h.b16 %v598
  %v2888 = vunpack.c.l.b16 %v599
  %v2889 = vunpack.c.h.b16 %v599
  %v2890 = vunpack.c.l.b16 %v600
  %v2891 = vunpack.c.h.b16 %v600
  %v2892 = vunpack.c.l.b16 %v601
  %v2893 = vunpack.c.h.b16 %v601
  %v2894 = vunpack.c.l.b16 %v602
  %v2895 = vunpack.c.h.b16 %v602
  %v2896 = vunpack.c.l.b16 %v603
  %v2897 = vunpack.c.h.b16 %v603
  %v2898 = vunpack.c.l.b16 %v604
  %v2899 = vunpack.c.h.b16 %v604
  %v2900 = vunpack.c.l.b16 %v605
  %v2901 = vunpack.c.h.b16 %v605
  %v2902 = vunpack.c.l.b16 %v606
  %v2903 = vunpack.c.h.b16 %v606
  %v2904 = vunpack.c.l.b16 %v607
  %v2905 = vunpack.c.h.b16 %v607
  %v2906 = vunpack.c.l.b16 %v608
  %v2907 = vunpack.c.h.b16 %v608
  %v2908 = vunpack.c.l.b16 %v609
  %v2909 = vunpack.c.h.b16 %v609
  %v2910 = vunpack.c.l.b16 %v610
  %v2911 = vunpack.c.h.b16 %v610
  %v2912 = vunpack.c.l.b16 %v611
  %v2913 = vunpack.c.h.b16 %v611
  %v2914 = vunpack.c.l.b16 %v612
  %v2915 = vunpack.c.h.b16 %v612
  %v2916 = vunpack.c.l.b16 %v613
  %v2917 = vunpack.c.h.b16 %v613
  %v2918 = vunpack.c.l.b16 %v614
  %v2919 = vunpack.c.h.b16 %v614
  %v2920 = vunpack.c.l.b16 %v615
  %v2921 = vunpack.c.h.b16 %v615
  %v2922 = vunpack.c.l.b16 %v616
  %v2923 = vunpack.c.h.b16 %v616
  %v2924 = vunpack.c.l.b16 %v617
  %v2925 = vunpack.c.h.b16 %v617
  %v2926 = vunpack.c.l.b16 %v618
  %v2927 = vunpack.c.h.b16 %v618
  %v2928 = vunpack.c.l.b16 %v619
  %v2929 = vunpack.c.h.b16 %v619
  %v2930 = vunpack.c.l.b16 %v620
  %v2931 = vunpack.c.h.b16 %v620
  %v2932 = vunpack.c.l.b16 %v621
  %v2933 = vunpack.c.h.b16 %v621
  %v2934 = vunpack.c.l.b16 %v622
  %v2935 = vunpack.c.h.b16 %v622
  %v2936 = vunpack.c.l.b16 %v623
  %v2937 = vunpack.c.h.b16 %v623
  %v2938 = vunpack.c.l.b16 %v624
  %v2939 = vunpack.c.h.b16 %v624
  %v2940 = vunpack.c.l.b16 %v625
  %v2941 = vunpack.c.h.b16 %v625
  %v2942 = vunpack.c.l.b16 %v626
  %v2943 = vunpack.c.h.b16 %v626
  %v2944 = vunpack.c.l.b16 %v627
  %v2945 = vunpack.c.h.b16 %v627
  %v2946 = vunpack.c.l.b16 %v628
  %v2947 = vunpack.c.h.b16 %v628
  %v2948 = vunpack.c.l.b16 %v629
  %v2949 = vunpack.c.h.b16 %v629
  %v2950 = vunpack.c.l.b16 %v630
  %v2951 = vunpack.c.h.b16 %v630
  %v2952 = vunpack.c.l.b16 %v631
  %v2953 = vunpack.c.h.b16 %v631
  %v2954 = vunpack.c.l.b16 %v632
  %v2955 = vunpack.c.h.b16 %v632
  %v2956 = vunpack.c.l.b16 %v633
  %v2957 = vunpack.c.h.b16 %v633
  %v2958 = vunpack.c.l.b16 %v634
  %v2959 = vunpack.c.h.b16 %v634
  %v2960 = vunpack.c.l.b16 %v635
  %v2961 = vunpack.c.h.b16 %v635
  %v2962 = vunpack.c.l.b16 %v636
  %v2963 = vunpack.c.h.b16 %v636
  %v2964 = vunpack.c.l.b16 %v637
  %v2965 = vunpack.c.h.b16 %v637
  %v2966 = vunpack.c.l.b16 %v638
  %v2967 = vunpack.c.h.b16 %v638
  %v2968 = vunpack.c.l.b16 %v639
  %v2969 = vunpack.c.h.b16 %v639
  %v2970 = vunpack.c.l.b16 %v640
  %v2971 = vunpack.c.h.b16 %v640
  %v2972 = vunpack.c.l.b16 %v641
  %v2973 = vunpack.c.h.b16 %v641
  %v2974 = vunpack.c.l.b16 %v642
  %v2975 = vunpack.c.h.b16 %v642
  %v2976 = vunpack.c.l.b16 %v643
  %v2977 = vunpack.c.h.b16 %v643
  %v2978 = vunpack.c.l.b16 %v644
  %v2979 = vunpack.c.h.b16 %v644
  %v2980 = vunpack.c.l.b16 %v645
  %v2981 = vunpack.c.h.b16 %v645
  %v2982 = vunpack.c.l.b16 %v646
  %v2983 = vunpack.c.h.b16 %v646
  %v2984 = vunpack.c.l.b16 %v647
  %v2985 = vunpack.c.h.b16 %v647
  %v2986 = vunpack.c.l.b16 %v648
  %v2987 = vunpack.c.h.b16 %v648
  %v2988 = vunpack.c.l.b16 %v649
  %v2989 = vunpack.c.h.b16 %v649
  %v2990 = vunpack.c.l.b16 %v650
  %v2991 = vunpack.c.h.b16 %v650
  %v2992 = vunpack.c.l.b16 %v651
  %v2993 = vunpack.c.h.b16 %v651
  %v2994 = vunpack.c.l.b16 %v652
  %v2995 = vunpack.c.h.b16 %v652
  %v2996 = vunpack.c.l.b16 %v653
  %v2997 = vunpack.c.h.b16 %v653
  %v2998 = vunpack.c.l.b16 %v654
  %v2999 = vunpack.c.h.b16 %v654
  %v3000 = vunpack.c.l.b16 %v655
  %v3001 = vunpack.c.h.b16 %v655
  %v3002 = vunpack.c.l.b16 %v656
  %v3003 = vunpack.c.h.b16 %v656
  %v3004 = vunpack.c.l.b16 %v657
  %v3005 = vunpack.c.h.b16 %v657
  %v3006 = vunpack.c.l.b16 %v658
  %v3007 = vunpack.c.h.b16 %v658
  %v3008 = vunpack.c.l.b16 %v659
  %v3009 = vunpack.c.h.b16 %v659
  %v3010 = vunpack.c.l.b16 %v660
  %v3011 = vunpack.c.h.b16 %v660
  %v3012 = vunpack.c.l.b16 %v661
  %v3013 = vunpack.c.h.b16 %v661
  %v3014 = vunpack.c.l.b16 %v662
  %v3015 = vunpack.c.h.b16 %v662
  %v3016 = vunpack.c.l.b16 %v663
  %v3017 = vunpack.c.h.b16 %v663
  %v3018 = vunpack.c.l.b16 %v664
  %v3019 = vunpack.c.h.b16 %v664
  %v3020 = vunpack.c.l.b16 %v665
  %v3021 = vunpack.c.h.b16 %v665
  %v3022 = vunpack.c.l.b16 %v666
  %v3023 = vunpack.c.h.b16 %v666
  %v3024 = vunpack.c.l.b16 %v667
  %v3025 = vunpack.c.h.b16 %v667
  %v3026 = vunpack.c.l.b16 %v668
  %v3027 = vunpack.c.h.b16 %v668
  %v3028 = vunpack.c.l.b16 %v669
  %v3029 = vunpack.c.h.b16 %v669
  %v3030 = vunpack.c.l.b16 %v670
  %v3031 = vunpack.c.h.b16 %v670
  %v3032 = vunpack.c.l.b16 %v671
  %v3033 = vunpack.c.h.b16 %v671
  %v3034 = vunpack.c.l.b16 %v672
  %v3035 = vunpack.c.h.b16 %v672
  %v3036 = vunpack.c.l.b16 %v673
  %v3037 = vunpack.c.h.b16 %v673
  %v3038 = vunpack.c.l.b16 %v674
  %v3039 = vunpack.c.h.b16 %v674
  %v3040 = vunpack.c.l.b16 %v675
  %v3041 = vunpack.c.h.b16 %v675
  %v3042 = vunpack.c.l.b16 %v676
  %v3043 = vunpack.c.h.b16 %v676
  %v3044 = vunpack.c.l.b16 %v677
  %v3045 = vunpack.c.h.b16 %v677
  %v3046 = vunpack.c.l.b16 %v678
  %v3047 = vunpack.c.h.b16 %v678
  %v3048 = vunpack.c.l.b16 %v679
  %v3049 = vunpack.c.h.b16 %v679
  %v3050 = vunpack.c.l.b16 %v680
  %v3051 = vunpack.c.h.b16 %v680
  %v3052 = vunpack.c.l.b16 %v681
  %v3053 = vunpack.c.h.b16 %v681
  %v3054 = vunpack.c.l.b16 %v682
  %v3055 = vunpack.c.h.b16 %v682
  %v3056 = vunpack.c.l.b16 %v683
  %v3057 = vunpack.c.h.b16 %v683
  %v3058 = vunpack.c.l.b16 %v684
  %v3059 = vunpack.c.h.b16 %v684
  %v3060 = vunpack.c.l.b16 %v685
  %v3061 = vunpack.c.h.b16 %v685
  %v3062 = vunpack.c.l.b16 %v686
  %v3063 = vunpack.c.h.b16 %v686
  %v3064 = vunpack.c.l.b16 %v687
  %v3065 = vunpack.c.h.b16 %v687
  %v3066 = vunpack.c.l.b16 %v688
  %v3067 = vunpack.c.h.b16 %v688
  %v3068 = vunpack.c.l.b16 %v689
  %v3069 = vunpack.c.h.b16 %v689
  %v3070 = vunpack.c.l.b16 %v690
  %v3071 = vunpack.c.h.b16 %v690
  %v3072 = vunpack.c.l.b16 %v691
  %v3073 = vunpack.c.h.b16 %v691
  %v3074 = vunpack.c.l.b16 %v692
  %v3075 = vunpack.c.h.b16 %v692
  %v3076 = vunpack.c.l.b16 %v693
  %v3077 = vunpack.c.h.b16 %v693
  %v3078 = vunpack.c.l.b16 %v694
  %v3079 = vunpack.c.h.b16 %v694
  %v3080 = vunpack.c.l.b16 %v695
  %v3081 = vunpack.c.h.b16 %v695
  %v3082 = vunpack.c.l.b16 %v696
  %v3083 = vunpack.c.h.b16 %v696
  %v3084 = vunpack.c.l.b16 %v697
  %v3085 = vunpack.c.h.b16 %v697
  %v3086 = vunpack.c.l.b16 %v698
  %v3087 = vunpack.c.h.b16 %v698
  %v3088 = vunpack.c.l.b16 %v699
  %v3089 = vunpack.c.h.b16 %v699
  %v3090 = vunpack.c.l.b16 %v700
  %v3091 = vunpack.c.h.b16 %v700
  %v3092 = vunpack.c.l.b16 %v701
  %v3093 = vunpack.c.h.b16 %v701
  %v3094 = vunpack.c.l.b16 %v702
  %v3095 = vunpack.c.h.b16 %v702
  %v3096 = vunpack.c.l.b16 %v703
  %v3097 = vunpack.c.h.b16 %v703
  %v3098 = vunpack.c.l.b16 %v704
  %v3099 = vunpack.c.h.b16 %v704
  %v3100 = vunpack.c.l.b16 %v705
  %v3101 = vunpack.c.h.b16 %v705
  %v3102 = vunpack.c.l.b16 %v706
  %v3103 = vunpack.c.h.b16 %v706
  %v3104 = vunpack.c.l.b16 %v707
  %v3105 = vunpack.c.h.b16 %v707
  %v3106 = vunpack.c.l.b16 %v708
  %v3107 = vunpack.c.h.b16 %v708
  %v3108 = vunpack.c.l.b16 %v709
  %v3109 = vunpack.c.h.b16 %v709
  %v3110 = vunpack.c.l.b16 %v710
  %v3111 = vunpack.c.h.b16 %v710
  %v3112 = vunpack.c.l.b16 %v711
  %v3113 = vunpack.c.h.b16 %v711
  %v3114 = vunpack.c.l.b16 %v712
  %v3115 = vunpack.c.h.b16 %v712
  %v3116 = vunpack.c.l.b16 %v713
  %v3117 = vunpack.c.h.b16 %v713
  %v3118 = vunpack.c.l.b16 %v714
  %v3119 = vunpack.c.h.b16 %v714
  %v3120 = vunpack.c.l.b16 %v715
  %v3121 = vunpack.c.h.b16 %v715
  %v3122 = vunpack.c.l.b16 %v716
  %v3123 = vunpack.c.h.b16 %v716
  %v3124 = vunpack.c.l.b16 %v717
  %v3125 = vunpack.c.h.b16 %v717
  %v3126 = vunpack.c.l.b16 %v718
  %v3127 = vunpack.c.h.b16 %v718
  %v3128 = vunpack.c.l.b16 %v719
  %v3129 = vunpack.c.h.b16 %v719
  %v3130 = vunpack.c.l.b16 %v720
  %v3131 = vunpack.c.h.b16 %v720
  %v3132 = vunpack.c.l.b16 %v721
  %v3133 = vunpack.c.h.b16 %v721
  %v3134 = vunpack.c.l.b16 %v722
  %v3135 = vunpack.c.h.b16 %v722
  %v3136 = vunpack.c.l.b16 %v723
  %v3137 = vunpack.c.h.b16 %v723
  %v3138 = vunpack.c.l.b16 %v724
  %v3139 = vunpack.c.h.b16 %v724
  %v3140 = vunpack.c.l.b16 %v725
  %v3141 = vunpack.c.h.b16 %v725
  %v3142 = vunpack.c.l.b16 %v726
  %v3143 = vunpack.c.h.b16 %v726
  %v3144 = vunpack.c.l.b16 %v727
  %v3145 = vunpack.c.h.b16 %v727
  %v3146 = vunpack.c.l.b16 %v728
  %v3147 = vunpack.c.h.b16 %v728
  %v3148 = vunpack.c.l.b16 %v729
  %v3149 = vunpack.c.h.b16 %v729
  %v3150 = vunpack.c.l.b16 %v730
  %v3151 = vunpack.c.h.b16 %v730
  %v3152 = vunpack.c.l.b16 %v731
  %v3153 = vunpack.c.h.b16 %v731
  %v3154 = vunpack.c.l.b16 %v732
  %v3155 = vunpack.c.h.b16 %v732
  %v3156 = vunpack.c.l.b16 %v733
  %v3157 = vunpack.c.h.b16 %v733
  %v3158 = vunpack.c.l.b16 %v734
  %v3159 = vunpack.c.h.b16 %v734
  %v3160 = vunpack.c.l.b16 %v735
  %v3161 = vunpack.c.h.b16 %v735
  %v3162 = vunpack.c.l.b16 %v736
  %v3163 = vunpack.c.h.b16 %v736
  %v3164 = vunpack.c.l.b16 %v737
  %v3165 = vunpack.c.h.b16 %v737
  %v3166 = vunpack.c.l.b16 %v738
  %v3167 = vunpack.c.h.b16 %v738
  %v3168 = vunpack.c.l.b16 %v739
  %v3169 = vunpack.c.h.b16 %v739
  %v3170 = vunpack.c.l.b16 %v740
  %v3171 = vunpack.c.h.b16 %v740
  %v3172 = vunpack.c.l.b16 %v741
  %v3173 = vunpack.c.h.b16 %v741
  %v3174 = vunpack.c.l.b16 %v742
  %v3175 = vunpack.c.h.b16 %v742
  %v3176 = vunpack.c.l.b16 %v743
  %v3177 = vunpack.c.h.b16 %v743
  %v3178 = vunpack.c.l.b16 %v744
  %v3179 = vunpack.c.h.b16 %v744
  %v3180 = vunpack.c.l.b16 %v745
  %v3181 = vunpack.c.h.b16 %v745
  %v3182 = vunpack.c.l.b16 %v746
  %v3183 = vunpack.c.h.b16 %v746
  %v3184 = vunpack.c.l.b16 %v747
  %v3185 = vunpack.c.h.b16 %v747
  %v3186 = vunpack.c.l.b16 %v748
  %v3187 = vunpack.c.h.b16 %v748
  %v3188 = vunpack.c.l.b16 %v749
  %v3189 = vunpack.c.h.b16 %v749
  %v3190 = vunpack.c.l.b16 %v750
  %v3191 = vunpack.c.h.b16 %v750
  %v3192 = vunpack.c.l.b16 %v751
  %v3193 = vunpack.c.h.b16 %v751
  %v3194 = vunpack.c.l.b16 %v752
  %v3195 = vunpack.c.h.b16 %v752
  %v3196 = vunpack.c.l.b16 %v753
  %v3197 = vunpack.c.h.b16 %v753
  %v3198 = vunpack.c.l.b16 %v754
  %v3199 = vunpack.c.h.b16 %v754
  %v3200 = vunpack.c.l.b16 %v755
  %v3201 = vunpack.c.h.b16 %v755
  %v3202 = vunpack.c.l.b16 %v756
  %v3203 = vunpack.c.h.b16 %v756
  %v3204 = vunpack.c.l.b16 %v757
  %v3205 = vunpack.c.h.b16 %v757
  %v3206 = vunpack.c.l.b16 %v758
  %v3207 = vunpack.c.h.b16 %v758
  %v3208 = vunpack.c.l.b16 %v759
  %v3209 = vunpack.c.h.b16 %v759
  %v3210 = vunpack.c.l.b16 %v760
  %v3211 = vunpack.c.h.b16 %v760
  %v3212 = vunpack.c.l.b16 %v761
  %v3213 = vunpack.c.h.b16 %v761
  %v3214 = vunpack.c.l.b16 %v762
  %v3215 = vunpack.c.h.b16 %v762
  %v3216 = vunpack.c.l.b16 %v763
  %v3217 = vunpack.c.h.b16 %v763
  %v3218 = vunpack.c.l.b16 %v764
  %v3219 = vunpack.c.h.b16 %v764
  %v3220 = vunpack.c.l.b16 %v765
  %v3221 = vunpack.c.h.b16 %v765
  %v3222 = vunpack.c.l.b16 %v766
  %v3223 = vunpack.c.h.b16 %v766
  %v3224 = vunpack.c.l.b16 %v767
  %v3225 = vunpack.c.h.b16 %v767
  %v3226 = vunpack.c.l.b16 %v768
  %v3227 = vunpack.c.h.b16 %v768
  %v3228 = vunpack.c.l.b16 %v769
  %v3229 = vunpack.c.h.b16 %v769
  %v3230 = vunpack.c.l.b16 %v770
  %v3231 = vunpack.c.h.b16 %v770
  %v3232 = vunpack.c.l.b16 %v771
  %v3233 = vunpack.c.h.b16 %v771
  %v3234 = vunpack.c.l.b16 %v772
  %v3235 = vunpack.c.h.b16 %v772
  %v3236 = vunpack.c.l.b16 %v773
  %v3237 = vunpack.c.h.b16 %v773
  %v3238 = vunpack.c.l.b16 %v774
  %v3239 = vunpack.c.h.b16 %v774
  %v3240 = vunpack.c.l.b16 %v775
  %v3241 = vunpack.c.h.b16 %v775
  %v3242 = vunpack.c.l.b16 %v776
  %v3243 = vunpack.c.h.b16 %v776
  %v3244 = vunpack.c.l.b16 %v777
  %v3245 = vunpack.c.h.b16 %v777
  %v3246 = vunpack.c.l.b16 %v778
  %v3247 = vunpack.c.h.b16 %v778
  %v3248 = vunpack.c.l.b16 %v779
  %v3249 = vunpack.c.h.b16 %v779
  %v3250 = vunpack.c.l.b16 %v780
  %v3251 = vunpack.c.h.b16 %v780
  %v3252 = vunpack.c.l.b16 %v781
  %v3253 = vunpack.c.h.b16 %v781
  %v3254 = vunpack.c.l.b16 %v782
  %v3255 = vunpack.c.h.b16 %v782
  %v3256 = vunpack.c.l.b16 %v783
  %v3257 = vunpack.c.h.b16 %v783
  %v3258 = vunpack.c.l.b16 %v784
  %v3259 = vunpack.c.h.b16 %v784
  %v3260 = vunpack.c.l.b16 %v785
  %v3261 = vunpack.c.h.b16 %v785
  %v3262 = vunpack.c.l.b16 %v786
  %v3263 = vunpack.c.h.b16 %v786
  %v3264 = vunpack.c.l.b16 %v787
  %v3265 = vunpack.c.h.b16 %v787
  %v3266 = vunpack.c.l.b16 %v788
  %v3267 = vunpack.c.h.b16 %v788
  %v3268 = vunpack.c.l.b16 %v789
  %v3269 = vunpack.c.h.b16 %v789
  %v3270 = vunpack.c.l.b16 %v790
  %v3271 = vunpack.c.h.b16 %v790
  %v3272 = vunpack.c.l.b16 %v791
  %v3273 = vunpack.c.h.b16 %v791
  %v3274 = vunpack.c.l.b16 %v792
  %v3275 = vunpack.c.h.b16 %v792
  %v3276 = vunpack.c.l.b16 %v793
  %v3277 = vunpack.c.h.b16 %v793
  %v3278 = vunpack.c.l.b16 %v794
  %v3279 = vunpack.c.h.b16 %v794
  %v3280 = vunpack.c.l.b16 %v795
  %v3281 = vunpack.c.h.b16 %v795
  %v3282 = vunpack.c.l.b16 %v796
  %v3283 = vunpack.c.h.b16 %v796
  %v3284 = vunpack.c.l.b16 %v797
  %v3285 = vunpack.c.h.b16 %v797
  %v3286 = vunpack.c.l.b16 %v798
  %v3287 = vunpack.c.h.b16 %v798
  %v3288 = vunpack.c.l.b16 %v799
  %v3289 = vunpack.c.h.b16 %v799
  %v3290 = vunpack.c.l.b16 %v800
  %v3291 = vunpack.c.h.b16 %v800
  %v3292 = vunpack.c.l.b16 %v801
  %v3293 = vunpack.c.h.b16 %v801
  %v3294 = vunpack.c.l.b16 %v802
  %v3295 = vunpack.c.h.b16 %v802
  %v3296 = vunpack.c.l.b16 %v803
  %v3297 = vunpack.c.h.b16 %v803
  %v3298 = vunpack.c.l.b16 %v804
  %v3299 = vunpack.c.h.b16 %v804
  %v3300 = vunpack.c.l.b16 %v805
  %v3301 = vunpack.c.h.b16 %v805
  %v3302 = vunpack.c.l.b16 %v806
  %v3303 = vunpack.c.h.b16 %v806
  %v3304 = vunpack.c.l.b16 %v807
  %v3305 = vunpack.c.h.b16 %v807
  %v3306 = vunpack.c.l.b16 %v808
  %v3307 = vunpack.c.h.b16 %v808
  %v3308 = vunpack.c.l.b16 %v809
  %v3309 = vunpack.c.h.b16 %v809
  %v3310 = vunpack.c.l.b16 %v810
  %v3311 = vunpack.c.h.b16 %v810
  %v3312 = vunpack.c.l.b16 %v811
  %v3313 = vunpack.c.h.b16 %v811
  %v3314 = vunpack.c.l.b16 %v812
  %v3315 = vunpack.c.h.b16 %v812
  %v3316 = vunpack.c.l.b16 %v813
  %v3317 = vunpack.c.h.b16 %v813
  %v3318 = vunpack.c.l.b16 %v814
  %v3319 = vunpack.c.h.b16 %v814
  %v3320 = vunpack.c.l.b16 %v815
  %v3321 = vunpack.c.h.b16 %v815
  %v3322 = vunpack.c.l.b16 %v816
  %v3323 = vunpack.c.h.b16 %v816
  %v3324 = vunpack.c.l.b16 %v817
  %v3325 = vunpack.c.h.b16 %v817
  %v3326 = vunpack.c.l.b16 %v818
  %v3327 = vunpack.c.h.b16 %v818
  %v3328 = vunpack.c.l.b16 %v819
  %v3329 = vunpack.c.h.b16 %v819
  %v3330 = vunpack.c.l.b16 %v820
  %v3331 = vunpack.c.h.b16 %v820
  %v3332 = vunpack.c.l.b16 %v821
  %v3333 = vunpack.c.h.b16 %v821
  %v3334 = vunpack.c.l.b16 %v822
  %v3335 = vunpack.c.h.b16 %v822
  %v3336 = vunpack.c.l.b16 %v823
  %v3337 = vunpack.c.h.b16 %v823
  %v3338 = vunpack.c.l.b16 %v824
  %v3339 = vunpack.c.h.b16 %v824
  %v3340 = vunpack.c.l.b16 %v825
  %v3341 = vunpack.c.h.b16 %v825
  %v3342 = vunpack.c.l.b16 %v826
  %v3343 = vunpack.c.h.b16 %v826
  %v3344 = vunpack.c.l.b16 %v827
  %v3345 = vunpack.c.h.b16 %v827
  %v3346 = vunpack.c.l.b16 %v828
  %v3347 = vunpack.c.h.b16 %v828
  %v3348 = vunpack.c.l.b16 %v829
  %v3349 = vunpack.c.h.b16 %v829
  %v3350 = vunpack.c.l.b16 %v830
  %v3351 = vunpack.c.h.b16 %v830
  %v3352 = vunpack.c.l.b16 %v831
  %v3353 = vunpack.c.h.b16 %v831
  %v3354 = vunpack.c.l.b16 %v832
  %v3355 = vunpack.c.h.b16 %v832
  %v3356 = vunpack.c.l.b16 %v833
  %v3357 = vunpack.c.h.b16 %v833
  %v3358 = vunpack.c.l.b16 %v834
  %v3359 = vunpack.c.h.b16 %v834
  %v3360 = vunpack.c.l.b16 %v835
  %v3361 = vunpack.c.h.b16 %v835
  %v3362 = vunpack.c.l.b16 %v836
  %v3363 = vunpack.c.h.b16 %v836
  %v3364 = vunpack.c.l.b16 %v837
  %v3365 = vunpack.c.h.b16 %v837
  %v3366 = vunpack.c.l.b16 %v838
  %v3367 = vunpack.c.h.b16 %v838
  %v3368 = vunpack.c.l.b16 %v839
  %v3369 = vunpack.c.h.b16 %v839
  %v3370 = vunpack.c.l.b16 %v840
  %v3371 = vunpack.c.h.b16 %v840
  %v3372 = vunpack.c.l.b16 %v841
  %v3373 = vunpack.c.h.b16 %v841
  %v3374 = vunpack.c.l.b16 %v842
  %v3375 = vunpack.c.h.b16 %v842
  %v3376 = vunpack.c.l.b16 %v843
  %v3377 = vunpack.c.h.b16 %v843
  %v3378 = vunpack.c.l.b16 %v844
  %v3379 = vunpack.c.h.b16 %v844
  %v3380 = vunpack.c.l.b16 %v845
  %v3381 = vunpack.c.h.b16 %v845
  %v3382 = vpack.c.b16 %v1786, %v1782
  %v3383 = vpack.c.b16 %v1787, %v1783
  %v3384 = vpack.c.b16 %v1788, %v1784
  %v3385 = vpack.c.b16 %v1789, %v1785
  %v3386 = vpack.c.b16 %v1794, %v1790
  %v3387 = vpack.c.b16 %v1795, %v1791
  %v3388 = vpack.c.b16 %v1796, %v1792
  %v3389 = vpack.c.b16 %v1797, %v1793
  %v3390 = vpack.c.b16 %v1802, %v1798
  %v3391 = vpack.c.b16 %v1803, %v1799
  %v3392 = vpack.c.b16 %v1804, %v1800
  %v3393 = vpack.c.b16 %v1805, %v1801
  %v3394 = vpack.c.b16 %v1810, %v1806
  %v3395 = vpack.c.b16 %v1811, %v1807
  %v3396 = vpack.c.b16 %v1812, %v1808
  %v3397 = vpack.c.b16 %v1813, %v1809
  %v3398 = vpack.c.b16 %v1818, %v1814
  %v3399 = vpack.c.b16 %v1819, %v1815
  %v3400 = vpack.c.b16 %v1820, %v1816
  %v3401 = vpack.c.b16 %v1821, %v1817
  %v3402 = vpack.c.b16 %v1826, %v1822
  %v3403 = vpack.c.b16 %v1827, %v1823
  %v3404 = vpack.c.b16 %v1828, %v1824
  %v3405 = vpack.c.b16 %v1829, %v1825
  %v3406 = vpack.c.b16 %v1834, %v1830
  %v3407 = vpack.c.b16 %v1835, %v1831
  %v3408 = vpack.c.b16 %v1836, %v1832
  %v3409 = vpack.c.b16 %v1837, %v1833
  %v3410 = vpack.c.b16 %v1842, %v1838
  %v3411 = vpack.c.b16 %v1843, %v1839
  %v3412 = vpack.c.b16 %v1844, %v1840
  %v3413 = vpack.c.b16 %v1845, %v1841
  %v3414 = vpack.c.b16 %v1850, %v1846
  %v3415 = vpack.c.b16 %v1851, %v1847
  %v3416 = vpack.c.b16 %v1852, %v1848
  %v3417 = vpack.c.b16 %v1853, %v1849
  %v3418 = vpack.c.b16 %v1858, %v1854
  %v3419 = vpack.c.b16 %v1859, %v1855
  %v3420 = vpack.c.b16 %v1860, %v1856
  %v3421 = vpack.c.b16 %v1861, %v1857
  %v3422 = vpack.c.b16 %v1866, %v1862
  %v3423 = vpack.c.b16 %v1867, %v1863
  %v3424 = vpack.c.b16 %v1868, %v1864
  %v3425 = vpack.c.b16 %v1869, %v1865
  %v3426 = vpack.c.b16 %v1874, %v1870
  %v3427 = vpack.c.b16 %v1875, %v1871
  %v3428 = vpack.c.b16 %v1876, %v1872
  %v3429 = vpack.c.b16 %v1877, %v1873
  %v3430 = vpack.c.b16 %v1882, %v1878
  %v3431 = vpack.c.b16 %v1883, %v1879
  %v3432 = vpack.c.b16 %v1884, %v1880
  %v3433 = vpack.c.b16 %v1885, %v1881
  %v3434 = vpack.c.b16 %v1890, %v1886
  %v3435 = vpack.c.b16 %v1891, %v1887
  %v3436 = vpack.c.b16 %v1892, %v1888
  %v3437 = vpack.c.b16 %v1893, %v1889
  %v3438 = vpack.c.b16 %v1898, %v1894
  %v3439 = vpack.c.b16 %v1899, %v1895
  %v3440 = vpack.c.b16 %v1900, %v1896
  %v3441 = vpack.c.b16 %v1901, %v1897
  %v3442 = vpack.c.b16 %v1906, %v1902
  %v3443 = vpack.c.b16 %v1907, %v1903
  %v3444 = vpack.c.b16 %v1908, %v1904
  %v3445 = vpack.c.b16 %v1909, %v1905
  %v3446 = vpack.c.b16 %v1914, %v1910
  %v3447 = vpack.c.b16 %v1915, %v1911
  %v3448 = vpack.c.b16 %v1916, %v1912
  %v3449 = vpack.c.b16 %v1917, %v1913
  %v3450 = vpack.c.b16 %v1922, %v1918
  %v3451 = vpack.c.b16 %v1923, %v1919
  %v3452 = vpack.c.b16 %v1924, %v1920
  %v3453 = vpack.c.b16 %v1925, %v1921
  %v3454 = vpack.c.b16 %v1930, %v1926
  %v3455 = vpack.c.b16 %v1931, %v1927
  %v3456 = vpack.c.b16 %v1932, %v1928
  %v3457 = vpack.c.b16 %v1933, %v1929
  %v3458 = vpack.c.b16 %v1938, %v1934
  %v3459 = vpack.c.b16 %v1939, %v1935
  %v3460 = vpack.c.b16 %v1940, %v1936
  %v3461 = vpack.c.b16 %v1941, %v1937
  %v3462 = vpack.c.b16 %v1946, %v1942
  %v3463 = vpack.c.b16 %v1947, %v1943
  %v3464 = vpack.c.b16 %v1948, %v1944
  %v3465 = vpack.c.b16 %v1949, %v1945
  %v3466 = vpack.c.b16 %v1954, %v1950
  %v3467 = vpack.c.b16 %v1955, %v1951
  %v3468 = vpack.c.b16 %v1956, %v1952
  %v3469 = vpack.c.b16 %v1957, %v1953
  %v3470 = vpack.c.b16 %v1962, %v1958
  %v3471 = vpack.c.b16 %v1963, %v1959
  %v3472 = vpack.c.b16 %v1964, %v1960
  %v3473 = vpack.c.b16 %v1965, %v1961
  %v3474 = vpack.c.b16 %v1970, %v1966
  %v3475 = vpack.c.b16 %v1971, %v1967
  %v3476 = vpack.c.b16 %v1972, %v1968
  %v3477 = vpack.c.b16 %v1973, %v1969
  %v3478 = vpack.c.b16 %v1978, %v1974
  %v3479 = vpack.c.b16 %v1979, %v1975
  %v3480 = vpack.c.b16 %v1980, %v1976
  %v3481 = vpack.c.b16 %v1981, %v1977
  %v3482 = vpack.c.b16 %v1986, %v1982
  %v3483 = vpack.c.b16 %v1987, %v1983
  %v3484 = vpack.c.b16 %v1988, %v1984
  %v3485 = vpack.c.b16 %v1989, %v1985
  %v3486 = vpack.c.b16 %v1994, %v1990
  %v3487 = vpack.c.b16 %v1995, %v1991
  %v3488 = vpack.c.b16 %v1996, %v1992
  %v3489 = vpack.c.b16 %v1997, %v1993
  %v3490 = vpack.c.b16 %v2002, %v1998
  %v3491 = vpack.c.b16 %v2003, %v1999
  %v3492 = vpack.c.b16 %v2004, %v2000
  %v3493 = vpack.c.b16 %v2005, %v2001
  %v3494 = vpack.c.b16 %v2010, %v2006
  %v3495 = vpack.c.b16 %v2011, %v2007
  %v3496 = vpack.c.b16 %v2012, %v2008
  %v3497 = vpack.c.b16 %v2013, %v2009
  %v3498 = vpack.c.b16 %v2018, %v2014
  %v3499 = vpack.c.b16 %v2019, %v2015
  %v3500 = vpack.c.b16 %v2020, %v2016
  %v3501 = vpack.c.b16 %v2021, %v2017
  %v3502 = vpack.c.b16 %v2026, %v2022
  %v3503 = vpack.c.b16 %v2027, %v2023
  %v3504 = vpack.c.b16 %v2028, %v2024
  %v3505 = vpack.c.b16 %v2029, %v2025
  %v3506 = vpack.c.b16 %v2034, %v2030
  %v3507 = vpack.c.b16 %v2035, %v2031
  %v3508 = vpack.c.b16 %v2036, %v2032
  %v3509 = vpack.c.b16 %v2037, %v2033
  %v3510 = vpack.c.b16 %v2042, %v2038
  %v3511 = vpack.c.b16 %v2043, %v2039
  %v3512 = vpack.c.b16 %v2044, %v2040
  %v3513 = vpack.c.b16 %v2045, %v2041
  %v3514 = vpack.c.b16 %v2050, %v2046
  %v3515 = vpack.c.b16 %v2051, %v2047
  %v3516 = vpack.c.b16 %v2052, %v2048
  %v3517 = vpack.c.b16 %v2053, %v2049
  %v3518 = vpack.c.b16 %v2058, %v2054
  %v3519 = vpack.c.b16 %v2059, %v2055
  %v3520 = vpack.c.b16 %v2060, %v2056
  %v3521 = vpack.c.b16 %v2061, %v2057
  %v3522 = vpack.c.b16 %v2066, %v2062
  %v3523 = vpack.c.b16 %v2067, %v2063
  %v3524 = vpack.c.b16 %v2068, %v2064
  %v3525 = vpack.c.b16 %v2069, %v2065
  %v3526 = vpack.c.b16 %v2074, %v2070
  %v3527 = vpack.c.b16 %v2075, %v2071
  %v3528 = vpack.c.b16 %v2076, %v2072
  %v3529 = vpack.c.b16 %v2077, %v2073
  %v3530 = vpack.c.b16 %v2082, %v2078
  %v3531 = vpack.c.b16 %v2083, %v2079
  %v3532 = vpack.c.b16 %v2084, %v2080
  %v3533 = vpack.c.b16 %v2085, %v2081
  %v3534 = vpack.c.b16 %v2090, %v2086
  %v3535 = vpack.c.b16 %v2091, %v2087
  %v3536 = vpack.c.b16 %v2092, %v2088
  %v3537 = vpack.c.b16 %v2093, %v2089
  %v3538 = vpack.c.b16 %v2098, %v2094
  %v3539 = vpack.c.b16 %v2099, %v2095
  %v3540 = vpack.c.b16 %v2100, %v2096
  %v3541 = vpack.c.b16 %v2101, %v2097
  %v3542 = vpack.c.b16 %v2106, %v2102
  %v3543 = vpack.c.b16 %v2107, %v2103
  %v3544 = vpack.c.b16 %v2108, %v2104
  %v3545 = vpack.c.b16 %v2109, %v2105
  %v3546 = vpack.c.b16 %v2114, %v2110
  %v3547 = vpack.c.b16 %v2115, %v2111
  %v3548 = vpack.c.b16 %v2116, %v2112
  %v3549 = vpack.c.b16 %v2117, %v2113
  %v3550 = vpack.c.b16 %v2122, %v2118
  %v3551 = vpack.c.b16 %v2123, %v2119
  %v3552 = vpack.c.b16 %v2124, %v2120
  %v3553 = vpack.c.b16 %v2125, %v2121
  %v3554 = vpack.c.b16 %v2130, %v2126
  %v3555 = vpack.c.b16 %v2131, %v2127
  %v3556 = vpack.c.b16 %v2132, %v2128
  %v3557 = vpack.c.b16 %v2133, %v2129
  %v3558 = vpack.c.b16 %v2138, %v2134
  %v3559 = vpack.c.b16 %v2139, %v2135
  %v3560 = vpack.c.b16 %v2140, %v2136
  %v3561 = vpack.c.b16 %v2141, %v2137
  %v3562 = vpack.c.b16 %v2146, %v2142
  %v3563 = vpack.c.b16 %v2147, %v2143
  %v3564 = vpack.c.b16 %v2148, %v2144
  %v3565 = vpack.c.b16 %v2149, %v2145
  %v3566 = vpack.c.b16 %v2154, %v2150
  %v3567 = vpack.c.b16 %v2155, %v2151
  %v3568 = vpack.c.b16 %v2156, %v2152
  %v3569 = vpack.c.b16 %v2157, %v2153
  %v3570 = vpack.c.b16 %v2162, %v2158
  %v3571 = vpack.c.b16 %v2163, %v2159
  %v3572 = vpack.c.b16 %v2164, %v2160
  %v3573 = vpack.c.b16 %v2165, %v2161
  %v3574 = vpack.c.b16 %v2170, %v2166
  %v3575 = vpack.c.b16 %v2171, %v2167
  %v3576 = vpack.c.b16 %v2172, %v2168
  %v3577 = vpack.c.b16 %v2173, %v2169
  %v3578 = vpack.c.b16 %v2178, %v2174
  %v3579 = vpack.c.b16 %v2179, %v2175
  %v3580 = vpack.c.b16 %v2180, %v2176
  %v3581 = vpack.c.b16 %v2181, %v2177
  %v3582 = vpack.c.b16 %v2186, %v2182
  %v3583 = vpack.c.b16 %v2187, %v2183
  %v3584 = vpack.c.b16 %v2188, %v2184
  %v3585 = vpack.c.b16 %v2189, %v2185
  %v3586 = vpack.c.b16 %v2194, %v2190
  %v3587 = vpack.c.b16 %v2195, %v2191
  %v3588 = vpack.c.b16 %v2196, %v2192
  %v3589 = vpack.c.b16 %v2197, %v2193
  %v3590 = vpack.c.b16 %v2202, %v2198
  %v3591 = vpack.c.b16 %v2203, %v2199
  %v3592 = vpack.c.b16 %v2204, %v2200
  %v3593 = vpack.c.b16 %v2205, %v2201
  %v3594 = vpack.c.b16 %v2210, %v2206
  %v3595 = vpack.c.b16 %v2211, %v2207
  %v3596 = vpack.c.b16 %v2212, %v2208
  %v3597 = vpack.c.b16 %v2213, %v2209
  %v3598 = vpack.c.b16 %v2218, %v2214
  %v3599 = vpack.c.b16 %v2219, %v2215
  %v3600 = vpack.c.b16 %v2220, %v2216
  %v3601 = vpack.c.b16 %v2221, %v2217
  %v3602 = vpack.c.b16 %v2226, %v2222
  %v3603 = vpack.c.b16 %v2227, %v2223
  %v3604 = vpack.c.b16 %v2228, %v2224
  %v3605 = vpack.c.b16 %v2229, %v2225
  %v3606 = vpack.c.b16 %v2234, %v2230
  %v3607 = vpack.c.b16 %v2235, %v2231
  %v3608 = vpack.c.b16 %v2236, %v2232
  %v3609 = vpack.c.b16 %v2237, %v2233
  %v3610 = vpack.c.b16 %v2242, %v2238
  %v3611 = vpack.c.b16 %v2243, %v2239
  %v3612 = vpack.c.b16 %v2244, %v2240
  %v3613 = vpack.c.b16 %v2245, %v2241
  %v3614 = vpack.c.b16 %v2250, %v2246
  %v3615 = vpack.c.b16 %v2251, %v2247
  %v3616 = vpack.c.b16 %v2252, %v2248
  %v3617 = vpack.c.b16 %v2253, %v2249
  %v3618 = vpack.c.b16 %v2258, %v2254
  %v3619 = vpack.c.b16 %v2259, %v2255
  %v3620 = vpack.c.b16 %v2260, %v2256
  %v3621 = vpack.c.b16 %v2261, %v2257
  %v3622 = vpack.c.b16 %v2266, %v2262
  %v3623 = vpack.c.b16 %v2267, %v2263
  %v3624 = vpack.c.b16 %v2268, %v2264
  %v3625 = vpack.c.b16 %v2269, %v2265
  %v3626 = vpack.c.b16 %v2274, %v2270
  %v3627 = vpack.c.b16 %v2275, %v2271
  %v3628 = vpack.c.b16 %v2276, %v2272
  %v3629 = vpack.c.b16 %v2277, %v2273
  %v3630 = vpack.c.b16 %v2282, %v2278
  %v3631 = vpack.c.b16 %v2283, %v2279
  %v3632 = vpack.c.b16 %v2284, %v2280
  %v3633 = vpack.c.b16 %v2285, %v2281
  %v3634 = vpack.c.b16 %v2290, %v2286
  %v3635 = vpack.c.b16 %v2291, %v2287
  %v3636 = vpack.c.b16 %v2292, %v2288
  %v3637 = vpack.c.b16 %v2293, %v2289
  %v3638 = vpack.c.b16 %v2298, %v2294
  %v3639 = vpack.c.b16 %v2299, %v2295
  %v3640 = vpack.c.b16 %v2300, %v2296
  %v3641 = vpack.c.b16 %v2301, %v2297
  %v3642 = vpack.c.b16 %v2306, %v2302
  %v3643 = vpack.c.b16 %v2307, %v2303
  %v3644 = vpack.c.b16 %v2308, %v2304
  %v3645 = vpack.c.b16 %v2309, %v2305
  %v3646 = vpack.c.b16 %v2314, %v2310
  %v3647 = vpack.c.b16 %v2315, %v2311
  %v3648 = vpack.c.b16 %v2316, %v2312
  %v3649 = vpack.c.b16 %v2317, %v2313
  %v3650 = vpack.c.b16 %v2322, %v2318
  %v3651 = vpack.c.b16 %v2323, %v2319
  %v3652 = vpack.c.b16 %v2324, %v2320
  %v3653 = vpack.c.b16 %v2325, %v2321
  %v3654 = vpack.c.b16 %v2330, %v2326
  %v3655 = vpack.c.b16 %v2331, %v2327
  %v3656 = vpack.c.b16 %v2332, %v2328
  %v3657 = vpack.c.b16 %v2333, %v2329
  %v3658 = vpack.c.b16 %v2338, %v2334
  %v3659 = vpack.c.b16 %v2339, %v2335
  %v3660 = vpack.c.b16 %v2340, %v2336
  %v3661 = vpack.c.b16 %v2341, %v2337
  %v3662 = vpack.c.b16 %v2346, %v2342
  %v3663 = vpack.c.b16 %v2347, %v2343
  %v3664 = vpack.c.b16 %v2348, %v2344
  %v3665 = vpack.c.b16 %v2349, %v2345
  %v3666 = vpack.c.b16 %v2354, %v2350
  %v3667 = vpack.c.b16 %v2355, %v2351
  %v3668 = vpack.c.b16 %v2356, %v2352
  %v3669 = vpack.c.b16 %v2357, %v2353
  %v3670 = vpack.c.b16 %v2362, %v2358
  %v3671 = vpack.c.b16 %v2363, %v2359
  %v3672 = vpack.c.b16 %v2364, %v2360
  %v3673 = vpack.c.b16 %v2365, %v2361
  %v3674 = vpack.c.b16 %v2370, %v2366
  %v3675 = vpack.c.b16 %v2371, %v2367
  %v3676 = vpack.c.b16 %v2372, %v2368
  %v3677 = vpack.c.b16 %v2373, %v2369
  %v3678 = vpack.c.b16 %v2378, %v2374
  %v3679 = vpack.c.b16 %v2379, %v2375
  %v3680 = vpack.c.b16 %v2380, %v2376
  %v3681 = vpack.c.b16 %v2381, %v2377
  %v3682 = vpack.c.b16 %v2386, %v2382
  %v3683 = vpack.c.b16 %v2387, %v2383
  %v3684 = vpack.c.b16 %v2388, %v2384
  %v3685 = vpack.c.b16 %v2389, %v2385
  %v3686 = vpack.c.b16 %v2394, %v2390
  %v3687 = vpack.c.b16 %v2395, %v2391
  %v3688 = vpack.c.b16 %v2396, %v2392
  %v3689 = vpack.c.b16 %v2397, %v2393
  %v3690 = vpack.c.b16 %v2402, %v2398
  %v3691 = vpack.c.b16 %v2403, %v2399
  %v3692 = vpack.c.b16 %v2404, %v2400
  %v3693 = vpack.c.b16 %v2405, %v2401
  %v3694 = vpack.c.b16 %v2410, %v2406
  %v3695 = vpack.c.b16 %v2411, %v2407
  %v3696 = vpack.c.b16 %v2412, %v2408
  %v3697 = vpack.c.b16 %v2413, %v2409
  %v3698 = vpack.c.b16 %v2418, %v2414
  %v3699 = vpack.c.b16 %v2419, %v2415
  %v3700 = vpack.c.b16 %v2420, %v2416
  %v3701 = vpack.c.b16 %v2421, %v2417
  %v3702 = vpack.c.b16 %v2426, %v2422
  %v3703 = vpack.c.b16 %v2427, %v2423
  %v3704 = vpack.c.b16 %v2428, %v2424
  %v3705 = vpack.c.b16 %v2429, %v2425
  %v3706 = vpack.c.b16 %v2434, %v2430
  %v3707 = vpack.c.b16 %v2435, %v2431
  %v3708 = vpack.c.b16 %v2436, %v2432
  %v3709 = vpack.c.b16 %v2437, %v2433
  %v3710 = vpack.c.b16 %v2442, %v2438
  %v3711 = vpack.c.b16 %v2443, %v2439
  %v3712 = vpack.c.b16 %v2444, %v2440
  %v3713 = vpack.c.b16 %v2445, %v2441
  %v3714 = vpack.c.b16 %v2450, %v2446
  %v3715 = vpack.c.b16 %v2451, %v2447
  %v3716 = vpack.c.b16 %v2452, %v2448
  %v3717 = vpack.c.b16 %v2453, %v2449
  %v3718 = vpack.c.b16 %v2458, %v2454
  %v3719 = vpack.c.b16 %v2459, %v2455
  %v3720 = vpack.c.b16 %v2460, %v2456
  %v3721 = vpack.c.b16 %v2461, %v2457
  %v3722 = vpack.c.b16 %v2466, %v2462
  %v3723 = vpack.c.b16 %v2467, %v2463
  %v3724 = vpack.c.b16 %v2468, %v2464
  %v3725 = vpack.c.b16 %v2469, %v2465
  %v3726 = vpack.c.b16 %v2474, %v2470
  %v3727 = vpack.c.b16 %v2475, %v2471
  %v3728 = vpack.c.b16 %v2476, %v2472
  %v3729 = vpack.c.b16 %v2477, %v2473
  %v3730 = vpack.c.b16 %v2482, %v2478
  %v3731 = vpack.c.b16 %v2483, %v2479
  %v3732 = vpack.c.b16 %v2484, %v2480
  %v3733 = vpack.c.b16 %v2485, %v2481
  %v3734 = vpack.c.b16 %v2490, %v2486
  %v3735 = vpack.c.b16 %v2491, %v2487
  %v3736 = vpack.c.b16 %v2492, %v2488
  %v3737 = vpack.c.b16 %v2493, %v2489
  %v3738 = vpack.c.b16 %v2498, %v2494
  %v3739 = vpack.c.b16 %v2499, %v2495
  %v3740 = vpack.c.b16 %v2500, %v2496
  %v3741 = vpack.c.b16 %v2501, %v2497
  %v3742 = vpack.c.b16 %v2506, %v2502
  %v3743 = vpack.c.b16 %v2507, %v2503
  %v3744 = vpack.c.b16 %v2508, %v2504
  %v3745 = vpack.c.b16 %v2509, %v2505
  %v3746 = vpack.c.b16 %v2514, %v2510
  %v3747 = vpack.c.b16 %v2515, %v2511
  %v3748 = vpack.c.b16 %v2516, %v2512
  %v3749 = vpack.c.b16 %v2517, %v2513
  %v3750 = vpack.c.b16 %v2522, %v2518
  %v3751 = vpack.c.b16 %v2523, %v2519
  %v3752 = vpack.c.b16 %v2524, %v2520
  %v3753 = vpack.c.b16 %v2525, %v2521
  %v3754 = vpack.c.b16 %v2530, %v2526
  %v3755 = vpack.c.b16 %v2531, %v2527
  %v3756 = vpack.c.b16 %v2532, %v2528
  %v3757 = vpack.c.b16 %v2533, %v2529
  %v3758 = vpack.c.b16 %v2538, %v2534
  %v3759 = vpack.c.b16 %v2539, %v2535
  %v3760 = vpack.c.b16 %v2540, %v2536
  %v3761 = vpack.c.b16 %v2541, %v2537
  %v3762 = vpack.c.b16 %v2546, %v2542
  %v3763 = vpack.c.b16 %v2547, %v2543
  %v3764 = vpack.c.b16 %v2548, %v2544
  %v3765 = vpack.c.b16 %v2549, %v2545
  %v3766 = vpack.c.b16 %v2554, %v2550
  %v3767 = vpack.c.b16 %v2555, %v2551
  %v3768 = vpack.c.b16 %v2556, %v2552
  %v3769 = vpack.c.b16 %v2557, %v2553
  %v3770 = vpack.c.b16 %v2562, %v2558
  %v3771 = vpack.c.b16 %v2563, %v2559
  %v3772 = vpack.c.b16 %v2564, %v2560
  %v3773 = vpack.c.b16 %v2565, %v2561
  %v3774 = vpack.c.b16 %v2570, %v2566
  %v3775 = vpack.c.b16 %v2571, %v2567
  %v3776 = vpack.c.b16 %v2572, %v2568
  %v3777 = vpack.c.b16 %v2573, %v2569
  %v3778 = vpack.c.b16 %v2578, %v2574
  %v3779 = vpack.c.b16 %v2579, %v2575
  %v3780 = vpack.c.b16 %v2580, %v2576
  %v3781 = vpack.c.b16 %v2581, %v2577
  %v3782 = vpack.c.b16 %v2586, %v2582
  %v3783 = vpack.c.b16 %v2587, %v2583
  %v3784 = vpack.c.b16 %v2588, %v2584
  %v3785 = vpack.c.b16 %v2589, %v2585
  %v3786 = vpack.c.b16 %v2594, %v2590
  %v3787 = vpack.c.b16 %v2595, %v2591
  %v3788 = vpack.c.b16 %v2596, %v2592
  %v3789 = vpack.c.b16 %v2597, %v2593
  %v3790 = vpack.c.b16 %v2602, %v2598
  %v3791 = vpack.c.b16 %v2603, %v2599
  %v3792 = vpack.c.b16 %v2604, %v2600
  %v3793 = vpack.c.b16 %v2605, %v2601
  %v3794 = vpack.c.b16 %v2610, %v2606
  %v3795 = vpack.c.b16 %v2611, %v2607
  %v3796 = vpack.c.b16 %v2612, %v2608
  %v3797 = vpack.c.b16 %v2613, %v2609
  %v3798 = vpack.c.b16 %v2618, %v2614
  %v3799 = vpack.c.b16 %v2619, %v2615
  %v3800 = vpack.c.b16 %v2620, %v2616
  %v3801 = vpack.c.b16 %v2621, %v2617
  %v3802 = vpack.c.b16 %v2626, %v2622
  %v3803 = vpack.c.b16 %v2627, %v2623
  %v3804 = vpack.c.b16 %v2628, %v2624
  %v3805 = vpack.c.b16 %v2629, %v2625
  %v3806 = vpack.c.b16 %v2634, %v2630
  %v3807 = vpack.c.b16 %v2635, %v2631
  %v3808 = vpack.c.b16 %v2636, %v2632
  %v3809 = vpack.c.b16 %v2637, %v2633
  %v3810 = vpack.c.b16 %v2642, %v2638
  %v3811 = vpack.c.b16 %v2643, %v2639
  %v3812 = vpack.c.b16 %v2644, %v2640
  %v3813 = vpack.c.b16 %v2645, %v2641
  %v3814 = vpack.c.b16 %v2650, %v2646
  %v3815 = vpack.c.b16 %v2651, %v2647
  %v3816 = vpack.c.b16 %v2652, %v2648
  %v3817 = vpack.c.b16 %v2653, %v2649
  %v3818 = vpack.c.b16 %v2658, %v2654
  %v3819 = vpack.c.b16 %v2659, %v2655
  %v3820 = vpack.c.b16 %v2660, %v2656
  %v3821 = vpack.c.b16 %v2661, %v2657
  %v3822 = vpack.c.b16 %v2666, %v2662
  %v3823 = vpack.c.b16 %v2667, %v2663
  %v3824 = vpack.c.b16 %v2668, %v2664
  %v3825 = vpack.c.b16 %v2669, %v2665
  %v3826 = vpack.c.b16 %v2674, %v2670
  %v3827 = vpack.c.b16 %v2675, %v2671
  %v3828 = vpack.c.b16 %v2676, %v2672
  %v3829 = vpack.c.b16 %v2677, %v2673
  %v3830 = vpack.c.b16 %v2682, %v2678
  %v3831 = vpack.c.b16 %v2683, %v2679
  %v3832 = vpack.c.b16 %v2684, %v2680
  %v3833 = vpack.c.b16 %v2685, %v2681
  %v3834 = vpack.c.b16 %v2690, %v2686
  %v3835 = vpack.c.b16 %v2691, %v2687
  %v3836 = vpack.c.b16 %v2692, %v2688
  %v3837 = vpack.c.b16 %v2693, %v2689
  %v3838 = vpack.c.b16 %v2698, %v2694
  %v3839 = vpack.c.b16 %v2699, %v2695
  %v3840 = vpack.c.b16 %v2700, %v2696
  %v3841 = vpack.c.b16 %v2701, %v2697
  %v3842 = vpack.c.b16 %v2706, %v2702
  %v3843 = vpack.c.b16 %v2707, %v2703
  %v3844 = vpack.c.b16 %v2708, %v2704
  %v3845 = vpack.c.b16 %v2709, %v2705
  %v3846 = vpack.c.b16 %v2714, %v2710
  %v3847 = vpack.c.b16 %v2715, %v2711
  %v3848 = vpack.c.b16 %v2716, %v2712
  %v3849 = vpack.c.b16 %v2717, %v2713
  %v3850 = vpack.c.b16 %v2722, %v2718
  %v3851 = vpack.c.b16 %v2723, %v2719
  %v3852 = vpack.c.b16 %v2724, %v2720
  %v3853 = vpack.c.b16 %v2725, %v2721
  %v3854 = vpack.c.b16 %v2730, %v2726
  %v3855 = vpack.c.b16 %v2731, %v2727
  %v3856 = vpack.c.b16 %v2732, %v2728
  %v3857 = vpack.c.b16 %v2733, %v2729
  %v3858 = vpack.c.b16 %v2738, %v2734
  %v3859 = vpack.c.b16 %v2739, %v2735
  %v3860 = vpack.c.b16 %v2740, %v2736
  %v3861 = vpack.c.b16 %v2741, %v2737
  %v3862 = vpack.c.b16 %v2746, %v2742
  %v3863 = vpack.c.b16 %v2747, %v2743
  %v3864 = vpack.c.b16 %v2748, %v2744
  %v3865 = vpack.c.b16 %v2749, %v2745
  %v3866 = vpack.c.b16 %v2754, %v2750
  %v3867 = vpack.c.b16 %v2755, %v2751
  %v3868 = vpack.c.b16 %v2756, %v2752
  %v3869 = vpack.c.b16 %v2757, %v2753
  %v3870 = vpack.c.b16 %v2762, %v2758
  %v3871 = vpack.c.b16 %v2763, %v2759
  %v3872 = vpack.c.b16 %v2764, %v2760
  %v3873 = vpack.c.b16 %v2765, %v2761
  %v3874 = vpack.c.b16 %v2770, %v2766
  %v3875 = vpack.c.b16 %v2771, %v2767
  %v3876 = vpack.c.b16 %v2772, %v2768
  %v3877 = vpack.c.b16 %v2773, %v2769
  %v3878 = vpack.c.b16 %v2778, %v2774
  %v3879 = vpack.c.b16 %v2779, %v2775
  %v3880 = vpack.c.b16 %v2780, %v2776
  %v3881 = vpack.c.b16 %v2781, %v2777
  %v3882 = vpack.c.b16 %v2786, %v2782
  %v3883 = vpack.c.b16 %v2787, %v2783
  %v3884 = vpack.c.b16 %v2788, %v2784
  %v3885 = vpack.c.b16 %v2789, %v2785
  %v3886 = vpack.c.b16 %v2794, %v2790
  %v3887 = vpack.c.b16 %v2795, %v2791
  %v3888 = vpack.c.b16 %v2796, %v2792
  %v3889 = vpack.c.b16 %v2797, %v2793
  %v3890 = vpack.c.b16 %v2802, %v2798
  %v3891 = vpack.c.b16 %v2803, %v2799
  %v3892 = vpack.c.b16 %v2804, %v2800
  %v3893 = vpack.c.b16 %v2805, %v2801
  %v3894 = vpack.c.b16 %v2810, %v2806
  %v3895 = vpack.c.b16 %v2811, %v2807
  %v3896 = vpack.c.b16 %v2812, %v2808
  %v3897 = vpack.c.b16 %v2813, %v2809
  %v3898 = vpack.c.b16 %v2818, %v2814
  %v3899 = vpack.c.b16 %v2819, %v2815
  %v3900 = vpack.c.b16 %v2820, %v2816
  %v3901 = vpack.c.b16 %v2821, %v2817
  %v3902 = vpack.c.b16 %v2826, %v2822
  %v3903 = vpack.c.b16 %v2827, %v2823
  %v3904 = vpack.c.b16 %v2828, %v2824
  %v3905 = vpack.c.b16 %v2829, %v2825
  %v3906 = vpack.c.b16 %v2834, %v2830
  %v3907 = vpack.c.b16 %v2835, %v2831
  %v3908 = vpack.c.b16 %v2836, %v2832
  %v3909 = vpack.c.b16 %v2837, %v2833
  %v3910 = vpack.c.b16 %v2842, %v2838
  %v3911 = vpack.c.b16 %v2843, %v2839
  %v3912 = vpack.c.b16 %v2844, %v2840
  %v3913 = vpack.c.b16 %v2845, %v2841
  %v3914 = vpack.c.b16 %v2850, %v2846
  %v3915 = vpack.c.b16 %v2851, %v2847
  %v3916 = vpack.c.b16 %v2852, %v2848
  %v3917 = vpack.c.b16 %v2853, %v2849
  %v3918 = vpack.c.b16 %v2858, %v2854
  %v3919 = vpack.c.b16 %v2859, %v2855
  %v3920 = vpack.c.b16 %v2860, %v2856
  %v3921 = vpack.c.b16 %v2861, %v2857
  %v3922 = vpack.c.b16 %v2866, %v2862
  %v3923 = vpack.c.b16 %v2867, %v2863
  %v3924 = vpack.c.b16 %v2868, %v2864
  %v3925 = vpack.c.b16 %v2869, %v2865
  %v3926 = vpack.c.b16 %v2874, %v2870
  %v3927 = vpack.c.b16 %v2875, %v2871
  %v3928 = vpack.c.b16 %v2876, %v2872
  %v3929 = vpack.c.b16 %v2877, %v2873
  %v3930 = vpack.c.b16 %v2882, %v2878
  %v3931 = vpack.c.b16 %v2883, %v2879
  %v3932 = vpack.c.b16 %v2884, %v2880
  %v3933 = vpack.c.b16 %v2885, %v2881
  %v3934 = vpack.c.b16 %v2890, %v2886
  %v3935 = vpack.c.b16 %v2891, %v2887
  %v3936 = vpack.c.b16 %v2892, %v2888
  %v3937 = vpack.c.b16 %v2893, %v2889
  %v3938 = vpack.c.b16 %v2898, %v2894
  %v3939 = vpack.c.b16 %v2899, %v2895
  %v3940 = vpack.c.b16 %v2900, %v2896
  %v3941 = vpack.c.b16 %v2901, %v2897
  %v3942 = vpack.c.b16 %v2906, %v2902
  %v3943 = vpack.c.b16 %v2907, %v2903
  %v3944 = vpack.c.b16 %v2908, %v2904
  %v3945 = vpack.c.b16 %v2909, %v2905
  %v3946 = vpack.c.b16 %v2914, %v2910
  %v3947 = vpack.c.b16 %v2915, %v2911
  %v3948 = vpack.c.b16 %v2916, %v2912
  %v3949 = vpack.c.b16 %v2917, %v2913
  %v3950 = vpack.c.b16 %v2922, %v2918
  %v3951 = vpack.c.b16 %v2923, %v2919
  %v3952 = vpack.c.b16 %v2924, %v2920
  %v3953 = vpack.c.b16 %v2925, %v2921
  %v3954 = vpack.c.b16 %v2930, %v2926
  %v3955 = vpack.c.b16 %v2931, %v2927
  %v3956 = vpack.c.b16 %v2932, %v2928
  %v3957 = vpack.c.b16 %v2933, %v2929
  %v3958 = vpack.c.b16 %v2938, %v2934
  %v3959 = vpack.c.b16 %v2939, %v2935
  %v3960 = vpack.c.b16 %v2940, %v2936
  %v3961 = vpack.c.b16 %v2941, %v2937
  %v3962 = vpack.c.b16 %v2946, %v2942
  %v3963 = vpack.c.b16 %v2947, %v2943
  %v3964 = vpack.c.b16 %v2948, %v2944
  %v3965 = vpack.c.b16 %v2949, %v2945
  %v3966 = vpack.c.b16 %v2954, %v2950
  %v3967 = vpack.c.b16 %v2955, %v2951
  %v3968 = vpack.c.b16 %v2956, %v2952
  %v3969 = vpack.c.b16 %v2957, %v2953
  %v3970 = vpack.c.b16 %v2962, %v2958
  %v3971 = vpack.c.b16 %v2963, %v2959
  %v3972 = vpack.c.b16 %v2964, %v2960
  %v3973 = vpack.c.b16 %v2965, %v2961
  %v3974 = vpack.c.b16 %v2970, %v2966
  %v3975 = vpack.c.b16 %v2971, %v2967
  %v3976 = vpack.c.b16 %v2972, %v2968
  %v3977 = vpack.c.b16 %v2973, %v2969
  %v3978 = vpack.c.b16 %v2978, %v2974
  %v3979 = vpack.c.b16 %v2979, %v2975
  %v3980 = vpack.c.b16 %v2980, %v2976
  %v3981 = vpack.c.b16 %v2981, %v2977
  %v3982 = vpack.c.b16 %v2986, %v2982
  %v3983 = vpack.c.b16 %v2987, %v2983
  %v3984 = vpack.c.b16 %v2988, %v2984
  %v3985 = vpack.c.b16 %v2989, %v2985
  %v3986 = vpack.c.b16 %v2994, %v2990
  %v3987 = vpack.c.b16 %v2995, %v2991
  %v3988 = vpack.c.b16 %v2996, %v2992
  %v3989 = vpack.c.b16 %v2997, %v2993
  %v3990 = vpack.c.b16 %v3002, %v2998
  %v3991 = vpack.c.b16 %v3003, %v2999
  %v3992 = vpack.c.b16 %v3004, %v3000
  %v3993 = vpack.c.b16 %v3005, %v3001
  %v3994 = vpack.c.b16 %v3010, %v3006
  %v3995 = vpack.c.b16 %v3011, %v3007
  %v3996 = vpack.c.b16 %v3012, %v3008
  %v3997 = vpack.c.b16 %v3013, %v3009
  %v3998 = vpack.c.b16 %v3018, %v3014
  %v3999 = vpack.c.b16 %v3019, %v3015
  %v4000 = vpack.c.b16 %v3020, %v3016
  %v4001 = vpack.c.b16 %v3021, %v3017
  %v4002 = vpack.c.b16 %v3026, %v3022
  %v4003 = vpack.c.b16 %v3027, %v3023
  %v4004 = vpack.c.b16 %v3028, %v3024
  %v4005 = vpack.c.b16 %v3029, %v3025
  %v4006 = vpack.c.b16 %v3034, %v3030
  %v4007 = vpack.c.b16 %v3035, %v3031
  %v4008 = vpack.c.b16 %v3036, %v3032
  %v4009 = vpack.c.b16 %v3037, %v3033
  %v4010 = vpack.c.b16 %v3042, %v3038
  %v4011 = vpack.c.b16 %v3043, %v3039
  %v4012 = vpack.c.b16 %v3044, %v3040
  %v4013 = vpack.c.b16 %v3045, %v3041
  %v4014 = vpack.c.b16 %v3050, %v3046
  %v4015 = vpack.c.b16 %v3051, %v3047
  %v4016 = vpack.c.b16 %v3052, %v3048
  %v4017 = vpack.c.b16 %v3053, %v3049
  %v4018 = vpack.c.b16 %v3058, %v3054
  %v4019 = vpack.c.b16 %v3059, %v3055
  %v4020 = vpack.c.b16 %v3060, %v3056
  %v4021 = vpack.c.b16 %v3061, %v3057
  %v4022 = vpack.c.b16 %v3066, %v3062
  %v4023 = vpack.c.b16 %v3067, %v3063
  %v4024 = vpack.c.b16 %v3068, %v3064
  %v4025 = vpack.c.b16 %v3069, %v3065
  %v4026 = vpack.c.b16 %v3074, %v3070
  %v4027 = vpack.c.b16 %v3075, %v3071
  %v4028 = vpack.c.b16 %v3076, %v3072
  %v4029 = vpack.c.b16 %v3077, %v3073
  %v4030 = vpack.c.b16 %v3082, %v3078
  %v4031 = vpack.c.b16 %v3083, %v3079
  %v4032 = vpack.c.b16 %v3084, %v3080
  %v4033 = vpack.c.b16 %v3085, %v3081
  %v4034 = vpack.c.b16 %v3090, %v3086
  %v4035 = vpack.c.b16 %v3091, %v3087
  %v4036 = vpack.c.b16 %v3092, %v3088
  %v4037 = vpack.c.b16 %v3093, %v3089
  %v4038 = vpack.c.b16 %v3098, %v3094
  %v4039 = vpack.c.b16 %v3099, %v3095
  %v4040 = vpack.c.b16 %v3100, %v3096
  %v4041 = vpack.c.b16 %v3101, %v3097
  %v4042 = vpack.c.b16 %v3106, %v3102
  %v4043 = vpack.c.b16 %v3107, %v3103
  %v4044 = vpack.c.b16 %v3108, %v3104
  %v4045 = vpack.c.b16 %v3109, %v3105
  %v4046 = vpack.c.b16 %v3114, %v3110
  %v4047 = vpack.c.b16 %v3115, %v3111
  %v4048 = vpack.c.b16 %v3116, %v3112
  %v4049 = vpack.c.b16 %v3117, %v3113
  %v4050 = vpack.c.b16 %v3122, %v3118
  %v4051 = vpack.c.b16 %v3123, %v3119
  %v4052 = vpack.c.b16 %v3124, %v3120
  %v4053 = vpack.c.b16 %v3125, %v3121
  %v4054 = vpack.c.b16 %v3130, %v3126
  %v4055 = vpack.c.b16 %v3131, %v3127
  %v4056 = vpack.c.b16 %v3132, %v3128
  %v4057 = vpack.c.b16 %v3133, %v3129
  %v4058 = vpack.c.b16 %v3138, %v3134
  %v4059 = vpack.c.b16 %v3139, %v3135
  %v4060 = vpack.c.b16 %v3140, %v3136
  %v4061 = vpack.c.b16 %v3141, %v3137
  %v4062 = vpack.c.b16 %v3146, %v3142
  %v4063 = vpack.c.b16 %v3147, %v3143
  %v4064 = vpack.c.b16 %v3148, %v3144
  %v4065 = vpack.c.b16 %v3149, %v3145
  %v4066 = vpack.c.b16 %v3154, %v3150
  %v4067 = vpack.c.b16 %v3155, %v3151
  %v4068 = vpack.c.b16 %v3156, %v3152
  %v4069 = vpack.c.b16 %v3157, %v3153
  %v4070 = vpack.c.b16 %v3162, %v3158
  %v4071 = vpack.c.b16 %v3163, %v3159
  %v4072 = vpack.c.b16 %v3164, %v3160
  %v4073 = vpack.c.b16 %v3165, %v3161
  %v4074 = vpack.c.b16 %v3170, %v3166
  %v4075 = vpack.c.b16 %v3171, %v3167
  %v4076 = vpack.c.b16 %v3172, %v3168
  %v4077 = vpack.c.b16 %v3173, %v3169
  %v4078 = vpack.c.b16 %v3178, %v3174
  %v4079 = vpack.c.b16 %v3179, %v3175
  %v4080 = vpack.c.b16 %v3180, %v3176
  %v4081 = vpack.c.b16 %v3181, %v3177
  %v4082 = vpack.c.b16 %v3186, %v3182
  %v4083 = vpack.c.b16 %v3187, %v3183
  %v4084 = vpack.c.b16 %v3188, %v3184
  %v4085 = vpack.c.b16 %v3189, %v3185
  %v4086 = vpack.c.b16 %v3194, %v3190
  %v4087 = vpack.c.b16 %v3195, %v3191
  %v4088 = vpack.c.b16 %v3196, %v3192
  %v4089 = vpack.c.b16 %v3197, %v3193
  %v4090 = vpack.c.b16 %v3202, %v3198
  %v4091 = vpack.c.b16 %v3203, %v3199
  %v4092 = vpack.c.b16 %v3204, %v3200
  %v4093 = vpack.c.b16 %v3205, %v3201
  %v4094 = vpack.c.b16 %v3210, %v3206
  %v4095 = vpack.c.b16 %v3211, %v3207
  %v4096 = vpack.c.b16 %v3212, %v3208
  %v4097 = vpack.c.b16 %v3213, %v3209
  %v4098 = vpack.c.b16 %v3218, %v3214
  %v4099 = vpack.c.b16 %v3219, %v3215
  %v4100 = vpack.c.b16 %v3220, %v3216
  %v4101 = vpack.c.b16 %v3221, %v3217
  %v4102 = vpack.c.b16 %v3226, %v3222
  %v4103 = vpack.c.b16 %v3227, %v3223
  %v4104 = vpack.c.b16 %v3228, %v3224
  %v4105 = vpack.c.b16 %v3229, %v3225
  %v4106 = vpack.c.b16 %v3234, %v3230
  %v4107 = vpack.c.b16 %v3235, %v3231
  %v4108 = vpack.c.b16 %v3236, %v3232
  %v4109 = vpack.c.b16 %v3237, %v3233
  %v4110 = vpack.c.b16 %v3242, %v3238
  %v4111 = vpack.c.b16 %v3243, %v3239
  %v4112 = vpack.c.b16 %v3244, %v3240
  %v4113 = vpack.c.b16 %v3245, %v3241
  %v4114 = vpack.c.b16 %v3250, %v3246
  %v4115 = vpack.c.b16 %v3251, %v3247
  %v4116 = vpack.c.b16 %v3252, %v3248
  %v4117 = vpack.c.b16 %v3253, %v3249
  %v4118 = vpack.c.b16 %v3258, %v3254
  %v4119 = vpack.c.b16 %v3259, %v3255
  %v4120 = vpack.c.b16 %v3260, %v3256
  %v4121 = vpack.c.b16 %v3261, %v3257
  %v4122 = vpack.c.b16 %v3266, %v3262
  %v4123 = vpack.c.b16 %v3267, %v3263
  %v4124 = vpack.c.b16 %v3268, %v3264
  %v4125 = vpack.c.b16 %v3269, %v3265
  %v4126 = vpack.c.b16 %v3274, %v3270
  %v4127 = vpack.c.b16 %v3275, %v3271
  %v4128 = vpack.c.b16 %v3276, %v3272
  %v4129 = vpack.c.b16 %v3277, %v3273
  %v4130 = vpack.c.b16 %v3282, %v3278
  %v4131 = vpack.c.b16 %v3283, %v3279
  %v4132 = vpack.c.b16 %v3284, %v3280
  %v4133 = vpack.c.b16 %v3285, %v3281
  %v4134 = vpack.c.b16 %v3290, %v3286
  %v4135 = vpack.c.b16 %v3291, %v3287
  %v4136 = vpack.c.b16 %v3292, %v3288
  %v4137 = vpack.c.b16 %v3293, %v3289
  %v4138 = vpack.c.b16 %v3298, %v3294
  %v4139 = vpack.c.b16 %v3299, %v3295
  %v4140 = vpack.c.b16 %v3300, %v3296
  %v4141 = vpack.c.b16 %v3301, %v3297
  %v4142 = vpack.c.b16 %v3306, %v3302
  %v4143 = vpack.c.b16 %v3307, %v3303
  %v4144 = vpack.c.b16 %v3308, %v3304
  %v4145 = vpack.c.b16 %v3309, %v3305
  %v4146 = vpack.c.b16 %v3314, %v3310
  %v4147 = vpack.c.b16 %v3315, %v3311
  %v4148 = vpack.c.b16 %v3316, %v3312
  %v4149 = vpack.c.b16 %v3317, %v3313
  %v4150 = vpack.c.b16 %v3322, %v3318
  %v4151 = vpack.c.b16 %v3323, %v3319
  %v4152 = vpack.c.b16 %v3324, %v3320
  %v4153 = vpack.c.b16 %v3325, %v3321
  %v4154 = vpack.c.b16 %v3330, %v3326
  %v4155 = vpack.c.b16 %v3331, %v3327
  %v4156 = vpack.c.b16 %v3332, %v3328
  %v4157 = vpack.c.b16 %v3333, %v3329
  %v4158 = vpack.c.b16 %v3338, %v3334
  %v4159 = vpack.c.b16 %v3339, %v3335
  %v4160 = vpack.c.b16 %v3340, %v3336
  %v4161 = vpack.c.b16 %v3341, %v3337
  %v4162 = vpack.c.b16 %v3346, %v3342
  %v4163 = vpack.c.b16 %v3347, %v3343
  %v4164 = vpack.c.b16 %v3348, %v3344
  %v4165 = vpack.c.b16 %v3349, %v3345
  %v4166 = vpack.c.b16 %v3354, %v3350
  %v4167 = vpack.c.b16 %v3355, %v3351
  %v4168 = vpack.c.b16 %v3356, %v3352
  %v4169 = vpack.c.b16 %v3357, %v3353
  %v4170 = vpack.c.b16 %v3362, %v3358
  %v4171 = vpack.c.b16 %v3363, %v3359
  %v4172 = vpack.c.b16 %v3364, %v3360
  %v4173 = vpack.c.b16 %v3365, %v3361
  %v4174 = vpack.c.b16 %v3370, %v3366
  %v4175 = vpack.c.b16 %v3371, %v3367
  %v4176 = vpack.c.b16 %v3372, %v3368
  %v4177 = vpack.c.b16 %v3373, %v3369
  %v4178 = vpack.c.b16 %v3378, %v3374
  %v4179 = vpack.c.b16 %v3379, %v3375
  %v4180 = vpack.c.b16 %v3380, %v3376
  %v4181 = vpack.c.b16 %v3381, %v3377
  %4982 = vmatpush.bf16.msra.mxu0 %v3410
  %4983 = vmatpush.bf16.msra.mxu0 %v3406
  %4984 = vmatpush.bf16.msra.mxu0 %v3402
  %4985 = vmatpush.bf16.msra.mxu0 %v3398
  %4986 = vmatpush.bf16.msra.mxu0 %v3394
  %4987 = vmatpush.bf16.msra.mxu0 %v3390
  %4988 = vmatpush.bf16.msra.mxu0 %v3386
  %4989 = vmatpush.bf16.msra.mxu0 %v3382
  %4990 = vmatmul.bf16.gmra.mxu0 %v932
  %v4991 = vpop.f32.mrf.mxu0
  %v4992 = vadd.f32 %v848, %v4991
  %v4993 = vpop.f32.mrf.mxu0
  %v4994 = vadd.f32 %v848, %v4993
  %4995 = vdwg.mxu0
  %4996 = vmatpush.bf16.msra.mxu0 %v3442
  %4997 = vmatpush.bf16.msra.mxu0 %v3438
  %4998 = vmatpush.bf16.msra.mxu0 %v3434
  %4999 = vmatpush.bf16.msra.mxu0 %v3430
  %5000 = vmatpush.bf16.msra.mxu0 %v3426
  %5001 = vmatpush.bf16.msra.mxu0 %v3422
  %5002 = vmatpush.bf16.msra.mxu0 %v3418
  %5003 = vmatpush.bf16.msra.mxu0 %v3414
  %5004 = vmatmul.bf16.gmra.mxu0 %v933
  %v5005 = vpop.f32.mrf.mxu0
  %v5006 = vadd.f32 %v4992, %v5005
  %v5007 = vpop.f32.mrf.mxu0
  %v5008 = vadd.f32 %v4994, %v5007
  %5009 = vdwg.mxu0
  %5010 = vmatpush.bf16.msra.mxu0 %v3474
  %5011 = vmatpush.bf16.msra.mxu0 %v3470
  %5012 = vmatpush.bf16.msra.mxu0 %v3466
  %5013 = vmatpush.bf16.msra.mxu0 %v3462
  %5014 = vmatpush.bf16.msra.mxu0 %v3458
  %5015 = vmatpush.bf16.msra.mxu0 %v3454
  %5016 = vmatpush.bf16.msra.mxu0 %v3450
  %5017 = vmatpush.bf16.msra.mxu0 %v3446
  %5018 = vmatmul.bf16.gmra.mxu0 %v934
  %v5019 = vpop.f32.mrf.mxu0
  %v5020 = vadd.f32 %v5006, %v5019
  %v5021 = vpop.f32.mrf.mxu0
  %v5022 = vadd.f32 %v5008, %v5021
  %5023 = vdwg.mxu0
  %5024 = vmatpush.bf16.msra.mxu0 %v3506
  %5025 = vmatpush.bf16.msra.mxu0 %v3502
  %5026 = vmatpush.bf16.msra.mxu0 %v3498
  %5027 = vmatpush.bf16.msra.mxu0 %v3494
  %5028 = vmatpush.bf16.msra.mxu0 %v3490
  %5029 = vmatpush.bf16.msra.mxu0 %v3486
  %5030 = vmatpush.bf16.msra.mxu0 %v3482
  %5031 = vmatpush.bf16.msra.mxu0 %v3478
  %5032 = vmatmul.bf16.gmra.mxu0 %v935
  %v5033 = vpop.f32.mrf.mxu0
  %v5034 = vadd.f32 %v5020, %v5033
  %v5035 = vpop.f32.mrf.mxu0
  %v5036 = vadd.f32 %v5022, %v5035
  %5037 = vdwg.mxu0
  %5038 = vmatpush.bf16.msra.mxu0 %v3538
  %5039 = vmatpush.bf16.msra.mxu0 %v3534
  %5040 = vmatpush.bf16.msra.mxu0 %v3530
  %5041 = vmatpush.bf16.msra.mxu0 %v3526
  %5042 = vmatpush.bf16.msra.mxu0 %v3522
  %5043 = vmatpush.bf16.msra.mxu0 %v3518
  %5044 = vmatpush.bf16.msra.mxu0 %v3514
  %5045 = vmatpush.bf16.msra.mxu0 %v3510
  %5046 = vmatmul.bf16.gmra.mxu0 %v936
  %v5047 = vpop.f32.mrf.mxu0
  %v5048 = vadd.f32 %v5034, %v5047
  %v5049 = vpop.f32.mrf.mxu0
  %v5050 = vadd.f32 %v5036, %v5049
  %5051 = vdwg.mxu0
  %5052 = vmatpush.bf16.msra.mxu0 %v3570
  %5053 = vmatpush.bf16.msra.mxu0 %v3566
  %5054 = vmatpush.bf16.msra.mxu0 %v3562
  %5055 = vmatpush.bf16.msra.mxu0 %v3558
  %5056 = vmatpush.bf16.msra.mxu0 %v3554
  %5057 = vmatpush.bf16.msra.mxu0 %v3550
  %5058 = vmatpush.bf16.msra.mxu0 %v3546
  %5059 = vmatpush.bf16.msra.mxu0 %v3542
  %5060 = vmatmul.bf16.gmra.mxu0 %v937
  %v5061 = vpop.f32.mrf.mxu0
  %v5062 = vadd.f32 %v5048, %v5061
  %v5063 = vpop.f32.mrf.mxu0
  %v5064 = vadd.f32 %v5050, %v5063
  %5065 = vdwg.mxu0
  %5066 = vmatpush.bf16.msra.mxu0 %v3602
  %5067 = vmatpush.bf16.msra.mxu0 %v3598
  %5068 = vmatpush.bf16.msra.mxu0 %v3594
  %5069 = vmatpush.bf16.msra.mxu0 %v3590
  %5070 = vmatpush.bf16.msra.mxu0 %v3586
  %5071 = vmatpush.bf16.msra.mxu0 %v3582
  %5072 = vmatpush.bf16.msra.mxu0 %v3578
  %5073 = vmatpush.bf16.msra.mxu0 %v3574
  %5074 = vmatmul.bf16.gmra.mxu0 %v938
  %v5075 = vpop.f32.mrf.mxu0
  %v5076 = vadd.f32 %v5062, %v5075
  %v5077 = vpop.f32.mrf.mxu0
  %v5078 = vadd.f32 %v5064, %v5077
  %5079 = vdwg.mxu0
  %5080 = vmatpush.bf16.msra.mxu0 %v3634
  %5081 = vmatpush.bf16.msra.mxu0 %v3630
  %5082 = vmatpush.bf16.msra.mxu0 %v3626
  %5083 = vmatpush.bf16.msra.mxu0 %v3622
  %5084 = vmatpush.bf16.msra.mxu0 %v3618
  %5085 = vmatpush.bf16.msra.mxu0 %v3614
  %5086 = vmatpush.bf16.msra.mxu0 %v3610
  %5087 = vmatpush.bf16.msra.mxu0 %v3606
  %5088 = vmatmul.bf16.gmra.mxu0 %v939
  %v5089 = vpop.f32.mrf.mxu0
  %v5090 = vadd.f32 %v5076, %v5089
  %v5091 = vpop.f32.mrf.mxu0
  %v5092 = vadd.f32 %v5078, %v5091
  %5093 = vdwg.mxu0
  %5094 = vmatpush.bf16.msra.mxu0 %v3666
  %5095 = vmatpush.bf16.msra.mxu0 %v3662
  %5096 = vmatpush.bf16.msra.mxu0 %v3658
  %5097 = vmatpush.bf16.msra.mxu0 %v3654
  %5098 = vmatpush.bf16.msra.mxu0 %v3650
  %5099 = vmatpush.bf16.msra.mxu0 %v3646
  %5100 = vmatpush.bf16.msra.mxu0 %v3642
  %5101 = vmatpush.bf16.msra.mxu0 %v3638
  %5102 = vmatmul.bf16.gmra.mxu0 %v940
  %v5103 = vpop.f32.mrf.mxu0
  %v5104 = vadd.f32 %v5090, %v5103
  %v5105 = vpop.f32.mrf.mxu0
  %v5106 = vadd.f32 %v5092, %v5105
  %5107 = vdwg.mxu0
  %5108 = vmatpush.bf16.msra.mxu0 %v3698
  %5109 = vmatpush.bf16.msra.mxu0 %v3694
  %5110 = vmatpush.bf16.msra.mxu0 %v3690
  %5111 = vmatpush.bf16.msra.mxu0 %v3686
  %5112 = vmatpush.bf16.msra.mxu0 %v3682
  %5113 = vmatpush.bf16.msra.mxu0 %v3678
  %5114 = vmatpush.bf16.msra.mxu0 %v3674
  %5115 = vmatpush.bf16.msra.mxu0 %v3670
  %5116 = vmatmul.bf16.gmra.mxu0 %v941
  %v5117 = vpop.f32.mrf.mxu0
  %v5118 = vadd.f32 %v5104, %v5117
  %v5119 = vpop.f32.mrf.mxu0
  %v5120 = vadd.f32 %v5106, %v5119
  %5121 = vdwg.mxu0
  %5122 = vmatpush.bf16.msra.mxu0 %v3730
  %5123 = vmatpush.bf16.msra.mxu0 %v3726
  %5124 = vmatpush.bf16.msra.mxu0 %v3722
  %5125 = vmatpush.bf16.msra.mxu0 %v3718
  %5126 = vmatpush.bf16.msra.mxu0 %v3714
  %5127 = vmatpush.bf16.msra.mxu0 %v3710
  %5128 = vmatpush.bf16.msra.mxu0 %v3706
  %5129 = vmatpush.bf16.msra.mxu0 %v3702
  %5130 = vmatmul.bf16.gmra.mxu0 %v942
  %v5131 = vpop.f32.mrf.mxu0
  %v5132 = vadd.f32 %v5118, %v5131
  %v5133 = vpop.f32.mrf.mxu0
  %v5134 = vadd.f32 %v5120, %v5133
  %5135 = vdwg.mxu0
  %5136 = vmatpush.bf16.msra.mxu0 %v3762
  %5137 = vmatpush.bf16.msra.mxu0 %v3758
  %5138 = vmatpush.bf16.msra.mxu0 %v3754
  %5139 = vmatpush.bf16.msra.mxu0 %v3750
  %5140 = vmatpush.bf16.msra.mxu0 %v3746
  %5141 = vmatpush.bf16.msra.mxu0 %v3742
  %5142 = vmatpush.bf16.msra.mxu0 %v3738
  %5143 = vmatpush.bf16.msra.mxu0 %v3734
  %5144 = vmatmul.bf16.gmra.mxu0 %v943
  %v5145 = vpop.f32.mrf.mxu0
  %v5146 = vadd.f32 %v5132, %v5145
  %v5147 = vpop.f32.mrf.mxu0
  %v5148 = vadd.f32 %v5134, %v5147
  %5149 = vdwg.mxu0
  %5150 = vmatpush.bf16.msra.mxu0 %v3794
  %5151 = vmatpush.bf16.msra.mxu0 %v3790
  %5152 = vmatpush.bf16.msra.mxu0 %v3786
  %5153 = vmatpush.bf16.msra.mxu0 %v3782
  %5154 = vmatpush.bf16.msra.mxu0 %v3778
  %5155 = vmatpush.bf16.msra.mxu0 %v3774
  %5156 = vmatpush.bf16.msra.mxu0 %v3770
  %5157 = vmatpush.bf16.msra.mxu0 %v3766
  %5158 = vmatmul.bf16.gmra.mxu0 %v944
  %v5159 = vpop.f32.mrf.mxu0
  %v5160 = vadd.f32 %v5146, %v5159
  %v5161 = vpop.f32.mrf.mxu0
  %v5162 = vadd.f32 %v5148, %v5161
  %5163 = vdwg.mxu0
  %5164 = vmatpush.bf16.msra.mxu0 %v3826
  %5165 = vmatpush.bf16.msra.mxu0 %v3822
  %5166 = vmatpush.bf16.msra.mxu0 %v3818
  %5167 = vmatpush.bf16.msra.mxu0 %v3814
  %5168 = vmatpush.bf16.msra.mxu0 %v3810
  %5169 = vmatpush.bf16.msra.mxu0 %v3806
  %5170 = vmatpush.bf16.msra.mxu0 %v3802
  %5171 = vmatpush.bf16.msra.mxu0 %v3798
  %5172 = vmatmul.bf16.gmra.mxu0 %v945
  %v5173 = vpop.f32.mrf.mxu0
  %v5174 = vadd.f32 %v5160, %v5173
  %v5175 = vpop.f32.mrf.mxu0
  %v5176 = vadd.f32 %v5162, %v5175
  %5177 = vdwg.mxu0
  %5178 = vmatpush.bf16.msra.mxu0 %v3858
  %5179 = vmatpush.bf16.msra.mxu0 %v3854
  %5180 = vmatpush.bf16.msra.mxu0 %v3850
  %5181 = vmatpush.bf16.msra.mxu0 %v3846
  %5182 = vmatpush.bf16.msra.mxu0 %v3842
  %5183 = vmatpush.bf16.msra.mxu0 %v3838
  %5184 = vmatpush.bf16.msra.mxu0 %v3834
  %5185 = vmatpush.bf16.msra.mxu0 %v3830
  %5186 = vmatmul.bf16.gmra.mxu0 %v946
  %v5187 = vpop.f32.mrf.mxu0
  %v5188 = vadd.f32 %v5174, %v5187
  %v5189 = vpop.f32.mrf.mxu0
  %v5190 = vadd.f32 %v5176, %v5189
  %5191 = vdwg.mxu0
  %5192 = vmatpush.bf16.msra.mxu0 %v3890
  %5193 = vmatpush.bf16.msra.mxu0 %v3886
  %5194 = vmatpush.bf16.msra.mxu0 %v3882
  %5195 = vmatpush.bf16.msra.mxu0 %v3878
  %5196 = vmatpush.bf16.msra.mxu0 %v3874
  %5197 = vmatpush.bf16.msra.mxu0 %v3870
  %5198 = vmatpush.bf16.msra.mxu0 %v3866
  %5199 = vmatpush.bf16.msra.mxu0 %v3862
  %5200 = vmatmul.bf16.gmra.mxu0 %v947
  %v5201 = vpop.f32.mrf.mxu0
  %v5202 = vadd.f32 %v5188, %v5201
  %v5203 = vpop.f32.mrf.mxu0
  %v5204 = vadd.f32 %v5190, %v5203
  %5205 = vdwg.mxu0
  %5206 = vmatpush.bf16.msra.mxu0 %v3922
  %5207 = vmatpush.bf16.msra.mxu0 %v3918
  %5208 = vmatpush.bf16.msra.mxu0 %v3914
  %5209 = vmatpush.bf16.msra.mxu0 %v3910
  %5210 = vmatpush.bf16.msra.mxu0 %v3906
  %5211 = vmatpush.bf16.msra.mxu0 %v3902
  %5212 = vmatpush.bf16.msra.mxu0 %v3898
  %5213 = vmatpush.bf16.msra.mxu0 %v3894
  %5214 = vmatmul.bf16.gmra.mxu0 %v948
  %v5215 = vpop.f32.mrf.mxu0
  %v5216 = vadd.f32 %v5202, %v5215
  %v5217 = vpop.f32.mrf.mxu0
  %v5218 = vadd.f32 %v5204, %v5217
  %5219 = vdwg.mxu0
  %5220 = vmatpush.bf16.msra.mxu0 %v3954
  %5221 = vmatpush.bf16.msra.mxu0 %v3950
  %5222 = vmatpush.bf16.msra.mxu0 %v3946
  %5223 = vmatpush.bf16.msra.mxu0 %v3942
  %5224 = vmatpush.bf16.msra.mxu0 %v3938
  %5225 = vmatpush.bf16.msra.mxu0 %v3934
  %5226 = vmatpush.bf16.msra.mxu0 %v3930
  %5227 = vmatpush.bf16.msra.mxu0 %v3926
  %5228 = vmatmul.bf16.gmra.mxu0 %v949
  %v5229 = vpop.f32.mrf.mxu0
  %v5230 = vadd.f32 %v5216, %v5229
  %v5231 = vpop.f32.mrf.mxu0
  %v5232 = vadd.f32 %v5218, %v5231
  %5233 = vdwg.mxu0
  %5234 = vmatpush.bf16.msra.mxu0 %v3986
  %5235 = vmatpush.bf16.msra.mxu0 %v3982
  %5236 = vmatpush.bf16.msra.mxu0 %v3978
  %5237 = vmatpush.bf16.msra.mxu0 %v3974
  %5238 = vmatpush.bf16.msra.mxu0 %v3970
  %5239 = vmatpush.bf16.msra.mxu0 %v3966
  %5240 = vmatpush.bf16.msra.mxu0 %v3962
  %5241 = vmatpush.bf16.msra.mxu0 %v3958
  %5242 = vmatmul.bf16.gmra.mxu0 %v950
  %v5243 = vpop.f32.mrf.mxu0
  %v5244 = vadd.f32 %v5230, %v5243
  %v5245 = vpop.f32.mrf.mxu0
  %v5246 = vadd.f32 %v5232, %v5245
  %5247 = vdwg.mxu0
  %5248 = vmatpush.bf16.msra.mxu0 %v4018
  %5249 = vmatpush.bf16.msra.mxu0 %v4014
  %5250 = vmatpush.bf16.msra.mxu0 %v4010
  %5251 = vmatpush.bf16.msra.mxu0 %v4006
  %5252 = vmatpush.bf16.msra.mxu0 %v4002
  %5253 = vmatpush.bf16.msra.mxu0 %v3998
  %5254 = vmatpush.bf16.msra.mxu0 %v3994
  %5255 = vmatpush.bf16.msra.mxu0 %v3990
  %5256 = vmatmul.bf16.gmra.mxu0 %v951
  %v5257 = vpop.f32.mrf.mxu0
  %v5258 = vadd.f32 %v5244, %v5257
  %v5259 = vpop.f32.mrf.mxu0
  %v5260 = vadd.f32 %v5246, %v5259
  %5261 = vdwg.mxu0
  %5262 = vmatpush.bf16.msra.mxu0 %v4050
  %5263 = vmatpush.bf16.msra.mxu0 %v4046
  %5264 = vmatpush.bf16.msra.mxu0 %v4042
  %5265 = vmatpush.bf16.msra.mxu0 %v4038
  %5266 = vmatpush.bf16.msra.mxu0 %v4034
  %5267 = vmatpush.bf16.msra.mxu0 %v4030
  %5268 = vmatpush.bf16.msra.mxu0 %v4026
  %5269 = vmatpush.bf16.msra.mxu0 %v4022
  %5270 = vmatmul.bf16.gmra.mxu0 %v952
  %v5271 = vpop.f32.mrf.mxu0
  %v5272 = vadd.f32 %v5258, %v5271
  %v5273 = vpop.f32.mrf.mxu0
  %v5274 = vadd.f32 %v5260, %v5273
  %5275 = vdwg.mxu0
  %5276 = vmatpush.bf16.msra.mxu0 %v4082
  %5277 = vmatpush.bf16.msra.mxu0 %v4078
  %5278 = vmatpush.bf16.msra.mxu0 %v4074
  %5279 = vmatpush.bf16.msra.mxu0 %v4070
  %5280 = vmatpush.bf16.msra.mxu0 %v4066
  %5281 = vmatpush.bf16.msra.mxu0 %v4062
  %5282 = vmatpush.bf16.msra.mxu0 %v4058
  %5283 = vmatpush.bf16.msra.mxu0 %v4054
  %5284 = vmatmul.bf16.gmra.mxu0 %v953
  %v5285 = vpop.f32.mrf.mxu0
  %v5286 = vadd.f32 %v5272, %v5285
  %v5287 = vpop.f32.mrf.mxu0
  %v5288 = vadd.f32 %v5274, %v5287
  %5289 = vdwg.mxu0
  %5290 = vmatpush.bf16.msra.mxu0 %v4114
  %5291 = vmatpush.bf16.msra.mxu0 %v4110
  %5292 = vmatpush.bf16.msra.mxu0 %v4106
  %5293 = vmatpush.bf16.msra.mxu0 %v4102
  %5294 = vmatpush.bf16.msra.mxu0 %v4098
  %5295 = vmatpush.bf16.msra.mxu0 %v4094
  %5296 = vmatpush.bf16.msra.mxu0 %v4090
  %5297 = vmatpush.bf16.msra.mxu0 %v4086
  %5298 = vmatmul.bf16.gmra.mxu0 %v954
  %v5299 = vpop.f32.mrf.mxu0
  %v5300 = vadd.f32 %v5286, %v5299
  %v5301 = vpop.f32.mrf.mxu0
  %v5302 = vadd.f32 %v5288, %v5301
  %5303 = vdwg.mxu0
  %5304 = vmatpush.bf16.msra.mxu0 %v4146
  %5305 = vmatpush.bf16.msra.mxu0 %v4142
  %5306 = vmatpush.bf16.msra.mxu0 %v4138
  %5307 = vmatpush.bf16.msra.mxu0 %v4134
  %5308 = vmatpush.bf16.msra.mxu0 %v4130
  %5309 = vmatpush.bf16.msra.mxu0 %v4126
  %5310 = vmatpush.bf16.msra.mxu0 %v4122
  %5311 = vmatpush.bf16.msra.mxu0 %v4118
  %5312 = vmatmul.bf16.gmra.mxu0 %v955
  %v5313 = vpop.f32.mrf.mxu0
  %v5314 = vadd.f32 %v5300, %v5313
  %v5315 = vpop.f32.mrf.mxu0
  %v5316 = vadd.f32 %v5302, %v5315
  %5317 = vdwg.mxu0
  %5318 = vmatpush.bf16.msra.mxu0 %v4178
  %5319 = vmatpush.bf16.msra.mxu0 %v4174
  %5320 = vmatpush.bf16.msra.mxu0 %v4170
  %5321 = vmatpush.bf16.msra.mxu0 %v4166
  %5322 = vmatpush.bf16.msra.mxu0 %v4162
  %5323 = vmatpush.bf16.msra.mxu0 %v4158
  %5324 = vmatpush.bf16.msra.mxu0 %v4154
  %5325 = vmatpush.bf16.msra.mxu0 %v4150
  %5326 = vmatmul.bf16.gmra.mxu0 %v956
  %v5327 = vpop.f32.mrf.mxu0
  %v5328 = vadd.f32 %v5314, %v5327
  %v5329 = vpop.f32.mrf.mxu0
  %v5330 = vadd.f32 %v5316, %v5329
  %5331 = vdwg.mxu0
  %5332 = vmatpush.bf16.msra.mxu0 %v3411
  %5333 = vmatpush.bf16.msra.mxu0 %v3407
  %5334 = vmatpush.bf16.msra.mxu0 %v3403
  %5335 = vmatpush.bf16.msra.mxu0 %v3399
  %5336 = vmatpush.bf16.msra.mxu0 %v3395
  %5337 = vmatpush.bf16.msra.mxu0 %v3391
  %5338 = vmatpush.bf16.msra.mxu0 %v3387
  %5339 = vmatpush.bf16.msra.mxu0 %v3383
  %5340 = vmatmul.bf16.gmra.mxu0 %v932
  %v5341 = vpop.f32.mrf.mxu0
  %v5342 = vadd.f32 %v849, %v5341
  %v5343 = vpop.f32.mrf.mxu0
  %v5344 = vadd.f32 %v849, %v5343
  %5345 = vdwg.mxu0
  %5346 = vmatpush.bf16.msra.mxu0 %v3443
  %5347 = vmatpush.bf16.msra.mxu0 %v3439
  %5348 = vmatpush.bf16.msra.mxu0 %v3435
  %5349 = vmatpush.bf16.msra.mxu0 %v3431
  %5350 = vmatpush.bf16.msra.mxu0 %v3427
  %5351 = vmatpush.bf16.msra.mxu0 %v3423
  %5352 = vmatpush.bf16.msra.mxu0 %v3419
  %5353 = vmatpush.bf16.msra.mxu0 %v3415
  %5354 = vmatmul.bf16.gmra.mxu0 %v933
  %v5355 = vpop.f32.mrf.mxu0
  %v5356 = vadd.f32 %v5342, %v5355
  %v5357 = vpop.f32.mrf.mxu0
  %v5358 = vadd.f32 %v5344, %v5357
  %5359 = vdwg.mxu0
  %5360 = vmatpush.bf16.msra.mxu0 %v3475
  %5361 = vmatpush.bf16.msra.mxu0 %v3471
  %5362 = vmatpush.bf16.msra.mxu0 %v3467
  %5363 = vmatpush.bf16.msra.mxu0 %v3463
  %5364 = vmatpush.bf16.msra.mxu0 %v3459
  %5365 = vmatpush.bf16.msra.mxu0 %v3455
  %5366 = vmatpush.bf16.msra.mxu0 %v3451
  %5367 = vmatpush.bf16.msra.mxu0 %v3447
  %5368 = vmatmul.bf16.gmra.mxu0 %v934
  %v5369 = vpop.f32.mrf.mxu0
  %v5370 = vadd.f32 %v5356, %v5369
  %v5371 = vpop.f32.mrf.mxu0
  %v5372 = vadd.f32 %v5358, %v5371
  %5373 = vdwg.mxu0
  %5374 = vmatpush.bf16.msra.mxu0 %v3507
  %5375 = vmatpush.bf16.msra.mxu0 %v3503
  %5376 = vmatpush.bf16.msra.mxu0 %v3499
  %5377 = vmatpush.bf16.msra.mxu0 %v3495
  %5378 = vmatpush.bf16.msra.mxu0 %v3491
  %5379 = vmatpush.bf16.msra.mxu0 %v3487
  %5380 = vmatpush.bf16.msra.mxu0 %v3483
  %5381 = vmatpush.bf16.msra.mxu0 %v3479
  %5382 = vmatmul.bf16.gmra.mxu0 %v935
  %v5383 = vpop.f32.mrf.mxu0
  %v5384 = vadd.f32 %v5370, %v5383
  %v5385 = vpop.f32.mrf.mxu0
  %v5386 = vadd.f32 %v5372, %v5385
  %5387 = vdwg.mxu0
  %5388 = vmatpush.bf16.msra.mxu0 %v3539
  %5389 = vmatpush.bf16.msra.mxu0 %v3535
  %5390 = vmatpush.bf16.msra.mxu0 %v3531
  %5391 = vmatpush.bf16.msra.mxu0 %v3527
  %5392 = vmatpush.bf16.msra.mxu0 %v3523
  %5393 = vmatpush.bf16.msra.mxu0 %v3519
  %5394 = vmatpush.bf16.msra.mxu0 %v3515
  %5395 = vmatpush.bf16.msra.mxu0 %v3511
  %5396 = vmatmul.bf16.gmra.mxu0 %v936
  %v5397 = vpop.f32.mrf.mxu0
  %v5398 = vadd.f32 %v5384, %v5397
  %v5399 = vpop.f32.mrf.mxu0
  %v5400 = vadd.f32 %v5386, %v5399
  %5401 = vdwg.mxu0
  %5402 = vmatpush.bf16.msra.mxu0 %v3571
  %5403 = vmatpush.bf16.msra.mxu0 %v3567
  %5404 = vmatpush.bf16.msra.mxu0 %v3563
  %5405 = vmatpush.bf16.msra.mxu0 %v3559
  %5406 = vmatpush.bf16.msra.mxu0 %v3555
  %5407 = vmatpush.bf16.msra.mxu0 %v3551
  %5408 = vmatpush.bf16.msra.mxu0 %v3547
  %5409 = vmatpush.bf16.msra.mxu0 %v3543
  %5410 = vmatmul.bf16.gmra.mxu0 %v937
  %v5411 = vpop.f32.mrf.mxu0
  %v5412 = vadd.f32 %v5398, %v5411
  %v5413 = vpop.f32.mrf.mxu0
  %v5414 = vadd.f32 %v5400, %v5413
  %5415 = vdwg.mxu0
  %5416 = vmatpush.bf16.msra.mxu0 %v3603
  %5417 = vmatpush.bf16.msra.mxu0 %v3599
  %5418 = vmatpush.bf16.msra.mxu0 %v3595
  %5419 = vmatpush.bf16.msra.mxu0 %v3591
  %5420 = vmatpush.bf16.msra.mxu0 %v3587
  %5421 = vmatpush.bf16.msra.mxu0 %v3583
  %5422 = vmatpush.bf16.msra.mxu0 %v3579
  %5423 = vmatpush.bf16.msra.mxu0 %v3575
  %5424 = vmatmul.bf16.gmra.mxu0 %v938
  %v5425 = vpop.f32.mrf.mxu0
  %v5426 = vadd.f32 %v5412, %v5425
  %v5427 = vpop.f32.mrf.mxu0
  %v5428 = vadd.f32 %v5414, %v5427
  %5429 = vdwg.mxu0
  %5430 = vmatpush.bf16.msra.mxu0 %v3635
  %5431 = vmatpush.bf16.msra.mxu0 %v3631
  %5432 = vmatpush.bf16.msra.mxu0 %v3627
  %5433 = vmatpush.bf16.msra.mxu0 %v3623
  %5434 = vmatpush.bf16.msra.mxu0 %v3619
  %5435 = vmatpush.bf16.msra.mxu0 %v3615
  %5436 = vmatpush.bf16.msra.mxu0 %v3611
  %5437 = vmatpush.bf16.msra.mxu0 %v3607
  %5438 = vmatmul.bf16.gmra.mxu0 %v939
  %v5439 = vpop.f32.mrf.mxu0
  %v5440 = vadd.f32 %v5426, %v5439
  %v5441 = vpop.f32.mrf.mxu0
  %v5442 = vadd.f32 %v5428, %v5441
  %5443 = vdwg.mxu0
  %5444 = vmatpush.bf16.msra.mxu0 %v3667
  %5445 = vmatpush.bf16.msra.mxu0 %v3663
  %5446 = vmatpush.bf16.msra.mxu0 %v3659
  %5447 = vmatpush.bf16.msra.mxu0 %v3655
  %5448 = vmatpush.bf16.msra.mxu0 %v3651
  %5449 = vmatpush.bf16.msra.mxu0 %v3647
  %5450 = vmatpush.bf16.msra.mxu0 %v3643
  %5451 = vmatpush.bf16.msra.mxu0 %v3639
  %5452 = vmatmul.bf16.gmra.mxu0 %v940
  %v5453 = vpop.f32.mrf.mxu0
  %v5454 = vadd.f32 %v5440, %v5453
  %v5455 = vpop.f32.mrf.mxu0
  %v5456 = vadd.f32 %v5442, %v5455
  %5457 = vdwg.mxu0
  %5458 = vmatpush.bf16.msra.mxu0 %v3699
  %5459 = vmatpush.bf16.msra.mxu0 %v3695
  %5460 = vmatpush.bf16.msra.mxu0 %v3691
  %5461 = vmatpush.bf16.msra.mxu0 %v3687
  %5462 = vmatpush.bf16.msra.mxu0 %v3683
  %5463 = vmatpush.bf16.msra.mxu0 %v3679
  %5464 = vmatpush.bf16.msra.mxu0 %v3675
  %5465 = vmatpush.bf16.msra.mxu0 %v3671
  %5466 = vmatmul.bf16.gmra.mxu0 %v941
  %v5467 = vpop.f32.mrf.mxu0
  %v5468 = vadd.f32 %v5454, %v5467
  %v5469 = vpop.f32.mrf.mxu0
  %v5470 = vadd.f32 %v5456, %v5469
  %5471 = vdwg.mxu0
  %5472 = vmatpush.bf16.msra.mxu0 %v3731
  %5473 = vmatpush.bf16.msra.mxu0 %v3727
  %5474 = vmatpush.bf16.msra.mxu0 %v3723
  %5475 = vmatpush.bf16.msra.mxu0 %v3719
  %5476 = vmatpush.bf16.msra.mxu0 %v3715
  %5477 = vmatpush.bf16.msra.mxu0 %v3711
  %5478 = vmatpush.bf16.msra.mxu0 %v3707
  %5479 = vmatpush.bf16.msra.mxu0 %v3703
  %5480 = vmatmul.bf16.gmra.mxu0 %v942
  %v5481 = vpop.f32.mrf.mxu0
  %v5482 = vadd.f32 %v5468, %v5481
  %v5483 = vpop.f32.mrf.mxu0
  %v5484 = vadd.f32 %v5470, %v5483
  %5485 = vdwg.mxu0
  %5486 = vmatpush.bf16.msra.mxu0 %v3763
  %5487 = vmatpush.bf16.msra.mxu0 %v3759
  %5488 = vmatpush.bf16.msra.mxu0 %v3755
  %5489 = vmatpush.bf16.msra.mxu0 %v3751
  %5490 = vmatpush.bf16.msra.mxu0 %v3747
  %5491 = vmatpush.bf16.msra.mxu0 %v3743
  %5492 = vmatpush.bf16.msra.mxu0 %v3739
  %5493 = vmatpush.bf16.msra.mxu0 %v3735
  %5494 = vmatmul.bf16.gmra.mxu0 %v943
  %v5495 = vpop.f32.mrf.mxu0
  %v5496 = vadd.f32 %v5482, %v5495
  %v5497 = vpop.f32.mrf.mxu0
  %v5498 = vadd.f32 %v5484, %v5497
  %5499 = vdwg.mxu0
  %5500 = vmatpush.bf16.msra.mxu0 %v3795
  %5501 = vmatpush.bf16.msra.mxu0 %v3791
  %5502 = vmatpush.bf16.msra.mxu0 %v3787
  %5503 = vmatpush.bf16.msra.mxu0 %v3783
  %5504 = vmatpush.bf16.msra.mxu0 %v3779
  %5505 = vmatpush.bf16.msra.mxu0 %v3775
  %5506 = vmatpush.bf16.msra.mxu0 %v3771
  %5507 = vmatpush.bf16.msra.mxu0 %v3767
  %5508 = vmatmul.bf16.gmra.mxu0 %v944
  %v5509 = vpop.f32.mrf.mxu0
  %v5510 = vadd.f32 %v5496, %v5509
  %v5511 = vpop.f32.mrf.mxu0
  %v5512 = vadd.f32 %v5498, %v5511
  %5513 = vdwg.mxu0
  %5514 = vmatpush.bf16.msra.mxu0 %v3827
  %5515 = vmatpush.bf16.msra.mxu0 %v3823
  %5516 = vmatpush.bf16.msra.mxu0 %v3819
  %5517 = vmatpush.bf16.msra.mxu0 %v3815
  %5518 = vmatpush.bf16.msra.mxu0 %v3811
  %5519 = vmatpush.bf16.msra.mxu0 %v3807
  %5520 = vmatpush.bf16.msra.mxu0 %v3803
  %5521 = vmatpush.bf16.msra.mxu0 %v3799
  %5522 = vmatmul.bf16.gmra.mxu0 %v945
  %v5523 = vpop.f32.mrf.mxu0
  %v5524 = vadd.f32 %v5510, %v5523
  %v5525 = vpop.f32.mrf.mxu0
  %v5526 = vadd.f32 %v5512, %v5525
  %5527 = vdwg.mxu0
  %5528 = vmatpush.bf16.msra.mxu0 %v3859
  %5529 = vmatpush.bf16.msra.mxu0 %v3855
  %5530 = vmatpush.bf16.msra.mxu0 %v3851
  %5531 = vmatpush.bf16.msra.mxu0 %v3847
  %5532 = vmatpush.bf16.msra.mxu0 %v3843
  %5533 = vmatpush.bf16.msra.mxu0 %v3839
  %5534 = vmatpush.bf16.msra.mxu0 %v3835
  %5535 = vmatpush.bf16.msra.mxu0 %v3831
  %5536 = vmatmul.bf16.gmra.mxu0 %v946
  %v5537 = vpop.f32.mrf.mxu0
  %v5538 = vadd.f32 %v5524, %v5537
  %v5539 = vpop.f32.mrf.mxu0
  %v5540 = vadd.f32 %v5526, %v5539
  %5541 = vdwg.mxu0
  %5542 = vmatpush.bf16.msra.mxu0 %v3891
  %5543 = vmatpush.bf16.msra.mxu0 %v3887
  %5544 = vmatpush.bf16.msra.mxu0 %v3883
  %5545 = vmatpush.bf16.msra.mxu0 %v3879
  %5546 = vmatpush.bf16.msra.mxu0 %v3875
  %5547 = vmatpush.bf16.msra.mxu0 %v3871
  %5548 = vmatpush.bf16.msra.mxu0 %v3867
  %5549 = vmatpush.bf16.msra.mxu0 %v3863
  %5550 = vmatmul.bf16.gmra.mxu0 %v947
  %v5551 = vpop.f32.mrf.mxu0
  %v5552 = vadd.f32 %v5538, %v5551
  %v5553 = vpop.f32.mrf.mxu0
  %v5554 = vadd.f32 %v5540, %v5553
  %5555 = vdwg.mxu0
  %5556 = vmatpush.bf16.msra.mxu0 %v3923
  %5557 = vmatpush.bf16.msra.mxu0 %v3919
  %5558 = vmatpush.bf16.msra.mxu0 %v3915
  %5559 = vmatpush.bf16.msra.mxu0 %v3911
  %5560 = vmatpush.bf16.msra.mxu0 %v3907
  %5561 = vmatpush.bf16.msra.mxu0 %v3903
  %5562 = vmatpush.bf16.msra.mxu0 %v3899
  %5563 = vmatpush.bf16.msra.mxu0 %v3895
  %5564 = vmatmul.bf16.gmra.mxu0 %v948
  %v5565 = vpop.f32.mrf.mxu0
  %v5566 = vadd.f32 %v5552, %v5565
  %v5567 = vpop.f32.mrf.mxu0
  %v5568 = vadd.f32 %v5554, %v5567
  %5569 = vdwg.mxu0
  %5570 = vmatpush.bf16.msra.mxu0 %v3955
  %5571 = vmatpush.bf16.msra.mxu0 %v3951
  %5572 = vmatpush.bf16.msra.mxu0 %v3947
  %5573 = vmatpush.bf16.msra.mxu0 %v3943
  %5574 = vmatpush.bf16.msra.mxu0 %v3939
  %5575 = vmatpush.bf16.msra.mxu0 %v3935
  %5576 = vmatpush.bf16.msra.mxu0 %v3931
  %5577 = vmatpush.bf16.msra.mxu0 %v3927
  %5578 = vmatmul.bf16.gmra.mxu0 %v949
  %v5579 = vpop.f32.mrf.mxu0
  %v5580 = vadd.f32 %v5566, %v5579
  %v5581 = vpop.f32.mrf.mxu0
  %v5582 = vadd.f32 %v5568, %v5581
  %5583 = vdwg.mxu0
  %5584 = vmatpush.bf16.msra.mxu0 %v3987
  %5585 = vmatpush.bf16.msra.mxu0 %v3983
  %5586 = vmatpush.bf16.msra.mxu0 %v3979
  %5587 = vmatpush.bf16.msra.mxu0 %v3975
  %5588 = vmatpush.bf16.msra.mxu0 %v3971
  %5589 = vmatpush.bf16.msra.mxu0 %v3967
  %5590 = vmatpush.bf16.msra.mxu0 %v3963
  %5591 = vmatpush.bf16.msra.mxu0 %v3959
  %5592 = vmatmul.bf16.gmra.mxu0 %v950
  %v5593 = vpop.f32.mrf.mxu0
  %v5594 = vadd.f32 %v5580, %v5593
  %v5595 = vpop.f32.mrf.mxu0
  %v5596 = vadd.f32 %v5582, %v5595
  %5597 = vdwg.mxu0
  %5598 = vmatpush.bf16.msra.mxu0 %v4019
  %5599 = vmatpush.bf16.msra.mxu0 %v4015
  %5600 = vmatpush.bf16.msra.mxu0 %v4011
  %5601 = vmatpush.bf16.msra.mxu0 %v4007
  %5602 = vmatpush.bf16.msra.mxu0 %v4003
  %5603 = vmatpush.bf16.msra.mxu0 %v3999
  %5604 = vmatpush.bf16.msra.mxu0 %v3995
  %5605 = vmatpush.bf16.msra.mxu0 %v3991
  %5606 = vmatmul.bf16.gmra.mxu0 %v951
  %v5607 = vpop.f32.mrf.mxu0
  %v5608 = vadd.f32 %v5594, %v5607
  %v5609 = vpop.f32.mrf.mxu0
  %v5610 = vadd.f32 %v5596, %v5609
  %5611 = vdwg.mxu0
  %5612 = vmatpush.bf16.msra.mxu0 %v4051
  %5613 = vmatpush.bf16.msra.mxu0 %v4047
  %5614 = vmatpush.bf16.msra.mxu0 %v4043
  %5615 = vmatpush.bf16.msra.mxu0 %v4039
  %5616 = vmatpush.bf16.msra.mxu0 %v4035
  %5617 = vmatpush.bf16.msra.mxu0 %v4031
  %5618 = vmatpush.bf16.msra.mxu0 %v4027
  %5619 = vmatpush.bf16.msra.mxu0 %v4023
  %5620 = vmatmul.bf16.gmra.mxu0 %v952
  %v5621 = vpop.f32.mrf.mxu0
  %v5622 = vadd.f32 %v5608, %v5621
  %v5623 = vpop.f32.mrf.mxu0
  %v5624 = vadd.f32 %v5610, %v5623
  %5625 = vdwg.mxu0
  %5626 = vmatpush.bf16.msra.mxu0 %v4083
  %5627 = vmatpush.bf16.msra.mxu0 %v4079
  %5628 = vmatpush.bf16.msra.mxu0 %v4075
  %5629 = vmatpush.bf16.msra.mxu0 %v4071
  %5630 = vmatpush.bf16.msra.mxu0 %v4067
  %5631 = vmatpush.bf16.msra.mxu0 %v4063
  %5632 = vmatpush.bf16.msra.mxu0 %v4059
  %5633 = vmatpush.bf16.msra.mxu0 %v4055
  %5634 = vmatmul.bf16.gmra.mxu0 %v953
  %v5635 = vpop.f32.mrf.mxu0
  %v5636 = vadd.f32 %v5622, %v5635
  %v5637 = vpop.f32.mrf.mxu0
  %v5638 = vadd.f32 %v5624, %v5637
  %5639 = vdwg.mxu0
  %5640 = vmatpush.bf16.msra.mxu0 %v4115
  %5641 = vmatpush.bf16.msra.mxu0 %v4111
  %5642 = vmatpush.bf16.msra.mxu0 %v4107
  %5643 = vmatpush.bf16.msra.mxu0 %v4103
  %5644 = vmatpush.bf16.msra.mxu0 %v4099
  %5645 = vmatpush.bf16.msra.mxu0 %v4095
  %5646 = vmatpush.bf16.msra.mxu0 %v4091
  %5647 = vmatpush.bf16.msra.mxu0 %v4087
  %5648 = vmatmul.bf16.gmra.mxu0 %v954
  %v5649 = vpop.f32.mrf.mxu0
  %v5650 = vadd.f32 %v5636, %v5649
  %v5651 = vpop.f32.mrf.mxu0
  %v5652 = vadd.f32 %v5638, %v5651
  %5653 = vdwg.mxu0
  %5654 = vmatpush.bf16.msra.mxu0 %v4147
  %5655 = vmatpush.bf16.msra.mxu0 %v4143
  %5656 = vmatpush.bf16.msra.mxu0 %v4139
  %5657 = vmatpush.bf16.msra.mxu0 %v4135
  %5658 = vmatpush.bf16.msra.mxu0 %v4131
  %5659 = vmatpush.bf16.msra.mxu0 %v4127
  %5660 = vmatpush.bf16.msra.mxu0 %v4123
  %5661 = vmatpush.bf16.msra.mxu0 %v4119
  %5662 = vmatmul.bf16.gmra.mxu0 %v955
  %v5663 = vpop.f32.mrf.mxu0
  %v5664 = vadd.f32 %v5650, %v5663
  %v5665 = vpop.f32.mrf.mxu0
  %v5666 = vadd.f32 %v5652, %v5665
  %5667 = vdwg.mxu0
  %5668 = vmatpush.bf16.msra.mxu0 %v4179
  %5669 = vmatpush.bf16.msra.mxu0 %v4175
  %5670 = vmatpush.bf16.msra.mxu0 %v4171
  %5671 = vmatpush.bf16.msra.mxu0 %v4167
  %5672 = vmatpush.bf16.msra.mxu0 %v4163
  %5673 = vmatpush.bf16.msra.mxu0 %v4159
  %5674 = vmatpush.bf16.msra.mxu0 %v4155
  %5675 = vmatpush.bf16.msra.mxu0 %v4151
  %5676 = vmatmul.bf16.gmra.mxu0 %v956
  %v5677 = vpop.f32.mrf.mxu0
  %v5678 = vadd.f32 %v5664, %v5677
  %v5679 = vpop.f32.mrf.mxu0
  %v5680 = vadd.f32 %v5666, %v5679
  %5681 = vdwg.mxu0
  %5682 = vmatpush.bf16.msra.mxu0 %v3412
  %5683 = vmatpush.bf16.msra.mxu0 %v3408
  %5684 = vmatpush.bf16.msra.mxu0 %v3404
  %5685 = vmatpush.bf16.msra.mxu0 %v3400
  %5686 = vmatpush.bf16.msra.mxu0 %v3396
  %5687 = vmatpush.bf16.msra.mxu0 %v3392
  %5688 = vmatpush.bf16.msra.mxu0 %v3388
  %5689 = vmatpush.bf16.msra.mxu0 %v3384
  %5690 = vmatmul.bf16.gmra.mxu0 %v932
  %v5691 = vpop.f32.mrf.mxu0
  %v5692 = vadd.f32 %v850, %v5691
  %v5693 = vpop.f32.mrf.mxu0
  %v5694 = vadd.f32 %v850, %v5693
  %5695 = vdwg.mxu0
  %5696 = vmatpush.bf16.msra.mxu0 %v3444
  %5697 = vmatpush.bf16.msra.mxu0 %v3440
  %5698 = vmatpush.bf16.msra.mxu0 %v3436
  %5699 = vmatpush.bf16.msra.mxu0 %v3432
  %5700 = vmatpush.bf16.msra.mxu0 %v3428
  %5701 = vmatpush.bf16.msra.mxu0 %v3424
  %5702 = vmatpush.bf16.msra.mxu0 %v3420
  %5703 = vmatpush.bf16.msra.mxu0 %v3416
  %5704 = vmatmul.bf16.gmra.mxu0 %v933
  %v5705 = vpop.f32.mrf.mxu0
  %v5706 = vadd.f32 %v5692, %v5705
  %v5707 = vpop.f32.mrf.mxu0
  %v5708 = vadd.f32 %v5694, %v5707
  %5709 = vdwg.mxu0
  %5710 = vmatpush.bf16.msra.mxu0 %v3476
  %5711 = vmatpush.bf16.msra.mxu0 %v3472
  %5712 = vmatpush.bf16.msra.mxu0 %v3468
  %5713 = vmatpush.bf16.msra.mxu0 %v3464
  %5714 = vmatpush.bf16.msra.mxu0 %v3460
  %5715 = vmatpush.bf16.msra.mxu0 %v3456
  %5716 = vmatpush.bf16.msra.mxu0 %v3452
  %5717 = vmatpush.bf16.msra.mxu0 %v3448
  %5718 = vmatmul.bf16.gmra.mxu0 %v934
  %v5719 = vpop.f32.mrf.mxu0
  %v5720 = vadd.f32 %v5706, %v5719
  %v5721 = vpop.f32.mrf.mxu0
  %v5722 = vadd.f32 %v5708, %v5721
  %5723 = vdwg.mxu0
  %5724 = vmatpush.bf16.msra.mxu0 %v3508
  %5725 = vmatpush.bf16.msra.mxu0 %v3504
  %5726 = vmatpush.bf16.msra.mxu0 %v3500
  %5727 = vmatpush.bf16.msra.mxu0 %v3496
  %5728 = vmatpush.bf16.msra.mxu0 %v3492
  %5729 = vmatpush.bf16.msra.mxu0 %v3488
  %5730 = vmatpush.bf16.msra.mxu0 %v3484
  %5731 = vmatpush.bf16.msra.mxu0 %v3480
  %5732 = vmatmul.bf16.gmra.mxu0 %v935
  %v5733 = vpop.f32.mrf.mxu0
  %v5734 = vadd.f32 %v5720, %v5733
  %v5735 = vpop.f32.mrf.mxu0
  %v5736 = vadd.f32 %v5722, %v5735
  %5737 = vdwg.mxu0
  %5738 = vmatpush.bf16.msra.mxu0 %v3540
  %5739 = vmatpush.bf16.msra.mxu0 %v3536
  %5740 = vmatpush.bf16.msra.mxu0 %v3532
  %5741 = vmatpush.bf16.msra.mxu0 %v3528
  %5742 = vmatpush.bf16.msra.mxu0 %v3524
  %5743 = vmatpush.bf16.msra.mxu0 %v3520
  %5744 = vmatpush.bf16.msra.mxu0 %v3516
  %5745 = vmatpush.bf16.msra.mxu0 %v3512
  %5746 = vmatmul.bf16.gmra.mxu0 %v936
  %v5747 = vpop.f32.mrf.mxu0
  %v5748 = vadd.f32 %v5734, %v5747
  %v5749 = vpop.f32.mrf.mxu0
  %v5750 = vadd.f32 %v5736, %v5749
  %5751 = vdwg.mxu0
  %5752 = vmatpush.bf16.msra.mxu0 %v3572
  %5753 = vmatpush.bf16.msra.mxu0 %v3568
  %5754 = vmatpush.bf16.msra.mxu0 %v3564
  %5755 = vmatpush.bf16.msra.mxu0 %v3560
  %5756 = vmatpush.bf16.msra.mxu0 %v3556
  %5757 = vmatpush.bf16.msra.mxu0 %v3552
  %5758 = vmatpush.bf16.msra.mxu0 %v3548
  %5759 = vmatpush.bf16.msra.mxu0 %v3544
  %5760 = vmatmul.bf16.gmra.mxu0 %v937
  %v5761 = vpop.f32.mrf.mxu0
  %v5762 = vadd.f32 %v5748, %v5761
  %v5763 = vpop.f32.mrf.mxu0
  %v5764 = vadd.f32 %v5750, %v5763
  %5765 = vdwg.mxu0
  %5766 = vmatpush.bf16.msra.mxu0 %v3604
  %5767 = vmatpush.bf16.msra.mxu0 %v3600
  %5768 = vmatpush.bf16.msra.mxu0 %v3596
  %5769 = vmatpush.bf16.msra.mxu0 %v3592
  %5770 = vmatpush.bf16.msra.mxu0 %v3588
  %5771 = vmatpush.bf16.msra.mxu0 %v3584
  %5772 = vmatpush.bf16.msra.mxu0 %v3580
  %5773 = vmatpush.bf16.msra.mxu0 %v3576
  %5774 = vmatmul.bf16.gmra.mxu0 %v938
  %v5775 = vpop.f32.mrf.mxu0
  %v5776 = vadd.f32 %v5762, %v5775
  %v5777 = vpop.f32.mrf.mxu0
  %v5778 = vadd.f32 %v5764, %v5777
  %5779 = vdwg.mxu0
  %5780 = vmatpush.bf16.msra.mxu0 %v3636
  %5781 = vmatpush.bf16.msra.mxu0 %v3632
  %5782 = vmatpush.bf16.msra.mxu0 %v3628
  %5783 = vmatpush.bf16.msra.mxu0 %v3624
  %5784 = vmatpush.bf16.msra.mxu0 %v3620
  %5785 = vmatpush.bf16.msra.mxu0 %v3616
  %5786 = vmatpush.bf16.msra.mxu0 %v3612
  %5787 = vmatpush.bf16.msra.mxu0 %v3608
  %5788 = vmatmul.bf16.gmra.mxu0 %v939
  %v5789 = vpop.f32.mrf.mxu0
  %v5790 = vadd.f32 %v5776, %v5789
  %v5791 = vpop.f32.mrf.mxu0
  %v5792 = vadd.f32 %v5778, %v5791
  %5793 = vdwg.mxu0
  %5794 = vmatpush.bf16.msra.mxu0 %v3668
  %5795 = vmatpush.bf16.msra.mxu0 %v3664
  %5796 = vmatpush.bf16.msra.mxu0 %v3660
  %5797 = vmatpush.bf16.msra.mxu0 %v3656
  %5798 = vmatpush.bf16.msra.mxu0 %v3652
  %5799 = vmatpush.bf16.msra.mxu0 %v3648
  %5800 = vmatpush.bf16.msra.mxu0 %v3644
  %5801 = vmatpush.bf16.msra.mxu0 %v3640
  %5802 = vmatmul.bf16.gmra.mxu0 %v940
  %v5803 = vpop.f32.mrf.mxu0
  %v5804 = vadd.f32 %v5790, %v5803
  %v5805 = vpop.f32.mrf.mxu0
  %v5806 = vadd.f32 %v5792, %v5805
  %5807 = vdwg.mxu0
  %5808 = vmatpush.bf16.msra.mxu0 %v3700
  %5809 = vmatpush.bf16.msra.mxu0 %v3696
  %5810 = vmatpush.bf16.msra.mxu0 %v3692
  %5811 = vmatpush.bf16.msra.mxu0 %v3688
  %5812 = vmatpush.bf16.msra.mxu0 %v3684
  %5813 = vmatpush.bf16.msra.mxu0 %v3680
  %5814 = vmatpush.bf16.msra.mxu0 %v3676
  %5815 = vmatpush.bf16.msra.mxu0 %v3672
  %5816 = vmatmul.bf16.gmra.mxu0 %v941
  %v5817 = vpop.f32.mrf.mxu0
  %v5818 = vadd.f32 %v5804, %v5817
  %v5819 = vpop.f32.mrf.mxu0
  %v5820 = vadd.f32 %v5806, %v5819
  %5821 = vdwg.mxu0
  %5822 = vmatpush.bf16.msra.mxu0 %v3732
  %5823 = vmatpush.bf16.msra.mxu0 %v3728
  %5824 = vmatpush.bf16.msra.mxu0 %v3724
  %5825 = vmatpush.bf16.msra.mxu0 %v3720
  %5826 = vmatpush.bf16.msra.mxu0 %v3716
  %5827 = vmatpush.bf16.msra.mxu0 %v3712
  %5828 = vmatpush.bf16.msra.mxu0 %v3708
  %5829 = vmatpush.bf16.msra.mxu0 %v3704
  %5830 = vmatmul.bf16.gmra.mxu0 %v942
  %v5831 = vpop.f32.mrf.mxu0
  %v5832 = vadd.f32 %v5818, %v5831
  %v5833 = vpop.f32.mrf.mxu0
  %v5834 = vadd.f32 %v5820, %v5833
  %5835 = vdwg.mxu0
  %5836 = vmatpush.bf16.msra.mxu0 %v3764
  %5837 = vmatpush.bf16.msra.mxu0 %v3760
  %5838 = vmatpush.bf16.msra.mxu0 %v3756
  %5839 = vmatpush.bf16.msra.mxu0 %v3752
  %5840 = vmatpush.bf16.msra.mxu0 %v3748
  %5841 = vmatpush.bf16.msra.mxu0 %v3744
  %5842 = vmatpush.bf16.msra.mxu0 %v3740
  %5843 = vmatpush.bf16.msra.mxu0 %v3736
  %5844 = vmatmul.bf16.gmra.mxu0 %v943
  %v5845 = vpop.f32.mrf.mxu0
  %v5846 = vadd.f32 %v5832, %v5845
  %v5847 = vpop.f32.mrf.mxu0
  %v5848 = vadd.f32 %v5834, %v5847
  %5849 = vdwg.mxu0
  %5850 = vmatpush.bf16.msra.mxu0 %v3796
  %5851 = vmatpush.bf16.msra.mxu0 %v3792
  %5852 = vmatpush.bf16.msra.mxu0 %v3788
  %5853 = vmatpush.bf16.msra.mxu0 %v3784
  %5854 = vmatpush.bf16.msra.mxu0 %v3780
  %5855 = vmatpush.bf16.msra.mxu0 %v3776
  %5856 = vmatpush.bf16.msra.mxu0 %v3772
  %5857 = vmatpush.bf16.msra.mxu0 %v3768
  %5858 = vmatmul.bf16.gmra.mxu0 %v944
  %v5859 = vpop.f32.mrf.mxu0
  %v5860 = vadd.f32 %v5846, %v5859
  %v5861 = vpop.f32.mrf.mxu0
  %v5862 = vadd.f32 %v5848, %v5861
  %5863 = vdwg.mxu0
  %5864 = vmatpush.bf16.msra.mxu0 %v3828
  %5865 = vmatpush.bf16.msra.mxu0 %v3824
  %5866 = vmatpush.bf16.msra.mxu0 %v3820
  %5867 = vmatpush.bf16.msra.mxu0 %v3816
  %5868 = vmatpush.bf16.msra.mxu0 %v3812
  %5869 = vmatpush.bf16.msra.mxu0 %v3808
  %5870 = vmatpush.bf16.msra.mxu0 %v3804
  %5871 = vmatpush.bf16.msra.mxu0 %v3800
  %5872 = vmatmul.bf16.gmra.mxu0 %v945
  %v5873 = vpop.f32.mrf.mxu0
  %v5874 = vadd.f32 %v5860, %v5873
  %v5875 = vpop.f32.mrf.mxu0
  %v5876 = vadd.f32 %v5862, %v5875
  %5877 = vdwg.mxu0
  %5878 = vmatpush.bf16.msra.mxu0 %v3860
  %5879 = vmatpush.bf16.msra.mxu0 %v3856
  %5880 = vmatpush.bf16.msra.mxu0 %v3852
  %5881 = vmatpush.bf16.msra.mxu0 %v3848
  %5882 = vmatpush.bf16.msra.mxu0 %v3844
  %5883 = vmatpush.bf16.msra.mxu0 %v3840
  %5884 = vmatpush.bf16.msra.mxu0 %v3836
  %5885 = vmatpush.bf16.msra.mxu0 %v3832
  %5886 = vmatmul.bf16.gmra.mxu0 %v946
  %v5887 = vpop.f32.mrf.mxu0
  %v5888 = vadd.f32 %v5874, %v5887
  %v5889 = vpop.f32.mrf.mxu0
  %v5890 = vadd.f32 %v5876, %v5889
  %5891 = vdwg.mxu0
  %5892 = vmatpush.bf16.msra.mxu0 %v3892
  %5893 = vmatpush.bf16.msra.mxu0 %v3888
  %5894 = vmatpush.bf16.msra.mxu0 %v3884
  %5895 = vmatpush.bf16.msra.mxu0 %v3880
  %5896 = vmatpush.bf16.msra.mxu0 %v3876
  %5897 = vmatpush.bf16.msra.mxu0 %v3872
  %5898 = vmatpush.bf16.msra.mxu0 %v3868
  %5899 = vmatpush.bf16.msra.mxu0 %v3864
  %5900 = vmatmul.bf16.gmra.mxu0 %v947
  %v5901 = vpop.f32.mrf.mxu0
  %v5902 = vadd.f32 %v5888, %v5901
  %v5903 = vpop.f32.mrf.mxu0
  %v5904 = vadd.f32 %v5890, %v5903
  %5905 = vdwg.mxu0
  %5906 = vmatpush.bf16.msra.mxu0 %v3924
  %5907 = vmatpush.bf16.msra.mxu0 %v3920
  %5908 = vmatpush.bf16.msra.mxu0 %v3916
  %5909 = vmatpush.bf16.msra.mxu0 %v3912
  %5910 = vmatpush.bf16.msra.mxu0 %v3908
  %5911 = vmatpush.bf16.msra.mxu0 %v3904
  %5912 = vmatpush.bf16.msra.mxu0 %v3900
  %5913 = vmatpush.bf16.msra.mxu0 %v3896
  %5914 = vmatmul.bf16.gmra.mxu0 %v948
  %v5915 = vpop.f32.mrf.mxu0
  %v5916 = vadd.f32 %v5902, %v5915
  %v5917 = vpop.f32.mrf.mxu0
  %v5918 = vadd.f32 %v5904, %v5917
  %5919 = vdwg.mxu0
  %5920 = vmatpush.bf16.msra.mxu0 %v3956
  %5921 = vmatpush.bf16.msra.mxu0 %v3952
  %5922 = vmatpush.bf16.msra.mxu0 %v3948
  %5923 = vmatpush.bf16.msra.mxu0 %v3944
  %5924 = vmatpush.bf16.msra.mxu0 %v3940
  %5925 = vmatpush.bf16.msra.mxu0 %v3936
  %5926 = vmatpush.bf16.msra.mxu0 %v3932
  %5927 = vmatpush.bf16.msra.mxu0 %v3928
  %5928 = vmatmul.bf16.gmra.mxu0 %v949
  %v5929 = vpop.f32.mrf.mxu0
  %v5930 = vadd.f32 %v5916, %v5929
  %v5931 = vpop.f32.mrf.mxu0
  %v5932 = vadd.f32 %v5918, %v5931
  %5933 = vdwg.mxu0
  %5934 = vmatpush.bf16.msra.mxu0 %v3988
  %5935 = vmatpush.bf16.msra.mxu0 %v3984
  %5936 = vmatpush.bf16.msra.mxu0 %v3980
  %5937 = vmatpush.bf16.msra.mxu0 %v3976
  %5938 = vmatpush.bf16.msra.mxu0 %v3972
  %5939 = vmatpush.bf16.msra.mxu0 %v3968
  %5940 = vmatpush.bf16.msra.mxu0 %v3964
  %5941 = vmatpush.bf16.msra.mxu0 %v3960
  %5942 = vmatmul.bf16.gmra.mxu0 %v950
  %v5943 = vpop.f32.mrf.mxu0
  %v5944 = vadd.f32 %v5930, %v5943
  %v5945 = vpop.f32.mrf.mxu0
  %v5946 = vadd.f32 %v5932, %v5945
  %5947 = vdwg.mxu0
  %5948 = vmatpush.bf16.msra.mxu0 %v4020
  %5949 = vmatpush.bf16.msra.mxu0 %v4016
  %5950 = vmatpush.bf16.msra.mxu0 %v4012
  %5951 = vmatpush.bf16.msra.mxu0 %v4008
  %5952 = vmatpush.bf16.msra.mxu0 %v4004
  %5953 = vmatpush.bf16.msra.mxu0 %v4000
  %5954 = vmatpush.bf16.msra.mxu0 %v3996
  %5955 = vmatpush.bf16.msra.mxu0 %v3992
  %5956 = vmatmul.bf16.gmra.mxu0 %v951
  %v5957 = vpop.f32.mrf.mxu0
  %v5958 = vadd.f32 %v5944, %v5957
  %v5959 = vpop.f32.mrf.mxu0
  %v5960 = vadd.f32 %v5946, %v5959
  %5961 = vdwg.mxu0
  %5962 = vmatpush.bf16.msra.mxu0 %v4052
  %5963 = vmatpush.bf16.msra.mxu0 %v4048
  %5964 = vmatpush.bf16.msra.mxu0 %v4044
  %5965 = vmatpush.bf16.msra.mxu0 %v4040
  %5966 = vmatpush.bf16.msra.mxu0 %v4036
  %5967 = vmatpush.bf16.msra.mxu0 %v4032
  %5968 = vmatpush.bf16.msra.mxu0 %v4028
  %5969 = vmatpush.bf16.msra.mxu0 %v4024
  %5970 = vmatmul.bf16.gmra.mxu0 %v952
  %v5971 = vpop.f32.mrf.mxu0
  %v5972 = vadd.f32 %v5958, %v5971
  %v5973 = vpop.f32.mrf.mxu0
  %v5974 = vadd.f32 %v5960, %v5973
  %5975 = vdwg.mxu0
  %5976 = vmatpush.bf16.msra.mxu0 %v4084
  %5977 = vmatpush.bf16.msra.mxu0 %v4080
  %5978 = vmatpush.bf16.msra.mxu0 %v4076
  %5979 = vmatpush.bf16.msra.mxu0 %v4072
  %5980 = vmatpush.bf16.msra.mxu0 %v4068
  %5981 = vmatpush.bf16.msra.mxu0 %v4064
  %5982 = vmatpush.bf16.msra.mxu0 %v4060
  %5983 = vmatpush.bf16.msra.mxu0 %v4056
  %5984 = vmatmul.bf16.gmra.mxu0 %v953
  %v5985 = vpop.f32.mrf.mxu0
  %v5986 = vadd.f32 %v5972, %v5985
  %v5987 = vpop.f32.mrf.mxu0
  %v5988 = vadd.f32 %v5974, %v5987
  %5989 = vdwg.mxu0
  %5990 = vmatpush.bf16.msra.mxu0 %v4116
  %5991 = vmatpush.bf16.msra.mxu0 %v4112
  %5992 = vmatpush.bf16.msra.mxu0 %v4108
  %5993 = vmatpush.bf16.msra.mxu0 %v4104
  %5994 = vmatpush.bf16.msra.mxu0 %v4100
  %5995 = vmatpush.bf16.msra.mxu0 %v4096
  %5996 = vmatpush.bf16.msra.mxu0 %v4092
  %5997 = vmatpush.bf16.msra.mxu0 %v4088
  %5998 = vmatmul.bf16.gmra.mxu0 %v954
  %v5999 = vpop.f32.mrf.mxu0
  %v6000 = vadd.f32 %v5986, %v5999
  %v6001 = vpop.f32.mrf.mxu0
  %v6002 = vadd.f32 %v5988, %v6001
  %6003 = vdwg.mxu0
  %6004 = vmatpush.bf16.msra.mxu0 %v4148
  %6005 = vmatpush.bf16.msra.mxu0 %v4144
  %6006 = vmatpush.bf16.msra.mxu0 %v4140
  %6007 = vmatpush.bf16.msra.mxu0 %v4136
  %6008 = vmatpush.bf16.msra.mxu0 %v4132
  %6009 = vmatpush.bf16.msra.mxu0 %v4128
  %6010 = vmatpush.bf16.msra.mxu0 %v4124
  %6011 = vmatpush.bf16.msra.mxu0 %v4120
  %6012 = vmatmul.bf16.gmra.mxu0 %v955
  %v6013 = vpop.f32.mrf.mxu0
  %v6014 = vadd.f32 %v6000, %v6013
  %v6015 = vpop.f32.mrf.mxu0
  %v6016 = vadd.f32 %v6002, %v6015
  %6017 = vdwg.mxu0
  %6018 = vmatpush.bf16.msra.mxu0 %v4180
  %6019 = vmatpush.bf16.msra.mxu0 %v4176
  %6020 = vmatpush.bf16.msra.mxu0 %v4172
  %6021 = vmatpush.bf16.msra.mxu0 %v4168
  %6022 = vmatpush.bf16.msra.mxu0 %v4164
  %6023 = vmatpush.bf16.msra.mxu0 %v4160
  %6024 = vmatpush.bf16.msra.mxu0 %v4156
  %6025 = vmatpush.bf16.msra.mxu0 %v4152
  %6026 = vmatmul.bf16.gmra.mxu0 %v956
  %v6027 = vpop.f32.mrf.mxu0
  %v6028 = vadd.f32 %v6014, %v6027
  %v6029 = vpop.f32.mrf.mxu0
  %v6030 = vadd.f32 %v6016, %v6029
  %6031 = vdwg.mxu0
  %6032 = vmatpush.bf16.msra.mxu0 %v3413
  %6033 = vmatpush.bf16.msra.mxu0 %v3409
  %6034 = vmatpush.bf16.msra.mxu0 %v3405
  %6035 = vmatpush.bf16.msra.mxu0 %v3401
  %6036 = vmatpush.bf16.msra.mxu0 %v3397
  %6037 = vmatpush.bf16.msra.mxu0 %v3393
  %6038 = vmatpush.bf16.msra.mxu0 %v3389
  %6039 = vmatpush.bf16.msra.mxu0 %v3385
  %6040 = vmatmul.bf16.gmra.mxu0 %v932
  %v6041 = vpop.f32.mrf.mxu0
  %v6042 = vadd.f32 %v851, %v6041
  %v6043 = vpop.f32.mrf.mxu0
  %v6044 = vadd.f32 %v851, %v6043
  %6045 = vdwg.mxu0
  %6046 = vmatpush.bf16.msra.mxu0 %v3445
  %6047 = vmatpush.bf16.msra.mxu0 %v3441
  %6048 = vmatpush.bf16.msra.mxu0 %v3437
  %6049 = vmatpush.bf16.msra.mxu0 %v3433
  %6050 = vmatpush.bf16.msra.mxu0 %v3429
  %6051 = vmatpush.bf16.msra.mxu0 %v3425
  %6052 = vmatpush.bf16.msra.mxu0 %v3421
  %6053 = vmatpush.bf16.msra.mxu0 %v3417
  %6054 = vmatmul.bf16.gmra.mxu0 %v933
  %v6055 = vpop.f32.mrf.mxu0
  %v6056 = vadd.f32 %v6042, %v6055
  %v6057 = vpop.f32.mrf.mxu0
  %v6058 = vadd.f32 %v6044, %v6057
  %6059 = vdwg.mxu0
  %6060 = vmatpush.bf16.msra.mxu0 %v3477
  %6061 = vmatpush.bf16.msra.mxu0 %v3473
  %6062 = vmatpush.bf16.msra.mxu0 %v3469
  %6063 = vmatpush.bf16.msra.mxu0 %v3465
  %6064 = vmatpush.bf16.msra.mxu0 %v3461
  %6065 = vmatpush.bf16.msra.mxu0 %v3457
  %6066 = vmatpush.bf16.msra.mxu0 %v3453
  %6067 = vmatpush.bf16.msra.mxu0 %v3449
  %6068 = vmatmul.bf16.gmra.mxu0 %v934
  %v6069 = vpop.f32.mrf.mxu0
  %v6070 = vadd.f32 %v6056, %v6069
  %v6071 = vpop.f32.mrf.mxu0
  %v6072 = vadd.f32 %v6058, %v6071
  %6073 = vdwg.mxu0
  %6074 = vmatpush.bf16.msra.mxu0 %v3509
  %6075 = vmatpush.bf16.msra.mxu0 %v3505
  %6076 = vmatpush.bf16.msra.mxu0 %v3501
  %6077 = vmatpush.bf16.msra.mxu0 %v3497
  %6078 = vmatpush.bf16.msra.mxu0 %v3493
  %6079 = vmatpush.bf16.msra.mxu0 %v3489
  %6080 = vmatpush.bf16.msra.mxu0 %v3485
  %6081 = vmatpush.bf16.msra.mxu0 %v3481
  %6082 = vmatmul.bf16.gmra.mxu0 %v935
  %v6083 = vpop.f32.mrf.mxu0
  %v6084 = vadd.f32 %v6070, %v6083
  %v6085 = vpop.f32.mrf.mxu0
  %v6086 = vadd.f32 %v6072, %v6085
  %6087 = vdwg.mxu0
  %6088 = vmatpush.bf16.msra.mxu0 %v3541
  %6089 = vmatpush.bf16.msra.mxu0 %v3537
  %6090 = vmatpush.bf16.msra.mxu0 %v3533
  %6091 = vmatpush.bf16.msra.mxu0 %v3529
  %6092 = vmatpush.bf16.msra.mxu0 %v3525
  %6093 = vmatpush.bf16.msra.mxu0 %v3521
  %6094 = vmatpush.bf16.msra.mxu0 %v3517
  %6095 = vmatpush.bf16.msra.mxu0 %v3513
  %6096 = vmatmul.bf16.gmra.mxu0 %v936
  %v6097 = vpop.f32.mrf.mxu0
  %v6098 = vadd.f32 %v6084, %v6097
  %v6099 = vpop.f32.mrf.mxu0
  %v6100 = vadd.f32 %v6086, %v6099
  %6101 = vdwg.mxu0
  %6102 = vmatpush.bf16.msra.mxu0 %v3573
  %6103 = vmatpush.bf16.msra.mxu0 %v3569
  %6104 = vmatpush.bf16.msra.mxu0 %v3565
  %6105 = vmatpush.bf16.msra.mxu0 %v3561
  %6106 = vmatpush.bf16.msra.mxu0 %v3557
  %6107 = vmatpush.bf16.msra.mxu0 %v3553
  %6108 = vmatpush.bf16.msra.mxu0 %v3549
  %6109 = vmatpush.bf16.msra.mxu0 %v3545
  %6110 = vmatmul.bf16.gmra.mxu0 %v937
  %v6111 = vpop.f32.mrf.mxu0
  %v6112 = vadd.f32 %v6098, %v6111
  %v6113 = vpop.f32.mrf.mxu0
  %v6114 = vadd.f32 %v6100, %v6113
  %6115 = vdwg.mxu0
  %6116 = vmatpush.bf16.msra.mxu0 %v3605
  %6117 = vmatpush.bf16.msra.mxu0 %v3601
  %6118 = vmatpush.bf16.msra.mxu0 %v3597
  %6119 = vmatpush.bf16.msra.mxu0 %v3593
  %6120 = vmatpush.bf16.msra.mxu0 %v3589
  %6121 = vmatpush.bf16.msra.mxu0 %v3585
  %6122 = vmatpush.bf16.msra.mxu0 %v3581
  %6123 = vmatpush.bf16.msra.mxu0 %v3577
  %6124 = vmatmul.bf16.gmra.mxu0 %v938
  %v6125 = vpop.f32.mrf.mxu0
  %v6126 = vadd.f32 %v6112, %v6125
  %v6127 = vpop.f32.mrf.mxu0
  %v6128 = vadd.f32 %v6114, %v6127
  %6129 = vdwg.mxu0
  %6130 = vmatpush.bf16.msra.mxu0 %v3637
  %6131 = vmatpush.bf16.msra.mxu0 %v3633
  %6132 = vmatpush.bf16.msra.mxu0 %v3629
  %6133 = vmatpush.bf16.msra.mxu0 %v3625
  %6134 = vmatpush.bf16.msra.mxu0 %v3621
  %6135 = vmatpush.bf16.msra.mxu0 %v3617
  %6136 = vmatpush.bf16.msra.mxu0 %v3613
  %6137 = vmatpush.bf16.msra.mxu0 %v3609
  %6138 = vmatmul.bf16.gmra.mxu0 %v939
  %v6139 = vpop.f32.mrf.mxu0
  %v6140 = vadd.f32 %v6126, %v6139
  %v6141 = vpop.f32.mrf.mxu0
  %v6142 = vadd.f32 %v6128, %v6141
  %6143 = vdwg.mxu0
  %6144 = vmatpush.bf16.msra.mxu0 %v3669
  %6145 = vmatpush.bf16.msra.mxu0 %v3665
  %6146 = vmatpush.bf16.msra.mxu0 %v3661
  %6147 = vmatpush.bf16.msra.mxu0 %v3657
  %6148 = vmatpush.bf16.msra.mxu0 %v3653
  %6149 = vmatpush.bf16.msra.mxu0 %v3649
  %6150 = vmatpush.bf16.msra.mxu0 %v3645
  %6151 = vmatpush.bf16.msra.mxu0 %v3641
  %6152 = vmatmul.bf16.gmra.mxu0 %v940
  %v6153 = vpop.f32.mrf.mxu0
  %v6154 = vadd.f32 %v6140, %v6153
  %v6155 = vpop.f32.mrf.mxu0
  %v6156 = vadd.f32 %v6142, %v6155
  %6157 = vdwg.mxu0
  %6158 = vmatpush.bf16.msra.mxu0 %v3701
  %6159 = vmatpush.bf16.msra.mxu0 %v3697
  %6160 = vmatpush.bf16.msra.mxu0 %v3693
  %6161 = vmatpush.bf16.msra.mxu0 %v3689
  %6162 = vmatpush.bf16.msra.mxu0 %v3685
  %6163 = vmatpush.bf16.msra.mxu0 %v3681
  %6164 = vmatpush.bf16.msra.mxu0 %v3677
  %6165 = vmatpush.bf16.msra.mxu0 %v3673
  %6166 = vmatmul.bf16.gmra.mxu0 %v941
  %v6167 = vpop.f32.mrf.mxu0
  %v6168 = vadd.f32 %v6154, %v6167
  %v6169 = vpop.f32.mrf.mxu0
  %v6170 = vadd.f32 %v6156, %v6169
  %6171 = vdwg.mxu0
  %6172 = vmatpush.bf16.msra.mxu0 %v3733
  %6173 = vmatpush.bf16.msra.mxu0 %v3729
  %6174 = vmatpush.bf16.msra.mxu0 %v3725
  %6175 = vmatpush.bf16.msra.mxu0 %v3721
  %6176 = vmatpush.bf16.msra.mxu0 %v3717
  %6177 = vmatpush.bf16.msra.mxu0 %v3713
  %6178 = vmatpush.bf16.msra.mxu0 %v3709
  %6179 = vmatpush.bf16.msra.mxu0 %v3705
  %6180 = vmatmul.bf16.gmra.mxu0 %v942
  %v6181 = vpop.f32.mrf.mxu0
  %v6182 = vadd.f32 %v6168, %v6181
  %v6183 = vpop.f32.mrf.mxu0
  %v6184 = vadd.f32 %v6170, %v6183
  %6185 = vdwg.mxu0
  %6186 = vmatpush.bf16.msra.mxu0 %v3765
  %6187 = vmatpush.bf16.msra.mxu0 %v3761
  %6188 = vmatpush.bf16.msra.mxu0 %v3757
  %6189 = vmatpush.bf16.msra.mxu0 %v3753
  %6190 = vmatpush.bf16.msra.mxu0 %v3749
  %6191 = vmatpush.bf16.msra.mxu0 %v3745
  %6192 = vmatpush.bf16.msra.mxu0 %v3741
  %6193 = vmatpush.bf16.msra.mxu0 %v3737
  %6194 = vmatmul.bf16.gmra.mxu0 %v943
  %v6195 = vpop.f32.mrf.mxu0
  %v6196 = vadd.f32 %v6182, %v6195
  %v6197 = vpop.f32.mrf.mxu0
  %v6198 = vadd.f32 %v6184, %v6197
  %6199 = vdwg.mxu0
  %6200 = vmatpush.bf16.msra.mxu0 %v3797
  %6201 = vmatpush.bf16.msra.mxu0 %v3793
  %6202 = vmatpush.bf16.msra.mxu0 %v3789
  %6203 = vmatpush.bf16.msra.mxu0 %v3785
  %6204 = vmatpush.bf16.msra.mxu0 %v3781
  %6205 = vmatpush.bf16.msra.mxu0 %v3777
  %6206 = vmatpush.bf16.msra.mxu0 %v3773
  %6207 = vmatpush.bf16.msra.mxu0 %v3769
  %6208 = vmatmul.bf16.gmra.mxu0 %v944
  %v6209 = vpop.f32.mrf.mxu0
  %v6210 = vadd.f32 %v6196, %v6209
  %v6211 = vpop.f32.mrf.mxu0
  %v6212 = vadd.f32 %v6198, %v6211
  %6213 = vdwg.mxu0
  %6214 = vmatpush.bf16.msra.mxu0 %v3829
  %6215 = vmatpush.bf16.msra.mxu0 %v3825
  %6216 = vmatpush.bf16.msra.mxu0 %v3821
  %6217 = vmatpush.bf16.msra.mxu0 %v3817
  %6218 = vmatpush.bf16.msra.mxu0 %v3813
  %6219 = vmatpush.bf16.msra.mxu0 %v3809
  %6220 = vmatpush.bf16.msra.mxu0 %v3805
  %6221 = vmatpush.bf16.msra.mxu0 %v3801
  %6222 = vmatmul.bf16.gmra.mxu0 %v945
  %v6223 = vpop.f32.mrf.mxu0
  %v6224 = vadd.f32 %v6210, %v6223
  %v6225 = vpop.f32.mrf.mxu0
  %v6226 = vadd.f32 %v6212, %v6225
  %6227 = vdwg.mxu0
  %6228 = vmatpush.bf16.msra.mxu0 %v3861
  %6229 = vmatpush.bf16.msra.mxu0 %v3857
  %6230 = vmatpush.bf16.msra.mxu0 %v3853
  %6231 = vmatpush.bf16.msra.mxu0 %v3849
  %6232 = vmatpush.bf16.msra.mxu0 %v3845
  %6233 = vmatpush.bf16.msra.mxu0 %v3841
  %6234 = vmatpush.bf16.msra.mxu0 %v3837
  %6235 = vmatpush.bf16.msra.mxu0 %v3833
  %6236 = vmatmul.bf16.gmra.mxu0 %v946
  %v6237 = vpop.f32.mrf.mxu0
  %v6238 = vadd.f32 %v6224, %v6237
  %v6239 = vpop.f32.mrf.mxu0
  %v6240 = vadd.f32 %v6226, %v6239
  %6241 = vdwg.mxu0
  %6242 = vmatpush.bf16.msra.mxu0 %v3893
  %6243 = vmatpush.bf16.msra.mxu0 %v3889
  %6244 = vmatpush.bf16.msra.mxu0 %v3885
  %6245 = vmatpush.bf16.msra.mxu0 %v3881
  %6246 = vmatpush.bf16.msra.mxu0 %v3877
  %6247 = vmatpush.bf16.msra.mxu0 %v3873
  %6248 = vmatpush.bf16.msra.mxu0 %v3869
  %6249 = vmatpush.bf16.msra.mxu0 %v3865
  %6250 = vmatmul.bf16.gmra.mxu0 %v947
  %v6251 = vpop.f32.mrf.mxu0
  %v6252 = vadd.f32 %v6238, %v6251
  %v6253 = vpop.f32.mrf.mxu0
  %v6254 = vadd.f32 %v6240, %v6253
  %6255 = vdwg.mxu0
  %6256 = vmatpush.bf16.msra.mxu0 %v3925
  %6257 = vmatpush.bf16.msra.mxu0 %v3921
  %6258 = vmatpush.bf16.msra.mxu0 %v3917
  %6259 = vmatpush.bf16.msra.mxu0 %v3913
  %6260 = vmatpush.bf16.msra.mxu0 %v3909
  %6261 = vmatpush.bf16.msra.mxu0 %v3905
  %6262 = vmatpush.bf16.msra.mxu0 %v3901
  %6263 = vmatpush.bf16.msra.mxu0 %v3897
  %6264 = vmatmul.bf16.gmra.mxu0 %v948
  %v6265 = vpop.f32.mrf.mxu0
  %v6266 = vadd.f32 %v6252, %v6265
  %v6267 = vpop.f32.mrf.mxu0
  %v6268 = vadd.f32 %v6254, %v6267
  %6269 = vdwg.mxu0
  %6270 = vmatpush.bf16.msra.mxu0 %v3957
  %6271 = vmatpush.bf16.msra.mxu0 %v3953
  %6272 = vmatpush.bf16.msra.mxu0 %v3949
  %6273 = vmatpush.bf16.msra.mxu0 %v3945
  %6274 = vmatpush.bf16.msra.mxu0 %v3941
  %6275 = vmatpush.bf16.msra.mxu0 %v3937
  %6276 = vmatpush.bf16.msra.mxu0 %v3933
  %6277 = vmatpush.bf16.msra.mxu0 %v3929
  %6278 = vmatmul.bf16.gmra.mxu0 %v949
  %v6279 = vpop.f32.mrf.mxu0
  %v6280 = vadd.f32 %v6266, %v6279
  %v6281 = vpop.f32.mrf.mxu0
  %v6282 = vadd.f32 %v6268, %v6281
  %6283 = vdwg.mxu0
  %6284 = vmatpush.bf16.msra.mxu0 %v3989
  %6285 = vmatpush.bf16.msra.mxu0 %v3985
  %6286 = vmatpush.bf16.msra.mxu0 %v3981
  %6287 = vmatpush.bf16.msra.mxu0 %v3977
  %6288 = vmatpush.bf16.msra.mxu0 %v3973
  %6289 = vmatpush.bf16.msra.mxu0 %v3969
  %6290 = vmatpush.bf16.msra.mxu0 %v3965
  %6291 = vmatpush.bf16.msra.mxu0 %v3961
  %6292 = vmatmul.bf16.gmra.mxu0 %v950
  %v6293 = vpop.f32.mrf.mxu0
  %v6294 = vadd.f32 %v6280, %v6293
  %v6295 = vpop.f32.mrf.mxu0
  %v6296 = vadd.f32 %v6282, %v6295
  %6297 = vdwg.mxu0
  %6298 = vmatpush.bf16.msra.mxu0 %v4021
  %6299 = vmatpush.bf16.msra.mxu0 %v4017
  %6300 = vmatpush.bf16.msra.mxu0 %v4013
  %6301 = vmatpush.bf16.msra.mxu0 %v4009
  %6302 = vmatpush.bf16.msra.mxu0 %v4005
  %6303 = vmatpush.bf16.msra.mxu0 %v4001
  %6304 = vmatpush.bf16.msra.mxu0 %v3997
  %6305 = vmatpush.bf16.msra.mxu0 %v3993
  %6306 = vmatmul.bf16.gmra.mxu0 %v951
  %v6307 = vpop.f32.mrf.mxu0
  %v6308 = vadd.f32 %v6294, %v6307
  %v6309 = vpop.f32.mrf.mxu0
  %v6310 = vadd.f32 %v6296, %v6309
  %6311 = vdwg.mxu0
  %6312 = vmatpush.bf16.msra.mxu0 %v4053
  %6313 = vmatpush.bf16.msra.mxu0 %v4049
  %6314 = vmatpush.bf16.msra.mxu0 %v4045
  %6315 = vmatpush.bf16.msra.mxu0 %v4041
  %6316 = vmatpush.bf16.msra.mxu0 %v4037
  %6317 = vmatpush.bf16.msra.mxu0 %v4033
  %6318 = vmatpush.bf16.msra.mxu0 %v4029
  %6319 = vmatpush.bf16.msra.mxu0 %v4025
  %6320 = vmatmul.bf16.gmra.mxu0 %v952
  %v6321 = vpop.f32.mrf.mxu0
  %v6322 = vadd.f32 %v6308, %v6321
  %v6323 = vpop.f32.mrf.mxu0
  %v6324 = vadd.f32 %v6310, %v6323
  %6325 = vdwg.mxu0
  %6326 = vmatpush.bf16.msra.mxu0 %v4085
  %6327 = vmatpush.bf16.msra.mxu0 %v4081
  %6328 = vmatpush.bf16.msra.mxu0 %v4077
  %6329 = vmatpush.bf16.msra.mxu0 %v4073
  %6330 = vmatpush.bf16.msra.mxu0 %v4069
  %6331 = vmatpush.bf16.msra.mxu0 %v4065
  %6332 = vmatpush.bf16.msra.mxu0 %v4061
  %6333 = vmatpush.bf16.msra.mxu0 %v4057
  %6334 = vmatmul.bf16.gmra.mxu0 %v953
  %v6335 = vpop.f32.mrf.mxu0
  %v6336 = vadd.f32 %v6322, %v6335
  %v6337 = vpop.f32.mrf.mxu0
  %v6338 = vadd.f32 %v6324, %v6337
  %6339 = vdwg.mxu0
  %6340 = vmatpush.bf16.msra.mxu0 %v4117
  %6341 = vmatpush.bf16.msra.mxu0 %v4113
  %6342 = vmatpush.bf16.msra.mxu0 %v4109
  %6343 = vmatpush.bf16.msra.mxu0 %v4105
  %6344 = vmatpush.bf16.msra.mxu0 %v4101
  %6345 = vmatpush.bf16.msra.mxu0 %v4097
  %6346 = vmatpush.bf16.msra.mxu0 %v4093
  %6347 = vmatpush.bf16.msra.mxu0 %v4089
  %6348 = vmatmul.bf16.gmra.mxu0 %v954
  %v6349 = vpop.f32.mrf.mxu0
  %v6350 = vadd.f32 %v6336, %v6349
  %v6351 = vpop.f32.mrf.mxu0
  %v6352 = vadd.f32 %v6338, %v6351
  %6353 = vdwg.mxu0
  %6354 = vmatpush.bf16.msra.mxu0 %v4149
  %6355 = vmatpush.bf16.msra.mxu0 %v4145
  %6356 = vmatpush.bf16.msra.mxu0 %v4141
  %6357 = vmatpush.bf16.msra.mxu0 %v4137
  %6358 = vmatpush.bf16.msra.mxu0 %v4133
  %6359 = vmatpush.bf16.msra.mxu0 %v4129
  %6360 = vmatpush.bf16.msra.mxu0 %v4125
  %6361 = vmatpush.bf16.msra.mxu0 %v4121
  %6362 = vmatmul.bf16.gmra.mxu0 %v955
  %v6363 = vpop.f32.mrf.mxu0
  %v6364 = vadd.f32 %v6350, %v6363
  %v6365 = vpop.f32.mrf.mxu0
  %v6366 = vadd.f32 %v6352, %v6365
  %6367 = vdwg.mxu0
  %6368 = vmatpush.bf16.msra.mxu0 %v4181
  %6369 = vmatpush.bf16.msra.mxu0 %v4177
  %6370 = vmatpush.bf16.msra.mxu0 %v4173
  %6371 = vmatpush.bf16.msra.mxu0 %v4169
  %6372 = vmatpush.bf16.msra.mxu0 %v4165
  %6373 = vmatpush.bf16.msra.mxu0 %v4161
  %6374 = vmatpush.bf16.msra.mxu0 %v4157
  %6375 = vmatpush.bf16.msra.mxu0 %v4153
  %6376 = vmatmul.bf16.gmra.mxu0 %v956
  %v6377 = vpop.f32.mrf.mxu0
  %v6378 = vadd.f32 %v6364, %v6377
  %v6379 = vpop.f32.mrf.mxu0
  %v6380 = vadd.f32 %v6366, %v6379
  %6381 = vdwg.mxu0
  %v6382 = vmax.f32 %v5328, 0.0
  %v6383 = vmax.f32 %v5678, 0.0
  %v6384 = vmax.f32 %v6028, 0.0
  %v6385 = vmax.f32 %v6378, 0.0
  %v6386 = vmax.f32 %v5330, 0.0
  %v6387 = vmax.f32 %v5680, 0.0
  %v6388 = vmax.f32 %v6030, 0.0
  %v6389 = vmax.f32 %v6380, 0.0
  %v6390 = vpack.c.bf16 %v6386, %v6382
  %v6391 = vpack.c.bf16 %v6387, %v6383
  %v6392 = vpack.c.bf16 %v6388, %v6384
  %v6393 = vpack.c.bf16 %v6389, %v6385
  %v6394 = vld [vmem:[%s3] sm:$0xf]
  %v6395 = vld [vmem:[%s3 + $0x4] sm:$0xf]
  %v6396 = vld [vmem:[%s3 + $0x8] sm:$0xf]
  %v6397 = vld [vmem:[%s3 + $0xc] sm:$0xf]
  %v6398 = vld [vmem:[%s3 + $0x10] sm:$0xf]
  %v6399 = vld [vmem:[%s3 + $0x14] sm:$0xf]
  %v6400 = vld [vmem:[%s3 + $0x18] sm:$0xf]
  %v6401 = vld [vmem:[%s3 + $0x1c] sm:$0xf]
  %v6402 = vld [vmem:[%s3 + $0x20] sm:$0xf]
  %v6403 = vld [vmem:[%s3 + $0x24] sm:$0xf]
  %v6404 = vld [vmem:[%s3 + $0x28] sm:$0xf]
  %v6405 = vld [vmem:[%s3 + $0x2c] sm:$0xf]
  %v6406 = vld [vmem:[%s3 + $0x30] sm:$0xf]
  %v6407 = vld [vmem:[%s3 + $0x34] sm:$0xf]
  %v6408 = vld [vmem:[%s3 + $0x38] sm:$0xf]
  %v6409 = vld [vmem:[%s3 + $0x3c] sm:$0xf]
  %v6410 = vld [vmem:[%s3 + $0x40] sm:$0xf]
  %v6411 = vld [vmem:[%s3 + $0x44] sm:$0xf]
  %v6412 = vld [vmem:[%s3 + $0x48] sm:$0xf]
  %v6413 = vld [vmem:[%s3 + $0x4c] sm:$0xf]
  %v6414 = vld [vmem:[%s3 + $0x50] sm:$0xf]
  %v6415 = vld [vmem:[%s3 + $0x54] sm:$0xf]
  %v6416 = vld [vmem:[%s3 + $0x58] sm:$0xf]
  %v6417 = vld [vmem:[%s3 + $0x5c] sm:$0xf]
  %v6418 = vld [vmem:[%s3 + $0x60] sm:$0xf]
  %v6419 = vld [vmem:[%s3 + $0x64] sm:$0xf]
  %v6420 = vld [vmem:[%s3 + $0x68] sm:$0xf]
  %v6421 = vld [vmem:[%s3 + $0x6c] sm:$0xf]
  %v6422 = vld [vmem:[%s3 + $0x70] sm:$0xf]
  %v6423 = vld [vmem:[%s3 + $0x74] sm:$0xf]
  %v6424 = vld [vmem:[%s3 + $0x78] sm:$0xf]
  %v6425 = vld [vmem:[%s3 + $0x7c] sm:$0xf]
  %v6426 = vld [vmem:[%s3 + $0x80] sm:$0xf]
  %v6427 = vld [vmem:[%s3 + $0x84] sm:$0xf]
  %v6428 = vld [vmem:[%s3 + $0x88] sm:$0xf]
  %v6429 = vld [vmem:[%s3 + $0x8c] sm:$0xf]
  %v6430 = vld [vmem:[%s3 + $0x90] sm:$0xf]
  %v6431 = vld [vmem:[%s3 + $0x94] sm:$0xf]
  %v6432 = vld [vmem:[%s3 + $0x98] sm:$0xf]
  %v6433 = vld [vmem:[%s3 + $0x9c] sm:$0xf]
  %v6434 = vld [vmem:[%s3 + $0xa0] sm:$0xf]
  %v6435 = vld [vmem:[%s3 + $0xa4] sm:$0xf]
  %v6436 = vld [vmem:[%s3 + $0xa8] sm:$0xf]
  %v6437 = vld [vmem:[%s3 + $0xac] sm:$0xf]
  %v6438 = vld [vmem:[%s3 + $0xb0] sm:$0xf]
  %v6439 = vld [vmem:[%s3 + $0xb4] sm:$0xf]
  %v6440 = vld [vmem:[%s3 + $0xb8] sm:$0xf]
  %v6441 = vld [vmem:[%s3 + $0xbc] sm:$0xf]
  %v6442 = vld [vmem:[%s3 + $0xc0] sm:$0xf]
  %v6443 = vld [vmem:[%s3 + $0xc4] sm:$0xf]
  %v6444 = vld [vmem:[%s3 + $0xc8] sm:$0xf]
  %v6445 = vld [vmem:[%s3 + $0xcc] sm:$0xf]
  %v6446 = vld [vmem:[%s3 + $0xd0] sm:$0xf]
  %v6447 = vld [vmem:[%s3 + $0xd4] sm:$0xf]
  %v6448 = vld [vmem:[%s3 + $0xd8] sm:$0xf]
  %v6449 = vld [vmem:[%s3 + $0xdc] sm:$0xf]
  %v6450 = vld [vmem:[%s3 + $0xe0] sm:$0xf]
  %v6451 = vld [vmem:[%s3 + $0xe4] sm:$0xf]
  %v6452 = vld [vmem:[%s3 + $0xe8] sm:$0xf]
  %v6453 = vld [vmem:[%s3 + $0xec] sm:$0xf]
  %v6454 = vld [vmem:[%s3 + $0xf0] sm:$0xf]
  %v6455 = vld [vmem:[%s3 + $0xf4] sm:$0xf]
  %v6456 = vld [vmem:[%s3 + $0xf8] sm:$0xf]
  %v6457 = vld [vmem:[%s3 + $0xfc] sm:$0xf]
  %v6458 = vld [vmem:[%s4] sm:$0x1]
  %v6460 = vperm.slane %v6458, 0
  %v6526 = vunpack.c.l.b16 %v6394
  %v6527 = vunpack.c.l.b16 %v6395
  %v6528 = vunpack.c.l.b16 %v6396
  %v6529 = vunpack.c.l.b16 %v6397
  %v6530 = vunpack.c.l.b16 %v6398
  %v6531 = vunpack.c.l.b16 %v6399
  %v6532 = vunpack.c.l.b16 %v6400
  %v6533 = vunpack.c.l.b16 %v6401
  %v6534 = vunpack.c.l.b16 %v6402
  %v6535 = vunpack.c.l.b16 %v6403
  %v6536 = vunpack.c.l.b16 %v6404
  %v6537 = vunpack.c.l.b16 %v6405
  %v6538 = vunpack.c.l.b16 %v6406
  %v6539 = vunpack.c.l.b16 %v6407
  %v6540 = vunpack.c.l.b16 %v6408
  %v6541 = vunpack.c.l.b16 %v6409
  %v6542 = vunpack.c.l.b16 %v6410
  %v6543 = vunpack.c.l.b16 %v6411
  %v6544 = vunpack.c.l.b16 %v6412
  %v6545 = vunpack.c.l.b16 %v6413
  %v6546 = vunpack.c.l.b16 %v6414
  %v6547 = vunpack.c.l.b16 %v6415
  %v6548 = vunpack.c.l.b16 %v6416
  %v6549 = vunpack.c.l.b16 %v6417
  %v6550 = vunpack.c.l.b16 %v6418
  %v6551 = vunpack.c.l.b16 %v6419
  %v6552 = vunpack.c.l.b16 %v6420
  %v6553 = vunpack.c.l.b16 %v6421
  %v6554 = vunpack.c.l.b16 %v6422
  %v6555 = vunpack.c.l.b16 %v6423
  %v6556 = vunpack.c.l.b16 %v6424
  %v6557 = vunpack.c.l.b16 %v6425
  %v6558 = vunpack.c.l.b16 %v6426
  %v6559 = vunpack.c.l.b16 %v6427
  %v6560 = vunpack.c.l.b16 %v6428
  %v6561 = vunpack.c.l.b16 %v6429
  %v6562 = vunpack.c.l.b16 %v6430
  %v6563 = vunpack.c.l.b16 %v6431
  %v6564 = vunpack.c.l.b16 %v6432
  %v6565 = vunpack.c.l.b16 %v6433
  %v6566 = vunpack.c.l.b16 %v6434
  %v6567 = vunpack.c.l.b16 %v6435
  %v6568 = vunpack.c.l.b16 %v6436
  %v6569 = vunpack.c.l.b16 %v6437
  %v6570 = vunpack.c.l.b16 %v6438
  %v6571 = vunpack.c.l.b16 %v6439
  %v6572 = vunpack.c.l.b16 %v6440
  %v6573 = vunpack.c.l.b16 %v6441
  %v6574 = vunpack.c.l.b16 %v6442
  %v6575 = vunpack.c.l.b16 %v6443
  %v6576 = vunpack.c.l.b16 %v6444
  %v6577 = vunpack.c.l.b16 %v6445
  %v6578 = vunpack.c.l.b16 %v6446
  %v6579 = vunpack.c.l.b16 %v6447
  %v6580 = vunpack.c.l.b16 %v6448
  %v6581 = vunpack.c.l.b16 %v6449
  %v6582 = vunpack.c.l.b16 %v6450
  %v6583 = vunpack.c.l.b16 %v6451
  %v6584 = vunpack.c.l.b16 %v6452
  %v6585 = vunpack.c.l.b16 %v6453
  %v6586 = vunpack.c.l.b16 %v6454
  %v6587 = vunpack.c.l.b16 %v6455
  %v6588 = vunpack.c.l.b16 %v6456
  %v6589 = vunpack.c.l.b16 %v6457
  %v6590 = vpack.c.b16 %v6527, %v6526
  %v6591 = vpack.c.b16 %v6529, %v6528
  %v6592 = vpack.c.b16 %v6531, %v6530
  %v6593 = vpack.c.b16 %v6533, %v6532
  %v6594 = vpack.c.b16 %v6535, %v6534
  %v6595 = vpack.c.b16 %v6537, %v6536
  %v6596 = vpack.c.b16 %v6539, %v6538
  %v6597 = vpack.c.b16 %v6541, %v6540
  %v6598 = vpack.c.b16 %v6543, %v6542
  %v6599 = vpack.c.b16 %v6545, %v6544
  %v6600 = vpack.c.b16 %v6547, %v6546
  %v6601 = vpack.c.b16 %v6549, %v6548
  %v6602 = vpack.c.b16 %v6551, %v6550
  %v6603 = vpack.c.b16 %v6553, %v6552
  %v6604 = vpack.c.b16 %v6555, %v6554
  %v6605 = vpack.c.b16 %v6557, %v6556
  %v6606 = vpack.c.b16 %v6559, %v6558
  %v6607 = vpack.c.b16 %v6561, %v6560
  %v6608 = vpack.c.b16 %v6563, %v6562
  %v6609 = vpack.c.b16 %v6565, %v6564
  %v6610 = vpack.c.b16 %v6567, %v6566
  %v6611 = vpack.c.b16 %v6569, %v6568
  %v6612 = vpack.c.b16 %v6571, %v6570
  %v6613 = vpack.c.b16 %v6573, %v6572
  %v6614 = vpack.c.b16 %v6575, %v6574
  %v6615 = vpack.c.b16 %v6577, %v6576
  %v6616 = vpack.c.b16 %v6579, %v6578
  %v6617 = vpack.c.b16 %v6581, %v6580
  %v6618 = vpack.c.b16 %v6583, %v6582
  %v6619 = vpack.c.b16 %v6585, %v6584
  %v6620 = vpack.c.b16 %v6587, %v6586
  %v6621 = vpack.c.b16 %v6589, %v6588
  %6654 = vmatpush.bf16.msra.mxu0 %v6597
  %6655 = vmatpush.bf16.msra.mxu0 %v6596
  %6656 = vmatpush.bf16.msra.mxu0 %v6595
  %6657 = vmatpush.bf16.msra.mxu0 %v6594
  %6658 = vmatpush.bf16.msra.mxu0 %v6593
  %6659 = vmatpush.bf16.msra.mxu0 %v6592
  %6660 = vmatpush.bf16.msra.mxu0 %v6591
  %6661 = vmatpush.bf16.msra.mxu0 %v6590
  %6662 = vmatmul.bf16.gmra.mxu0 %v6390
  %v6663 = vpop.f32.mrf.mxu0
  %v6664 = vadd.f32 %v6460, %v6663
  %v6665 = vpop.f32.mrf.mxu0
  %v6666 = vadd.f32 %v6460, %v6665
  %6667 = vdwg.mxu0
  %6668 = vmatpush.bf16.msra.mxu0 %v6605
  %6669 = vmatpush.bf16.msra.mxu0 %v6604
  %6670 = vmatpush.bf16.msra.mxu0 %v6603
  %6671 = vmatpush.bf16.msra.mxu0 %v6602
  %6672 = vmatpush.bf16.msra.mxu0 %v6601
  %6673 = vmatpush.bf16.msra.mxu0 %v6600
  %6674 = vmatpush.bf16.msra.mxu0 %v6599
  %6675 = vmatpush.bf16.msra.mxu0 %v6598
  %6676 = vmatmul.bf16.gmra.mxu0 %v6391
  %v6677 = vpop.f32.mrf.mxu0
  %v6678 = vadd.f32 %v6664, %v6677
  %v6679 = vpop.f32.mrf.mxu0
  %v6680 = vadd.f32 %v6666, %v6679
  %6681 = vdwg.mxu0
  %6682 = vmatpush.bf16.msra.mxu0 %v6613
  %6683 = vmatpush.bf16.msra.mxu0 %v6612
  %6684 = vmatpush.bf16.msra.mxu0 %v6611
  %6685 = vmatpush.bf16.msra.mxu0 %v6610
  %6686 = vmatpush.bf16.msra.mxu0 %v6609
  %6687 = vmatpush.bf16.msra.mxu0 %v6608
  %6688 = vmatpush.bf16.msra.mxu0 %v6607
  %6689 = vmatpush.bf16.msra.mxu0 %v6606
  %6690 = vmatmul.bf16.gmra.mxu0 %v6392
  %v6691 = vpop.f32.mrf.mxu0
  %v6692 = vadd.f32 %v6678, %v6691
  %v6693 = vpop.f32.mrf.mxu0
  %v6694 = vadd.f32 %v6680, %v6693
  %6695 = vdwg.mxu0
  %6696 = vmatpush.bf16.msra.mxu0 %v6621
  %6697 = vmatpush.bf16.msra.mxu0 %v6620
  %6698 = vmatpush.bf16.msra.mxu0 %v6619
  %6699 = vmatpush.bf16.msra.mxu0 %v6618
  %6700 = vmatpush.bf16.msra.mxu0 %v6617
  %6701 = vmatpush.bf16.msra.mxu0 %v6616
  %6702 = vmatpush.bf16.msra.mxu0 %v6615
  %6703 = vmatpush.bf16.msra.mxu0 %v6614
  %6704 = vmatmul.bf16.gmra.mxu0 %v6393
  %v6705 = vpop.f32.mrf.mxu0
  %v6706 = vadd.f32 %v6692, %v6705
  %v6707 = vpop.f32.mrf.mxu0
  %v6708 = vadd.f32 %v6694, %v6707
  %6709 = vdwg.mxu0
  %6710 = vst [vmem:[%s5] sm:$0xff] %v6706
  %6711 = vst [vmem:[%s5 + $0x8] sm:$0xff] %v6708
  // Predicated region
  $region22: #{cnn_forward.7} parent=0 // pred_check
    _
  $region23: #{cnn_forward.7} parent=0 // pred_check_branch
    %6713 = sbr.rel (0) target = $region25
  $region24: #{cnn_forward.7} parent=0 // pred_region
    _
  $region25: #{cnn_forward.7} parent=0 // pred_fallthru
    _
  // Predicated region
  $region26: #{cnn_forward.7} parent=0 // pred_check
    _
  $region27: #{cnn_forward.7} parent=0 // pred_check_branch
    %6715 = sbr.rel (0) target = $region29
  $region28: #{cnn_forward.7} parent=0 // pred_region
    _
  $region29: #{cnn_forward.7} parent=0 // pred_fallthru
    _

</llo_original>
